<compile_context>
chip_gen: v7x
topology: tpu7x:2x2x1
jax: 0.10.0
libtpu: 0.0.40
codegen_flags: <defaults>
</compile_context>

<pallas_src>
import jax
import jax.numpy as jnp
from jax.experimental import pallas as pl
from jax.experimental.pallas import tpu as pltpu

STATE_DIM = 32      # flat state vector, consistent with an MLP critic
HIDDEN = 1000
HIDDEN_PAD = 1024   # next multiple of 128
BM_CAP = 1024       # max batch tile (amortizes ~0.35us/step grid overhead)


def _critic_kernel(x_ref, w1_ref, b1_ref, w2_ref, b2_ref, w3_ref, b3_ref, out_ref):
    # Layer 1: (bm, S)bf16 @ (S, HP)bf16 -> (bm, HP) f32 on the MXU.
    h1 = jnp.dot(x_ref[...], w1_ref[...], preferred_element_type=jnp.float32)
    h1 = jnp.maximum(h1 + b1_ref[...], 0.0)

    # Layer 2: (bm, HP) @ (HP, HP) -> (bm, HP).
    h2 = jnp.dot(h1.astype(jnp.bfloat16), w2_ref[...],
                 preferred_element_type=jnp.float32)
    h2 = jnp.maximum(h2 + b2_ref[...], 0.0)

    # Layer 3: rank-1 output -> VPU multiply + lane reduction (no zero-padded
    # MXU pass, no 256 KiB of resident padded w3, plain (bm, 1) store).
    w3_row = w3_ref[...].astype(jnp.float32)                  # (1, HP)
    y = jnp.sum(h2 * w3_row, axis=-1, keepdims=True) + b3_ref[...]
    out_ref[...] = y


def _pick_bm(batch, cap=BM_CAP):
    """Batch tile: smallest multiple of 16 covering `batch` in cdiv(batch, cap)
    tiles. Multiple of 16 keeps bf16 (16,128) sublane packing aligned; sizing
    to the batch minimizes padded-row waste (B=300 -> bm=304, 4 pad rows)."""
    n_tiles = pl.cdiv(batch, cap)
    bm = -(-batch // n_tiles)            # ceil(batch / n_tiles)
    return ((bm + 15) // 16) * 16


def critic_forward(x, params, *, bm=None):
    """x: (B, STATE_DIM) float32 -> (B, 1) float32."""
    w1, b1, w2, b2, w3, b3 = params
    B, S = x.shape
    if bm is None:
        bm = _pick_bm(B)

    n_tiles = pl.cdiv(B, bm)
    Bp = n_tiles * bm

    # Cast activations to bf16 in the wrapper (halves per-tile x DMA; the MXU
    # consumes bf16 anyway) and pad the batch to a tile multiple.
    x = x.astype(jnp.bfloat16)
    if Bp != B:
        x = jnp.pad(x, ((0, Bp - B), (0, 0)))

    # Megacore: only mark the batch axis parallel when there are >=2 tiles;
    # otherwise v7x would duplicate the weight DMA per-TC for nothing.
    dim_sem = ("parallel",) if n_tiles > 1 else ("arbitrary",)

    def build(single_buffer_weights):
        if single_buffer_weights:
            # Constant block index -> the default double buffer is wasted VMEM
            # (~2.2 MiB, mostly w2); request a single pipeline buffer.
            wspec = lambda shape: pl.BlockSpec(shape, lambda i: (0, 0),
                                               pipeline_mode=pl.Buffered(1))
        else:
            wspec = lambda shape: pl.BlockSpec(shape, lambda i: (0, 0))
        return pl.pallas_call(
            _critic_kernel,
            out_shape=jax.ShapeDtypeStruct((Bp, 1), jnp.float32),
            grid=(n_tiles,),
            in_specs=[
                pl.BlockSpec((bm, S), lambda i: (i, 0)),      # x (bf16, batch-tiled)
                wspec((S, HIDDEN_PAD)),                        # w1 (bf16)
                wspec((1, HIDDEN_PAD)),                        # b1 (f32)
                wspec((HIDDEN_PAD, HIDDEN_PAD)),               # w2 (bf16)
                wspec((1, HIDDEN_PAD)),                        # b2 (f32)
                wspec((1, HIDDEN_PAD)),                        # w3 row (bf16)
                wspec((1, 1)),                                 # b3 (f32)
            ],
            out_specs=pl.BlockSpec((bm, 1), lambda i: (i, 0)),
            compiler_params=pltpu.CompilerParams(
                dimension_semantics=dim_sem,
                vmem_limit_bytes=32 << 20,   # f32 h1/h2 at bm<=1024 + weights
            ),
        )

    try:
        out = jax.block_until_ready(build(True)(x, w1, b1, w2, b2, w3, b3))
    except Exception:
        # pipeline_mode=pl.Buffered(1) unsupported on this jax version; fall
        # back to default double-buffering (still fits the VMEM limit).
        out = build(False)(x, w1, b1, w2, b2, w3, b3)

    return out[:B]


def init_params(key, state_dim=STATE_DIM):
    """Deterministic init mimicking nn.Linear default (U[-1/sqrt(fan_in), +])."""
    ks = jax.random.split(key, 6)

    def lin(kw, kb, fan_in, fan_out):
        bound = 1.0 / jnp.sqrt(fan_in)
        w = jax.random.uniform(kw, (fan_in, fan_out), jnp.float32, -bound, bound)
        b = jax.random.uniform(kb, (fan_out,), jnp.float32, -bound, bound)
        return w, b

    w1, b1 = lin(ks[0], ks[1], state_dim, HIDDEN)
    w2, b2 = lin(ks[2], ks[3], HIDDEN, HIDDEN)
    w3, b3 = lin(ks[4], ks[5], HIDDEN, 1)

    # Zero-pad hidden width to 1024; store weights in bf16, biases in f32.
    w1p = (jnp.zeros((state_dim, HIDDEN_PAD), jnp.float32)
           .at[:, :HIDDEN].set(w1).astype(jnp.bfloat16))
    b1p = jnp.zeros((1, HIDDEN_PAD), jnp.float32).at[0, :HIDDEN].set(b1)
    w2p = (jnp.zeros((HIDDEN_PAD, HIDDEN_PAD), jnp.float32)
           .at[:HIDDEN, :HIDDEN].set(w2).astype(jnp.bfloat16))
    b2p = jnp.zeros((1, HIDDEN_PAD), jnp.float32).at[0, :HIDDEN].set(b2)
    w3p = (jnp.zeros((1, HIDDEN_PAD), jnp.float32)
           .at[0, :HIDDEN].set(w3[:, 0]).astype(jnp.bfloat16))
    b3p = jnp.zeros((1, 1), jnp.float32).at[0, 0].set(b3[0])

    padded = (w1p, b1p, w2p, b2p, w3p, b3p)
    unpadded = (w1, b1, w2, b2, w3, b3)
    return padded, unpadded


def critic_reference_f32(x, unpadded):
    """Pure-JAX f32 reference matching the PyTorch forward exactly."""
    w1, b1, w2, b2, w3, b3 = unpadded
    a1 = jnp.maximum(x @ w1 + b1, 0.0)
    a2 = jnp.maximum(a1 @ w2 + b2, 0.0)
    return a2 @ w3 + b3


def critic_reference_bf16(x, padded):
    """Pure-JAX reference reproducing the kernel's bf16-weight arithmetic."""
    w1p, b1p, w2p, b2p, w3p, b3p = padded
    h1 = jnp.dot(x.astype(jnp.bfloat16), w1p, preferred_element_type=jnp.float32)
    h1 = jnp.maximum(h1 + b1p, 0.0)
    h2 = jnp.dot(h1.astype(jnp.bfloat16), w2p, preferred_element_type=jnp.float32)
    h2 = jnp.maximum(h2 + b2p, 0.0)
    return jnp.sum(h2 * w3p.astype(jnp.float32), axis=-1, keepdims=True) + b3p


if __name__ == "__main__":
    key = jax.random.PRNGKey(0)
    k_x, k_p = jax.random.split(key)

    padded_params, unpadded_params = init_params(k_p)

    # Small batch (spec-sized): B=2 -> one 16-row tile with padded rows.
    B = 2
    x = jax.random.normal(k_x, (B, STATE_DIM), jnp.float32)

    out = jax.block_until_ready(critic_forward(x, padded_params))
    assert out.shape == (B, 1), out.shape

    ref_q = critic_reference_bf16(x, padded_params)   # same arithmetic as kernel
    assert jnp.allclose(out, ref_q, atol=1e-3, rtol=1e-3), (out, ref_q)

    ref_f = critic_reference_f32(x, unpadded_params)  # original f32 model
    assert jnp.allclose(out, ref_f, atol=5e-2, rtol=5e-2), (out, ref_f)

    # B=300: now a single 304-row tile (4 padded rows instead of 212).
    B2 = 300
    x2 = jax.random.normal(jax.random.PRNGKey(1), (B2, STATE_DIM), jnp.float32)
    out2 = jax.block_until_ready(critic_forward(x2, padded_params))
    ref2 = critic_reference_bf16(x2, padded_params)
    assert out2.shape == (B2, 1), out2.shape
    assert jnp.allclose(out2, ref2, atol=1e-3, rtol=1e-3)

    # Larger batch: exercises the multi-tile 'parallel' grid with
    # VMEM-resident weights (B=2500 -> 3 tiles of 848 rows).
    B3 = 2500
    x3 = jax.random.normal(jax.random.PRNGKey(2), (B3, STATE_DIM), jnp.float32)
    out3 = jax.block_until_ready(critic_forward(x3, padded_params))
    ref3 = critic_reference_bf16(x3, padded_params)
    assert out3.shape == (B3, 1), out3.shape
    assert jnp.allclose(out3, ref3, atol=1e-3, rtol=1e-3)

    print("KERNEL_OK")
</pallas_src>

<mosaic_0001>
module attributes {stable_mosaic.version = 11 : i64} {
  func.func @_critic_kernel(%arg0: i32, %arg1: memref<16x32xbf16, #tpu.memory_space<vmem>>, %arg2: memref<32x1024xbf16, #tpu.memory_space<vmem>>, %arg3: memref<1x1024xf32, #tpu.memory_space<vmem>>, %arg4: memref<1024x1024xbf16, #tpu.memory_space<vmem>>, %arg5: memref<1x1024xf32, #tpu.memory_space<vmem>>, %arg6: memref<1x1024xbf16, #tpu.memory_space<vmem>>, %arg7: memref<1x1xf32, #tpu.memory_space<vmem>>, %arg8: memref<16x1xf32, #tpu.memory_space<vmem>>) attributes {dimension_semantics = [#tpu.dimension_semantics<arbitrary>], iteration_bounds = array<i64: 1>, scalar_prefetch = 0 : i64, scratch_operands = 0 : i64, tpu.core_type = #tpu.core_type<tc>, window_params = [{transform_indices = @transform_0, window_bounds = array<i64: 16, 32>}, {pipeline_mode = #tpu.pipeline_mode<synchronous>, transform_indices = @transform_1, window_bounds = array<i64: 32, 1024>}, {pipeline_mode = #tpu.pipeline_mode<synchronous>, transform_indices = @transform_2, window_bounds = array<i64: 1, 1024>}, {pipeline_mode = #tpu.pipeline_mode<synchronous>, transform_indices = @transform_3, window_bounds = array<i64: 1024, 1024>}, {pipeline_mode = #tpu.pipeline_mode<synchronous>, transform_indices = @transform_4, window_bounds = array<i64: 1, 1024>}, {pipeline_mode = #tpu.pipeline_mode<synchronous>, transform_indices = @transform_5, window_bounds = array<i64: 1, 1024>}, {pipeline_mode = #tpu.pipeline_mode<synchronous>, transform_indices = @transform_6, window_bounds = array<i64: 1, 1>}, {transform_indices = @transform_7, window_bounds = array<i64: 16, 1>}]} {
    %c0 = arith.constant 0 : index
    %c0_0 = arith.constant 0 : index
    %0 = vector.load %arg1[%c0, %c0_0] : memref<16x32xbf16, #tpu.memory_space<vmem>>, vector<16x32xbf16>
    %c0_1 = arith.constant 0 : index
    %c0_2 = arith.constant 0 : index
    %1 = vector.load %arg2[%c0_1, %c0_2] : memref<32x1024xbf16, #tpu.memory_space<vmem>>, vector<32x1024xbf16>
    %cst = arith.constant dense<0.000000e+00> : vector<16x1024xf32>
    %2 = tpu.matmul %0, %1, %cst {dimension_numbers = #tpu.dot_dimension_numbers<[1], [0], [0], [1], [0, 0, 1, 1], [], []>} : vector<16x32xbf16>, vector<32x1024xbf16>, vector<16x1024xf32> -> vector<16x1024xf32>
    %c0_3 = arith.constant 0 : index
    %c0_4 = arith.constant 0 : index
    %3 = vector.load %arg3[%c0_3, %c0_4] : memref<1x1024xf32, #tpu.memory_space<vmem>>, vector<1x1024xf32>
    %4 = vector.broadcast %3 : vector<1x1024xf32> to vector<16x1024xf32>
    %5 = arith.addf %2, %4 : vector<16x1024xf32>
    %cst_5 = arith.constant 0.000000e+00 : f32
    %6 = vector.broadcast %cst_5 : f32 to vector<16x1024xf32>
    %7 = arith.maximumf %5, %6 : vector<16x1024xf32>
    %8 = arith.truncf %7 : vector<16x1024xf32> to vector<16x1024xbf16>
    %c0_6 = arith.constant 0 : index
    %c0_7 = arith.constant 0 : index
    %9 = vector.load %arg4[%c0_6, %c0_7] : memref<1024x1024xbf16, #tpu.memory_space<vmem>>, vector<1024x1024xbf16>
    %cst_8 = arith.constant dense<0.000000e+00> : vector<16x1024xf32>
    %10 = tpu.matmul %8, %9, %cst_8 {dimension_numbers = #tpu.dot_dimension_numbers<[1], [0], [0], [1], [0, 0, 1, 1], [], []>} : vector<16x1024xbf16>, vector<1024x1024xbf16>, vector<16x1024xf32> -> vector<16x1024xf32>
    %c0_9 = arith.constant 0 : index
    %c0_10 = arith.constant 0 : index
    %11 = vector.load %arg5[%c0_9, %c0_10] : memref<1x1024xf32, #tpu.memory_space<vmem>>, vector<1x1024xf32>
    %12 = vector.broadcast %11 : vector<1x1024xf32> to vector<16x1024xf32>
    %13 = arith.addf %10, %12 : vector<16x1024xf32>
    %cst_11 = arith.constant 0.000000e+00 : f32
    %14 = vector.broadcast %cst_11 : f32 to vector<16x1024xf32>
    %15 = arith.maximumf %13, %14 : vector<16x1024xf32>
    %c0_12 = arith.constant 0 : index
    %c0_13 = arith.constant 0 : index
    %16 = vector.load %arg6[%c0_12, %c0_13] : memref<1x1024xbf16, #tpu.memory_space<vmem>>, vector<1x1024xbf16>
    %17 = arith.extf %16 : vector<1x1024xbf16> to vector<1x1024xf32>
    %18 = vector.broadcast %17 : vector<1x1024xf32> to vector<16x1024xf32>
    %19 = arith.mulf %15, %18 : vector<16x1024xf32>
    %cst_14 = arith.constant dense<0.000000e+00> : vector<16xf32>
    %20 = vector.multi_reduction <add>, %19, %cst_14 [1] : vector<16x1024xf32> to vector<16xf32>
    %21 = vector.shape_cast %20 : vector<16xf32> to vector<16x1xf32>
    %c0_15 = arith.constant 0 : index
    %c0_16 = arith.constant 0 : index
    %22 = vector.load %arg7[%c0_15, %c0_16] : memref<1x1xf32, #tpu.memory_space<vmem>>, vector<1x1xf32>
    %23 = vector.broadcast %22 : vector<1x1xf32> to vector<16x1xf32>
    %24 = arith.addf %21, %23 : vector<16x1xf32>
    %c0_17 = arith.constant 0 : index
    %c0_18 = arith.constant 0 : index
    %25 = vector.load %arg8[%c0_17, %c0_18] : memref<16x1xf32, #tpu.memory_space<vmem>>, vector<16x1xf32>
    tpu.vector_store %arg8[%c0_17, %c0_18], %24 {strides = array<i32>} : memref<16x1xf32, #tpu.memory_space<vmem>>, vector<16x1xf32>,
    return
  }
  func.func @transform_0(%arg0: i32) -> (i32, i32) {
    %c0_i32 = arith.constant 0 : i32
    %c0_i32_0 = arith.constant 0 : i32
    return %arg0, %c0_i32 : i32, i32
  }
  func.func @transform_1(%arg0: i32) -> (i32, i32) {
    %c0_i32 = arith.constant 0 : i32
    %c0_i32_0 = arith.constant 0 : i32
    %c0_i32_1 = arith.constant 0 : i32
    return %c0_i32, %c0_i32_0 : i32, i32
  }
  func.func @transform_2(%arg0: i32) -> (i32, i32) {
    %c0_i32 = arith.constant 0 : i32
    %c0_i32_0 = arith.constant 0 : i32
    %c0_i32_1 = arith.constant 0 : i32
    return %c0_i32, %c0_i32_0 : i32, i32
  }
  func.func @transform_3(%arg0: i32) -> (i32, i32) {
    %c0_i32 = arith.constant 0 : i32
    %c0_i32_0 = arith.constant 0 : i32
    %c0_i32_1 = arith.constant 0 : i32
    return %c0_i32, %c0_i32_0 : i32, i32
  }
  func.func @transform_4(%arg0: i32) -> (i32, i32) {
    %c0_i32 = arith.constant 0 : i32
    %c0_i32_0 = arith.constant 0 : i32
    %c0_i32_1 = arith.constant 0 : i32
    return %c0_i32, %c0_i32_0 : i32, i32
  }
  func.func @transform_5(%arg0: i32) -> (i32, i32) {
    %c0_i32 = arith.constant 0 : i32
    %c0_i32_0 = arith.constant 0 : i32
    %c0_i32_1 = arith.constant 0 : i32
    return %c0_i32, %c0_i32_0 : i32, i32
  }
  func.func @transform_6(%arg0: i32) -> (i32, i32) {
    %c0_i32 = arith.constant 0 : i32
    %c0_i32_0 = arith.constant 0 : i32
    %c0_i32_1 = arith.constant 0 : i32
    return %c0_i32, %c0_i32_0 : i32, i32
  }
  func.func @transform_7(%arg0: i32) -> (i32, i32) {
    %c0_i32 = arith.constant 0 : i32
    %c0_i32_0 = arith.constant 0 : i32
    return %arg0, %c0_i32 : i32, i32
  }
}

module attributes {stable_mosaic.version = 11 : i64} {
  func.func @_critic_kernel(%arg0: i32, %arg1: memref<16x32xbf16, #tpu.memory_space<vmem>>, %arg2: memref<32x1024xbf16, #tpu.memory_space<vmem>>, %arg3: memref<1x1024xf32, #tpu.memory_space<vmem>>, %arg4: memref<1024x1024xbf16, #tpu.memory_space<vmem>>, %arg5: memref<1x1024xf32, #tpu.memory_space<vmem>>, %arg6: memref<1x1024xbf16, #tpu.memory_space<vmem>>, %arg7: memref<1x1xf32, #tpu.memory_space<vmem>>, %arg8: memref<16x1xf32, #tpu.memory_space<vmem>>) attributes {dimension_semantics = [#tpu.dimension_semantics<arbitrary>], iteration_bounds = array<i64: 1>, scalar_prefetch = 0 : i64, scratch_operands = 0 : i64, tpu.core_type = #tpu.core_type<tc>, window_params = [{transform_indices = @transform_0, window_bounds = array<i64: 16, 32>}, {pipeline_mode = #tpu.pipeline_mode<synchronous>, transform_indices = @transform_1, window_bounds = array<i64: 32, 1024>}, {pipeline_mode = #tpu.pipeline_mode<synchronous>, transform_indices = @transform_2, window_bounds = array<i64: 1, 1024>}, {pipeline_mode = #tpu.pipeline_mode<synchronous>, transform_indices = @transform_3, window_bounds = array<i64: 1024, 1024>}, {pipeline_mode = #tpu.pipeline_mode<synchronous>, transform_indices = @transform_4, window_bounds = array<i64: 1, 1024>}, {pipeline_mode = #tpu.pipeline_mode<synchronous>, transform_indices = @transform_5, window_bounds = array<i64: 1, 1024>}, {pipeline_mode = #tpu.pipeline_mode<synchronous>, transform_indices = @transform_6, window_bounds = array<i64: 1, 1>}, {transform_indices = @transform_7, window_bounds = array<i64: 16, 1>}]} {
    %c0 = arith.constant 0 : index
    %c0_0 = arith.constant 0 : index
    %0 = vector.load %arg1[%c0, %c0_0] : memref<16x32xbf16, #tpu.memory_space<vmem>>, vector<16x32xbf16>
    %c0_1 = arith.constant 0 : index
    %c0_2 = arith.constant 0 : index
    %1 = vector.load %arg2[%c0_1, %c0_2] : memref<32x1024xbf16, #tpu.memory_space<vmem>>, vector<32x1024xbf16>
    %cst = arith.constant dense<0.000000e+00> : vector<16x1024xf32>
    %2 = tpu.matmul %0, %1, %cst {dimension_numbers = #tpu.dot_dimension_numbers<[1], [0], [0], [1], [0, 0, 1, 1], [], []>} : vector<16x32xbf16>, vector<32x1024xbf16>, vector<16x1024xf32> -> vector<16x1024xf32>
    %c0_3 = arith.constant 0 : index
    %c0_4 = arith.constant 0 : index
    %3 = vector.load %arg3[%c0_3, %c0_4] : memref<1x1024xf32, #tpu.memory_space<vmem>>, vector<1x1024xf32>
    %4 = vector.broadcast %3 : vector<1x1024xf32> to vector<16x1024xf32>
    %5 = arith.addf %2, %4 : vector<16x1024xf32>
    %cst_5 = arith.constant 0.000000e+00 : f32
    %6 = vector.broadcast %cst_5 : f32 to vector<16x1024xf32>
    %7 = arith.maximumf %5, %6 : vector<16x1024xf32>
    %8 = arith.truncf %7 : vector<16x1024xf32> to vector<16x1024xbf16>
    %c0_6 = arith.constant 0 : index
    %c0_7 = arith.constant 0 : index
    %9 = vector.load %arg4[%c0_6, %c0_7] : memref<1024x1024xbf16, #tpu.memory_space<vmem>>, vector<1024x1024xbf16>
    %cst_8 = arith.constant dense<0.000000e+00> : vector<16x1024xf32>
    %10 = tpu.matmul %8, %9, %cst_8 {dimension_numbers = #tpu.dot_dimension_numbers<[1], [0], [0], [1], [0, 0, 1, 1], [], []>} : vector<16x1024xbf16>, vector<1024x1024xbf16>, vector<16x1024xf32> -> vector<16x1024xf32>
    %c0_9 = arith.constant 0 : index
    %c0_10 = arith.constant 0 : index
    %11 = vector.load %arg5[%c0_9, %c0_10] : memref<1x1024xf32, #tpu.memory_space<vmem>>, vector<1x1024xf32>
    %12 = vector.broadcast %11 : vector<1x1024xf32> to vector<16x1024xf32>
    %13 = arith.addf %10, %12 : vector<16x1024xf32>
    %cst_11 = arith.constant 0.000000e+00 : f32
    %14 = vector.broadcast %cst_11 : f32 to vector<16x1024xf32>
    %15 = arith.maximumf %13, %14 : vector<16x1024xf32>
    %c0_12 = arith.constant 0 : index
    %c0_13 = arith.constant 0 : index
    %16 = vector.load %arg6[%c0_12, %c0_13] : memref<1x1024xbf16, #tpu.memory_space<vmem>>, vector<1x1024xbf16>
    %17 = arith.extf %16 : vector<1x1024xbf16> to vector<1x1024xf32>
    %18 = vector.broadcast %17 : vector<1x1024xf32> to vector<16x1024xf32>
    %19 = arith.mulf %15, %18 : vector<16x1024xf32>
    %cst_14 = arith.constant dense<0.000000e+00> : vector<16xf32>
    %20 = vector.multi_reduction <add>, %19, %cst_14 [1] : vector<16x1024xf32> to vector<16xf32>
    %21 = vector.shape_cast %20 : vector<16xf32> to vector<16x1xf32>
    %c0_15 = arith.constant 0 : index
    %c0_16 = arith.constant 0 : index
    %22 = vector.load %arg7[%c0_15, %c0_16] : memref<1x1xf32, #tpu.memory_space<vmem>>, vector<1x1xf32>
    %23 = vector.broadcast %22 : vector<1x1xf32> to vector<16x1xf32>
    %24 = arith.addf %21, %23 : vector<16x1xf32>
    %c0_17 = arith.constant 0 : index
    %c0_18 = arith.constant 0 : index
    %25 = vector.load %arg8[%c0_17, %c0_18] : memref<16x1xf32, #tpu.memory_space<vmem>>, vector<16x1xf32>
    tpu.vector_store %arg8[%c0_17, %c0_18], %24 {strides = array<i32>} : memref<16x1xf32, #tpu.memory_space<vmem>>, vector<16x1xf32>,
    return
  }
  func.func @transform_0(%arg0: i32) -> (i32, i32) {
    %c0_i32 = arith.constant 0 : i32
    %c0_i32_0 = arith.constant 0 : i32
    return %arg0, %c0_i32 : i32, i32
  }
  func.func @transform_1(%arg0: i32) -> (i32, i32) {
    %c0_i32 = arith.constant 0 : i32
    %c0_i32_0 = arith.constant 0 : i32
    %c0_i32_1 = arith.constant 0 : i32
    return %c0_i32, %c0_i32_0 : i32, i32
  }
  func.func @transform_2(%arg0: i32) -> (i32, i32) {
    %c0_i32 = arith.constant 0 : i32
    %c0_i32_0 = arith.constant 0 : i32
    %c0_i32_1 = arith.constant 0 : i32
    return %c0_i32, %c0_i32_0 : i32, i32
  }
  func.func @transform_3(%arg0: i32) -> (i32, i32) {
    %c0_i32 = arith.constant 0 : i32
    %c0_i32_0 = arith.constant 0 : i32
    %c0_i32_1 = arith.constant 0 : i32
    return %c0_i32, %c0_i32_0 : i32, i32
  }
  func.func @transform_4(%arg0: i32) -> (i32, i32) {
    %c0_i32 = arith.constant 0 : i32
    %c0_i32_0 = arith.constant 0 : i32
    %c0_i32_1 = arith.constant 0 : i32
    return %c0_i32, %c0_i32_0 : i32, i32
  }
  func.func @transform_5(%arg0: i32) -> (i32, i32) {
    %c0_i32 = arith.constant 0 : i32
    %c0_i32_0 = arith.constant 0 : i32
    %c0_i32_1 = arith.constant 0 : i32
    return %c0_i32, %c0_i32_0 : i32, i32
  }
  func.func @transform_6(%arg0: i32) -> (i32, i32) {
    %c0_i32 = arith.constant 0 : i32
    %c0_i32_0 = arith.constant 0 : i32
    %c0_i32_1 = arith.constant 0 : i32
    return %c0_i32, %c0_i32_0 : i32, i32
  }
  func.func @transform_7(%arg0: i32) -> (i32, i32) {
    %c0_i32 = arith.constant 0 : i32
    %c0_i32_0 = arith.constant 0 : i32
    return %arg0, %c0_i32 : i32, i32
  }
}

</mosaic_0001>

<llo_original>
// kernel: tpu_custom_call.1
$region0: #{tpu_custom_call.1}
  #allocation0 [shape = 'u32[]', space=smem, size = 0x4, offset = 0x4, fixed_abs, tag = 'smem constant byte address 0x4 - core index']
  #allocation1 [shape = 'u32[144,128]{1,0:T(1,128)}', space=vmem, size = 0x12000, scoped, tag = 'internal scratch']
  #allocation2 [shape = 'f32[1,1]{1,0:T(1,128)S(1)}', space=vmem, size = 0x200, scoped, tag = 'scoped memory for tpu_custom_call.1']
  %s0 = inlined_call_operand.hbm [shape: bf16[16,32], index: 0, kind: input, shape index: {}]
  %s1 = inlined_call_operand.hbm [shape: bf16[32,1024], index: 1, kind: input, shape index: {}]
  %s2 = inlined_call_operand.hbm [shape: f32[1,1024], index: 2, kind: input, shape index: {}]
  %s3 = inlined_call_operand.hbm [shape: bf16[1024,1024], index: 3, kind: input, shape index: {}]
  %s4 = inlined_call_operand.hbm [shape: f32[1,1024], index: 4, kind: input, shape index: {}]
  %s5 = inlined_call_operand.hbm [shape: bf16[1,1024], index: 5, kind: input, shape index: {}]
  %s6 = inlined_call_operand.<no memory space> [shape: f32[1,1], index: 6, kind: input, shape index: {}]
  %s7 = inlined_call_operand.vmem [shape: f32[16,1], index: 7, kind: output, shape index: {}]
  %s8 = sld [smem:[#allocation0]]
  $region62: #{tpu_custom_call.1} parent=0
    _
  %s10 = ssub.s32 1, %s8
  %s11 = scalar_select 0, %s10, %s8
  %v12 = vstv %s6
  %13 = vst [vmem:[#allocation2] sm:$0x1] %v12
  $region1: #{tpu_custom_call.1} parent=0
    #allocation3 [shape = 'u8[4096]{0}', space=vmem, size = 0x1000, scoped, tag = 'input window, operand 0, single buffered']
    #allocation4 [shape = 's32[1]{0}', space=sflag, size = 0x4, scoped, tag = 'scoped memory for tpu_custom_call.1']
    #allocation5 [shape = 'u8[65536]{0}', space=vmem, size = 0x10000, scoped, tag = 'input window, operand 1, single buffered']
    #allocation6 [shape = 's32[1]{0}', space=sflag, size = 0x4, scoped, tag = 'scoped memory for tpu_custom_call.1']
    #allocation7 [shape = 'u8[4096]{0}', space=vmem, size = 0x1000, scoped, tag = 'input window, operand 2, single buffered']
    #allocation8 [shape = 'u8[2097152]{0}', space=vmem, size = 0x200000, scoped, tag = 'input window, operand 3, single buffered']
    #allocation9 [shape = 's32[1]{0}', space=sflag, size = 0x4, scoped, tag = 'scoped memory for tpu_custom_call.1']
    #allocation10 [shape = 'u8[4096]{0}', space=vmem, size = 0x1000, scoped, tag = 'input window, operand 4, single buffered']
    #allocation11 [shape = 'u8[4096]{0}', space=vmem, size = 0x1000, scoped, tag = 'input window, operand 5, single buffered']
    #allocation12 [shape = 's32[1]{0}', space=sflag, size = 0x4, scoped, tag = 'scoped memory for tpu_custom_call.1']
    %14 = vsyncpa [#allocation4], 0
    %15 = vsyncpa [#allocation6], 0
    %16 = vsyncpa [#allocation9], 0
    %17 = vsyncpa [#allocation12], 0
    // Predicated region
    $region2: #{tpu_custom_call.1} parent=1 // pred_check
      _
    $region3: #{tpu_custom_call.1} parent=1 // pred_check_branch
      %19 = sbr.rel (0) target = $region5
    $region4: #{tpu_custom_call.1} parent=1 // pred_region
      %s21 = ssub.s32 128, 128
      %22 = vsyncadd [#allocation4], %s21
      %s23 = sshll.u32 [#allocation3], 4
      %s24 = int_to_ptr.vmem [resolvable:$true] %s23
      %29 = dma.hbm_to_vmem [thread:$0]  %s0, 128, %s24, [#allocation4], 64, 64, 4
    $region5: #{tpu_custom_call.1} parent=1 // pred_fallthru
      _
    // Predicated region
    $region6: #{tpu_custom_call.1} parent=1 // pred_check
      _
    $region7: #{tpu_custom_call.1} parent=1 // pred_check_branch
      %31 = sbr.rel (0) target = $region9
    $region8: #{tpu_custom_call.1} parent=1 // pred_region
      %s33 = ssub.s32 2048, 2048
      %34 = vsyncadd [#allocation6], %s33
      %s35 = sshll.u32 [#allocation5], 4
      %s36 = int_to_ptr.vmem [resolvable:$true] %s35
      %41 = dma.hbm_to_vmem [thread:$0]  %s1, 2048, %s36, [#allocation6], 512, 512, 32
    $region9: #{tpu_custom_call.1} parent=1 // pred_fallthru
      _
    // Predicated region
    $region10: #{tpu_custom_call.1} parent=1 // pred_check
      _
    $region11: #{tpu_custom_call.1} parent=1 // pred_check_branch
      %43 = sbr.rel (0) target = $region13
    $region12: #{tpu_custom_call.1} parent=1 // pred_region
      %s45 = ssub.s32 128, 128
      %46 = vsyncadd [#allocation6], %s45
      %s48 = sshll.u32 [#allocation7], 4
      %s49 = int_to_ptr.vmem [resolvable:$true] %s48
      %51 = dma.hbm_to_vmem [thread:$0]  %s2, 128, %s49, [#allocation6]
    $region13: #{tpu_custom_call.1} parent=1 // pred_fallthru
      _
    // Predicated region
    $region14: #{tpu_custom_call.1} parent=1 // pred_check
      _
    $region15: #{tpu_custom_call.1} parent=1 // pred_check_branch
      %53 = sbr.rel (0) target = $region17
    $region16: #{tpu_custom_call.1} parent=1 // pred_region
      %s55 = ssub.s32 65536, 65536
      %56 = vsyncadd [#allocation9], %s55
      %s57 = sshll.u32 [#allocation8], 4
      %s58 = int_to_ptr.vmem [resolvable:$true] %s57
      %63 = dma.hbm_to_vmem [thread:$0]  %s3, 65536, %s58, [#allocation9], 512, 512, 32
    $region17: #{tpu_custom_call.1} parent=1 // pred_fallthru
      _
    // Predicated region
    $region18: #{tpu_custom_call.1} parent=1 // pred_check
      _
    $region19: #{tpu_custom_call.1} parent=1 // pred_check_branch
      %65 = sbr.rel (0) target = $region21
    $region20: #{tpu_custom_call.1} parent=1 // pred_region
      %s67 = ssub.s32 128, 128
      %68 = vsyncadd [#allocation9], %s67
      %s70 = sshll.u32 [#allocation10], 4
      %s71 = int_to_ptr.vmem [resolvable:$true] %s70
      %73 = dma.hbm_to_vmem [thread:$0]  %s4, 128, %s71, [#allocation9]
    $region21: #{tpu_custom_call.1} parent=1 // pred_fallthru
      _
    // Predicated region
    $region22: #{tpu_custom_call.1} parent=1 // pred_check
      _
    $region23: #{tpu_custom_call.1} parent=1 // pred_check_branch
      %75 = sbr.rel (0) target = $region25
    $region24: #{tpu_custom_call.1} parent=1 // pred_region
      %s77 = ssub.s32 128, 128
      %78 = vsyncadd [#allocation12], %s77
      %s80 = sshll.u32 [#allocation11], 4
      %s81 = int_to_ptr.vmem [resolvable:$true] %s80
      %83 = dma.hbm_to_vmem [thread:$0]  %s5, 128, %s81, [#allocation12]
    $region25: #{tpu_custom_call.1} parent=1 // pred_fallthru
      _
    // Predicated region
    $region26: #{tpu_custom_call.1} parent=1 // pred_check
      _
    $region27: #{tpu_custom_call.1} parent=1 // pred_check_branch
      %85 = sbr.rel (0) target = $region29
    $region28: #{tpu_custom_call.1} parent=1 // pred_region
      _
    $region29: #{tpu_custom_call.1} parent=1 // pred_fallthru
      _
    // Predicated region
    $region30: #{tpu_custom_call.1} parent=1 // pred_check
      _
    $region31: #{tpu_custom_call.1} parent=1 // pred_check_branch
      %87 = sbr.rel (0) target = $region33
    $region32: #{tpu_custom_call.1} parent=1 // pred_region
      %88 = dma.done [#allocation4], 128
    $region33: #{tpu_custom_call.1} parent=1 // pred_fallthru
      _
    // Predicated region
    $region34: #{tpu_custom_call.1} parent=1 // pred_check
      _
    $region35: #{tpu_custom_call.1} parent=1 // pred_check_branch
      %90 = sbr.rel (0) target = $region37
    $region36: #{tpu_custom_call.1} parent=1 // pred_region
      %91 = dma.done [#allocation6], 2048
    $region37: #{tpu_custom_call.1} parent=1 // pred_fallthru
      _
    // Predicated region
    $region38: #{tpu_custom_call.1} parent=1 // pred_check
      _
    $region39: #{tpu_custom_call.1} parent=1 // pred_check_branch
      %93 = sbr.rel (0) target = $region41
    $region40: #{tpu_custom_call.1} parent=1 // pred_region
      %94 = dma.done [#allocation6], 128
    $region41: #{tpu_custom_call.1} parent=1 // pred_fallthru
      _
    // Predicated region
    $region42: #{tpu_custom_call.1} parent=1 // pred_check
      _
    $region43: #{tpu_custom_call.1} parent=1 // pred_check_branch
      %96 = sbr.rel (0) target = $region45
    $region44: #{tpu_custom_call.1} parent=1 // pred_region
      %97 = dma.done [#allocation9], 65536
    $region45: #{tpu_custom_call.1} parent=1 // pred_fallthru
      _
    // Predicated region
    $region46: #{tpu_custom_call.1} parent=1 // pred_check
      _
    $region47: #{tpu_custom_call.1} parent=1 // pred_check_branch
      %99 = sbr.rel (0) target = $region49
    $region48: #{tpu_custom_call.1} parent=1 // pred_region
      %100 = dma.done [#allocation9], 128
    $region49: #{tpu_custom_call.1} parent=1 // pred_fallthru
      _
    // Predicated region
    $region50: #{tpu_custom_call.1} parent=1 // pred_check
      _
    $region51: #{tpu_custom_call.1} parent=1 // pred_check_branch
      %102 = sbr.rel (0) target = $region53
    $region52: #{tpu_custom_call.1} parent=1 // pred_region
      %103 = dma.done [#allocation12], 128
    $region53: #{tpu_custom_call.1} parent=1 // pred_fallthru
      _
    %v105 = vld [vmem:[#allocation3] sm:$0xf]
    %v106 = vld [vmem:[#allocation3 + $0x4] sm:$0xf]
    %v107 = vld [vmem:[#allocation5] sm:$0xff]
    %v108 = vld [vmem:[#allocation5 + $0x8] sm:$0xff]
    %v109 = vld [vmem:[#allocation5 + $0x10] sm:$0xff]
    %v110 = vld [vmem:[#allocation5 + $0x18] sm:$0xff]
    %v111 = vld [vmem:[#allocation5 + $0x20] sm:$0xff]
    %v112 = vld [vmem:[#allocation5 + $0x28] sm:$0xff]
    %v113 = vld [vmem:[#allocation5 + $0x30] sm:$0xff]
    %v114 = vld [vmem:[#allocation5 + $0x38] sm:$0xff]
    %v115 = vld [vmem:[#allocation5 + $0x40] sm:$0xff]
    %v116 = vld [vmem:[#allocation5 + $0x48] sm:$0xff]
    %v117 = vld [vmem:[#allocation5 + $0x50] sm:$0xff]
    %v118 = vld [vmem:[#allocation5 + $0x58] sm:$0xff]
    %v119 = vld [vmem:[#allocation5 + $0x60] sm:$0xff]
    %v120 = vld [vmem:[#allocation5 + $0x68] sm:$0xff]
    %v121 = vld [vmem:[#allocation5 + $0x70] sm:$0xff]
    %v122 = vld [vmem:[#allocation5 + $0x78] sm:$0xff]
    %v123 = vld [vmem:[#allocation7] sm:$0xff]
    %v125 = vlaneseq
    %v126 = vshrl.u32 %v125, 7
    %v127 = vsub.s32 0, %v126
    %v128 = vrot.slane %v123, %v127
    %v129 = vlaneseq
    %v130 = vshrl.u32 %v129, 7
    %v131 = vsub.s32 1, %v130
    %v132 = vrot.slane %v123, %v131
    %v133 = vlaneseq
    %v134 = vshrl.u32 %v133, 7
    %v135 = vsub.s32 2, %v134
    %v136 = vrot.slane %v123, %v135
    %v137 = vlaneseq
    %v138 = vshrl.u32 %v137, 7
    %v139 = vsub.s32 3, %v138
    %v140 = vrot.slane %v123, %v139
    %v141 = vlaneseq
    %v142 = vshrl.u32 %v141, 7
    %v143 = vsub.s32 4, %v142
    %v144 = vrot.slane %v123, %v143
    %v145 = vlaneseq
    %v146 = vshrl.u32 %v145, 7
    %v147 = vsub.s32 5, %v146
    %v148 = vrot.slane %v123, %v147
    %v149 = vlaneseq
    %v150 = vshrl.u32 %v149, 7
    %v151 = vsub.s32 6, %v150
    %v152 = vrot.slane %v123, %v151
    %v153 = vlaneseq
    %v154 = vshrl.u32 %v153, 7
    %v155 = vsub.s32 7, %v154
    %v156 = vrot.slane %v123, %v155
    %v167 = vunpack.c.l.b16 %v105
    %v168 = vunpack.c.l.b16 %v106
    %v169 = vpack.c.b16 %v168, %v167
    %v186 = vunpack.c.l.b16 %v107
    %v187 = vunpack.c.h.b16 %v107
    %v188 = vunpack.c.l.b16 %v108
    %v189 = vunpack.c.h.b16 %v108
    %v190 = vunpack.c.l.b16 %v109
    %v191 = vunpack.c.h.b16 %v109
    %v192 = vunpack.c.l.b16 %v110
    %v193 = vunpack.c.h.b16 %v110
    %v194 = vunpack.c.l.b16 %v111
    %v195 = vunpack.c.h.b16 %v111
    %v196 = vunpack.c.l.b16 %v112
    %v197 = vunpack.c.h.b16 %v112
    %v198 = vunpack.c.l.b16 %v113
    %v199 = vunpack.c.h.b16 %v113
    %v200 = vunpack.c.l.b16 %v114
    %v201 = vunpack.c.h.b16 %v114
    %v202 = vunpack.c.l.b16 %v115
    %v203 = vunpack.c.h.b16 %v115
    %v204 = vunpack.c.l.b16 %v116
    %v205 = vunpack.c.h.b16 %v116
    %v206 = vunpack.c.l.b16 %v117
    %v207 = vunpack.c.h.b16 %v117
    %v208 = vunpack.c.l.b16 %v118
    %v209 = vunpack.c.h.b16 %v118
    %v210 = vunpack.c.l.b16 %v119
    %v211 = vunpack.c.h.b16 %v119
    %v212 = vunpack.c.l.b16 %v120
    %v213 = vunpack.c.h.b16 %v120
    %v214 = vunpack.c.l.b16 %v121
    %v215 = vunpack.c.h.b16 %v121
    %v216 = vunpack.c.l.b16 %v122
    %v217 = vunpack.c.h.b16 %v122
    %v218 = vpack.c.b16 %v194, %v186
    %v219 = vpack.c.b16 %v195, %v187
    %v220 = vpack.c.b16 %v196, %v188
    %v221 = vpack.c.b16 %v197, %v189
    %v222 = vpack.c.b16 %v198, %v190
    %v223 = vpack.c.b16 %v199, %v191
    %v224 = vpack.c.b16 %v200, %v192
    %v225 = vpack.c.b16 %v201, %v193
    %v226 = vpack.c.b16 %v210, %v202
    %v227 = vpack.c.b16 %v211, %v203
    %v228 = vpack.c.b16 %v212, %v204
    %v229 = vpack.c.b16 %v213, %v205
    %v230 = vpack.c.b16 %v214, %v206
    %v231 = vpack.c.b16 %v215, %v207
    %v232 = vpack.c.b16 %v216, %v208
    %v233 = vpack.c.b16 %v217, %v209
    %vm250 = vcmask 261120
    %v252 = vsel %vm250, %v169, 0
    %254 = vmatprep.subr.bf16.mxu0 %v219
    %255 = vmatpush1.bf16.msra.mxu0 %v218
    %256 = vmatprep.subr.bf16.mxu0 %v227
    %257 = vmatpush1.bf16.msra.mxu0 %v226
    %258 = vmatprep.subr.bf16.mxu0 0
    %259 = vmatpush1.bf16.msra.mxu0 0
    %260 = vmatprep.subr.bf16.mxu0 0
    %261 = vmatpush1.bf16.msra.mxu0 0
    %262 = vmatprep.subr.bf16.mxu0 0
    %263 = vmatpush1.bf16.msra.mxu0 0
    %264 = vmatprep.subr.bf16.mxu0 0
    %265 = vmatpush1.bf16.msra.mxu0 0
    %266 = vmatprep.subr.bf16.mxu0 0
    %267 = vmatpush1.bf16.msra.mxu0 0
    %268 = vmatprep.subr.bf16.mxu0 0
    %269 = vmatpush1.bf16.msra.mxu0 0
    %270 = vmatprep.subr.bf16.mxu0 0
    %271 = vmatpush1.bf16.msra.mxu0 0
    %272 = vmatprep.subr.bf16.mxu0 0
    %273 = vmatpush1.bf16.msra.mxu0 0
    %274 = vmatprep.subr.bf16.mxu0 0
    %275 = vmatpush1.bf16.msra.mxu0 0
    %276 = vmatprep.subr.bf16.mxu0 0
    %277 = vmatpush1.bf16.msra.mxu0 0
    %278 = vmatprep.subr.bf16.mxu0 0
    %279 = vmatpush1.bf16.msra.mxu0 0
    %280 = vmatprep.subr.bf16.mxu0 0
    %281 = vmatpush1.bf16.msra.mxu0 0
    %282 = vmatprep.subr.bf16.mxu0 0
    %283 = vmatpush1.bf16.msra.mxu0 0
    %284 = vmatprep.subr.bf16.mxu0 0
    %285 = vmatpush1.bf16.msra.mxu0 0
    %286 = vmatprep.mubr.bf16.mxu0 0
    %287 = vmatmul.mubr.bf16.gmra.mrb[0].mxu0 %v252
    %v288 = vpop.f32.mrb[0].mxu0
    %v289 = vadd.f32 %v128, %v288
    %v290 = vpop.f32.mrb[0].mxu0
    %v291 = vadd.f32 %v132, %v290
    %v292 = vpop.f32.mrb[0].mxu0
    %v293 = vadd.f32 %v128, %v292
    %v294 = vpop.f32.mrb[0].mxu0
    %v295 = vadd.f32 %v132, %v294
    %296 = vdwg.mxu0
    %297 = vmatprep.subr.bf16.mxu0 %v221
    %298 = vmatpush1.bf16.msra.mxu0 %v220
    %299 = vmatprep.subr.bf16.mxu0 %v229
    %300 = vmatpush1.bf16.msra.mxu0 %v228
    %301 = vmatprep.subr.bf16.mxu0 0
    %302 = vmatpush1.bf16.msra.mxu0 0
    %303 = vmatprep.subr.bf16.mxu0 0
    %304 = vmatpush1.bf16.msra.mxu0 0
    %305 = vmatprep.subr.bf16.mxu0 0
    %306 = vmatpush1.bf16.msra.mxu0 0
    %307 = vmatprep.subr.bf16.mxu0 0
    %308 = vmatpush1.bf16.msra.mxu0 0
    %309 = vmatprep.subr.bf16.mxu0 0
    %310 = vmatpush1.bf16.msra.mxu0 0
    %311 = vmatprep.subr.bf16.mxu0 0
    %312 = vmatpush1.bf16.msra.mxu0 0
    %313 = vmatprep.subr.bf16.mxu0 0
    %314 = vmatpush1.bf16.msra.mxu0 0
    %315 = vmatprep.subr.bf16.mxu0 0
    %316 = vmatpush1.bf16.msra.mxu0 0
    %317 = vmatprep.subr.bf16.mxu0 0
    %318 = vmatpush1.bf16.msra.mxu0 0
    %319 = vmatprep.subr.bf16.mxu0 0
    %320 = vmatpush1.bf16.msra.mxu0 0
    %321 = vmatprep.subr.bf16.mxu0 0
    %322 = vmatpush1.bf16.msra.mxu0 0
    %323 = vmatprep.subr.bf16.mxu0 0
    %324 = vmatpush1.bf16.msra.mxu0 0
    %325 = vmatprep.subr.bf16.mxu0 0
    %326 = vmatpush1.bf16.msra.mxu0 0
    %327 = vmatprep.subr.bf16.mxu0 0
    %328 = vmatpush1.bf16.msra.mxu0 0
    %329 = vmatprep.mubr.bf16.mxu0 0
    %330 = vmatmul.mubr.bf16.gmra.mrb[0].mxu0 %v252
    %v331 = vpop.f32.mrb[0].mxu0
    %v332 = vadd.f32 %v136, %v331
    %v333 = vpop.f32.mrb[0].mxu0
    %v334 = vadd.f32 %v140, %v333
    %v335 = vpop.f32.mrb[0].mxu0
    %v336 = vadd.f32 %v136, %v335
    %v337 = vpop.f32.mrb[0].mxu0
    %v338 = vadd.f32 %v140, %v337
    %339 = vdwg.mxu0
    %340 = vmatprep.subr.bf16.mxu0 %v223
    %341 = vmatpush1.bf16.msra.mxu0 %v222
    %342 = vmatprep.subr.bf16.mxu0 %v231
    %343 = vmatpush1.bf16.msra.mxu0 %v230
    %344 = vmatprep.subr.bf16.mxu0 0
    %345 = vmatpush1.bf16.msra.mxu0 0
    %346 = vmatprep.subr.bf16.mxu0 0
    %347 = vmatpush1.bf16.msra.mxu0 0
    %348 = vmatprep.subr.bf16.mxu0 0
    %349 = vmatpush1.bf16.msra.mxu0 0
    %350 = vmatprep.subr.bf16.mxu0 0
    %351 = vmatpush1.bf16.msra.mxu0 0
    %352 = vmatprep.subr.bf16.mxu0 0
    %353 = vmatpush1.bf16.msra.mxu0 0
    %354 = vmatprep.subr.bf16.mxu0 0
    %355 = vmatpush1.bf16.msra.mxu0 0
    %356 = vmatprep.subr.bf16.mxu0 0
    %357 = vmatpush1.bf16.msra.mxu0 0
    %358 = vmatprep.subr.bf16.mxu0 0
    %359 = vmatpush1.bf16.msra.mxu0 0
    %360 = vmatprep.subr.bf16.mxu0 0
    %361 = vmatpush1.bf16.msra.mxu0 0
    %362 = vmatprep.subr.bf16.mxu0 0
    %363 = vmatpush1.bf16.msra.mxu0 0
    %364 = vmatprep.subr.bf16.mxu0 0
    %365 = vmatpush1.bf16.msra.mxu0 0
    %366 = vmatprep.subr.bf16.mxu0 0
    %367 = vmatpush1.bf16.msra.mxu0 0
    %368 = vmatprep.subr.bf16.mxu0 0
    %369 = vmatpush1.bf16.msra.mxu0 0
    %370 = vmatprep.subr.bf16.mxu0 0
    %371 = vmatpush1.bf16.msra.mxu0 0
    %372 = vmatprep.mubr.bf16.mxu0 0
    %373 = vmatmul.mubr.bf16.gmra.mrb[0].mxu0 %v252
    %v374 = vpop.f32.mrb[0].mxu0
    %v375 = vadd.f32 %v144, %v374
    %v376 = vpop.f32.mrb[0].mxu0
    %v377 = vadd.f32 %v148, %v376
    %v378 = vpop.f32.mrb[0].mxu0
    %v379 = vadd.f32 %v144, %v378
    %v380 = vpop.f32.mrb[0].mxu0
    %v381 = vadd.f32 %v148, %v380
    %382 = vdwg.mxu0
    %383 = vmatprep.subr.bf16.mxu0 %v225
    %384 = vmatpush1.bf16.msra.mxu0 %v224
    %385 = vmatprep.subr.bf16.mxu0 %v233
    %386 = vmatpush1.bf16.msra.mxu0 %v232
    %387 = vmatprep.subr.bf16.mxu0 0
    %388 = vmatpush1.bf16.msra.mxu0 0
    %389 = vmatprep.subr.bf16.mxu0 0
    %390 = vmatpush1.bf16.msra.mxu0 0
    %391 = vmatprep.subr.bf16.mxu0 0
    %392 = vmatpush1.bf16.msra.mxu0 0
    %393 = vmatprep.subr.bf16.mxu0 0
    %394 = vmatpush1.bf16.msra.mxu0 0
    %395 = vmatprep.subr.bf16.mxu0 0
    %396 = vmatpush1.bf16.msra.mxu0 0
    %397 = vmatprep.subr.bf16.mxu0 0
    %398 = vmatpush1.bf16.msra.mxu0 0
    %399 = vmatprep.subr.bf16.mxu0 0
    %400 = vmatpush1.bf16.msra.mxu0 0
    %401 = vmatprep.subr.bf16.mxu0 0
    %402 = vmatpush1.bf16.msra.mxu0 0
    %403 = vmatprep.subr.bf16.mxu0 0
    %404 = vmatpush1.bf16.msra.mxu0 0
    %405 = vmatprep.subr.bf16.mxu0 0
    %406 = vmatpush1.bf16.msra.mxu0 0
    %407 = vmatprep.subr.bf16.mxu0 0
    %408 = vmatpush1.bf16.msra.mxu0 0
    %409 = vmatprep.subr.bf16.mxu0 0
    %410 = vmatpush1.bf16.msra.mxu0 0
    %411 = vmatprep.subr.bf16.mxu0 0
    %412 = vmatpush1.bf16.msra.mxu0 0
    %413 = vmatprep.subr.bf16.mxu0 0
    %414 = vmatpush1.bf16.msra.mxu0 0
    %415 = vmatprep.mubr.bf16.mxu0 0
    %416 = vmatmul.mubr.bf16.gmra.mrb[0].mxu0 %v252
    %v417 = vpop.f32.mrb[0].mxu0
    %v418 = vadd.f32 %v152, %v417
    %v419 = vpop.f32.mrb[0].mxu0
    %v420 = vadd.f32 %v156, %v419
    %v421 = vpop.f32.mrb[0].mxu0
    %v422 = vadd.f32 %v152, %v421
    %v423 = vpop.f32.mrb[0].mxu0
    %v424 = vadd.f32 %v156, %v423
    %425 = vdwg.mxu0
    %v426 = vmax.f32 %v289, 0.0
    %v427 = vmax.f32 %v291, 0.0
    %v428 = vmax.f32 %v332, 0.0
    %v429 = vmax.f32 %v334, 0.0
    %v430 = vmax.f32 %v375, 0.0
    %v431 = vmax.f32 %v377, 0.0
    %v432 = vmax.f32 %v418, 0.0
    %v433 = vmax.f32 %v420, 0.0
    %v434 = vmax.f32 %v293, 0.0
    %v435 = vmax.f32 %v295, 0.0
    %v436 = vmax.f32 %v336, 0.0
    %v437 = vmax.f32 %v338, 0.0
    %v438 = vmax.f32 %v379, 0.0
    %v439 = vmax.f32 %v381, 0.0
    %v440 = vmax.f32 %v422, 0.0
    %v441 = vmax.f32 %v424, 0.0
    %v442 = vpack.c.bf16 %v434, %v426
    %v443 = vpack.c.bf16 %v435, %v427
    %v444 = vpack.c.bf16 %v436, %v428
    %v445 = vpack.c.bf16 %v437, %v429
    %v446 = vpack.c.bf16 %v438, %v430
    %v447 = vpack.c.bf16 %v439, %v431
    %v448 = vpack.c.bf16 %v440, %v432
    %v449 = vpack.c.bf16 %v441, %v433
    %v450 = vld [vmem:[#allocation8] sm:$0xff]
    %v451 = vld [vmem:[#allocation8 + $0x8] sm:$0xff]
    %v452 = vld [vmem:[#allocation8 + $0x10] sm:$0xff]
    %v453 = vld [vmem:[#allocation8 + $0x18] sm:$0xff]
    %v454 = vld [vmem:[#allocation8 + $0x20] sm:$0xff]
    %v455 = vld [vmem:[#allocation8 + $0x28] sm:$0xff]
    %v456 = vld [vmem:[#allocation8 + $0x30] sm:$0xff]
    %v457 = vld [vmem:[#allocation8 + $0x38] sm:$0xff]
    %v458 = vld [vmem:[#allocation8 + $0x40] sm:$0xff]
    %v459 = vld [vmem:[#allocation8 + $0x48] sm:$0xff]
    %v460 = vld [vmem:[#allocation8 + $0x50] sm:$0xff]
    %v461 = vld [vmem:[#allocation8 + $0x58] sm:$0xff]
    %v462 = vld [vmem:[#allocation8 + $0x60] sm:$0xff]
    %v463 = vld [vmem:[#allocation8 + $0x68] sm:$0xff]
    %v464 = vld [vmem:[#allocation8 + $0x70] sm:$0xff]
    %v465 = vld [vmem:[#allocation8 + $0x78] sm:$0xff]
    %v466 = vld [vmem:[#allocation8 + $0x80] sm:$0xff]
    %v467 = vld [vmem:[#allocation8 + $0x88] sm:$0xff]
    %v468 = vld [vmem:[#allocation8 + $0x90] sm:$0xff]
    %v469 = vld [vmem:[#allocation8 + $0x98] sm:$0xff]
    %v470 = vld [vmem:[#allocation8 + $0xa0] sm:$0xff]
    %v471 = vld [vmem:[#allocation8 + $0xa8] sm:$0xff]
    %v472 = vld [vmem:[#allocation8 + $0xb0] sm:$0xff]
    %v473 = vld [vmem:[#allocation8 + $0xb8] sm:$0xff]
    %v474 = vld [vmem:[#allocation8 + $0xc0] sm:$0xff]
    %v475 = vld [vmem:[#allocation8 + $0xc8] sm:$0xff]
    %v476 = vld [vmem:[#allocation8 + $0xd0] sm:$0xff]
    %v477 = vld [vmem:[#allocation8 + $0xd8] sm:$0xff]
    %v478 = vld [vmem:[#allocation8 + $0xe0] sm:$0xff]
    %v479 = vld [vmem:[#allocation8 + $0xe8] sm:$0xff]
    %v480 = vld [vmem:[#allocation8 + $0xf0] sm:$0xff]
    %v481 = vld [vmem:[#allocation8 + $0xf8] sm:$0xff]
    %v482 = vld [vmem:[#allocation8 + $0x100] sm:$0xff]
    %v483 = vld [vmem:[#allocation8 + $0x108] sm:$0xff]
    %v484 = vld [vmem:[#allocation8 + $0x110] sm:$0xff]
    %v485 = vld [vmem:[#allocation8 + $0x118] sm:$0xff]
    %v486 = vld [vmem:[#allocation8 + $0x120] sm:$0xff]
    %v487 = vld [vmem:[#allocation8 + $0x128] sm:$0xff]
    %v488 = vld [vmem:[#allocation8 + $0x130] sm:$0xff]
    %v489 = vld [vmem:[#allocation8 + $0x138] sm:$0xff]
    %v490 = vld [vmem:[#allocation8 + $0x140] sm:$0xff]
    %v491 = vld [vmem:[#allocation8 + $0x148] sm:$0xff]
    %v492 = vld [vmem:[#allocation8 + $0x150] sm:$0xff]
    %v493 = vld [vmem:[#allocation8 + $0x158] sm:$0xff]
    %v494 = vld [vmem:[#allocation8 + $0x160] sm:$0xff]
    %v495 = vld [vmem:[#allocation8 + $0x168] sm:$0xff]
    %v496 = vld [vmem:[#allocation8 + $0x170] sm:$0xff]
    %v497 = vld [vmem:[#allocation8 + $0x178] sm:$0xff]
    %v498 = vld [vmem:[#allocation8 + $0x180] sm:$0xff]
    %v499 = vld [vmem:[#allocation8 + $0x188] sm:$0xff]
    %v500 = vld [vmem:[#allocation8 + $0x190] sm:$0xff]
    %v501 = vld [vmem:[#allocation8 + $0x198] sm:$0xff]
    %v502 = vld [vmem:[#allocation8 + $0x1a0] sm:$0xff]
    %v503 = vld [vmem:[#allocation8 + $0x1a8] sm:$0xff]
    %v504 = vld [vmem:[#allocation8 + $0x1b0] sm:$0xff]
    %v505 = vld [vmem:[#allocation8 + $0x1b8] sm:$0xff]
    %v506 = vld [vmem:[#allocation8 + $0x1c0] sm:$0xff]
    %v507 = vld [vmem:[#allocation8 + $0x1c8] sm:$0xff]
    %v508 = vld [vmem:[#allocation8 + $0x1d0] sm:$0xff]
    %v509 = vld [vmem:[#allocation8 + $0x1d8] sm:$0xff]
    %v510 = vld [vmem:[#allocation8 + $0x1e0] sm:$0xff]
    %v511 = vld [vmem:[#allocation8 + $0x1e8] sm:$0xff]
    %v512 = vld [vmem:[#allocation8 + $0x1f0] sm:$0xff]
    %v513 = vld [vmem:[#allocation8 + $0x1f8] sm:$0xff]
    %v514 = vld [vmem:[#allocation8 + $0x200] sm:$0xff]
    %v515 = vld [vmem:[#allocation8 + $0x208] sm:$0xff]
    %v516 = vld [vmem:[#allocation8 + $0x210] sm:$0xff]
    %v517 = vld [vmem:[#allocation8 + $0x218] sm:$0xff]
    %v518 = vld [vmem:[#allocation8 + $0x220] sm:$0xff]
    %v519 = vld [vmem:[#allocation8 + $0x228] sm:$0xff]
    %v520 = vld [vmem:[#allocation8 + $0x230] sm:$0xff]
    %v521 = vld [vmem:[#allocation8 + $0x238] sm:$0xff]
    %v522 = vld [vmem:[#allocation8 + $0x240] sm:$0xff]
    %v523 = vld [vmem:[#allocation8 + $0x248] sm:$0xff]
    %v524 = vld [vmem:[#allocation8 + $0x250] sm:$0xff]
    %v525 = vld [vmem:[#allocation8 + $0x258] sm:$0xff]
    %v526 = vld [vmem:[#allocation8 + $0x260] sm:$0xff]
    %v527 = vld [vmem:[#allocation8 + $0x268] sm:$0xff]
    %v528 = vld [vmem:[#allocation8 + $0x270] sm:$0xff]
    %v529 = vld [vmem:[#allocation8 + $0x278] sm:$0xff]
    %v530 = vld [vmem:[#allocation8 + $0x280] sm:$0xff]
    %v531 = vld [vmem:[#allocation8 + $0x288] sm:$0xff]
    %v532 = vld [vmem:[#allocation8 + $0x290] sm:$0xff]
    %v533 = vld [vmem:[#allocation8 + $0x298] sm:$0xff]
    %v534 = vld [vmem:[#allocation8 + $0x2a0] sm:$0xff]
    %v535 = vld [vmem:[#allocation8 + $0x2a8] sm:$0xff]
    %v536 = vld [vmem:[#allocation8 + $0x2b0] sm:$0xff]
    %v537 = vld [vmem:[#allocation8 + $0x2b8] sm:$0xff]
    %v538 = vld [vmem:[#allocation8 + $0x2c0] sm:$0xff]
    %v539 = vld [vmem:[#allocation8 + $0x2c8] sm:$0xff]
    %v540 = vld [vmem:[#allocation8 + $0x2d0] sm:$0xff]
    %v541 = vld [vmem:[#allocation8 + $0x2d8] sm:$0xff]
    %v542 = vld [vmem:[#allocation8 + $0x2e0] sm:$0xff]
    %v543 = vld [vmem:[#allocation8 + $0x2e8] sm:$0xff]
    %v544 = vld [vmem:[#allocation8 + $0x2f0] sm:$0xff]
    %v545 = vld [vmem:[#allocation8 + $0x2f8] sm:$0xff]
    %v546 = vld [vmem:[#allocation8 + $0x300] sm:$0xff]
    %v547 = vld [vmem:[#allocation8 + $0x308] sm:$0xff]
    %v548 = vld [vmem:[#allocation8 + $0x310] sm:$0xff]
    %v549 = vld [vmem:[#allocation8 + $0x318] sm:$0xff]
    %v550 = vld [vmem:[#allocation8 + $0x320] sm:$0xff]
    %v551 = vld [vmem:[#allocation8 + $0x328] sm:$0xff]
    %v552 = vld [vmem:[#allocation8 + $0x330] sm:$0xff]
    %v553 = vld [vmem:[#allocation8 + $0x338] sm:$0xff]
    %v554 = vld [vmem:[#allocation8 + $0x340] sm:$0xff]
    %v555 = vld [vmem:[#allocation8 + $0x348] sm:$0xff]
    %v556 = vld [vmem:[#allocation8 + $0x350] sm:$0xff]
    %v557 = vld [vmem:[#allocation8 + $0x358] sm:$0xff]
    %v558 = vld [vmem:[#allocation8 + $0x360] sm:$0xff]
    %v559 = vld [vmem:[#allocation8 + $0x368] sm:$0xff]
    %v560 = vld [vmem:[#allocation8 + $0x370] sm:$0xff]
    %v561 = vld [vmem:[#allocation8 + $0x378] sm:$0xff]
    %v562 = vld [vmem:[#allocation8 + $0x380] sm:$0xff]
    %v563 = vld [vmem:[#allocation8 + $0x388] sm:$0xff]
    %v564 = vld [vmem:[#allocation8 + $0x390] sm:$0xff]
    %v565 = vld [vmem:[#allocation8 + $0x398] sm:$0xff]
    %v566 = vld [vmem:[#allocation8 + $0x3a0] sm:$0xff]
    %v567 = vld [vmem:[#allocation8 + $0x3a8] sm:$0xff]
    %v568 = vld [vmem:[#allocation8 + $0x3b0] sm:$0xff]
    %v569 = vld [vmem:[#allocation8 + $0x3b8] sm:$0xff]
    %v570 = vld [vmem:[#allocation8 + $0x3c0] sm:$0xff]
    %v571 = vld [vmem:[#allocation8 + $0x3c8] sm:$0xff]
    %v572 = vld [vmem:[#allocation8 + $0x3d0] sm:$0xff]
    %v573 = vld [vmem:[#allocation8 + $0x3d8] sm:$0xff]
    %v574 = vld [vmem:[#allocation8 + $0x3e0] sm:$0xff]
    %v575 = vld [vmem:[#allocation8 + $0x3e8] sm:$0xff]
    %v576 = vld [vmem:[#allocation8 + $0x3f0] sm:$0xff]
    %v577 = vld [vmem:[#allocation8 + $0x3f8] sm:$0xff]
    %v578 = vld [vmem:[#allocation8 + $0x400] sm:$0xff]
    %v579 = vld [vmem:[#allocation8 + $0x408] sm:$0xff]
    %v580 = vld [vmem:[#allocation8 + $0x410] sm:$0xff]
    %v581 = vld [vmem:[#allocation8 + $0x418] sm:$0xff]
    %v582 = vld [vmem:[#allocation8 + $0x420] sm:$0xff]
    %v583 = vld [vmem:[#allocation8 + $0x428] sm:$0xff]
    %v584 = vld [vmem:[#allocation8 + $0x430] sm:$0xff]
    %v585 = vld [vmem:[#allocation8 + $0x438] sm:$0xff]
    %v586 = vld [vmem:[#allocation8 + $0x440] sm:$0xff]
    %v587 = vld [vmem:[#allocation8 + $0x448] sm:$0xff]
    %v588 = vld [vmem:[#allocation8 + $0x450] sm:$0xff]
    %v589 = vld [vmem:[#allocation8 + $0x458] sm:$0xff]
    %v590 = vld [vmem:[#allocation8 + $0x460] sm:$0xff]
    %v591 = vld [vmem:[#allocation8 + $0x468] sm:$0xff]
    %v592 = vld [vmem:[#allocation8 + $0x470] sm:$0xff]
    %v593 = vld [vmem:[#allocation8 + $0x478] sm:$0xff]
    %v594 = vld [vmem:[#allocation8 + $0x480] sm:$0xff]
    %v595 = vld [vmem:[#allocation8 + $0x488] sm:$0xff]
    %v596 = vld [vmem:[#allocation8 + $0x490] sm:$0xff]
    %v597 = vld [vmem:[#allocation8 + $0x498] sm:$0xff]
    %v598 = vld [vmem:[#allocation8 + $0x4a0] sm:$0xff]
    %v599 = vld [vmem:[#allocation8 + $0x4a8] sm:$0xff]
    %v600 = vld [vmem:[#allocation8 + $0x4b0] sm:$0xff]
    %v601 = vld [vmem:[#allocation8 + $0x4b8] sm:$0xff]
    %v602 = vld [vmem:[#allocation8 + $0x4c0] sm:$0xff]
    %v603 = vld [vmem:[#allocation8 + $0x4c8] sm:$0xff]
    %v604 = vld [vmem:[#allocation8 + $0x4d0] sm:$0xff]
    %v605 = vld [vmem:[#allocation8 + $0x4d8] sm:$0xff]
    %v606 = vld [vmem:[#allocation8 + $0x4e0] sm:$0xff]
    %v607 = vld [vmem:[#allocation8 + $0x4e8] sm:$0xff]
    %v608 = vld [vmem:[#allocation8 + $0x4f0] sm:$0xff]
    %v609 = vld [vmem:[#allocation8 + $0x4f8] sm:$0xff]
    %v610 = vld [vmem:[#allocation8 + $0x500] sm:$0xff]
    %v611 = vld [vmem:[#allocation8 + $0x508] sm:$0xff]
    %v612 = vld [vmem:[#allocation8 + $0x510] sm:$0xff]
    %v613 = vld [vmem:[#allocation8 + $0x518] sm:$0xff]
    %v614 = vld [vmem:[#allocation8 + $0x520] sm:$0xff]
    %v615 = vld [vmem:[#allocation8 + $0x528] sm:$0xff]
    %v616 = vld [vmem:[#allocation8 + $0x530] sm:$0xff]
    %v617 = vld [vmem:[#allocation8 + $0x538] sm:$0xff]
    %v618 = vld [vmem:[#allocation8 + $0x540] sm:$0xff]
    %v619 = vld [vmem:[#allocation8 + $0x548] sm:$0xff]
    %v620 = vld [vmem:[#allocation8 + $0x550] sm:$0xff]
    %v621 = vld [vmem:[#allocation8 + $0x558] sm:$0xff]
    %v622 = vld [vmem:[#allocation8 + $0x560] sm:$0xff]
    %v623 = vld [vmem:[#allocation8 + $0x568] sm:$0xff]
    %v624 = vld [vmem:[#allocation8 + $0x570] sm:$0xff]
    %v625 = vld [vmem:[#allocation8 + $0x578] sm:$0xff]
    %v626 = vld [vmem:[#allocation8 + $0x580] sm:$0xff]
    %v627 = vld [vmem:[#allocation8 + $0x588] sm:$0xff]
    %v628 = vld [vmem:[#allocation8 + $0x590] sm:$0xff]
    %v629 = vld [vmem:[#allocation8 + $0x598] sm:$0xff]
    %v630 = vld [vmem:[#allocation8 + $0x5a0] sm:$0xff]
    %v631 = vld [vmem:[#allocation8 + $0x5a8] sm:$0xff]
    %v632 = vld [vmem:[#allocation8 + $0x5b0] sm:$0xff]
    %v633 = vld [vmem:[#allocation8 + $0x5b8] sm:$0xff]
    %v634 = vld [vmem:[#allocation8 + $0x5c0] sm:$0xff]
    %v635 = vld [vmem:[#allocation8 + $0x5c8] sm:$0xff]
    %v636 = vld [vmem:[#allocation8 + $0x5d0] sm:$0xff]
    %v637 = vld [vmem:[#allocation8 + $0x5d8] sm:$0xff]
    %v638 = vld [vmem:[#allocation8 + $0x5e0] sm:$0xff]
    %v639 = vld [vmem:[#allocation8 + $0x5e8] sm:$0xff]
    %v640 = vld [vmem:[#allocation8 + $0x5f0] sm:$0xff]
    %v641 = vld [vmem:[#allocation8 + $0x5f8] sm:$0xff]
    %v642 = vld [vmem:[#allocation8 + $0x600] sm:$0xff]
    %v643 = vld [vmem:[#allocation8 + $0x608] sm:$0xff]
    %v644 = vld [vmem:[#allocation8 + $0x610] sm:$0xff]
    %v645 = vld [vmem:[#allocation8 + $0x618] sm:$0xff]
    %v646 = vld [vmem:[#allocation8 + $0x620] sm:$0xff]
    %v647 = vld [vmem:[#allocation8 + $0x628] sm:$0xff]
    %v648 = vld [vmem:[#allocation8 + $0x630] sm:$0xff]
    %v649 = vld [vmem:[#allocation8 + $0x638] sm:$0xff]
    %v650 = vld [vmem:[#allocation8 + $0x640] sm:$0xff]
    %v651 = vld [vmem:[#allocation8 + $0x648] sm:$0xff]
    %v652 = vld [vmem:[#allocation8 + $0x650] sm:$0xff]
    %v653 = vld [vmem:[#allocation8 + $0x658] sm:$0xff]
    %v654 = vld [vmem:[#allocation8 + $0x660] sm:$0xff]
    %v655 = vld [vmem:[#allocation8 + $0x668] sm:$0xff]
    %v656 = vld [vmem:[#allocation8 + $0x670] sm:$0xff]
    %v657 = vld [vmem:[#allocation8 + $0x678] sm:$0xff]
    %v658 = vld [vmem:[#allocation8 + $0x680] sm:$0xff]
    %v659 = vld [vmem:[#allocation8 + $0x688] sm:$0xff]
    %v660 = vld [vmem:[#allocation8 + $0x690] sm:$0xff]
    %v661 = vld [vmem:[#allocation8 + $0x698] sm:$0xff]
    %v662 = vld [vmem:[#allocation8 + $0x6a0] sm:$0xff]
    %v663 = vld [vmem:[#allocation8 + $0x6a8] sm:$0xff]
    %v664 = vld [vmem:[#allocation8 + $0x6b0] sm:$0xff]
    %v665 = vld [vmem:[#allocation8 + $0x6b8] sm:$0xff]
    %v666 = vld [vmem:[#allocation8 + $0x6c0] sm:$0xff]
    %v667 = vld [vmem:[#allocation8 + $0x6c8] sm:$0xff]
    %v668 = vld [vmem:[#allocation8 + $0x6d0] sm:$0xff]
    %v669 = vld [vmem:[#allocation8 + $0x6d8] sm:$0xff]
    %v670 = vld [vmem:[#allocation8 + $0x6e0] sm:$0xff]
    %v671 = vld [vmem:[#allocation8 + $0x6e8] sm:$0xff]
    %v672 = vld [vmem:[#allocation8 + $0x6f0] sm:$0xff]
    %v673 = vld [vmem:[#allocation8 + $0x6f8] sm:$0xff]
    %v674 = vld [vmem:[#allocation8 + $0x700] sm:$0xff]
    %v675 = vld [vmem:[#allocation8 + $0x708] sm:$0xff]
    %v676 = vld [vmem:[#allocation8 + $0x710] sm:$0xff]
    %v677 = vld [vmem:[#allocation8 + $0x718] sm:$0xff]
    %v678 = vld [vmem:[#allocation8 + $0x720] sm:$0xff]
    %v679 = vld [vmem:[#allocation8 + $0x728] sm:$0xff]
    %v680 = vld [vmem:[#allocation8 + $0x730] sm:$0xff]
    %v681 = vld [vmem:[#allocation8 + $0x738] sm:$0xff]
    %v682 = vld [vmem:[#allocation8 + $0x740] sm:$0xff]
    %v683 = vld [vmem:[#allocation8 + $0x748] sm:$0xff]
    %v684 = vld [vmem:[#allocation8 + $0x750] sm:$0xff]
    %v685 = vld [vmem:[#allocation8 + $0x758] sm:$0xff]
    %v686 = vld [vmem:[#allocation8 + $0x760] sm:$0xff]
    %v687 = vld [vmem:[#allocation8 + $0x768] sm:$0xff]
    %v688 = vld [vmem:[#allocation8 + $0x770] sm:$0xff]
    %v689 = vld [vmem:[#allocation8 + $0x778] sm:$0xff]
    %v690 = vld [vmem:[#allocation8 + $0x780] sm:$0xff]
    %v691 = vld [vmem:[#allocation8 + $0x788] sm:$0xff]
    %v692 = vld [vmem:[#allocation8 + $0x790] sm:$0xff]
    %v693 = vld [vmem:[#allocation8 + $0x798] sm:$0xff]
    %v694 = vld [vmem:[#allocation8 + $0x7a0] sm:$0xff]
    %v695 = vld [vmem:[#allocation8 + $0x7a8] sm:$0xff]
    %v696 = vld [vmem:[#allocation8 + $0x7b0] sm:$0xff]
    %v697 = vld [vmem:[#allocation8 + $0x7b8] sm:$0xff]
    %v698 = vld [vmem:[#allocation8 + $0x7c0] sm:$0xff]
    %v699 = vld [vmem:[#allocation8 + $0x7c8] sm:$0xff]
    %v700 = vld [vmem:[#allocation8 + $0x7d0] sm:$0xff]
    %v701 = vld [vmem:[#allocation8 + $0x7d8] sm:$0xff]
    %v702 = vld [vmem:[#allocation8 + $0x7e0] sm:$0xff]
    %v703 = vld [vmem:[#allocation8 + $0x7e8] sm:$0xff]
    %v704 = vld [vmem:[#allocation8 + $0x7f0] sm:$0xff]
    %v705 = vld [vmem:[#allocation8 + $0x7f8] sm:$0xff]
    %v706 = vld [vmem:[#allocation8 + $0x800] sm:$0xff]
    %v707 = vld [vmem:[#allocation8 + $0x808] sm:$0xff]
    %v708 = vld [vmem:[#allocation8 + $0x810] sm:$0xff]
    %v709 = vld [vmem:[#allocation8 + $0x818] sm:$0xff]
    %v710 = vld [vmem:[#allocation8 + $0x820] sm:$0xff]
    %v711 = vld [vmem:[#allocation8 + $0x828] sm:$0xff]
    %v712 = vld [vmem:[#allocation8 + $0x830] sm:$0xff]
    %v713 = vld [vmem:[#allocation8 + $0x838] sm:$0xff]
    %v714 = vld [vmem:[#allocation8 + $0x840] sm:$0xff]
    %v715 = vld [vmem:[#allocation8 + $0x848] sm:$0xff]
    %v716 = vld [vmem:[#allocation8 + $0x850] sm:$0xff]
    %v717 = vld [vmem:[#allocation8 + $0x858] sm:$0xff]
    %v718 = vld [vmem:[#allocation8 + $0x860] sm:$0xff]
    %v719 = vld [vmem:[#allocation8 + $0x868] sm:$0xff]
    %v720 = vld [vmem:[#allocation8 + $0x870] sm:$0xff]
    %v721 = vld [vmem:[#allocation8 + $0x878] sm:$0xff]
    %v722 = vld [vmem:[#allocation8 + $0x880] sm:$0xff]
    %v723 = vld [vmem:[#allocation8 + $0x888] sm:$0xff]
    %v724 = vld [vmem:[#allocation8 + $0x890] sm:$0xff]
    %v725 = vld [vmem:[#allocation8 + $0x898] sm:$0xff]
    %v726 = vld [vmem:[#allocation8 + $0x8a0] sm:$0xff]
    %v727 = vld [vmem:[#allocation8 + $0x8a8] sm:$0xff]
    %v728 = vld [vmem:[#allocation8 + $0x8b0] sm:$0xff]
    %v729 = vld [vmem:[#allocation8 + $0x8b8] sm:$0xff]
    %v730 = vld [vmem:[#allocation8 + $0x8c0] sm:$0xff]
    %v731 = vld [vmem:[#allocation8 + $0x8c8] sm:$0xff]
    %v732 = vld [vmem:[#allocation8 + $0x8d0] sm:$0xff]
    %v733 = vld [vmem:[#allocation8 + $0x8d8] sm:$0xff]
    %v734 = vld [vmem:[#allocation8 + $0x8e0] sm:$0xff]
    %v735 = vld [vmem:[#allocation8 + $0x8e8] sm:$0xff]
    %v736 = vld [vmem:[#allocation8 + $0x8f0] sm:$0xff]
    %v737 = vld [vmem:[#allocation8 + $0x8f8] sm:$0xff]
    %v738 = vld [vmem:[#allocation8 + $0x900] sm:$0xff]
    %v739 = vld [vmem:[#allocation8 + $0x908] sm:$0xff]
    %v740 = vld [vmem:[#allocation8 + $0x910] sm:$0xff]
    %v741 = vld [vmem:[#allocation8 + $0x918] sm:$0xff]
    %v742 = vld [vmem:[#allocation8 + $0x920] sm:$0xff]
    %v743 = vld [vmem:[#allocation8 + $0x928] sm:$0xff]
    %v744 = vld [vmem:[#allocation8 + $0x930] sm:$0xff]
    %v745 = vld [vmem:[#allocation8 + $0x938] sm:$0xff]
    %v746 = vld [vmem:[#allocation8 + $0x940] sm:$0xff]
    %v747 = vld [vmem:[#allocation8 + $0x948] sm:$0xff]
    %v748 = vld [vmem:[#allocation8 + $0x950] sm:$0xff]
    %v749 = vld [vmem:[#allocation8 + $0x958] sm:$0xff]
    %v750 = vld [vmem:[#allocation8 + $0x960] sm:$0xff]
    %v751 = vld [vmem:[#allocation8 + $0x968] sm:$0xff]
    %v752 = vld [vmem:[#allocation8 + $0x970] sm:$0xff]
    %v753 = vld [vmem:[#allocation8 + $0x978] sm:$0xff]
    %v754 = vld [vmem:[#allocation8 + $0x980] sm:$0xff]
    %v755 = vld [vmem:[#allocation8 + $0x988] sm:$0xff]
    %v756 = vld [vmem:[#allocation8 + $0x990] sm:$0xff]
    %v757 = vld [vmem:[#allocation8 + $0x998] sm:$0xff]
    %v758 = vld [vmem:[#allocation8 + $0x9a0] sm:$0xff]
    %v759 = vld [vmem:[#allocation8 + $0x9a8] sm:$0xff]
    %v760 = vld [vmem:[#allocation8 + $0x9b0] sm:$0xff]
    %v761 = vld [vmem:[#allocation8 + $0x9b8] sm:$0xff]
    %v762 = vld [vmem:[#allocation8 + $0x9c0] sm:$0xff]
    %v763 = vld [vmem:[#allocation8 + $0x9c8] sm:$0xff]
    %v764 = vld [vmem:[#allocation8 + $0x9d0] sm:$0xff]
    %v765 = vld [vmem:[#allocation8 + $0x9d8] sm:$0xff]
    %v766 = vld [vmem:[#allocation8 + $0x9e0] sm:$0xff]
    %v767 = vld [vmem:[#allocation8 + $0x9e8] sm:$0xff]
    %v768 = vld [vmem:[#allocation8 + $0x9f0] sm:$0xff]
    %v769 = vld [vmem:[#allocation8 + $0x9f8] sm:$0xff]
    %v770 = vld [vmem:[#allocation8 + $0xa00] sm:$0xff]
    %v771 = vld [vmem:[#allocation8 + $0xa08] sm:$0xff]
    %v772 = vld [vmem:[#allocation8 + $0xa10] sm:$0xff]
    %v773 = vld [vmem:[#allocation8 + $0xa18] sm:$0xff]
    %v774 = vld [vmem:[#allocation8 + $0xa20] sm:$0xff]
    %v775 = vld [vmem:[#allocation8 + $0xa28] sm:$0xff]
    %v776 = vld [vmem:[#allocation8 + $0xa30] sm:$0xff]
    %v777 = vld [vmem:[#allocation8 + $0xa38] sm:$0xff]
    %v778 = vld [vmem:[#allocation8 + $0xa40] sm:$0xff]
    %v779 = vld [vmem:[#allocation8 + $0xa48] sm:$0xff]
    %v780 = vld [vmem:[#allocation8 + $0xa50] sm:$0xff]
    %v781 = vld [vmem:[#allocation8 + $0xa58] sm:$0xff]
    %v782 = vld [vmem:[#allocation8 + $0xa60] sm:$0xff]
    %v783 = vld [vmem:[#allocation8 + $0xa68] sm:$0xff]
    %v784 = vld [vmem:[#allocation8 + $0xa70] sm:$0xff]
    %v785 = vld [vmem:[#allocation8 + $0xa78] sm:$0xff]
    %v786 = vld [vmem:[#allocation8 + $0xa80] sm:$0xff]
    %v787 = vld [vmem:[#allocation8 + $0xa88] sm:$0xff]
    %v788 = vld [vmem:[#allocation8 + $0xa90] sm:$0xff]
    %v789 = vld [vmem:[#allocation8 + $0xa98] sm:$0xff]
    %v790 = vld [vmem:[#allocation8 + $0xaa0] sm:$0xff]
    %v791 = vld [vmem:[#allocation8 + $0xaa8] sm:$0xff]
    %v792 = vld [vmem:[#allocation8 + $0xab0] sm:$0xff]
    %v793 = vld [vmem:[#allocation8 + $0xab8] sm:$0xff]
    %v794 = vld [vmem:[#allocation8 + $0xac0] sm:$0xff]
    %v795 = vld [vmem:[#allocation8 + $0xac8] sm:$0xff]
    %v796 = vld [vmem:[#allocation8 + $0xad0] sm:$0xff]
    %v797 = vld [vmem:[#allocation8 + $0xad8] sm:$0xff]
    %v798 = vld [vmem:[#allocation8 + $0xae0] sm:$0xff]
    %v799 = vld [vmem:[#allocation8 + $0xae8] sm:$0xff]
    %v800 = vld [vmem:[#allocation8 + $0xaf0] sm:$0xff]
    %v801 = vld [vmem:[#allocation8 + $0xaf8] sm:$0xff]
    %v802 = vld [vmem:[#allocation8 + $0xb00] sm:$0xff]
    %v803 = vld [vmem:[#allocation8 + $0xb08] sm:$0xff]
    %v804 = vld [vmem:[#allocation8 + $0xb10] sm:$0xff]
    %v805 = vld [vmem:[#allocation8 + $0xb18] sm:$0xff]
    %v806 = vld [vmem:[#allocation8 + $0xb20] sm:$0xff]
    %v807 = vld [vmem:[#allocation8 + $0xb28] sm:$0xff]
    %v808 = vld [vmem:[#allocation8 + $0xb30] sm:$0xff]
    %v809 = vld [vmem:[#allocation8 + $0xb38] sm:$0xff]
    %v810 = vld [vmem:[#allocation8 + $0xb40] sm:$0xff]
    %v811 = vld [vmem:[#allocation8 + $0xb48] sm:$0xff]
    %v812 = vld [vmem:[#allocation8 + $0xb50] sm:$0xff]
    %v813 = vld [vmem:[#allocation8 + $0xb58] sm:$0xff]
    %v814 = vld [vmem:[#allocation8 + $0xb60] sm:$0xff]
    %v815 = vld [vmem:[#allocation8 + $0xb68] sm:$0xff]
    %v816 = vld [vmem:[#allocation8 + $0xb70] sm:$0xff]
    %v817 = vld [vmem:[#allocation8 + $0xb78] sm:$0xff]
    %v818 = vld [vmem:[#allocation8 + $0xb80] sm:$0xff]
    %v819 = vld [vmem:[#allocation8 + $0xb88] sm:$0xff]
    %v820 = vld [vmem:[#allocation8 + $0xb90] sm:$0xff]
    %v821 = vld [vmem:[#allocation8 + $0xb98] sm:$0xff]
    %v822 = vld [vmem:[#allocation8 + $0xba0] sm:$0xff]
    %v823 = vld [vmem:[#allocation8 + $0xba8] sm:$0xff]
    %v824 = vld [vmem:[#allocation8 + $0xbb0] sm:$0xff]
    %v825 = vld [vmem:[#allocation8 + $0xbb8] sm:$0xff]
    %v826 = vld [vmem:[#allocation8 + $0xbc0] sm:$0xff]
    %v827 = vld [vmem:[#allocation8 + $0xbc8] sm:$0xff]
    %v828 = vld [vmem:[#allocation8 + $0xbd0] sm:$0xff]
    %v829 = vld [vmem:[#allocation8 + $0xbd8] sm:$0xff]
    %v830 = vld [vmem:[#allocation8 + $0xbe0] sm:$0xff]
    %v831 = vld [vmem:[#allocation8 + $0xbe8] sm:$0xff]
    %v832 = vld [vmem:[#allocation8 + $0xbf0] sm:$0xff]
    %v833 = vld [vmem:[#allocation8 + $0xbf8] sm:$0xff]
    %v834 = vld [vmem:[#allocation8 + $0xc00] sm:$0xff]
    %v835 = vld [vmem:[#allocation8 + $0xc08] sm:$0xff]
    %v836 = vld [vmem:[#allocation8 + $0xc10] sm:$0xff]
    %v837 = vld [vmem:[#allocation8 + $0xc18] sm:$0xff]
    %v838 = vld [vmem:[#allocation8 + $0xc20] sm:$0xff]
    %v839 = vld [vmem:[#allocation8 + $0xc28] sm:$0xff]
    %v840 = vld [vmem:[#allocation8 + $0xc30] sm:$0xff]
    %v841 = vld [vmem:[#allocation8 + $0xc38] sm:$0xff]
    %v842 = vld [vmem:[#allocation8 + $0xc40] sm:$0xff]
    %v843 = vld [vmem:[#allocation8 + $0xc48] sm:$0xff]
    %v844 = vld [vmem:[#allocation8 + $0xc50] sm:$0xff]
    %v845 = vld [vmem:[#allocation8 + $0xc58] sm:$0xff]
    %v846 = vld [vmem:[#allocation8 + $0xc60] sm:$0xff]
    %v847 = vld [vmem:[#allocation8 + $0xc68] sm:$0xff]
    %v848 = vld [vmem:[#allocation8 + $0xc70] sm:$0xff]
    %v849 = vld [vmem:[#allocation8 + $0xc78] sm:$0xff]
    %v850 = vld [vmem:[#allocation8 + $0xc80] sm:$0xff]
    %v851 = vld [vmem:[#allocation8 + $0xc88] sm:$0xff]
    %v852 = vld [vmem:[#allocation8 + $0xc90] sm:$0xff]
    %v853 = vld [vmem:[#allocation8 + $0xc98] sm:$0xff]
    %v854 = vld [vmem:[#allocation8 + $0xca0] sm:$0xff]
    %v855 = vld [vmem:[#allocation8 + $0xca8] sm:$0xff]
    %v856 = vld [vmem:[#allocation8 + $0xcb0] sm:$0xff]
    %v857 = vld [vmem:[#allocation8 + $0xcb8] sm:$0xff]
    %v858 = vld [vmem:[#allocation8 + $0xcc0] sm:$0xff]
    %v859 = vld [vmem:[#allocation8 + $0xcc8] sm:$0xff]
    %v860 = vld [vmem:[#allocation8 + $0xcd0] sm:$0xff]
    %v861 = vld [vmem:[#allocation8 + $0xcd8] sm:$0xff]
    %v862 = vld [vmem:[#allocation8 + $0xce0] sm:$0xff]
    %v863 = vld [vmem:[#allocation8 + $0xce8] sm:$0xff]
    %v864 = vld [vmem:[#allocation8 + $0xcf0] sm:$0xff]
    %v865 = vld [vmem:[#allocation8 + $0xcf8] sm:$0xff]
    %v866 = vld [vmem:[#allocation8 + $0xd00] sm:$0xff]
    %v867 = vld [vmem:[#allocation8 + $0xd08] sm:$0xff]
    %v868 = vld [vmem:[#allocation8 + $0xd10] sm:$0xff]
    %v869 = vld [vmem:[#allocation8 + $0xd18] sm:$0xff]
    %v870 = vld [vmem:[#allocation8 + $0xd20] sm:$0xff]
    %v871 = vld [vmem:[#allocation8 + $0xd28] sm:$0xff]
    %v872 = vld [vmem:[#allocation8 + $0xd30] sm:$0xff]
    %v873 = vld [vmem:[#allocation8 + $0xd38] sm:$0xff]
    %v874 = vld [vmem:[#allocation8 + $0xd40] sm:$0xff]
    %v875 = vld [vmem:[#allocation8 + $0xd48] sm:$0xff]
    %v876 = vld [vmem:[#allocation8 + $0xd50] sm:$0xff]
    %v877 = vld [vmem:[#allocation8 + $0xd58] sm:$0xff]
    %v878 = vld [vmem:[#allocation8 + $0xd60] sm:$0xff]
    %v879 = vld [vmem:[#allocation8 + $0xd68] sm:$0xff]
    %v880 = vld [vmem:[#allocation8 + $0xd70] sm:$0xff]
    %v881 = vld [vmem:[#allocation8 + $0xd78] sm:$0xff]
    %v882 = vld [vmem:[#allocation8 + $0xd80] sm:$0xff]
    %v883 = vld [vmem:[#allocation8 + $0xd88] sm:$0xff]
    %v884 = vld [vmem:[#allocation8 + $0xd90] sm:$0xff]
    %v885 = vld [vmem:[#allocation8 + $0xd98] sm:$0xff]
    %v886 = vld [vmem:[#allocation8 + $0xda0] sm:$0xff]
    %v887 = vld [vmem:[#allocation8 + $0xda8] sm:$0xff]
    %v888 = vld [vmem:[#allocation8 + $0xdb0] sm:$0xff]
    %v889 = vld [vmem:[#allocation8 + $0xdb8] sm:$0xff]
    %v890 = vld [vmem:[#allocation8 + $0xdc0] sm:$0xff]
    %v891 = vld [vmem:[#allocation8 + $0xdc8] sm:$0xff]
    %v892 = vld [vmem:[#allocation8 + $0xdd0] sm:$0xff]
    %v893 = vld [vmem:[#allocation8 + $0xdd8] sm:$0xff]
    %v894 = vld [vmem:[#allocation8 + $0xde0] sm:$0xff]
    %v895 = vld [vmem:[#allocation8 + $0xde8] sm:$0xff]
    %v896 = vld [vmem:[#allocation8 + $0xdf0] sm:$0xff]
    %v897 = vld [vmem:[#allocation8 + $0xdf8] sm:$0xff]
    %v898 = vld [vmem:[#allocation8 + $0xe00] sm:$0xff]
    %v899 = vld [vmem:[#allocation8 + $0xe08] sm:$0xff]
    %v900 = vld [vmem:[#allocation8 + $0xe10] sm:$0xff]
    %v901 = vld [vmem:[#allocation8 + $0xe18] sm:$0xff]
    %v902 = vld [vmem:[#allocation8 + $0xe20] sm:$0xff]
    %v903 = vld [vmem:[#allocation8 + $0xe28] sm:$0xff]
    %v904 = vld [vmem:[#allocation8 + $0xe30] sm:$0xff]
    %v905 = vld [vmem:[#allocation8 + $0xe38] sm:$0xff]
    %v906 = vld [vmem:[#allocation8 + $0xe40] sm:$0xff]
    %v907 = vld [vmem:[#allocation8 + $0xe48] sm:$0xff]
    %v908 = vld [vmem:[#allocation8 + $0xe50] sm:$0xff]
    %v909 = vld [vmem:[#allocation8 + $0xe58] sm:$0xff]
    %v910 = vld [vmem:[#allocation8 + $0xe60] sm:$0xff]
    %v911 = vld [vmem:[#allocation8 + $0xe68] sm:$0xff]
    %v912 = vld [vmem:[#allocation8 + $0xe70] sm:$0xff]
    %v913 = vld [vmem:[#allocation8 + $0xe78] sm:$0xff]
    %v914 = vld [vmem:[#allocation8 + $0xe80] sm:$0xff]
    %v915 = vld [vmem:[#allocation8 + $0xe88] sm:$0xff]
    %v916 = vld [vmem:[#allocation8 + $0xe90] sm:$0xff]
    %v917 = vld [vmem:[#allocation8 + $0xe98] sm:$0xff]
    %v918 = vld [vmem:[#allocation8 + $0xea0] sm:$0xff]
    %v919 = vld [vmem:[#allocation8 + $0xea8] sm:$0xff]
    %v920 = vld [vmem:[#allocation8 + $0xeb0] sm:$0xff]
    %v921 = vld [vmem:[#allocation8 + $0xeb8] sm:$0xff]
    %v922 = vld [vmem:[#allocation8 + $0xec0] sm:$0xff]
    %v923 = vld [vmem:[#allocation8 + $0xec8] sm:$0xff]
    %v924 = vld [vmem:[#allocation8 + $0xed0] sm:$0xff]
    %v925 = vld [vmem:[#allocation8 + $0xed8] sm:$0xff]
    %v926 = vld [vmem:[#allocation8 + $0xee0] sm:$0xff]
    %v927 = vld [vmem:[#allocation8 + $0xee8] sm:$0xff]
    %v928 = vld [vmem:[#allocation8 + $0xef0] sm:$0xff]
    %v929 = vld [vmem:[#allocation8 + $0xef8] sm:$0xff]
    %v930 = vld [vmem:[#allocation8 + $0xf00] sm:$0xff]
    %v931 = vld [vmem:[#allocation8 + $0xf08] sm:$0xff]
    %v932 = vld [vmem:[#allocation8 + $0xf10] sm:$0xff]
    %v933 = vld [vmem:[#allocation8 + $0xf18] sm:$0xff]
    %v934 = vld [vmem:[#allocation8 + $0xf20] sm:$0xff]
    %v935 = vld [vmem:[#allocation8 + $0xf28] sm:$0xff]
    %v936 = vld [vmem:[#allocation8 + $0xf30] sm:$0xff]
    %v937 = vld [vmem:[#allocation8 + $0xf38] sm:$0xff]
    %v938 = vld [vmem:[#allocation8 + $0xf40] sm:$0xff]
    %v939 = vld [vmem:[#allocation8 + $0xf48] sm:$0xff]
    %v940 = vld [vmem:[#allocation8 + $0xf50] sm:$0xff]
    %v941 = vld [vmem:[#allocation8 + $0xf58] sm:$0xff]
    %v942 = vld [vmem:[#allocation8 + $0xf60] sm:$0xff]
    %v943 = vld [vmem:[#allocation8 + $0xf68] sm:$0xff]
    %v944 = vld [vmem:[#allocation8 + $0xf70] sm:$0xff]
    %v945 = vld [vmem:[#allocation8 + $0xf78] sm:$0xff]
    %v946 = vld [vmem:[#allocation8 + $0xf80] sm:$0xff]
    %v947 = vld [vmem:[#allocation8 + $0xf88] sm:$0xff]
    %v948 = vld [vmem:[#allocation8 + $0xf90] sm:$0xff]
    %v949 = vld [vmem:[#allocation8 + $0xf98] sm:$0xff]
    %v950 = vld [vmem:[#allocation8 + $0xfa0] sm:$0xff]
    %v951 = vld [vmem:[#allocation8 + $0xfa8] sm:$0xff]
    %v952 = vld [vmem:[#allocation8 + $0xfb0] sm:$0xff]
    %v953 = vld [vmem:[#allocation8 + $0xfb8] sm:$0xff]
    %v954 = vld [vmem:[#allocation8 + $0xfc0] sm:$0xff]
    %v955 = vld [vmem:[#allocation8 + $0xfc8] sm:$0xff]
    %v956 = vld [vmem:[#allocation8 + $0xfd0] sm:$0xff]
    %v957 = vld [vmem:[#allocation8 + $0xfd8] sm:$0xff]
    %v958 = vld [vmem:[#allocation8 + $0xfe0] sm:$0xff]
    %v959 = vld [vmem:[#allocation8 + $0xfe8] sm:$0xff]
    %v960 = vld [vmem:[#allocation8 + $0xff0] sm:$0xff]
    %v961 = vld [vmem:[#allocation8 + $0xff8] sm:$0xff]
    %v962 = vld [vmem:[#allocation10] sm:$0xff]
    %v964 = vlaneseq
    %v965 = vshrl.u32 %v964, 7
    %v966 = vsub.s32 0, %v965
    %v967 = vrot.slane %v962, %v966
    %v968 = vlaneseq
    %v969 = vshrl.u32 %v968, 7
    %v970 = vsub.s32 1, %v969
    %v971 = vrot.slane %v962, %v970
    %v972 = vlaneseq
    %v973 = vshrl.u32 %v972, 7
    %v974 = vsub.s32 2, %v973
    %v975 = vrot.slane %v962, %v974
    %v976 = vlaneseq
    %v977 = vshrl.u32 %v976, 7
    %v978 = vsub.s32 3, %v977
    %v979 = vrot.slane %v962, %v978
    %v980 = vlaneseq
    %v981 = vshrl.u32 %v980, 7
    %v982 = vsub.s32 4, %v981
    %v983 = vrot.slane %v962, %v982
    %v984 = vlaneseq
    %v985 = vshrl.u32 %v984, 7
    %v986 = vsub.s32 5, %v985
    %v987 = vrot.slane %v962, %v986
    %v988 = vlaneseq
    %v989 = vshrl.u32 %v988, 7
    %v990 = vsub.s32 6, %v989
    %v991 = vrot.slane %v962, %v990
    %v992 = vlaneseq
    %v993 = vshrl.u32 %v992, 7
    %v994 = vsub.s32 7, %v993
    %v995 = vrot.slane %v962, %v994
    %v1516 = vunpack.c.l.b16 %v450
    %v1517 = vunpack.c.h.b16 %v450
    %v1518 = vunpack.c.l.b16 %v451
    %v1519 = vunpack.c.h.b16 %v451
    %v1520 = vunpack.c.l.b16 %v452
    %v1521 = vunpack.c.h.b16 %v452
    %v1522 = vunpack.c.l.b16 %v453
    %v1523 = vunpack.c.h.b16 %v453
    %v1524 = vunpack.c.l.b16 %v454
    %v1525 = vunpack.c.h.b16 %v454
    %v1526 = vunpack.c.l.b16 %v455
    %v1527 = vunpack.c.h.b16 %v455
    %v1528 = vunpack.c.l.b16 %v456
    %v1529 = vunpack.c.h.b16 %v456
    %v1530 = vunpack.c.l.b16 %v457
    %v1531 = vunpack.c.h.b16 %v457
    %v1532 = vunpack.c.l.b16 %v458
    %v1533 = vunpack.c.h.b16 %v458
    %v1534 = vunpack.c.l.b16 %v459
    %v1535 = vunpack.c.h.b16 %v459
    %v1536 = vunpack.c.l.b16 %v460
    %v1537 = vunpack.c.h.b16 %v460
    %v1538 = vunpack.c.l.b16 %v461
    %v1539 = vunpack.c.h.b16 %v461
    %v1540 = vunpack.c.l.b16 %v462
    %v1541 = vunpack.c.h.b16 %v462
    %v1542 = vunpack.c.l.b16 %v463
    %v1543 = vunpack.c.h.b16 %v463
    %v1544 = vunpack.c.l.b16 %v464
    %v1545 = vunpack.c.h.b16 %v464
    %v1546 = vunpack.c.l.b16 %v465
    %v1547 = vunpack.c.h.b16 %v465
    %v1548 = vunpack.c.l.b16 %v466
    %v1549 = vunpack.c.h.b16 %v466
    %v1550 = vunpack.c.l.b16 %v467
    %v1551 = vunpack.c.h.b16 %v467
    %v1552 = vunpack.c.l.b16 %v468
    %v1553 = vunpack.c.h.b16 %v468
    %v1554 = vunpack.c.l.b16 %v469
    %v1555 = vunpack.c.h.b16 %v469
    %v1556 = vunpack.c.l.b16 %v470
    %v1557 = vunpack.c.h.b16 %v470
    %v1558 = vunpack.c.l.b16 %v471
    %v1559 = vunpack.c.h.b16 %v471
    %v1560 = vunpack.c.l.b16 %v472
    %v1561 = vunpack.c.h.b16 %v472
    %v1562 = vunpack.c.l.b16 %v473
    %v1563 = vunpack.c.h.b16 %v473
    %v1564 = vunpack.c.l.b16 %v474
    %v1565 = vunpack.c.h.b16 %v474
    %v1566 = vunpack.c.l.b16 %v475
    %v1567 = vunpack.c.h.b16 %v475
    %v1568 = vunpack.c.l.b16 %v476
    %v1569 = vunpack.c.h.b16 %v476
    %v1570 = vunpack.c.l.b16 %v477
    %v1571 = vunpack.c.h.b16 %v477
    %v1572 = vunpack.c.l.b16 %v478
    %v1573 = vunpack.c.h.b16 %v478
    %v1574 = vunpack.c.l.b16 %v479
    %v1575 = vunpack.c.h.b16 %v479
    %v1576 = vunpack.c.l.b16 %v480
    %v1577 = vunpack.c.h.b16 %v480
    %v1578 = vunpack.c.l.b16 %v481
    %v1579 = vunpack.c.h.b16 %v481
    %v1580 = vunpack.c.l.b16 %v482
    %v1581 = vunpack.c.h.b16 %v482
    %v1582 = vunpack.c.l.b16 %v483
    %v1583 = vunpack.c.h.b16 %v483
    %v1584 = vunpack.c.l.b16 %v484
    %v1585 = vunpack.c.h.b16 %v484
    %v1586 = vunpack.c.l.b16 %v485
    %v1587 = vunpack.c.h.b16 %v485
    %v1588 = vunpack.c.l.b16 %v486
    %v1589 = vunpack.c.h.b16 %v486
    %v1590 = vunpack.c.l.b16 %v487
    %v1591 = vunpack.c.h.b16 %v487
    %v1592 = vunpack.c.l.b16 %v488
    %v1593 = vunpack.c.h.b16 %v488
    %v1594 = vunpack.c.l.b16 %v489
    %v1595 = vunpack.c.h.b16 %v489
    %v1596 = vunpack.c.l.b16 %v490
    %v1597 = vunpack.c.h.b16 %v490
    %v1598 = vunpack.c.l.b16 %v491
    %v1599 = vunpack.c.h.b16 %v491
    %v1600 = vunpack.c.l.b16 %v492
    %v1601 = vunpack.c.h.b16 %v492
    %v1602 = vunpack.c.l.b16 %v493
    %v1603 = vunpack.c.h.b16 %v493
    %v1604 = vunpack.c.l.b16 %v494
    %v1605 = vunpack.c.h.b16 %v494
    %v1606 = vunpack.c.l.b16 %v495
    %v1607 = vunpack.c.h.b16 %v495
    %v1608 = vunpack.c.l.b16 %v496
    %v1609 = vunpack.c.h.b16 %v496
    %v1610 = vunpack.c.l.b16 %v497
    %v1611 = vunpack.c.h.b16 %v497
    %v1612 = vunpack.c.l.b16 %v498
    %v1613 = vunpack.c.h.b16 %v498
    %v1614 = vunpack.c.l.b16 %v499
    %v1615 = vunpack.c.h.b16 %v499
    %v1616 = vunpack.c.l.b16 %v500
    %v1617 = vunpack.c.h.b16 %v500
    %v1618 = vunpack.c.l.b16 %v501
    %v1619 = vunpack.c.h.b16 %v501
    %v1620 = vunpack.c.l.b16 %v502
    %v1621 = vunpack.c.h.b16 %v502
    %v1622 = vunpack.c.l.b16 %v503
    %v1623 = vunpack.c.h.b16 %v503
    %v1624 = vunpack.c.l.b16 %v504
    %v1625 = vunpack.c.h.b16 %v504
    %v1626 = vunpack.c.l.b16 %v505
    %v1627 = vunpack.c.h.b16 %v505
    %v1628 = vunpack.c.l.b16 %v506
    %v1629 = vunpack.c.h.b16 %v506
    %v1630 = vunpack.c.l.b16 %v507
    %v1631 = vunpack.c.h.b16 %v507
    %v1632 = vunpack.c.l.b16 %v508
    %v1633 = vunpack.c.h.b16 %v508
    %v1634 = vunpack.c.l.b16 %v509
    %v1635 = vunpack.c.h.b16 %v509
    %v1636 = vunpack.c.l.b16 %v510
    %v1637 = vunpack.c.h.b16 %v510
    %v1638 = vunpack.c.l.b16 %v511
    %v1639 = vunpack.c.h.b16 %v511
    %v1640 = vunpack.c.l.b16 %v512
    %v1641 = vunpack.c.h.b16 %v512
    %v1642 = vunpack.c.l.b16 %v513
    %v1643 = vunpack.c.h.b16 %v513
    %v1644 = vunpack.c.l.b16 %v514
    %v1645 = vunpack.c.h.b16 %v514
    %v1646 = vunpack.c.l.b16 %v515
    %v1647 = vunpack.c.h.b16 %v515
    %v1648 = vunpack.c.l.b16 %v516
    %v1649 = vunpack.c.h.b16 %v516
    %v1650 = vunpack.c.l.b16 %v517
    %v1651 = vunpack.c.h.b16 %v517
    %v1652 = vunpack.c.l.b16 %v518
    %v1653 = vunpack.c.h.b16 %v518
    %v1654 = vunpack.c.l.b16 %v519
    %v1655 = vunpack.c.h.b16 %v519
    %v1656 = vunpack.c.l.b16 %v520
    %v1657 = vunpack.c.h.b16 %v520
    %v1658 = vunpack.c.l.b16 %v521
    %v1659 = vunpack.c.h.b16 %v521
    %v1660 = vunpack.c.l.b16 %v522
    %v1661 = vunpack.c.h.b16 %v522
    %v1662 = vunpack.c.l.b16 %v523
    %v1663 = vunpack.c.h.b16 %v523
    %v1664 = vunpack.c.l.b16 %v524
    %v1665 = vunpack.c.h.b16 %v524
    %v1666 = vunpack.c.l.b16 %v525
    %v1667 = vunpack.c.h.b16 %v525
    %v1668 = vunpack.c.l.b16 %v526
    %v1669 = vunpack.c.h.b16 %v526
    %v1670 = vunpack.c.l.b16 %v527
    %v1671 = vunpack.c.h.b16 %v527
    %v1672 = vunpack.c.l.b16 %v528
    %v1673 = vunpack.c.h.b16 %v528
    %v1674 = vunpack.c.l.b16 %v529
    %v1675 = vunpack.c.h.b16 %v529
    %v1676 = vunpack.c.l.b16 %v530
    %v1677 = vunpack.c.h.b16 %v530
    %v1678 = vunpack.c.l.b16 %v531
    %v1679 = vunpack.c.h.b16 %v531
    %v1680 = vunpack.c.l.b16 %v532
    %v1681 = vunpack.c.h.b16 %v532
    %v1682 = vunpack.c.l.b16 %v533
    %v1683 = vunpack.c.h.b16 %v533
    %v1684 = vunpack.c.l.b16 %v534
    %v1685 = vunpack.c.h.b16 %v534
    %v1686 = vunpack.c.l.b16 %v535
    %v1687 = vunpack.c.h.b16 %v535
    %v1688 = vunpack.c.l.b16 %v536
    %v1689 = vunpack.c.h.b16 %v536
    %v1690 = vunpack.c.l.b16 %v537
    %v1691 = vunpack.c.h.b16 %v537
    %v1692 = vunpack.c.l.b16 %v538
    %v1693 = vunpack.c.h.b16 %v538
    %v1694 = vunpack.c.l.b16 %v539
    %v1695 = vunpack.c.h.b16 %v539
    %v1696 = vunpack.c.l.b16 %v540
    %v1697 = vunpack.c.h.b16 %v540
    %v1698 = vunpack.c.l.b16 %v541
    %v1699 = vunpack.c.h.b16 %v541
    %v1700 = vunpack.c.l.b16 %v542
    %v1701 = vunpack.c.h.b16 %v542
    %v1702 = vunpack.c.l.b16 %v543
    %v1703 = vunpack.c.h.b16 %v543
    %v1704 = vunpack.c.l.b16 %v544
    %v1705 = vunpack.c.h.b16 %v544
    %v1706 = vunpack.c.l.b16 %v545
    %v1707 = vunpack.c.h.b16 %v545
    %v1708 = vunpack.c.l.b16 %v546
    %v1709 = vunpack.c.h.b16 %v546
    %v1710 = vunpack.c.l.b16 %v547
    %v1711 = vunpack.c.h.b16 %v547
    %v1712 = vunpack.c.l.b16 %v548
    %v1713 = vunpack.c.h.b16 %v548
    %v1714 = vunpack.c.l.b16 %v549
    %v1715 = vunpack.c.h.b16 %v549
    %v1716 = vunpack.c.l.b16 %v550
    %v1717 = vunpack.c.h.b16 %v550
    %v1718 = vunpack.c.l.b16 %v551
    %v1719 = vunpack.c.h.b16 %v551
    %v1720 = vunpack.c.l.b16 %v552
    %v1721 = vunpack.c.h.b16 %v552
    %v1722 = vunpack.c.l.b16 %v553
    %v1723 = vunpack.c.h.b16 %v553
    %v1724 = vunpack.c.l.b16 %v554
    %v1725 = vunpack.c.h.b16 %v554
    %v1726 = vunpack.c.l.b16 %v555
    %v1727 = vunpack.c.h.b16 %v555
    %v1728 = vunpack.c.l.b16 %v556
    %v1729 = vunpack.c.h.b16 %v556
    %v1730 = vunpack.c.l.b16 %v557
    %v1731 = vunpack.c.h.b16 %v557
    %v1732 = vunpack.c.l.b16 %v558
    %v1733 = vunpack.c.h.b16 %v558
    %v1734 = vunpack.c.l.b16 %v559
    %v1735 = vunpack.c.h.b16 %v559
    %v1736 = vunpack.c.l.b16 %v560
    %v1737 = vunpack.c.h.b16 %v560
    %v1738 = vunpack.c.l.b16 %v561
    %v1739 = vunpack.c.h.b16 %v561
    %v1740 = vunpack.c.l.b16 %v562
    %v1741 = vunpack.c.h.b16 %v562
    %v1742 = vunpack.c.l.b16 %v563
    %v1743 = vunpack.c.h.b16 %v563
    %v1744 = vunpack.c.l.b16 %v564
    %v1745 = vunpack.c.h.b16 %v564
    %v1746 = vunpack.c.l.b16 %v565
    %v1747 = vunpack.c.h.b16 %v565
    %v1748 = vunpack.c.l.b16 %v566
    %v1749 = vunpack.c.h.b16 %v566
    %v1750 = vunpack.c.l.b16 %v567
    %v1751 = vunpack.c.h.b16 %v567
    %v1752 = vunpack.c.l.b16 %v568
    %v1753 = vunpack.c.h.b16 %v568
    %v1754 = vunpack.c.l.b16 %v569
    %v1755 = vunpack.c.h.b16 %v569
    %v1756 = vunpack.c.l.b16 %v570
    %v1757 = vunpack.c.h.b16 %v570
    %v1758 = vunpack.c.l.b16 %v571
    %v1759 = vunpack.c.h.b16 %v571
    %v1760 = vunpack.c.l.b16 %v572
    %v1761 = vunpack.c.h.b16 %v572
    %v1762 = vunpack.c.l.b16 %v573
    %v1763 = vunpack.c.h.b16 %v573
    %v1764 = vunpack.c.l.b16 %v574
    %v1765 = vunpack.c.h.b16 %v574
    %v1766 = vunpack.c.l.b16 %v575
    %v1767 = vunpack.c.h.b16 %v575
    %v1768 = vunpack.c.l.b16 %v576
    %v1769 = vunpack.c.h.b16 %v576
    %v1770 = vunpack.c.l.b16 %v577
    %v1771 = vunpack.c.h.b16 %v577
    %v1772 = vunpack.c.l.b16 %v578
    %v1773 = vunpack.c.h.b16 %v578
    %v1774 = vunpack.c.l.b16 %v579
    %v1775 = vunpack.c.h.b16 %v579
    %v1776 = vunpack.c.l.b16 %v580
    %v1777 = vunpack.c.h.b16 %v580
    %v1778 = vunpack.c.l.b16 %v581
    %v1779 = vunpack.c.h.b16 %v581
    %v1780 = vunpack.c.l.b16 %v582
    %v1781 = vunpack.c.h.b16 %v582
    %v1782 = vunpack.c.l.b16 %v583
    %v1783 = vunpack.c.h.b16 %v583
    %v1784 = vunpack.c.l.b16 %v584
    %v1785 = vunpack.c.h.b16 %v584
    %v1786 = vunpack.c.l.b16 %v585
    %v1787 = vunpack.c.h.b16 %v585
    %v1788 = vunpack.c.l.b16 %v586
    %v1789 = vunpack.c.h.b16 %v586
    %v1790 = vunpack.c.l.b16 %v587
    %v1791 = vunpack.c.h.b16 %v587
    %v1792 = vunpack.c.l.b16 %v588
    %v1793 = vunpack.c.h.b16 %v588
    %v1794 = vunpack.c.l.b16 %v589
    %v1795 = vunpack.c.h.b16 %v589
    %v1796 = vunpack.c.l.b16 %v590
    %v1797 = vunpack.c.h.b16 %v590
    %v1798 = vunpack.c.l.b16 %v591
    %v1799 = vunpack.c.h.b16 %v591
    %v1800 = vunpack.c.l.b16 %v592
    %v1801 = vunpack.c.h.b16 %v592
    %v1802 = vunpack.c.l.b16 %v593
    %v1803 = vunpack.c.h.b16 %v593
    %v1804 = vunpack.c.l.b16 %v594
    %v1805 = vunpack.c.h.b16 %v594
    %v1806 = vunpack.c.l.b16 %v595
    %v1807 = vunpack.c.h.b16 %v595
    %v1808 = vunpack.c.l.b16 %v596
    %v1809 = vunpack.c.h.b16 %v596
    %v1810 = vunpack.c.l.b16 %v597
    %v1811 = vunpack.c.h.b16 %v597
    %v1812 = vunpack.c.l.b16 %v598
    %v1813 = vunpack.c.h.b16 %v598
    %v1814 = vunpack.c.l.b16 %v599
    %v1815 = vunpack.c.h.b16 %v599
    %v1816 = vunpack.c.l.b16 %v600
    %v1817 = vunpack.c.h.b16 %v600
    %v1818 = vunpack.c.l.b16 %v601
    %v1819 = vunpack.c.h.b16 %v601
    %v1820 = vunpack.c.l.b16 %v602
    %v1821 = vunpack.c.h.b16 %v602
    %v1822 = vunpack.c.l.b16 %v603
    %v1823 = vunpack.c.h.b16 %v603
    %v1824 = vunpack.c.l.b16 %v604
    %v1825 = vunpack.c.h.b16 %v604
    %v1826 = vunpack.c.l.b16 %v605
    %v1827 = vunpack.c.h.b16 %v605
    %v1828 = vunpack.c.l.b16 %v606
    %v1829 = vunpack.c.h.b16 %v606
    %v1830 = vunpack.c.l.b16 %v607
    %v1831 = vunpack.c.h.b16 %v607
    %v1832 = vunpack.c.l.b16 %v608
    %v1833 = vunpack.c.h.b16 %v608
    %v1834 = vunpack.c.l.b16 %v609
    %v1835 = vunpack.c.h.b16 %v609
    %v1836 = vunpack.c.l.b16 %v610
    %v1837 = vunpack.c.h.b16 %v610
    %v1838 = vunpack.c.l.b16 %v611
    %v1839 = vunpack.c.h.b16 %v611
    %v1840 = vunpack.c.l.b16 %v612
    %v1841 = vunpack.c.h.b16 %v612
    %v1842 = vunpack.c.l.b16 %v613
    %v1843 = vunpack.c.h.b16 %v613
    %v1844 = vunpack.c.l.b16 %v614
    %v1845 = vunpack.c.h.b16 %v614
    %v1846 = vunpack.c.l.b16 %v615
    %v1847 = vunpack.c.h.b16 %v615
    %v1848 = vunpack.c.l.b16 %v616
    %v1849 = vunpack.c.h.b16 %v616
    %v1850 = vunpack.c.l.b16 %v617
    %v1851 = vunpack.c.h.b16 %v617
    %v1852 = vunpack.c.l.b16 %v618
    %v1853 = vunpack.c.h.b16 %v618
    %v1854 = vunpack.c.l.b16 %v619
    %v1855 = vunpack.c.h.b16 %v619
    %v1856 = vunpack.c.l.b16 %v620
    %v1857 = vunpack.c.h.b16 %v620
    %v1858 = vunpack.c.l.b16 %v621
    %v1859 = vunpack.c.h.b16 %v621
    %v1860 = vunpack.c.l.b16 %v622
    %v1861 = vunpack.c.h.b16 %v622
    %v1862 = vunpack.c.l.b16 %v623
    %v1863 = vunpack.c.h.b16 %v623
    %v1864 = vunpack.c.l.b16 %v624
    %v1865 = vunpack.c.h.b16 %v624
    %v1866 = vunpack.c.l.b16 %v625
    %v1867 = vunpack.c.h.b16 %v625
    %v1868 = vunpack.c.l.b16 %v626
    %v1869 = vunpack.c.h.b16 %v626
    %v1870 = vunpack.c.l.b16 %v627
    %v1871 = vunpack.c.h.b16 %v627
    %v1872 = vunpack.c.l.b16 %v628
    %v1873 = vunpack.c.h.b16 %v628
    %v1874 = vunpack.c.l.b16 %v629
    %v1875 = vunpack.c.h.b16 %v629
    %v1876 = vunpack.c.l.b16 %v630
    %v1877 = vunpack.c.h.b16 %v630
    %v1878 = vunpack.c.l.b16 %v631
    %v1879 = vunpack.c.h.b16 %v631
    %v1880 = vunpack.c.l.b16 %v632
    %v1881 = vunpack.c.h.b16 %v632
    %v1882 = vunpack.c.l.b16 %v633
    %v1883 = vunpack.c.h.b16 %v633
    %v1884 = vunpack.c.l.b16 %v634
    %v1885 = vunpack.c.h.b16 %v634
    %v1886 = vunpack.c.l.b16 %v635
    %v1887 = vunpack.c.h.b16 %v635
    %v1888 = vunpack.c.l.b16 %v636
    %v1889 = vunpack.c.h.b16 %v636
    %v1890 = vunpack.c.l.b16 %v637
    %v1891 = vunpack.c.h.b16 %v637
    %v1892 = vunpack.c.l.b16 %v638
    %v1893 = vunpack.c.h.b16 %v638
    %v1894 = vunpack.c.l.b16 %v639
    %v1895 = vunpack.c.h.b16 %v639
    %v1896 = vunpack.c.l.b16 %v640
    %v1897 = vunpack.c.h.b16 %v640
    %v1898 = vunpack.c.l.b16 %v641
    %v1899 = vunpack.c.h.b16 %v641
    %v1900 = vunpack.c.l.b16 %v642
    %v1901 = vunpack.c.h.b16 %v642
    %v1902 = vunpack.c.l.b16 %v643
    %v1903 = vunpack.c.h.b16 %v643
    %v1904 = vunpack.c.l.b16 %v644
    %v1905 = vunpack.c.h.b16 %v644
    %v1906 = vunpack.c.l.b16 %v645
    %v1907 = vunpack.c.h.b16 %v645
    %v1908 = vunpack.c.l.b16 %v646
    %v1909 = vunpack.c.h.b16 %v646
    %v1910 = vunpack.c.l.b16 %v647
    %v1911 = vunpack.c.h.b16 %v647
    %v1912 = vunpack.c.l.b16 %v648
    %v1913 = vunpack.c.h.b16 %v648
    %v1914 = vunpack.c.l.b16 %v649
    %v1915 = vunpack.c.h.b16 %v649
    %v1916 = vunpack.c.l.b16 %v650
    %v1917 = vunpack.c.h.b16 %v650
    %v1918 = vunpack.c.l.b16 %v651
    %v1919 = vunpack.c.h.b16 %v651
    %v1920 = vunpack.c.l.b16 %v652
    %v1921 = vunpack.c.h.b16 %v652
    %v1922 = vunpack.c.l.b16 %v653
    %v1923 = vunpack.c.h.b16 %v653
    %v1924 = vunpack.c.l.b16 %v654
    %v1925 = vunpack.c.h.b16 %v654
    %v1926 = vunpack.c.l.b16 %v655
    %v1927 = vunpack.c.h.b16 %v655
    %v1928 = vunpack.c.l.b16 %v656
    %v1929 = vunpack.c.h.b16 %v656
    %v1930 = vunpack.c.l.b16 %v657
    %v1931 = vunpack.c.h.b16 %v657
    %v1932 = vunpack.c.l.b16 %v658
    %v1933 = vunpack.c.h.b16 %v658
    %v1934 = vunpack.c.l.b16 %v659
    %v1935 = vunpack.c.h.b16 %v659
    %v1936 = vunpack.c.l.b16 %v660
    %v1937 = vunpack.c.h.b16 %v660
    %v1938 = vunpack.c.l.b16 %v661
    %v1939 = vunpack.c.h.b16 %v661
    %v1940 = vunpack.c.l.b16 %v662
    %v1941 = vunpack.c.h.b16 %v662
    %v1942 = vunpack.c.l.b16 %v663
    %v1943 = vunpack.c.h.b16 %v663
    %v1944 = vunpack.c.l.b16 %v664
    %v1945 = vunpack.c.h.b16 %v664
    %v1946 = vunpack.c.l.b16 %v665
    %v1947 = vunpack.c.h.b16 %v665
    %v1948 = vunpack.c.l.b16 %v666
    %v1949 = vunpack.c.h.b16 %v666
    %v1950 = vunpack.c.l.b16 %v667
    %v1951 = vunpack.c.h.b16 %v667
    %v1952 = vunpack.c.l.b16 %v668
    %v1953 = vunpack.c.h.b16 %v668
    %v1954 = vunpack.c.l.b16 %v669
    %v1955 = vunpack.c.h.b16 %v669
    %v1956 = vunpack.c.l.b16 %v670
    %v1957 = vunpack.c.h.b16 %v670
    %v1958 = vunpack.c.l.b16 %v671
    %v1959 = vunpack.c.h.b16 %v671
    %v1960 = vunpack.c.l.b16 %v672
    %v1961 = vunpack.c.h.b16 %v672
    %v1962 = vunpack.c.l.b16 %v673
    %v1963 = vunpack.c.h.b16 %v673
    %v1964 = vunpack.c.l.b16 %v674
    %v1965 = vunpack.c.h.b16 %v674
    %v1966 = vunpack.c.l.b16 %v675
    %v1967 = vunpack.c.h.b16 %v675
    %v1968 = vunpack.c.l.b16 %v676
    %v1969 = vunpack.c.h.b16 %v676
    %v1970 = vunpack.c.l.b16 %v677
    %v1971 = vunpack.c.h.b16 %v677
    %v1972 = vunpack.c.l.b16 %v678
    %v1973 = vunpack.c.h.b16 %v678
    %v1974 = vunpack.c.l.b16 %v679
    %v1975 = vunpack.c.h.b16 %v679
    %v1976 = vunpack.c.l.b16 %v680
    %v1977 = vunpack.c.h.b16 %v680
    %v1978 = vunpack.c.l.b16 %v681
    %v1979 = vunpack.c.h.b16 %v681
    %v1980 = vunpack.c.l.b16 %v682
    %v1981 = vunpack.c.h.b16 %v682
    %v1982 = vunpack.c.l.b16 %v683
    %v1983 = vunpack.c.h.b16 %v683
    %v1984 = vunpack.c.l.b16 %v684
    %v1985 = vunpack.c.h.b16 %v684
    %v1986 = vunpack.c.l.b16 %v685
    %v1987 = vunpack.c.h.b16 %v685
    %v1988 = vunpack.c.l.b16 %v686
    %v1989 = vunpack.c.h.b16 %v686
    %v1990 = vunpack.c.l.b16 %v687
    %v1991 = vunpack.c.h.b16 %v687
    %v1992 = vunpack.c.l.b16 %v688
    %v1993 = vunpack.c.h.b16 %v688
    %v1994 = vunpack.c.l.b16 %v689
    %v1995 = vunpack.c.h.b16 %v689
    %v1996 = vunpack.c.l.b16 %v690
    %v1997 = vunpack.c.h.b16 %v690
    %v1998 = vunpack.c.l.b16 %v691
    %v1999 = vunpack.c.h.b16 %v691
    %v2000 = vunpack.c.l.b16 %v692
    %v2001 = vunpack.c.h.b16 %v692
    %v2002 = vunpack.c.l.b16 %v693
    %v2003 = vunpack.c.h.b16 %v693
    %v2004 = vunpack.c.l.b16 %v694
    %v2005 = vunpack.c.h.b16 %v694
    %v2006 = vunpack.c.l.b16 %v695
    %v2007 = vunpack.c.h.b16 %v695
    %v2008 = vunpack.c.l.b16 %v696
    %v2009 = vunpack.c.h.b16 %v696
    %v2010 = vunpack.c.l.b16 %v697
    %v2011 = vunpack.c.h.b16 %v697
    %v2012 = vunpack.c.l.b16 %v698
    %v2013 = vunpack.c.h.b16 %v698
    %v2014 = vunpack.c.l.b16 %v699
    %v2015 = vunpack.c.h.b16 %v699
    %v2016 = vunpack.c.l.b16 %v700
    %v2017 = vunpack.c.h.b16 %v700
    %v2018 = vunpack.c.l.b16 %v701
    %v2019 = vunpack.c.h.b16 %v701
    %v2020 = vunpack.c.l.b16 %v702
    %v2021 = vunpack.c.h.b16 %v702
    %v2022 = vunpack.c.l.b16 %v703
    %v2023 = vunpack.c.h.b16 %v703
    %v2024 = vunpack.c.l.b16 %v704
    %v2025 = vunpack.c.h.b16 %v704
    %v2026 = vunpack.c.l.b16 %v705
    %v2027 = vunpack.c.h.b16 %v705
    %v2028 = vunpack.c.l.b16 %v706
    %v2029 = vunpack.c.h.b16 %v706
    %v2030 = vunpack.c.l.b16 %v707
    %v2031 = vunpack.c.h.b16 %v707
    %v2032 = vunpack.c.l.b16 %v708
    %v2033 = vunpack.c.h.b16 %v708
    %v2034 = vunpack.c.l.b16 %v709
    %v2035 = vunpack.c.h.b16 %v709
    %v2036 = vunpack.c.l.b16 %v710
    %v2037 = vunpack.c.h.b16 %v710
    %v2038 = vunpack.c.l.b16 %v711
    %v2039 = vunpack.c.h.b16 %v711
    %v2040 = vunpack.c.l.b16 %v712
    %v2041 = vunpack.c.h.b16 %v712
    %v2042 = vunpack.c.l.b16 %v713
    %v2043 = vunpack.c.h.b16 %v713
    %v2044 = vunpack.c.l.b16 %v714
    %v2045 = vunpack.c.h.b16 %v714
    %v2046 = vunpack.c.l.b16 %v715
    %v2047 = vunpack.c.h.b16 %v715
    %v2048 = vunpack.c.l.b16 %v716
    %v2049 = vunpack.c.h.b16 %v716
    %v2050 = vunpack.c.l.b16 %v717
    %v2051 = vunpack.c.h.b16 %v717
    %v2052 = vunpack.c.l.b16 %v718
    %v2053 = vunpack.c.h.b16 %v718
    %v2054 = vunpack.c.l.b16 %v719
    %v2055 = vunpack.c.h.b16 %v719
    %v2056 = vunpack.c.l.b16 %v720
    %v2057 = vunpack.c.h.b16 %v720
    %v2058 = vunpack.c.l.b16 %v721
    %v2059 = vunpack.c.h.b16 %v721
    %v2060 = vunpack.c.l.b16 %v722
    %v2061 = vunpack.c.h.b16 %v722
    %v2062 = vunpack.c.l.b16 %v723
    %v2063 = vunpack.c.h.b16 %v723
    %v2064 = vunpack.c.l.b16 %v724
    %v2065 = vunpack.c.h.b16 %v724
    %v2066 = vunpack.c.l.b16 %v725
    %v2067 = vunpack.c.h.b16 %v725
    %v2068 = vunpack.c.l.b16 %v726
    %v2069 = vunpack.c.h.b16 %v726
    %v2070 = vunpack.c.l.b16 %v727
    %v2071 = vunpack.c.h.b16 %v727
    %v2072 = vunpack.c.l.b16 %v728
    %v2073 = vunpack.c.h.b16 %v728
    %v2074 = vunpack.c.l.b16 %v729
    %v2075 = vunpack.c.h.b16 %v729
    %v2076 = vunpack.c.l.b16 %v730
    %v2077 = vunpack.c.h.b16 %v730
    %v2078 = vunpack.c.l.b16 %v731
    %v2079 = vunpack.c.h.b16 %v731
    %v2080 = vunpack.c.l.b16 %v732
    %v2081 = vunpack.c.h.b16 %v732
    %v2082 = vunpack.c.l.b16 %v733
    %v2083 = vunpack.c.h.b16 %v733
    %v2084 = vunpack.c.l.b16 %v734
    %v2085 = vunpack.c.h.b16 %v734
    %v2086 = vunpack.c.l.b16 %v735
    %v2087 = vunpack.c.h.b16 %v735
    %v2088 = vunpack.c.l.b16 %v736
    %v2089 = vunpack.c.h.b16 %v736
    %v2090 = vunpack.c.l.b16 %v737
    %v2091 = vunpack.c.h.b16 %v737
    %v2092 = vunpack.c.l.b16 %v738
    %v2093 = vunpack.c.h.b16 %v738
    %v2094 = vunpack.c.l.b16 %v739
    %v2095 = vunpack.c.h.b16 %v739
    %v2096 = vunpack.c.l.b16 %v740
    %v2097 = vunpack.c.h.b16 %v740
    %v2098 = vunpack.c.l.b16 %v741
    %v2099 = vunpack.c.h.b16 %v741
    %v2100 = vunpack.c.l.b16 %v742
    %v2101 = vunpack.c.h.b16 %v742
    %v2102 = vunpack.c.l.b16 %v743
    %v2103 = vunpack.c.h.b16 %v743
    %v2104 = vunpack.c.l.b16 %v744
    %v2105 = vunpack.c.h.b16 %v744
    %v2106 = vunpack.c.l.b16 %v745
    %v2107 = vunpack.c.h.b16 %v745
    %v2108 = vunpack.c.l.b16 %v746
    %v2109 = vunpack.c.h.b16 %v746
    %v2110 = vunpack.c.l.b16 %v747
    %v2111 = vunpack.c.h.b16 %v747
    %v2112 = vunpack.c.l.b16 %v748
    %v2113 = vunpack.c.h.b16 %v748
    %v2114 = vunpack.c.l.b16 %v749
    %v2115 = vunpack.c.h.b16 %v749
    %v2116 = vunpack.c.l.b16 %v750
    %v2117 = vunpack.c.h.b16 %v750
    %v2118 = vunpack.c.l.b16 %v751
    %v2119 = vunpack.c.h.b16 %v751
    %v2120 = vunpack.c.l.b16 %v752
    %v2121 = vunpack.c.h.b16 %v752
    %v2122 = vunpack.c.l.b16 %v753
    %v2123 = vunpack.c.h.b16 %v753
    %v2124 = vunpack.c.l.b16 %v754
    %v2125 = vunpack.c.h.b16 %v754
    %v2126 = vunpack.c.l.b16 %v755
    %v2127 = vunpack.c.h.b16 %v755
    %v2128 = vunpack.c.l.b16 %v756
    %v2129 = vunpack.c.h.b16 %v756
    %v2130 = vunpack.c.l.b16 %v757
    %v2131 = vunpack.c.h.b16 %v757
    %v2132 = vunpack.c.l.b16 %v758
    %v2133 = vunpack.c.h.b16 %v758
    %v2134 = vunpack.c.l.b16 %v759
    %v2135 = vunpack.c.h.b16 %v759
    %v2136 = vunpack.c.l.b16 %v760
    %v2137 = vunpack.c.h.b16 %v760
    %v2138 = vunpack.c.l.b16 %v761
    %v2139 = vunpack.c.h.b16 %v761
    %v2140 = vunpack.c.l.b16 %v762
    %v2141 = vunpack.c.h.b16 %v762
    %v2142 = vunpack.c.l.b16 %v763
    %v2143 = vunpack.c.h.b16 %v763
    %v2144 = vunpack.c.l.b16 %v764
    %v2145 = vunpack.c.h.b16 %v764
    %v2146 = vunpack.c.l.b16 %v765
    %v2147 = vunpack.c.h.b16 %v765
    %v2148 = vunpack.c.l.b16 %v766
    %v2149 = vunpack.c.h.b16 %v766
    %v2150 = vunpack.c.l.b16 %v767
    %v2151 = vunpack.c.h.b16 %v767
    %v2152 = vunpack.c.l.b16 %v768
    %v2153 = vunpack.c.h.b16 %v768
    %v2154 = vunpack.c.l.b16 %v769
    %v2155 = vunpack.c.h.b16 %v769
    %v2156 = vunpack.c.l.b16 %v770
    %v2157 = vunpack.c.h.b16 %v770
    %v2158 = vunpack.c.l.b16 %v771
    %v2159 = vunpack.c.h.b16 %v771
    %v2160 = vunpack.c.l.b16 %v772
    %v2161 = vunpack.c.h.b16 %v772
    %v2162 = vunpack.c.l.b16 %v773
    %v2163 = vunpack.c.h.b16 %v773
    %v2164 = vunpack.c.l.b16 %v774
    %v2165 = vunpack.c.h.b16 %v774
    %v2166 = vunpack.c.l.b16 %v775
    %v2167 = vunpack.c.h.b16 %v775
    %v2168 = vunpack.c.l.b16 %v776
    %v2169 = vunpack.c.h.b16 %v776
    %v2170 = vunpack.c.l.b16 %v777
    %v2171 = vunpack.c.h.b16 %v777
    %v2172 = vunpack.c.l.b16 %v778
    %v2173 = vunpack.c.h.b16 %v778
    %v2174 = vunpack.c.l.b16 %v779
    %v2175 = vunpack.c.h.b16 %v779
    %v2176 = vunpack.c.l.b16 %v780
    %v2177 = vunpack.c.h.b16 %v780
    %v2178 = vunpack.c.l.b16 %v781
    %v2179 = vunpack.c.h.b16 %v781
    %v2180 = vunpack.c.l.b16 %v782
    %v2181 = vunpack.c.h.b16 %v782
    %v2182 = vunpack.c.l.b16 %v783
    %v2183 = vunpack.c.h.b16 %v783
    %v2184 = vunpack.c.l.b16 %v784
    %v2185 = vunpack.c.h.b16 %v784
    %v2186 = vunpack.c.l.b16 %v785
    %v2187 = vunpack.c.h.b16 %v785
    %v2188 = vunpack.c.l.b16 %v786
    %v2189 = vunpack.c.h.b16 %v786
    %v2190 = vunpack.c.l.b16 %v787
    %v2191 = vunpack.c.h.b16 %v787
    %v2192 = vunpack.c.l.b16 %v788
    %v2193 = vunpack.c.h.b16 %v788
    %v2194 = vunpack.c.l.b16 %v789
    %v2195 = vunpack.c.h.b16 %v789
    %v2196 = vunpack.c.l.b16 %v790
    %v2197 = vunpack.c.h.b16 %v790
    %v2198 = vunpack.c.l.b16 %v791
    %v2199 = vunpack.c.h.b16 %v791
    %v2200 = vunpack.c.l.b16 %v792
    %v2201 = vunpack.c.h.b16 %v792
    %v2202 = vunpack.c.l.b16 %v793
    %v2203 = vunpack.c.h.b16 %v793
    %v2204 = vunpack.c.l.b16 %v794
    %v2205 = vunpack.c.h.b16 %v794
    %v2206 = vunpack.c.l.b16 %v795
    %v2207 = vunpack.c.h.b16 %v795
    %v2208 = vunpack.c.l.b16 %v796
    %v2209 = vunpack.c.h.b16 %v796
    %v2210 = vunpack.c.l.b16 %v797
    %v2211 = vunpack.c.h.b16 %v797
    %v2212 = vunpack.c.l.b16 %v798
    %v2213 = vunpack.c.h.b16 %v798
    %v2214 = vunpack.c.l.b16 %v799
    %v2215 = vunpack.c.h.b16 %v799
    %v2216 = vunpack.c.l.b16 %v800
    %v2217 = vunpack.c.h.b16 %v800
    %v2218 = vunpack.c.l.b16 %v801
    %v2219 = vunpack.c.h.b16 %v801
    %v2220 = vunpack.c.l.b16 %v802
    %v2221 = vunpack.c.h.b16 %v802
    %v2222 = vunpack.c.l.b16 %v803
    %v2223 = vunpack.c.h.b16 %v803
    %v2224 = vunpack.c.l.b16 %v804
    %v2225 = vunpack.c.h.b16 %v804
    %v2226 = vunpack.c.l.b16 %v805
    %v2227 = vunpack.c.h.b16 %v805
    %v2228 = vunpack.c.l.b16 %v806
    %v2229 = vunpack.c.h.b16 %v806
    %v2230 = vunpack.c.l.b16 %v807
    %v2231 = vunpack.c.h.b16 %v807
    %v2232 = vunpack.c.l.b16 %v808
    %v2233 = vunpack.c.h.b16 %v808
    %v2234 = vunpack.c.l.b16 %v809
    %v2235 = vunpack.c.h.b16 %v809
    %v2236 = vunpack.c.l.b16 %v810
    %v2237 = vunpack.c.h.b16 %v810
    %v2238 = vunpack.c.l.b16 %v811
    %v2239 = vunpack.c.h.b16 %v811
    %v2240 = vunpack.c.l.b16 %v812
    %v2241 = vunpack.c.h.b16 %v812
    %v2242 = vunpack.c.l.b16 %v813
    %v2243 = vunpack.c.h.b16 %v813
    %v2244 = vunpack.c.l.b16 %v814
    %v2245 = vunpack.c.h.b16 %v814
    %v2246 = vunpack.c.l.b16 %v815
    %v2247 = vunpack.c.h.b16 %v815
    %v2248 = vunpack.c.l.b16 %v816
    %v2249 = vunpack.c.h.b16 %v816
    %v2250 = vunpack.c.l.b16 %v817
    %v2251 = vunpack.c.h.b16 %v817
    %v2252 = vunpack.c.l.b16 %v818
    %v2253 = vunpack.c.h.b16 %v818
    %v2254 = vunpack.c.l.b16 %v819
    %v2255 = vunpack.c.h.b16 %v819
    %v2256 = vunpack.c.l.b16 %v820
    %v2257 = vunpack.c.h.b16 %v820
    %v2258 = vunpack.c.l.b16 %v821
    %v2259 = vunpack.c.h.b16 %v821
    %v2260 = vunpack.c.l.b16 %v822
    %v2261 = vunpack.c.h.b16 %v822
    %v2262 = vunpack.c.l.b16 %v823
    %v2263 = vunpack.c.h.b16 %v823
    %v2264 = vunpack.c.l.b16 %v824
    %v2265 = vunpack.c.h.b16 %v824
    %v2266 = vunpack.c.l.b16 %v825
    %v2267 = vunpack.c.h.b16 %v825
    %v2268 = vunpack.c.l.b16 %v826
    %v2269 = vunpack.c.h.b16 %v826
    %v2270 = vunpack.c.l.b16 %v827
    %v2271 = vunpack.c.h.b16 %v827
    %v2272 = vunpack.c.l.b16 %v828
    %v2273 = vunpack.c.h.b16 %v828
    %v2274 = vunpack.c.l.b16 %v829
    %v2275 = vunpack.c.h.b16 %v829
    %v2276 = vunpack.c.l.b16 %v830
    %v2277 = vunpack.c.h.b16 %v830
    %v2278 = vunpack.c.l.b16 %v831
    %v2279 = vunpack.c.h.b16 %v831
    %v2280 = vunpack.c.l.b16 %v832
    %v2281 = vunpack.c.h.b16 %v832
    %v2282 = vunpack.c.l.b16 %v833
    %v2283 = vunpack.c.h.b16 %v833
    %v2284 = vunpack.c.l.b16 %v834
    %v2285 = vunpack.c.h.b16 %v834
    %v2286 = vunpack.c.l.b16 %v835
    %v2287 = vunpack.c.h.b16 %v835
    %v2288 = vunpack.c.l.b16 %v836
    %v2289 = vunpack.c.h.b16 %v836
    %v2290 = vunpack.c.l.b16 %v837
    %v2291 = vunpack.c.h.b16 %v837
    %v2292 = vunpack.c.l.b16 %v838
    %v2293 = vunpack.c.h.b16 %v838
    %v2294 = vunpack.c.l.b16 %v839
    %v2295 = vunpack.c.h.b16 %v839
    %v2296 = vunpack.c.l.b16 %v840
    %v2297 = vunpack.c.h.b16 %v840
    %v2298 = vunpack.c.l.b16 %v841
    %v2299 = vunpack.c.h.b16 %v841
    %v2300 = vunpack.c.l.b16 %v842
    %v2301 = vunpack.c.h.b16 %v842
    %v2302 = vunpack.c.l.b16 %v843
    %v2303 = vunpack.c.h.b16 %v843
    %v2304 = vunpack.c.l.b16 %v844
    %v2305 = vunpack.c.h.b16 %v844
    %v2306 = vunpack.c.l.b16 %v845
    %v2307 = vunpack.c.h.b16 %v845
    %v2308 = vunpack.c.l.b16 %v846
    %v2309 = vunpack.c.h.b16 %v846
    %v2310 = vunpack.c.l.b16 %v847
    %v2311 = vunpack.c.h.b16 %v847
    %v2312 = vunpack.c.l.b16 %v848
    %v2313 = vunpack.c.h.b16 %v848
    %v2314 = vunpack.c.l.b16 %v849
    %v2315 = vunpack.c.h.b16 %v849
    %v2316 = vunpack.c.l.b16 %v850
    %v2317 = vunpack.c.h.b16 %v850
    %v2318 = vunpack.c.l.b16 %v851
    %v2319 = vunpack.c.h.b16 %v851
    %v2320 = vunpack.c.l.b16 %v852
    %v2321 = vunpack.c.h.b16 %v852
    %v2322 = vunpack.c.l.b16 %v853
    %v2323 = vunpack.c.h.b16 %v853
    %v2324 = vunpack.c.l.b16 %v854
    %v2325 = vunpack.c.h.b16 %v854
    %v2326 = vunpack.c.l.b16 %v855
    %v2327 = vunpack.c.h.b16 %v855
    %v2328 = vunpack.c.l.b16 %v856
    %v2329 = vunpack.c.h.b16 %v856
    %v2330 = vunpack.c.l.b16 %v857
    %v2331 = vunpack.c.h.b16 %v857
    %v2332 = vunpack.c.l.b16 %v858
    %v2333 = vunpack.c.h.b16 %v858
    %v2334 = vunpack.c.l.b16 %v859
    %v2335 = vunpack.c.h.b16 %v859
    %v2336 = vunpack.c.l.b16 %v860
    %v2337 = vunpack.c.h.b16 %v860
    %v2338 = vunpack.c.l.b16 %v861
    %v2339 = vunpack.c.h.b16 %v861
    %v2340 = vunpack.c.l.b16 %v862
    %v2341 = vunpack.c.h.b16 %v862
    %v2342 = vunpack.c.l.b16 %v863
    %v2343 = vunpack.c.h.b16 %v863
    %v2344 = vunpack.c.l.b16 %v864
    %v2345 = vunpack.c.h.b16 %v864
    %v2346 = vunpack.c.l.b16 %v865
    %v2347 = vunpack.c.h.b16 %v865
    %v2348 = vunpack.c.l.b16 %v866
    %v2349 = vunpack.c.h.b16 %v866
    %v2350 = vunpack.c.l.b16 %v867
    %v2351 = vunpack.c.h.b16 %v867
    %v2352 = vunpack.c.l.b16 %v868
    %v2353 = vunpack.c.h.b16 %v868
    %v2354 = vunpack.c.l.b16 %v869
    %v2355 = vunpack.c.h.b16 %v869
    %v2356 = vunpack.c.l.b16 %v870
    %v2357 = vunpack.c.h.b16 %v870
    %v2358 = vunpack.c.l.b16 %v871
    %v2359 = vunpack.c.h.b16 %v871
    %v2360 = vunpack.c.l.b16 %v872
    %v2361 = vunpack.c.h.b16 %v872
    %v2362 = vunpack.c.l.b16 %v873
    %v2363 = vunpack.c.h.b16 %v873
    %v2364 = vunpack.c.l.b16 %v874
    %v2365 = vunpack.c.h.b16 %v874
    %v2366 = vunpack.c.l.b16 %v875
    %v2367 = vunpack.c.h.b16 %v875
    %v2368 = vunpack.c.l.b16 %v876
    %v2369 = vunpack.c.h.b16 %v876
    %v2370 = vunpack.c.l.b16 %v877
    %v2371 = vunpack.c.h.b16 %v877
    %v2372 = vunpack.c.l.b16 %v878
    %v2373 = vunpack.c.h.b16 %v878
    %v2374 = vunpack.c.l.b16 %v879
    %v2375 = vunpack.c.h.b16 %v879
    %v2376 = vunpack.c.l.b16 %v880
    %v2377 = vunpack.c.h.b16 %v880
    %v2378 = vunpack.c.l.b16 %v881
    %v2379 = vunpack.c.h.b16 %v881
    %v2380 = vunpack.c.l.b16 %v882
    %v2381 = vunpack.c.h.b16 %v882
    %v2382 = vunpack.c.l.b16 %v883
    %v2383 = vunpack.c.h.b16 %v883
    %v2384 = vunpack.c.l.b16 %v884
    %v2385 = vunpack.c.h.b16 %v884
    %v2386 = vunpack.c.l.b16 %v885
    %v2387 = vunpack.c.h.b16 %v885
    %v2388 = vunpack.c.l.b16 %v886
    %v2389 = vunpack.c.h.b16 %v886
    %v2390 = vunpack.c.l.b16 %v887
    %v2391 = vunpack.c.h.b16 %v887
    %v2392 = vunpack.c.l.b16 %v888
    %v2393 = vunpack.c.h.b16 %v888
    %v2394 = vunpack.c.l.b16 %v889
    %v2395 = vunpack.c.h.b16 %v889
    %v2396 = vunpack.c.l.b16 %v890
    %v2397 = vunpack.c.h.b16 %v890
    %v2398 = vunpack.c.l.b16 %v891
    %v2399 = vunpack.c.h.b16 %v891
    %v2400 = vunpack.c.l.b16 %v892
    %v2401 = vunpack.c.h.b16 %v892
    %v2402 = vunpack.c.l.b16 %v893
    %v2403 = vunpack.c.h.b16 %v893
    %v2404 = vunpack.c.l.b16 %v894
    %v2405 = vunpack.c.h.b16 %v894
    %v2406 = vunpack.c.l.b16 %v895
    %v2407 = vunpack.c.h.b16 %v895
    %v2408 = vunpack.c.l.b16 %v896
    %v2409 = vunpack.c.h.b16 %v896
    %v2410 = vunpack.c.l.b16 %v897
    %v2411 = vunpack.c.h.b16 %v897
    %v2412 = vunpack.c.l.b16 %v898
    %v2413 = vunpack.c.h.b16 %v898
    %v2414 = vunpack.c.l.b16 %v899
    %v2415 = vunpack.c.h.b16 %v899
    %v2416 = vunpack.c.l.b16 %v900
    %v2417 = vunpack.c.h.b16 %v900
    %v2418 = vunpack.c.l.b16 %v901
    %v2419 = vunpack.c.h.b16 %v901
    %v2420 = vunpack.c.l.b16 %v902
    %v2421 = vunpack.c.h.b16 %v902
    %v2422 = vunpack.c.l.b16 %v903
    %v2423 = vunpack.c.h.b16 %v903
    %v2424 = vunpack.c.l.b16 %v904
    %v2425 = vunpack.c.h.b16 %v904
    %v2426 = vunpack.c.l.b16 %v905
    %v2427 = vunpack.c.h.b16 %v905
    %v2428 = vunpack.c.l.b16 %v906
    %v2429 = vunpack.c.h.b16 %v906
    %v2430 = vunpack.c.l.b16 %v907
    %v2431 = vunpack.c.h.b16 %v907
    %v2432 = vunpack.c.l.b16 %v908
    %v2433 = vunpack.c.h.b16 %v908
    %v2434 = vunpack.c.l.b16 %v909
    %v2435 = vunpack.c.h.b16 %v909
    %v2436 = vunpack.c.l.b16 %v910
    %v2437 = vunpack.c.h.b16 %v910
    %v2438 = vunpack.c.l.b16 %v911
    %v2439 = vunpack.c.h.b16 %v911
    %v2440 = vunpack.c.l.b16 %v912
    %v2441 = vunpack.c.h.b16 %v912
    %v2442 = vunpack.c.l.b16 %v913
    %v2443 = vunpack.c.h.b16 %v913
    %v2444 = vunpack.c.l.b16 %v914
    %v2445 = vunpack.c.h.b16 %v914
    %v2446 = vunpack.c.l.b16 %v915
    %v2447 = vunpack.c.h.b16 %v915
    %v2448 = vunpack.c.l.b16 %v916
    %v2449 = vunpack.c.h.b16 %v916
    %v2450 = vunpack.c.l.b16 %v917
    %v2451 = vunpack.c.h.b16 %v917
    %v2452 = vunpack.c.l.b16 %v918
    %v2453 = vunpack.c.h.b16 %v918
    %v2454 = vunpack.c.l.b16 %v919
    %v2455 = vunpack.c.h.b16 %v919
    %v2456 = vunpack.c.l.b16 %v920
    %v2457 = vunpack.c.h.b16 %v920
    %v2458 = vunpack.c.l.b16 %v921
    %v2459 = vunpack.c.h.b16 %v921
    %v2460 = vunpack.c.l.b16 %v922
    %v2461 = vunpack.c.h.b16 %v922
    %v2462 = vunpack.c.l.b16 %v923
    %v2463 = vunpack.c.h.b16 %v923
    %v2464 = vunpack.c.l.b16 %v924
    %v2465 = vunpack.c.h.b16 %v924
    %v2466 = vunpack.c.l.b16 %v925
    %v2467 = vunpack.c.h.b16 %v925
    %v2468 = vunpack.c.l.b16 %v926
    %v2469 = vunpack.c.h.b16 %v926
    %v2470 = vunpack.c.l.b16 %v927
    %v2471 = vunpack.c.h.b16 %v927
    %v2472 = vunpack.c.l.b16 %v928
    %v2473 = vunpack.c.h.b16 %v928
    %v2474 = vunpack.c.l.b16 %v929
    %v2475 = vunpack.c.h.b16 %v929
    %v2476 = vunpack.c.l.b16 %v930
    %v2477 = vunpack.c.h.b16 %v930
    %v2478 = vunpack.c.l.b16 %v931
    %v2479 = vunpack.c.h.b16 %v931
    %v2480 = vunpack.c.l.b16 %v932
    %v2481 = vunpack.c.h.b16 %v932
    %v2482 = vunpack.c.l.b16 %v933
    %v2483 = vunpack.c.h.b16 %v933
    %v2484 = vunpack.c.l.b16 %v934
    %v2485 = vunpack.c.h.b16 %v934
    %v2486 = vunpack.c.l.b16 %v935
    %v2487 = vunpack.c.h.b16 %v935
    %v2488 = vunpack.c.l.b16 %v936
    %v2489 = vunpack.c.h.b16 %v936
    %v2490 = vunpack.c.l.b16 %v937
    %v2491 = vunpack.c.h.b16 %v937
    %v2492 = vunpack.c.l.b16 %v938
    %v2493 = vunpack.c.h.b16 %v938
    %v2494 = vunpack.c.l.b16 %v939
    %v2495 = vunpack.c.h.b16 %v939
    %v2496 = vunpack.c.l.b16 %v940
    %v2497 = vunpack.c.h.b16 %v940
    %v2498 = vunpack.c.l.b16 %v941
    %v2499 = vunpack.c.h.b16 %v941
    %v2500 = vunpack.c.l.b16 %v942
    %v2501 = vunpack.c.h.b16 %v942
    %v2502 = vunpack.c.l.b16 %v943
    %v2503 = vunpack.c.h.b16 %v943
    %v2504 = vunpack.c.l.b16 %v944
    %v2505 = vunpack.c.h.b16 %v944
    %v2506 = vunpack.c.l.b16 %v945
    %v2507 = vunpack.c.h.b16 %v945
    %v2508 = vunpack.c.l.b16 %v946
    %v2509 = vunpack.c.h.b16 %v946
    %v2510 = vunpack.c.l.b16 %v947
    %v2511 = vunpack.c.h.b16 %v947
    %v2512 = vunpack.c.l.b16 %v948
    %v2513 = vunpack.c.h.b16 %v948
    %v2514 = vunpack.c.l.b16 %v949
    %v2515 = vunpack.c.h.b16 %v949
    %v2516 = vunpack.c.l.b16 %v950
    %v2517 = vunpack.c.h.b16 %v950
    %v2518 = vunpack.c.l.b16 %v951
    %v2519 = vunpack.c.h.b16 %v951
    %v2520 = vunpack.c.l.b16 %v952
    %v2521 = vunpack.c.h.b16 %v952
    %v2522 = vunpack.c.l.b16 %v953
    %v2523 = vunpack.c.h.b16 %v953
    %v2524 = vunpack.c.l.b16 %v954
    %v2525 = vunpack.c.h.b16 %v954
    %v2526 = vunpack.c.l.b16 %v955
    %v2527 = vunpack.c.h.b16 %v955
    %v2528 = vunpack.c.l.b16 %v956
    %v2529 = vunpack.c.h.b16 %v956
    %v2530 = vunpack.c.l.b16 %v957
    %v2531 = vunpack.c.h.b16 %v957
    %v2532 = vunpack.c.l.b16 %v958
    %v2533 = vunpack.c.h.b16 %v958
    %v2534 = vunpack.c.l.b16 %v959
    %v2535 = vunpack.c.h.b16 %v959
    %v2536 = vunpack.c.l.b16 %v960
    %v2537 = vunpack.c.h.b16 %v960
    %v2538 = vunpack.c.l.b16 %v961
    %v2539 = vunpack.c.h.b16 %v961
    %v2540 = vpack.c.b16 %v1524, %v1516
    %v2541 = vpack.c.b16 %v1525, %v1517
    %v2542 = vpack.c.b16 %v1526, %v1518
    %v2543 = vpack.c.b16 %v1527, %v1519
    %v2544 = vpack.c.b16 %v1528, %v1520
    %v2545 = vpack.c.b16 %v1529, %v1521
    %v2546 = vpack.c.b16 %v1530, %v1522
    %v2547 = vpack.c.b16 %v1531, %v1523
    %v2548 = vpack.c.b16 %v1540, %v1532
    %v2549 = vpack.c.b16 %v1541, %v1533
    %v2550 = vpack.c.b16 %v1542, %v1534
    %v2551 = vpack.c.b16 %v1543, %v1535
    %v2552 = vpack.c.b16 %v1544, %v1536
    %v2553 = vpack.c.b16 %v1545, %v1537
    %v2554 = vpack.c.b16 %v1546, %v1538
    %v2555 = vpack.c.b16 %v1547, %v1539
    %v2556 = vpack.c.b16 %v1556, %v1548
    %v2557 = vpack.c.b16 %v1557, %v1549
    %v2558 = vpack.c.b16 %v1558, %v1550
    %v2559 = vpack.c.b16 %v1559, %v1551
    %v2560 = vpack.c.b16 %v1560, %v1552
    %v2561 = vpack.c.b16 %v1561, %v1553
    %v2562 = vpack.c.b16 %v1562, %v1554
    %v2563 = vpack.c.b16 %v1563, %v1555
    %v2564 = vpack.c.b16 %v1572, %v1564
    %v2565 = vpack.c.b16 %v1573, %v1565
    %v2566 = vpack.c.b16 %v1574, %v1566
    %v2567 = vpack.c.b16 %v1575, %v1567
    %v2568 = vpack.c.b16 %v1576, %v1568
    %v2569 = vpack.c.b16 %v1577, %v1569
    %v2570 = vpack.c.b16 %v1578, %v1570
    %v2571 = vpack.c.b16 %v1579, %v1571
    %v2572 = vpack.c.b16 %v1588, %v1580
    %v2573 = vpack.c.b16 %v1589, %v1581
    %v2574 = vpack.c.b16 %v1590, %v1582
    %v2575 = vpack.c.b16 %v1591, %v1583
    %v2576 = vpack.c.b16 %v1592, %v1584
    %v2577 = vpack.c.b16 %v1593, %v1585
    %v2578 = vpack.c.b16 %v1594, %v1586
    %v2579 = vpack.c.b16 %v1595, %v1587
    %v2580 = vpack.c.b16 %v1604, %v1596
    %v2581 = vpack.c.b16 %v1605, %v1597
    %v2582 = vpack.c.b16 %v1606, %v1598
    %v2583 = vpack.c.b16 %v1607, %v1599
    %v2584 = vpack.c.b16 %v1608, %v1600
    %v2585 = vpack.c.b16 %v1609, %v1601
    %v2586 = vpack.c.b16 %v1610, %v1602
    %v2587 = vpack.c.b16 %v1611, %v1603
    %v2588 = vpack.c.b16 %v1620, %v1612
    %v2589 = vpack.c.b16 %v1621, %v1613
    %v2590 = vpack.c.b16 %v1622, %v1614
    %v2591 = vpack.c.b16 %v1623, %v1615
    %v2592 = vpack.c.b16 %v1624, %v1616
    %v2593 = vpack.c.b16 %v1625, %v1617
    %v2594 = vpack.c.b16 %v1626, %v1618
    %v2595 = vpack.c.b16 %v1627, %v1619
    %v2596 = vpack.c.b16 %v1636, %v1628
    %v2597 = vpack.c.b16 %v1637, %v1629
    %v2598 = vpack.c.b16 %v1638, %v1630
    %v2599 = vpack.c.b16 %v1639, %v1631
    %v2600 = vpack.c.b16 %v1640, %v1632
    %v2601 = vpack.c.b16 %v1641, %v1633
    %v2602 = vpack.c.b16 %v1642, %v1634
    %v2603 = vpack.c.b16 %v1643, %v1635
    %v2604 = vpack.c.b16 %v1652, %v1644
    %v2605 = vpack.c.b16 %v1653, %v1645
    %v2606 = vpack.c.b16 %v1654, %v1646
    %v2607 = vpack.c.b16 %v1655, %v1647
    %v2608 = vpack.c.b16 %v1656, %v1648
    %v2609 = vpack.c.b16 %v1657, %v1649
    %v2610 = vpack.c.b16 %v1658, %v1650
    %v2611 = vpack.c.b16 %v1659, %v1651
    %v2612 = vpack.c.b16 %v1668, %v1660
    %v2613 = vpack.c.b16 %v1669, %v1661
    %v2614 = vpack.c.b16 %v1670, %v1662
    %v2615 = vpack.c.b16 %v1671, %v1663
    %v2616 = vpack.c.b16 %v1672, %v1664
    %v2617 = vpack.c.b16 %v1673, %v1665
    %v2618 = vpack.c.b16 %v1674, %v1666
    %v2619 = vpack.c.b16 %v1675, %v1667
    %v2620 = vpack.c.b16 %v1684, %v1676
    %v2621 = vpack.c.b16 %v1685, %v1677
    %v2622 = vpack.c.b16 %v1686, %v1678
    %v2623 = vpack.c.b16 %v1687, %v1679
    %v2624 = vpack.c.b16 %v1688, %v1680
    %v2625 = vpack.c.b16 %v1689, %v1681
    %v2626 = vpack.c.b16 %v1690, %v1682
    %v2627 = vpack.c.b16 %v1691, %v1683
    %v2628 = vpack.c.b16 %v1700, %v1692
    %v2629 = vpack.c.b16 %v1701, %v1693
    %v2630 = vpack.c.b16 %v1702, %v1694
    %v2631 = vpack.c.b16 %v1703, %v1695
    %v2632 = vpack.c.b16 %v1704, %v1696
    %v2633 = vpack.c.b16 %v1705, %v1697
    %v2634 = vpack.c.b16 %v1706, %v1698
    %v2635 = vpack.c.b16 %v1707, %v1699
    %v2636 = vpack.c.b16 %v1716, %v1708
    %v2637 = vpack.c.b16 %v1717, %v1709
    %v2638 = vpack.c.b16 %v1718, %v1710
    %v2639 = vpack.c.b16 %v1719, %v1711
    %v2640 = vpack.c.b16 %v1720, %v1712
    %v2641 = vpack.c.b16 %v1721, %v1713
    %v2642 = vpack.c.b16 %v1722, %v1714
    %v2643 = vpack.c.b16 %v1723, %v1715
    %v2644 = vpack.c.b16 %v1732, %v1724
    %v2645 = vpack.c.b16 %v1733, %v1725
    %v2646 = vpack.c.b16 %v1734, %v1726
    %v2647 = vpack.c.b16 %v1735, %v1727
    %v2648 = vpack.c.b16 %v1736, %v1728
    %v2649 = vpack.c.b16 %v1737, %v1729
    %v2650 = vpack.c.b16 %v1738, %v1730
    %v2651 = vpack.c.b16 %v1739, %v1731
    %v2652 = vpack.c.b16 %v1748, %v1740
    %v2653 = vpack.c.b16 %v1749, %v1741
    %v2654 = vpack.c.b16 %v1750, %v1742
    %v2655 = vpack.c.b16 %v1751, %v1743
    %v2656 = vpack.c.b16 %v1752, %v1744
    %v2657 = vpack.c.b16 %v1753, %v1745
    %v2658 = vpack.c.b16 %v1754, %v1746
    %v2659 = vpack.c.b16 %v1755, %v1747
    %v2660 = vpack.c.b16 %v1764, %v1756
    %v2661 = vpack.c.b16 %v1765, %v1757
    %v2662 = vpack.c.b16 %v1766, %v1758
    %v2663 = vpack.c.b16 %v1767, %v1759
    %v2664 = vpack.c.b16 %v1768, %v1760
    %v2665 = vpack.c.b16 %v1769, %v1761
    %v2666 = vpack.c.b16 %v1770, %v1762
    %v2667 = vpack.c.b16 %v1771, %v1763
    %v2668 = vpack.c.b16 %v1780, %v1772
    %v2669 = vpack.c.b16 %v1781, %v1773
    %v2670 = vpack.c.b16 %v1782, %v1774
    %v2671 = vpack.c.b16 %v1783, %v1775
    %v2672 = vpack.c.b16 %v1784, %v1776
    %v2673 = vpack.c.b16 %v1785, %v1777
    %v2674 = vpack.c.b16 %v1786, %v1778
    %v2675 = vpack.c.b16 %v1787, %v1779
    %v2676 = vpack.c.b16 %v1796, %v1788
    %v2677 = vpack.c.b16 %v1797, %v1789
    %v2678 = vpack.c.b16 %v1798, %v1790
    %v2679 = vpack.c.b16 %v1799, %v1791
    %v2680 = vpack.c.b16 %v1800, %v1792
    %v2681 = vpack.c.b16 %v1801, %v1793
    %v2682 = vpack.c.b16 %v1802, %v1794
    %v2683 = vpack.c.b16 %v1803, %v1795
    %v2684 = vpack.c.b16 %v1812, %v1804
    %v2685 = vpack.c.b16 %v1813, %v1805
    %v2686 = vpack.c.b16 %v1814, %v1806
    %v2687 = vpack.c.b16 %v1815, %v1807
    %v2688 = vpack.c.b16 %v1816, %v1808
    %v2689 = vpack.c.b16 %v1817, %v1809
    %v2690 = vpack.c.b16 %v1818, %v1810
    %v2691 = vpack.c.b16 %v1819, %v1811
    %v2692 = vpack.c.b16 %v1828, %v1820
    %v2693 = vpack.c.b16 %v1829, %v1821
    %v2694 = vpack.c.b16 %v1830, %v1822
    %v2695 = vpack.c.b16 %v1831, %v1823
    %v2696 = vpack.c.b16 %v1832, %v1824
    %v2697 = vpack.c.b16 %v1833, %v1825
    %v2698 = vpack.c.b16 %v1834, %v1826
    %v2699 = vpack.c.b16 %v1835, %v1827
    %v2700 = vpack.c.b16 %v1844, %v1836
    %v2701 = vpack.c.b16 %v1845, %v1837
    %v2702 = vpack.c.b16 %v1846, %v1838
    %v2703 = vpack.c.b16 %v1847, %v1839
    %v2704 = vpack.c.b16 %v1848, %v1840
    %v2705 = vpack.c.b16 %v1849, %v1841
    %v2706 = vpack.c.b16 %v1850, %v1842
    %v2707 = vpack.c.b16 %v1851, %v1843
    %v2708 = vpack.c.b16 %v1860, %v1852
    %v2709 = vpack.c.b16 %v1861, %v1853
    %v2710 = vpack.c.b16 %v1862, %v1854
    %v2711 = vpack.c.b16 %v1863, %v1855
    %v2712 = vpack.c.b16 %v1864, %v1856
    %v2713 = vpack.c.b16 %v1865, %v1857
    %v2714 = vpack.c.b16 %v1866, %v1858
    %v2715 = vpack.c.b16 %v1867, %v1859
    %v2716 = vpack.c.b16 %v1876, %v1868
    %v2717 = vpack.c.b16 %v1877, %v1869
    %v2718 = vpack.c.b16 %v1878, %v1870
    %v2719 = vpack.c.b16 %v1879, %v1871
    %v2720 = vpack.c.b16 %v1880, %v1872
    %v2721 = vpack.c.b16 %v1881, %v1873
    %v2722 = vpack.c.b16 %v1882, %v1874
    %v2723 = vpack.c.b16 %v1883, %v1875
    %v2724 = vpack.c.b16 %v1892, %v1884
    %v2725 = vpack.c.b16 %v1893, %v1885
    %v2726 = vpack.c.b16 %v1894, %v1886
    %v2727 = vpack.c.b16 %v1895, %v1887
    %v2728 = vpack.c.b16 %v1896, %v1888
    %v2729 = vpack.c.b16 %v1897, %v1889
    %v2730 = vpack.c.b16 %v1898, %v1890
    %v2731 = vpack.c.b16 %v1899, %v1891
    %v2732 = vpack.c.b16 %v1908, %v1900
    %v2733 = vpack.c.b16 %v1909, %v1901
    %v2734 = vpack.c.b16 %v1910, %v1902
    %v2735 = vpack.c.b16 %v1911, %v1903
    %v2736 = vpack.c.b16 %v1912, %v1904
    %v2737 = vpack.c.b16 %v1913, %v1905
    %v2738 = vpack.c.b16 %v1914, %v1906
    %v2739 = vpack.c.b16 %v1915, %v1907
    %v2740 = vpack.c.b16 %v1924, %v1916
    %v2741 = vpack.c.b16 %v1925, %v1917
    %v2742 = vpack.c.b16 %v1926, %v1918
    %v2743 = vpack.c.b16 %v1927, %v1919
    %v2744 = vpack.c.b16 %v1928, %v1920
    %v2745 = vpack.c.b16 %v1929, %v1921
    %v2746 = vpack.c.b16 %v1930, %v1922
    %v2747 = vpack.c.b16 %v1931, %v1923
    %v2748 = vpack.c.b16 %v1940, %v1932
    %v2749 = vpack.c.b16 %v1941, %v1933
    %v2750 = vpack.c.b16 %v1942, %v1934
    %v2751 = vpack.c.b16 %v1943, %v1935
    %v2752 = vpack.c.b16 %v1944, %v1936
    %v2753 = vpack.c.b16 %v1945, %v1937
    %v2754 = vpack.c.b16 %v1946, %v1938
    %v2755 = vpack.c.b16 %v1947, %v1939
    %v2756 = vpack.c.b16 %v1956, %v1948
    %v2757 = vpack.c.b16 %v1957, %v1949
    %v2758 = vpack.c.b16 %v1958, %v1950
    %v2759 = vpack.c.b16 %v1959, %v1951
    %v2760 = vpack.c.b16 %v1960, %v1952
    %v2761 = vpack.c.b16 %v1961, %v1953
    %v2762 = vpack.c.b16 %v1962, %v1954
    %v2763 = vpack.c.b16 %v1963, %v1955
    %v2764 = vpack.c.b16 %v1972, %v1964
    %v2765 = vpack.c.b16 %v1973, %v1965
    %v2766 = vpack.c.b16 %v1974, %v1966
    %v2767 = vpack.c.b16 %v1975, %v1967
    %v2768 = vpack.c.b16 %v1976, %v1968
    %v2769 = vpack.c.b16 %v1977, %v1969
    %v2770 = vpack.c.b16 %v1978, %v1970
    %v2771 = vpack.c.b16 %v1979, %v1971
    %v2772 = vpack.c.b16 %v1988, %v1980
    %v2773 = vpack.c.b16 %v1989, %v1981
    %v2774 = vpack.c.b16 %v1990, %v1982
    %v2775 = vpack.c.b16 %v1991, %v1983
    %v2776 = vpack.c.b16 %v1992, %v1984
    %v2777 = vpack.c.b16 %v1993, %v1985
    %v2778 = vpack.c.b16 %v1994, %v1986
    %v2779 = vpack.c.b16 %v1995, %v1987
    %v2780 = vpack.c.b16 %v2004, %v1996
    %v2781 = vpack.c.b16 %v2005, %v1997
    %v2782 = vpack.c.b16 %v2006, %v1998
    %v2783 = vpack.c.b16 %v2007, %v1999
    %v2784 = vpack.c.b16 %v2008, %v2000
    %v2785 = vpack.c.b16 %v2009, %v2001
    %v2786 = vpack.c.b16 %v2010, %v2002
    %v2787 = vpack.c.b16 %v2011, %v2003
    %v2788 = vpack.c.b16 %v2020, %v2012
    %v2789 = vpack.c.b16 %v2021, %v2013
    %v2790 = vpack.c.b16 %v2022, %v2014
    %v2791 = vpack.c.b16 %v2023, %v2015
    %v2792 = vpack.c.b16 %v2024, %v2016
    %v2793 = vpack.c.b16 %v2025, %v2017
    %v2794 = vpack.c.b16 %v2026, %v2018
    %v2795 = vpack.c.b16 %v2027, %v2019
    %v2796 = vpack.c.b16 %v2036, %v2028
    %v2797 = vpack.c.b16 %v2037, %v2029
    %v2798 = vpack.c.b16 %v2038, %v2030
    %v2799 = vpack.c.b16 %v2039, %v2031
    %v2800 = vpack.c.b16 %v2040, %v2032
    %v2801 = vpack.c.b16 %v2041, %v2033
    %v2802 = vpack.c.b16 %v2042, %v2034
    %v2803 = vpack.c.b16 %v2043, %v2035
    %v2804 = vpack.c.b16 %v2052, %v2044
    %v2805 = vpack.c.b16 %v2053, %v2045
    %v2806 = vpack.c.b16 %v2054, %v2046
    %v2807 = vpack.c.b16 %v2055, %v2047
    %v2808 = vpack.c.b16 %v2056, %v2048
    %v2809 = vpack.c.b16 %v2057, %v2049
    %v2810 = vpack.c.b16 %v2058, %v2050
    %v2811 = vpack.c.b16 %v2059, %v2051
    %v2812 = vpack.c.b16 %v2068, %v2060
    %v2813 = vpack.c.b16 %v2069, %v2061
    %v2814 = vpack.c.b16 %v2070, %v2062
    %v2815 = vpack.c.b16 %v2071, %v2063
    %v2816 = vpack.c.b16 %v2072, %v2064
    %v2817 = vpack.c.b16 %v2073, %v2065
    %v2818 = vpack.c.b16 %v2074, %v2066
    %v2819 = vpack.c.b16 %v2075, %v2067
    %v2820 = vpack.c.b16 %v2084, %v2076
    %v2821 = vpack.c.b16 %v2085, %v2077
    %v2822 = vpack.c.b16 %v2086, %v2078
    %v2823 = vpack.c.b16 %v2087, %v2079
    %v2824 = vpack.c.b16 %v2088, %v2080
    %v2825 = vpack.c.b16 %v2089, %v2081
    %v2826 = vpack.c.b16 %v2090, %v2082
    %v2827 = vpack.c.b16 %v2091, %v2083
    %v2828 = vpack.c.b16 %v2100, %v2092
    %v2829 = vpack.c.b16 %v2101, %v2093
    %v2830 = vpack.c.b16 %v2102, %v2094
    %v2831 = vpack.c.b16 %v2103, %v2095
    %v2832 = vpack.c.b16 %v2104, %v2096
    %v2833 = vpack.c.b16 %v2105, %v2097
    %v2834 = vpack.c.b16 %v2106, %v2098
    %v2835 = vpack.c.b16 %v2107, %v2099
    %v2836 = vpack.c.b16 %v2116, %v2108
    %v2837 = vpack.c.b16 %v2117, %v2109
    %v2838 = vpack.c.b16 %v2118, %v2110
    %v2839 = vpack.c.b16 %v2119, %v2111
    %v2840 = vpack.c.b16 %v2120, %v2112
    %v2841 = vpack.c.b16 %v2121, %v2113
    %v2842 = vpack.c.b16 %v2122, %v2114
    %v2843 = vpack.c.b16 %v2123, %v2115
    %v2844 = vpack.c.b16 %v2132, %v2124
    %v2845 = vpack.c.b16 %v2133, %v2125
    %v2846 = vpack.c.b16 %v2134, %v2126
    %v2847 = vpack.c.b16 %v2135, %v2127
    %v2848 = vpack.c.b16 %v2136, %v2128
    %v2849 = vpack.c.b16 %v2137, %v2129
    %v2850 = vpack.c.b16 %v2138, %v2130
    %v2851 = vpack.c.b16 %v2139, %v2131
    %v2852 = vpack.c.b16 %v2148, %v2140
    %v2853 = vpack.c.b16 %v2149, %v2141
    %v2854 = vpack.c.b16 %v2150, %v2142
    %v2855 = vpack.c.b16 %v2151, %v2143
    %v2856 = vpack.c.b16 %v2152, %v2144
    %v2857 = vpack.c.b16 %v2153, %v2145
    %v2858 = vpack.c.b16 %v2154, %v2146
    %v2859 = vpack.c.b16 %v2155, %v2147
    %v2860 = vpack.c.b16 %v2164, %v2156
    %v2861 = vpack.c.b16 %v2165, %v2157
    %v2862 = vpack.c.b16 %v2166, %v2158
    %v2863 = vpack.c.b16 %v2167, %v2159
    %v2864 = vpack.c.b16 %v2168, %v2160
    %v2865 = vpack.c.b16 %v2169, %v2161
    %v2866 = vpack.c.b16 %v2170, %v2162
    %v2867 = vpack.c.b16 %v2171, %v2163
    %v2868 = vpack.c.b16 %v2180, %v2172
    %v2869 = vpack.c.b16 %v2181, %v2173
    %v2870 = vpack.c.b16 %v2182, %v2174
    %v2871 = vpack.c.b16 %v2183, %v2175
    %v2872 = vpack.c.b16 %v2184, %v2176
    %v2873 = vpack.c.b16 %v2185, %v2177
    %v2874 = vpack.c.b16 %v2186, %v2178
    %v2875 = vpack.c.b16 %v2187, %v2179
    %v2876 = vpack.c.b16 %v2196, %v2188
    %v2877 = vpack.c.b16 %v2197, %v2189
    %v2878 = vpack.c.b16 %v2198, %v2190
    %v2879 = vpack.c.b16 %v2199, %v2191
    %v2880 = vpack.c.b16 %v2200, %v2192
    %v2881 = vpack.c.b16 %v2201, %v2193
    %v2882 = vpack.c.b16 %v2202, %v2194
    %v2883 = vpack.c.b16 %v2203, %v2195
    %v2884 = vpack.c.b16 %v2212, %v2204
    %v2885 = vpack.c.b16 %v2213, %v2205
    %v2886 = vpack.c.b16 %v2214, %v2206
    %v2887 = vpack.c.b16 %v2215, %v2207
    %v2888 = vpack.c.b16 %v2216, %v2208
    %v2889 = vpack.c.b16 %v2217, %v2209
    %v2890 = vpack.c.b16 %v2218, %v2210
    %v2891 = vpack.c.b16 %v2219, %v2211
    %v2892 = vpack.c.b16 %v2228, %v2220
    %v2893 = vpack.c.b16 %v2229, %v2221
    %v2894 = vpack.c.b16 %v2230, %v2222
    %v2895 = vpack.c.b16 %v2231, %v2223
    %v2896 = vpack.c.b16 %v2232, %v2224
    %v2897 = vpack.c.b16 %v2233, %v2225
    %v2898 = vpack.c.b16 %v2234, %v2226
    %v2899 = vpack.c.b16 %v2235, %v2227
    %v2900 = vpack.c.b16 %v2244, %v2236
    %v2901 = vpack.c.b16 %v2245, %v2237
    %v2902 = vpack.c.b16 %v2246, %v2238
    %v2903 = vpack.c.b16 %v2247, %v2239
    %v2904 = vpack.c.b16 %v2248, %v2240
    %v2905 = vpack.c.b16 %v2249, %v2241
    %v2906 = vpack.c.b16 %v2250, %v2242
    %v2907 = vpack.c.b16 %v2251, %v2243
    %v2908 = vpack.c.b16 %v2260, %v2252
    %v2909 = vpack.c.b16 %v2261, %v2253
    %v2910 = vpack.c.b16 %v2262, %v2254
    %v2911 = vpack.c.b16 %v2263, %v2255
    %v2912 = vpack.c.b16 %v2264, %v2256
    %v2913 = vpack.c.b16 %v2265, %v2257
    %v2914 = vpack.c.b16 %v2266, %v2258
    %v2915 = vpack.c.b16 %v2267, %v2259
    %v2916 = vpack.c.b16 %v2276, %v2268
    %v2917 = vpack.c.b16 %v2277, %v2269
    %v2918 = vpack.c.b16 %v2278, %v2270
    %v2919 = vpack.c.b16 %v2279, %v2271
    %v2920 = vpack.c.b16 %v2280, %v2272
    %v2921 = vpack.c.b16 %v2281, %v2273
    %v2922 = vpack.c.b16 %v2282, %v2274
    %v2923 = vpack.c.b16 %v2283, %v2275
    %v2924 = vpack.c.b16 %v2292, %v2284
    %v2925 = vpack.c.b16 %v2293, %v2285
    %v2926 = vpack.c.b16 %v2294, %v2286
    %v2927 = vpack.c.b16 %v2295, %v2287
    %v2928 = vpack.c.b16 %v2296, %v2288
    %v2929 = vpack.c.b16 %v2297, %v2289
    %v2930 = vpack.c.b16 %v2298, %v2290
    %v2931 = vpack.c.b16 %v2299, %v2291
    %v2932 = vpack.c.b16 %v2308, %v2300
    %v2933 = vpack.c.b16 %v2309, %v2301
    %v2934 = vpack.c.b16 %v2310, %v2302
    %v2935 = vpack.c.b16 %v2311, %v2303
    %v2936 = vpack.c.b16 %v2312, %v2304
    %v2937 = vpack.c.b16 %v2313, %v2305
    %v2938 = vpack.c.b16 %v2314, %v2306
    %v2939 = vpack.c.b16 %v2315, %v2307
    %v2940 = vpack.c.b16 %v2324, %v2316
    %v2941 = vpack.c.b16 %v2325, %v2317
    %v2942 = vpack.c.b16 %v2326, %v2318
    %v2943 = vpack.c.b16 %v2327, %v2319
    %v2944 = vpack.c.b16 %v2328, %v2320
    %v2945 = vpack.c.b16 %v2329, %v2321
    %v2946 = vpack.c.b16 %v2330, %v2322
    %v2947 = vpack.c.b16 %v2331, %v2323
    %v2948 = vpack.c.b16 %v2340, %v2332
    %v2949 = vpack.c.b16 %v2341, %v2333
    %v2950 = vpack.c.b16 %v2342, %v2334
    %v2951 = vpack.c.b16 %v2343, %v2335
    %v2952 = vpack.c.b16 %v2344, %v2336
    %v2953 = vpack.c.b16 %v2345, %v2337
    %v2954 = vpack.c.b16 %v2346, %v2338
    %v2955 = vpack.c.b16 %v2347, %v2339
    %v2956 = vpack.c.b16 %v2356, %v2348
    %v2957 = vpack.c.b16 %v2357, %v2349
    %v2958 = vpack.c.b16 %v2358, %v2350
    %v2959 = vpack.c.b16 %v2359, %v2351
    %v2960 = vpack.c.b16 %v2360, %v2352
    %v2961 = vpack.c.b16 %v2361, %v2353
    %v2962 = vpack.c.b16 %v2362, %v2354
    %v2963 = vpack.c.b16 %v2363, %v2355
    %v2964 = vpack.c.b16 %v2372, %v2364
    %v2965 = vpack.c.b16 %v2373, %v2365
    %v2966 = vpack.c.b16 %v2374, %v2366
    %v2967 = vpack.c.b16 %v2375, %v2367
    %v2968 = vpack.c.b16 %v2376, %v2368
    %v2969 = vpack.c.b16 %v2377, %v2369
    %v2970 = vpack.c.b16 %v2378, %v2370
    %v2971 = vpack.c.b16 %v2379, %v2371
    %v2972 = vpack.c.b16 %v2388, %v2380
    %v2973 = vpack.c.b16 %v2389, %v2381
    %v2974 = vpack.c.b16 %v2390, %v2382
    %v2975 = vpack.c.b16 %v2391, %v2383
    %v2976 = vpack.c.b16 %v2392, %v2384
    %v2977 = vpack.c.b16 %v2393, %v2385
    %v2978 = vpack.c.b16 %v2394, %v2386
    %v2979 = vpack.c.b16 %v2395, %v2387
    %v2980 = vpack.c.b16 %v2404, %v2396
    %v2981 = vpack.c.b16 %v2405, %v2397
    %v2982 = vpack.c.b16 %v2406, %v2398
    %v2983 = vpack.c.b16 %v2407, %v2399
    %v2984 = vpack.c.b16 %v2408, %v2400
    %v2985 = vpack.c.b16 %v2409, %v2401
    %v2986 = vpack.c.b16 %v2410, %v2402
    %v2987 = vpack.c.b16 %v2411, %v2403
    %v2988 = vpack.c.b16 %v2420, %v2412
    %v2989 = vpack.c.b16 %v2421, %v2413
    %v2990 = vpack.c.b16 %v2422, %v2414
    %v2991 = vpack.c.b16 %v2423, %v2415
    %v2992 = vpack.c.b16 %v2424, %v2416
    %v2993 = vpack.c.b16 %v2425, %v2417
    %v2994 = vpack.c.b16 %v2426, %v2418
    %v2995 = vpack.c.b16 %v2427, %v2419
    %v2996 = vpack.c.b16 %v2436, %v2428
    %v2997 = vpack.c.b16 %v2437, %v2429
    %v2998 = vpack.c.b16 %v2438, %v2430
    %v2999 = vpack.c.b16 %v2439, %v2431
    %v3000 = vpack.c.b16 %v2440, %v2432
    %v3001 = vpack.c.b16 %v2441, %v2433
    %v3002 = vpack.c.b16 %v2442, %v2434
    %v3003 = vpack.c.b16 %v2443, %v2435
    %v3004 = vpack.c.b16 %v2452, %v2444
    %v3005 = vpack.c.b16 %v2453, %v2445
    %v3006 = vpack.c.b16 %v2454, %v2446
    %v3007 = vpack.c.b16 %v2455, %v2447
    %v3008 = vpack.c.b16 %v2456, %v2448
    %v3009 = vpack.c.b16 %v2457, %v2449
    %v3010 = vpack.c.b16 %v2458, %v2450
    %v3011 = vpack.c.b16 %v2459, %v2451
    %v3012 = vpack.c.b16 %v2468, %v2460
    %v3013 = vpack.c.b16 %v2469, %v2461
    %v3014 = vpack.c.b16 %v2470, %v2462
    %v3015 = vpack.c.b16 %v2471, %v2463
    %v3016 = vpack.c.b16 %v2472, %v2464
    %v3017 = vpack.c.b16 %v2473, %v2465
    %v3018 = vpack.c.b16 %v2474, %v2466
    %v3019 = vpack.c.b16 %v2475, %v2467
    %v3020 = vpack.c.b16 %v2484, %v2476
    %v3021 = vpack.c.b16 %v2485, %v2477
    %v3022 = vpack.c.b16 %v2486, %v2478
    %v3023 = vpack.c.b16 %v2487, %v2479
    %v3024 = vpack.c.b16 %v2488, %v2480
    %v3025 = vpack.c.b16 %v2489, %v2481
    %v3026 = vpack.c.b16 %v2490, %v2482
    %v3027 = vpack.c.b16 %v2491, %v2483
    %v3028 = vpack.c.b16 %v2500, %v2492
    %v3029 = vpack.c.b16 %v2501, %v2493
    %v3030 = vpack.c.b16 %v2502, %v2494
    %v3031 = vpack.c.b16 %v2503, %v2495
    %v3032 = vpack.c.b16 %v2504, %v2496
    %v3033 = vpack.c.b16 %v2505, %v2497
    %v3034 = vpack.c.b16 %v2506, %v2498
    %v3035 = vpack.c.b16 %v2507, %v2499
    %v3036 = vpack.c.b16 %v2516, %v2508
    %v3037 = vpack.c.b16 %v2517, %v2509
    %v3038 = vpack.c.b16 %v2518, %v2510
    %v3039 = vpack.c.b16 %v2519, %v2511
    %v3040 = vpack.c.b16 %v2520, %v2512
    %v3041 = vpack.c.b16 %v2521, %v2513
    %v3042 = vpack.c.b16 %v2522, %v2514
    %v3043 = vpack.c.b16 %v2523, %v2515
    %v3044 = vpack.c.b16 %v2532, %v2524
    %v3045 = vpack.c.b16 %v2533, %v2525
    %v3046 = vpack.c.b16 %v2534, %v2526
    %v3047 = vpack.c.b16 %v2535, %v2527
    %v3048 = vpack.c.b16 %v2536, %v2528
    %v3049 = vpack.c.b16 %v2537, %v2529
    %v3050 = vpack.c.b16 %v2538, %v2530
    %v3051 = vpack.c.b16 %v2539, %v2531
    %3564 = vmatprep.subr.bf16.mxu0 %v2541
    %3565 = vmatpush1.bf16.msra.mxu0 %v2540
    %3566 = vmatprep.subr.bf16.mxu0 %v2549
    %3567 = vmatpush1.bf16.msra.mxu0 %v2548
    %3568 = vmatprep.subr.bf16.mxu0 %v2557
    %3569 = vmatpush1.bf16.msra.mxu0 %v2556
    %3570 = vmatprep.subr.bf16.mxu0 %v2565
    %3571 = vmatpush1.bf16.msra.mxu0 %v2564
    %3572 = vmatprep.subr.bf16.mxu0 %v2573
    %3573 = vmatpush1.bf16.msra.mxu0 %v2572
    %3574 = vmatprep.subr.bf16.mxu0 %v2581
    %3575 = vmatpush1.bf16.msra.mxu0 %v2580
    %3576 = vmatprep.subr.bf16.mxu0 %v2589
    %3577 = vmatpush1.bf16.msra.mxu0 %v2588
    %3578 = vmatprep.subr.bf16.mxu0 %v2597
    %3579 = vmatpush1.bf16.msra.mxu0 %v2596
    %3580 = vmatprep.subr.bf16.mxu0 %v2605
    %3581 = vmatpush1.bf16.msra.mxu0 %v2604
    %3582 = vmatprep.subr.bf16.mxu0 %v2613
    %3583 = vmatpush1.bf16.msra.mxu0 %v2612
    %3584 = vmatprep.subr.bf16.mxu0 %v2621
    %3585 = vmatpush1.bf16.msra.mxu0 %v2620
    %3586 = vmatprep.subr.bf16.mxu0 %v2629
    %3587 = vmatpush1.bf16.msra.mxu0 %v2628
    %3588 = vmatprep.subr.bf16.mxu0 %v2637
    %3589 = vmatpush1.bf16.msra.mxu0 %v2636
    %3590 = vmatprep.subr.bf16.mxu0 %v2645
    %3591 = vmatpush1.bf16.msra.mxu0 %v2644
    %3592 = vmatprep.subr.bf16.mxu0 %v2653
    %3593 = vmatpush1.bf16.msra.mxu0 %v2652
    %3594 = vmatprep.subr.bf16.mxu0 %v2661
    %3595 = vmatpush1.bf16.msra.mxu0 %v2660
    %3596 = vmatprep.mubr.bf16.mxu0 %v443
    %3597 = vmatmul.mubr.bf16.gmra.mrb[0].mxu0 %v442
    %v3598 = vpop.f32.mrb[0].mxu0
    %v3599 = vadd.f32 %v967, %v3598
    %v3600 = vpop.f32.mrb[0].mxu0
    %v3601 = vadd.f32 %v971, %v3600
    %v3602 = vpop.f32.mrb[0].mxu0
    %v3603 = vadd.f32 %v967, %v3602
    %v3604 = vpop.f32.mrb[0].mxu0
    %v3605 = vadd.f32 %v971, %v3604
    %3606 = vdwg.mxu0
    %3607 = vmatprep.subr.bf16.mxu0 %v2669
    %3608 = vmatpush1.bf16.msra.mxu0 %v2668
    %3609 = vmatprep.subr.bf16.mxu0 %v2677
    %3610 = vmatpush1.bf16.msra.mxu0 %v2676
    %3611 = vmatprep.subr.bf16.mxu0 %v2685
    %3612 = vmatpush1.bf16.msra.mxu0 %v2684
    %3613 = vmatprep.subr.bf16.mxu0 %v2693
    %3614 = vmatpush1.bf16.msra.mxu0 %v2692
    %3615 = vmatprep.subr.bf16.mxu0 %v2701
    %3616 = vmatpush1.bf16.msra.mxu0 %v2700
    %3617 = vmatprep.subr.bf16.mxu0 %v2709
    %3618 = vmatpush1.bf16.msra.mxu0 %v2708
    %3619 = vmatprep.subr.bf16.mxu0 %v2717
    %3620 = vmatpush1.bf16.msra.mxu0 %v2716
    %3621 = vmatprep.subr.bf16.mxu0 %v2725
    %3622 = vmatpush1.bf16.msra.mxu0 %v2724
    %3623 = vmatprep.subr.bf16.mxu0 %v2733
    %3624 = vmatpush1.bf16.msra.mxu0 %v2732
    %3625 = vmatprep.subr.bf16.mxu0 %v2741
    %3626 = vmatpush1.bf16.msra.mxu0 %v2740
    %3627 = vmatprep.subr.bf16.mxu0 %v2749
    %3628 = vmatpush1.bf16.msra.mxu0 %v2748
    %3629 = vmatprep.subr.bf16.mxu0 %v2757
    %3630 = vmatpush1.bf16.msra.mxu0 %v2756
    %3631 = vmatprep.subr.bf16.mxu0 %v2765
    %3632 = vmatpush1.bf16.msra.mxu0 %v2764
    %3633 = vmatprep.subr.bf16.mxu0 %v2773
    %3634 = vmatpush1.bf16.msra.mxu0 %v2772
    %3635 = vmatprep.subr.bf16.mxu0 %v2781
    %3636 = vmatpush1.bf16.msra.mxu0 %v2780
    %3637 = vmatprep.subr.bf16.mxu0 %v2789
    %3638 = vmatpush1.bf16.msra.mxu0 %v2788
    %3639 = vmatprep.mubr.bf16.mxu0 %v445
    %3640 = vmatmul.mubr.bf16.gmra.mrb[0].mxu0 %v444
    %v3641 = vpop.f32.mrb[0].mxu0
    %v3642 = vadd.f32 %v3599, %v3641
    %v3643 = vpop.f32.mrb[0].mxu0
    %v3644 = vadd.f32 %v3601, %v3643
    %v3645 = vpop.f32.mrb[0].mxu0
    %v3646 = vadd.f32 %v3603, %v3645
    %v3647 = vpop.f32.mrb[0].mxu0
    %v3648 = vadd.f32 %v3605, %v3647
    %3649 = vdwg.mxu0
    %3650 = vmatprep.subr.bf16.mxu0 %v2797
    %3651 = vmatpush1.bf16.msra.mxu0 %v2796
    %3652 = vmatprep.subr.bf16.mxu0 %v2805
    %3653 = vmatpush1.bf16.msra.mxu0 %v2804
    %3654 = vmatprep.subr.bf16.mxu0 %v2813
    %3655 = vmatpush1.bf16.msra.mxu0 %v2812
    %3656 = vmatprep.subr.bf16.mxu0 %v2821
    %3657 = vmatpush1.bf16.msra.mxu0 %v2820
    %3658 = vmatprep.subr.bf16.mxu0 %v2829
    %3659 = vmatpush1.bf16.msra.mxu0 %v2828
    %3660 = vmatprep.subr.bf16.mxu0 %v2837
    %3661 = vmatpush1.bf16.msra.mxu0 %v2836
    %3662 = vmatprep.subr.bf16.mxu0 %v2845
    %3663 = vmatpush1.bf16.msra.mxu0 %v2844
    %3664 = vmatprep.subr.bf16.mxu0 %v2853
    %3665 = vmatpush1.bf16.msra.mxu0 %v2852
    %3666 = vmatprep.subr.bf16.mxu0 %v2861
    %3667 = vmatpush1.bf16.msra.mxu0 %v2860
    %3668 = vmatprep.subr.bf16.mxu0 %v2869
    %3669 = vmatpush1.bf16.msra.mxu0 %v2868
    %3670 = vmatprep.subr.bf16.mxu0 %v2877
    %3671 = vmatpush1.bf16.msra.mxu0 %v2876
    %3672 = vmatprep.subr.bf16.mxu0 %v2885
    %3673 = vmatpush1.bf16.msra.mxu0 %v2884
    %3674 = vmatprep.subr.bf16.mxu0 %v2893
    %3675 = vmatpush1.bf16.msra.mxu0 %v2892
    %3676 = vmatprep.subr.bf16.mxu0 %v2901
    %3677 = vmatpush1.bf16.msra.mxu0 %v2900
    %3678 = vmatprep.subr.bf16.mxu0 %v2909
    %3679 = vmatpush1.bf16.msra.mxu0 %v2908
    %3680 = vmatprep.subr.bf16.mxu0 %v2917
    %3681 = vmatpush1.bf16.msra.mxu0 %v2916
    %3682 = vmatprep.mubr.bf16.mxu0 %v447
    %3683 = vmatmul.mubr.bf16.gmra.mrb[0].mxu0 %v446
    %v3684 = vpop.f32.mrb[0].mxu0
    %v3685 = vadd.f32 %v3642, %v3684
    %v3686 = vpop.f32.mrb[0].mxu0
    %v3687 = vadd.f32 %v3644, %v3686
    %v3688 = vpop.f32.mrb[0].mxu0
    %v3689 = vadd.f32 %v3646, %v3688
    %v3690 = vpop.f32.mrb[0].mxu0
    %v3691 = vadd.f32 %v3648, %v3690
    %3692 = vdwg.mxu0
    %3693 = vmatprep.subr.bf16.mxu0 %v2925
    %3694 = vmatpush1.bf16.msra.mxu0 %v2924
    %3695 = vmatprep.subr.bf16.mxu0 %v2933
    %3696 = vmatpush1.bf16.msra.mxu0 %v2932
    %3697 = vmatprep.subr.bf16.mxu0 %v2941
    %3698 = vmatpush1.bf16.msra.mxu0 %v2940
    %3699 = vmatprep.subr.bf16.mxu0 %v2949
    %3700 = vmatpush1.bf16.msra.mxu0 %v2948
    %3701 = vmatprep.subr.bf16.mxu0 %v2957
    %3702 = vmatpush1.bf16.msra.mxu0 %v2956
    %3703 = vmatprep.subr.bf16.mxu0 %v2965
    %3704 = vmatpush1.bf16.msra.mxu0 %v2964
    %3705 = vmatprep.subr.bf16.mxu0 %v2973
    %3706 = vmatpush1.bf16.msra.mxu0 %v2972
    %3707 = vmatprep.subr.bf16.mxu0 %v2981
    %3708 = vmatpush1.bf16.msra.mxu0 %v2980
    %3709 = vmatprep.subr.bf16.mxu0 %v2989
    %3710 = vmatpush1.bf16.msra.mxu0 %v2988
    %3711 = vmatprep.subr.bf16.mxu0 %v2997
    %3712 = vmatpush1.bf16.msra.mxu0 %v2996
    %3713 = vmatprep.subr.bf16.mxu0 %v3005
    %3714 = vmatpush1.bf16.msra.mxu0 %v3004
    %3715 = vmatprep.subr.bf16.mxu0 %v3013
    %3716 = vmatpush1.bf16.msra.mxu0 %v3012
    %3717 = vmatprep.subr.bf16.mxu0 %v3021
    %3718 = vmatpush1.bf16.msra.mxu0 %v3020
    %3719 = vmatprep.subr.bf16.mxu0 %v3029
    %3720 = vmatpush1.bf16.msra.mxu0 %v3028
    %3721 = vmatprep.subr.bf16.mxu0 %v3037
    %3722 = vmatpush1.bf16.msra.mxu0 %v3036
    %3723 = vmatprep.subr.bf16.mxu0 %v3045
    %3724 = vmatpush1.bf16.msra.mxu0 %v3044
    %3725 = vmatprep.mubr.bf16.mxu0 %v449
    %3726 = vmatmul.mubr.bf16.gmra.mrb[0].mxu0 %v448
    %v3727 = vpop.f32.mrb[0].mxu0
    %v3728 = vadd.f32 %v3685, %v3727
    %v3729 = vpop.f32.mrb[0].mxu0
    %v3730 = vadd.f32 %v3687, %v3729
    %v3731 = vpop.f32.mrb[0].mxu0
    %v3732 = vadd.f32 %v3689, %v3731
    %v3733 = vpop.f32.mrb[0].mxu0
    %v3734 = vadd.f32 %v3691, %v3733
    %3735 = vdwg.mxu0
    %3736 = vmatprep.subr.bf16.mxu0 %v2543
    %3737 = vmatpush1.bf16.msra.mxu0 %v2542
    %3738 = vmatprep.subr.bf16.mxu0 %v2551
    %3739 = vmatpush1.bf16.msra.mxu0 %v2550
    %3740 = vmatprep.subr.bf16.mxu0 %v2559
    %3741 = vmatpush1.bf16.msra.mxu0 %v2558
    %3742 = vmatprep.subr.bf16.mxu0 %v2567
    %3743 = vmatpush1.bf16.msra.mxu0 %v2566
    %3744 = vmatprep.subr.bf16.mxu0 %v2575
    %3745 = vmatpush1.bf16.msra.mxu0 %v2574
    %3746 = vmatprep.subr.bf16.mxu0 %v2583
    %3747 = vmatpush1.bf16.msra.mxu0 %v2582
    %3748 = vmatprep.subr.bf16.mxu0 %v2591
    %3749 = vmatpush1.bf16.msra.mxu0 %v2590
    %3750 = vmatprep.subr.bf16.mxu0 %v2599
    %3751 = vmatpush1.bf16.msra.mxu0 %v2598
    %3752 = vmatprep.subr.bf16.mxu0 %v2607
    %3753 = vmatpush1.bf16.msra.mxu0 %v2606
    %3754 = vmatprep.subr.bf16.mxu0 %v2615
    %3755 = vmatpush1.bf16.msra.mxu0 %v2614
    %3756 = vmatprep.subr.bf16.mxu0 %v2623
    %3757 = vmatpush1.bf16.msra.mxu0 %v2622
    %3758 = vmatprep.subr.bf16.mxu0 %v2631
    %3759 = vmatpush1.bf16.msra.mxu0 %v2630
    %3760 = vmatprep.subr.bf16.mxu0 %v2639
    %3761 = vmatpush1.bf16.msra.mxu0 %v2638
    %3762 = vmatprep.subr.bf16.mxu0 %v2647
    %3763 = vmatpush1.bf16.msra.mxu0 %v2646
    %3764 = vmatprep.subr.bf16.mxu0 %v2655
    %3765 = vmatpush1.bf16.msra.mxu0 %v2654
    %3766 = vmatprep.subr.bf16.mxu0 %v2663
    %3767 = vmatpush1.bf16.msra.mxu0 %v2662
    %3768 = vmatprep.mubr.bf16.mxu0 %v443
    %3769 = vmatmul.mubr.bf16.gmra.mrb[0].mxu0 %v442
    %v3770 = vpop.f32.mrb[0].mxu0
    %v3771 = vadd.f32 %v975, %v3770
    %v3772 = vpop.f32.mrb[0].mxu0
    %v3773 = vadd.f32 %v979, %v3772
    %v3774 = vpop.f32.mrb[0].mxu0
    %v3775 = vadd.f32 %v975, %v3774
    %v3776 = vpop.f32.mrb[0].mxu0
    %v3777 = vadd.f32 %v979, %v3776
    %3778 = vdwg.mxu0
    %3779 = vmatprep.subr.bf16.mxu0 %v2671
    %3780 = vmatpush1.bf16.msra.mxu0 %v2670
    %3781 = vmatprep.subr.bf16.mxu0 %v2679
    %3782 = vmatpush1.bf16.msra.mxu0 %v2678
    %3783 = vmatprep.subr.bf16.mxu0 %v2687
    %3784 = vmatpush1.bf16.msra.mxu0 %v2686
    %3785 = vmatprep.subr.bf16.mxu0 %v2695
    %3786 = vmatpush1.bf16.msra.mxu0 %v2694
    %3787 = vmatprep.subr.bf16.mxu0 %v2703
    %3788 = vmatpush1.bf16.msra.mxu0 %v2702
    %3789 = vmatprep.subr.bf16.mxu0 %v2711
    %3790 = vmatpush1.bf16.msra.mxu0 %v2710
    %3791 = vmatprep.subr.bf16.mxu0 %v2719
    %3792 = vmatpush1.bf16.msra.mxu0 %v2718
    %3793 = vmatprep.subr.bf16.mxu0 %v2727
    %3794 = vmatpush1.bf16.msra.mxu0 %v2726
    %3795 = vmatprep.subr.bf16.mxu0 %v2735
    %3796 = vmatpush1.bf16.msra.mxu0 %v2734
    %3797 = vmatprep.subr.bf16.mxu0 %v2743
    %3798 = vmatpush1.bf16.msra.mxu0 %v2742
    %3799 = vmatprep.subr.bf16.mxu0 %v2751
    %3800 = vmatpush1.bf16.msra.mxu0 %v2750
    %3801 = vmatprep.subr.bf16.mxu0 %v2759
    %3802 = vmatpush1.bf16.msra.mxu0 %v2758
    %3803 = vmatprep.subr.bf16.mxu0 %v2767
    %3804 = vmatpush1.bf16.msra.mxu0 %v2766
    %3805 = vmatprep.subr.bf16.mxu0 %v2775
    %3806 = vmatpush1.bf16.msra.mxu0 %v2774
    %3807 = vmatprep.subr.bf16.mxu0 %v2783
    %3808 = vmatpush1.bf16.msra.mxu0 %v2782
    %3809 = vmatprep.subr.bf16.mxu0 %v2791
    %3810 = vmatpush1.bf16.msra.mxu0 %v2790
    %3811 = vmatprep.mubr.bf16.mxu0 %v445
    %3812 = vmatmul.mubr.bf16.gmra.mrb[0].mxu0 %v444
    %v3813 = vpop.f32.mrb[0].mxu0
    %v3814 = vadd.f32 %v3771, %v3813
    %v3815 = vpop.f32.mrb[0].mxu0
    %v3816 = vadd.f32 %v3773, %v3815
    %v3817 = vpop.f32.mrb[0].mxu0
    %v3818 = vadd.f32 %v3775, %v3817
    %v3819 = vpop.f32.mrb[0].mxu0
    %v3820 = vadd.f32 %v3777, %v3819
    %3821 = vdwg.mxu0
    %3822 = vmatprep.subr.bf16.mxu0 %v2799
    %3823 = vmatpush1.bf16.msra.mxu0 %v2798
    %3824 = vmatprep.subr.bf16.mxu0 %v2807
    %3825 = vmatpush1.bf16.msra.mxu0 %v2806
    %3826 = vmatprep.subr.bf16.mxu0 %v2815
    %3827 = vmatpush1.bf16.msra.mxu0 %v2814
    %3828 = vmatprep.subr.bf16.mxu0 %v2823
    %3829 = vmatpush1.bf16.msra.mxu0 %v2822
    %3830 = vmatprep.subr.bf16.mxu0 %v2831
    %3831 = vmatpush1.bf16.msra.mxu0 %v2830
    %3832 = vmatprep.subr.bf16.mxu0 %v2839
    %3833 = vmatpush1.bf16.msra.mxu0 %v2838
    %3834 = vmatprep.subr.bf16.mxu0 %v2847
    %3835 = vmatpush1.bf16.msra.mxu0 %v2846
    %3836 = vmatprep.subr.bf16.mxu0 %v2855
    %3837 = vmatpush1.bf16.msra.mxu0 %v2854
    %3838 = vmatprep.subr.bf16.mxu0 %v2863
    %3839 = vmatpush1.bf16.msra.mxu0 %v2862
    %3840 = vmatprep.subr.bf16.mxu0 %v2871
    %3841 = vmatpush1.bf16.msra.mxu0 %v2870
    %3842 = vmatprep.subr.bf16.mxu0 %v2879
    %3843 = vmatpush1.bf16.msra.mxu0 %v2878
    %3844 = vmatprep.subr.bf16.mxu0 %v2887
    %3845 = vmatpush1.bf16.msra.mxu0 %v2886
    %3846 = vmatprep.subr.bf16.mxu0 %v2895
    %3847 = vmatpush1.bf16.msra.mxu0 %v2894
    %3848 = vmatprep.subr.bf16.mxu0 %v2903
    %3849 = vmatpush1.bf16.msra.mxu0 %v2902
    %3850 = vmatprep.subr.bf16.mxu0 %v2911
    %3851 = vmatpush1.bf16.msra.mxu0 %v2910
    %3852 = vmatprep.subr.bf16.mxu0 %v2919
    %3853 = vmatpush1.bf16.msra.mxu0 %v2918
    %3854 = vmatprep.mubr.bf16.mxu0 %v447
    %3855 = vmatmul.mubr.bf16.gmra.mrb[0].mxu0 %v446
    %v3856 = vpop.f32.mrb[0].mxu0
    %v3857 = vadd.f32 %v3814, %v3856
    %v3858 = vpop.f32.mrb[0].mxu0
    %v3859 = vadd.f32 %v3816, %v3858
    %v3860 = vpop.f32.mrb[0].mxu0
    %v3861 = vadd.f32 %v3818, %v3860
    %v3862 = vpop.f32.mrb[0].mxu0
    %v3863 = vadd.f32 %v3820, %v3862
    %3864 = vdwg.mxu0
    %3865 = vmatprep.subr.bf16.mxu0 %v2927
    %3866 = vmatpush1.bf16.msra.mxu0 %v2926
    %3867 = vmatprep.subr.bf16.mxu0 %v2935
    %3868 = vmatpush1.bf16.msra.mxu0 %v2934
    %3869 = vmatprep.subr.bf16.mxu0 %v2943
    %3870 = vmatpush1.bf16.msra.mxu0 %v2942
    %3871 = vmatprep.subr.bf16.mxu0 %v2951
    %3872 = vmatpush1.bf16.msra.mxu0 %v2950
    %3873 = vmatprep.subr.bf16.mxu0 %v2959
    %3874 = vmatpush1.bf16.msra.mxu0 %v2958
    %3875 = vmatprep.subr.bf16.mxu0 %v2967
    %3876 = vmatpush1.bf16.msra.mxu0 %v2966
    %3877 = vmatprep.subr.bf16.mxu0 %v2975
    %3878 = vmatpush1.bf16.msra.mxu0 %v2974
    %3879 = vmatprep.subr.bf16.mxu0 %v2983
    %3880 = vmatpush1.bf16.msra.mxu0 %v2982
    %3881 = vmatprep.subr.bf16.mxu0 %v2991
    %3882 = vmatpush1.bf16.msra.mxu0 %v2990
    %3883 = vmatprep.subr.bf16.mxu0 %v2999
    %3884 = vmatpush1.bf16.msra.mxu0 %v2998
    %3885 = vmatprep.subr.bf16.mxu0 %v3007
    %3886 = vmatpush1.bf16.msra.mxu0 %v3006
    %3887 = vmatprep.subr.bf16.mxu0 %v3015
    %3888 = vmatpush1.bf16.msra.mxu0 %v3014
    %3889 = vmatprep.subr.bf16.mxu0 %v3023
    %3890 = vmatpush1.bf16.msra.mxu0 %v3022
    %3891 = vmatprep.subr.bf16.mxu0 %v3031
    %3892 = vmatpush1.bf16.msra.mxu0 %v3030
    %3893 = vmatprep.subr.bf16.mxu0 %v3039
    %3894 = vmatpush1.bf16.msra.mxu0 %v3038
    %3895 = vmatprep.subr.bf16.mxu0 %v3047
    %3896 = vmatpush1.bf16.msra.mxu0 %v3046
    %3897 = vmatprep.mubr.bf16.mxu0 %v449
    %3898 = vmatmul.mubr.bf16.gmra.mrb[0].mxu0 %v448
    %v3899 = vpop.f32.mrb[0].mxu0
    %v3900 = vadd.f32 %v3857, %v3899
    %v3901 = vpop.f32.mrb[0].mxu0
    %v3902 = vadd.f32 %v3859, %v3901
    %v3903 = vpop.f32.mrb[0].mxu0
    %v3904 = vadd.f32 %v3861, %v3903
    %v3905 = vpop.f32.mrb[0].mxu0
    %v3906 = vadd.f32 %v3863, %v3905
    %3907 = vdwg.mxu0
    %3908 = vmatprep.subr.bf16.mxu0 %v2545
    %3909 = vmatpush1.bf16.msra.mxu0 %v2544
    %3910 = vmatprep.subr.bf16.mxu0 %v2553
    %3911 = vmatpush1.bf16.msra.mxu0 %v2552
    %3912 = vmatprep.subr.bf16.mxu0 %v2561
    %3913 = vmatpush1.bf16.msra.mxu0 %v2560
    %3914 = vmatprep.subr.bf16.mxu0 %v2569
    %3915 = vmatpush1.bf16.msra.mxu0 %v2568
    %3916 = vmatprep.subr.bf16.mxu0 %v2577
    %3917 = vmatpush1.bf16.msra.mxu0 %v2576
    %3918 = vmatprep.subr.bf16.mxu0 %v2585
    %3919 = vmatpush1.bf16.msra.mxu0 %v2584
    %3920 = vmatprep.subr.bf16.mxu0 %v2593
    %3921 = vmatpush1.bf16.msra.mxu0 %v2592
    %3922 = vmatprep.subr.bf16.mxu0 %v2601
    %3923 = vmatpush1.bf16.msra.mxu0 %v2600
    %3924 = vmatprep.subr.bf16.mxu0 %v2609
    %3925 = vmatpush1.bf16.msra.mxu0 %v2608
    %3926 = vmatprep.subr.bf16.mxu0 %v2617
    %3927 = vmatpush1.bf16.msra.mxu0 %v2616
    %3928 = vmatprep.subr.bf16.mxu0 %v2625
    %3929 = vmatpush1.bf16.msra.mxu0 %v2624
    %3930 = vmatprep.subr.bf16.mxu0 %v2633
    %3931 = vmatpush1.bf16.msra.mxu0 %v2632
    %3932 = vmatprep.subr.bf16.mxu0 %v2641
    %3933 = vmatpush1.bf16.msra.mxu0 %v2640
    %3934 = vmatprep.subr.bf16.mxu0 %v2649
    %3935 = vmatpush1.bf16.msra.mxu0 %v2648
    %3936 = vmatprep.subr.bf16.mxu0 %v2657
    %3937 = vmatpush1.bf16.msra.mxu0 %v2656
    %3938 = vmatprep.subr.bf16.mxu0 %v2665
    %3939 = vmatpush1.bf16.msra.mxu0 %v2664
    %3940 = vmatprep.mubr.bf16.mxu0 %v443
    %3941 = vmatmul.mubr.bf16.gmra.mrb[0].mxu0 %v442
    %v3942 = vpop.f32.mrb[0].mxu0
    %v3943 = vadd.f32 %v983, %v3942
    %v3944 = vpop.f32.mrb[0].mxu0
    %v3945 = vadd.f32 %v987, %v3944
    %v3946 = vpop.f32.mrb[0].mxu0
    %v3947 = vadd.f32 %v983, %v3946
    %v3948 = vpop.f32.mrb[0].mxu0
    %v3949 = vadd.f32 %v987, %v3948
    %3950 = vdwg.mxu0
    %3951 = vmatprep.subr.bf16.mxu0 %v2673
    %3952 = vmatpush1.bf16.msra.mxu0 %v2672
    %3953 = vmatprep.subr.bf16.mxu0 %v2681
    %3954 = vmatpush1.bf16.msra.mxu0 %v2680
    %3955 = vmatprep.subr.bf16.mxu0 %v2689
    %3956 = vmatpush1.bf16.msra.mxu0 %v2688
    %3957 = vmatprep.subr.bf16.mxu0 %v2697
    %3958 = vmatpush1.bf16.msra.mxu0 %v2696
    %3959 = vmatprep.subr.bf16.mxu0 %v2705
    %3960 = vmatpush1.bf16.msra.mxu0 %v2704
    %3961 = vmatprep.subr.bf16.mxu0 %v2713
    %3962 = vmatpush1.bf16.msra.mxu0 %v2712
    %3963 = vmatprep.subr.bf16.mxu0 %v2721
    %3964 = vmatpush1.bf16.msra.mxu0 %v2720
    %3965 = vmatprep.subr.bf16.mxu0 %v2729
    %3966 = vmatpush1.bf16.msra.mxu0 %v2728
    %3967 = vmatprep.subr.bf16.mxu0 %v2737
    %3968 = vmatpush1.bf16.msra.mxu0 %v2736
    %3969 = vmatprep.subr.bf16.mxu0 %v2745
    %3970 = vmatpush1.bf16.msra.mxu0 %v2744
    %3971 = vmatprep.subr.bf16.mxu0 %v2753
    %3972 = vmatpush1.bf16.msra.mxu0 %v2752
    %3973 = vmatprep.subr.bf16.mxu0 %v2761
    %3974 = vmatpush1.bf16.msra.mxu0 %v2760
    %3975 = vmatprep.subr.bf16.mxu0 %v2769
    %3976 = vmatpush1.bf16.msra.mxu0 %v2768
    %3977 = vmatprep.subr.bf16.mxu0 %v2777
    %3978 = vmatpush1.bf16.msra.mxu0 %v2776
    %3979 = vmatprep.subr.bf16.mxu0 %v2785
    %3980 = vmatpush1.bf16.msra.mxu0 %v2784
    %3981 = vmatprep.subr.bf16.mxu0 %v2793
    %3982 = vmatpush1.bf16.msra.mxu0 %v2792
    %3983 = vmatprep.mubr.bf16.mxu0 %v445
    %3984 = vmatmul.mubr.bf16.gmra.mrb[0].mxu0 %v444
    %v3985 = vpop.f32.mrb[0].mxu0
    %v3986 = vadd.f32 %v3943, %v3985
    %v3987 = vpop.f32.mrb[0].mxu0
    %v3988 = vadd.f32 %v3945, %v3987
    %v3989 = vpop.f32.mrb[0].mxu0
    %v3990 = vadd.f32 %v3947, %v3989
    %v3991 = vpop.f32.mrb[0].mxu0
    %v3992 = vadd.f32 %v3949, %v3991
    %3993 = vdwg.mxu0
    %3994 = vmatprep.subr.bf16.mxu0 %v2801
    %3995 = vmatpush1.bf16.msra.mxu0 %v2800
    %3996 = vmatprep.subr.bf16.mxu0 %v2809
    %3997 = vmatpush1.bf16.msra.mxu0 %v2808
    %3998 = vmatprep.subr.bf16.mxu0 %v2817
    %3999 = vmatpush1.bf16.msra.mxu0 %v2816
    %4000 = vmatprep.subr.bf16.mxu0 %v2825
    %4001 = vmatpush1.bf16.msra.mxu0 %v2824
    %4002 = vmatprep.subr.bf16.mxu0 %v2833
    %4003 = vmatpush1.bf16.msra.mxu0 %v2832
    %4004 = vmatprep.subr.bf16.mxu0 %v2841
    %4005 = vmatpush1.bf16.msra.mxu0 %v2840
    %4006 = vmatprep.subr.bf16.mxu0 %v2849
    %4007 = vmatpush1.bf16.msra.mxu0 %v2848
    %4008 = vmatprep.subr.bf16.mxu0 %v2857
    %4009 = vmatpush1.bf16.msra.mxu0 %v2856
    %4010 = vmatprep.subr.bf16.mxu0 %v2865
    %4011 = vmatpush1.bf16.msra.mxu0 %v2864
    %4012 = vmatprep.subr.bf16.mxu0 %v2873
    %4013 = vmatpush1.bf16.msra.mxu0 %v2872
    %4014 = vmatprep.subr.bf16.mxu0 %v2881
    %4015 = vmatpush1.bf16.msra.mxu0 %v2880
    %4016 = vmatprep.subr.bf16.mxu0 %v2889
    %4017 = vmatpush1.bf16.msra.mxu0 %v2888
    %4018 = vmatprep.subr.bf16.mxu0 %v2897
    %4019 = vmatpush1.bf16.msra.mxu0 %v2896
    %4020 = vmatprep.subr.bf16.mxu0 %v2905
    %4021 = vmatpush1.bf16.msra.mxu0 %v2904
    %4022 = vmatprep.subr.bf16.mxu0 %v2913
    %4023 = vmatpush1.bf16.msra.mxu0 %v2912
    %4024 = vmatprep.subr.bf16.mxu0 %v2921
    %4025 = vmatpush1.bf16.msra.mxu0 %v2920
    %4026 = vmatprep.mubr.bf16.mxu0 %v447
    %4027 = vmatmul.mubr.bf16.gmra.mrb[0].mxu0 %v446
    %v4028 = vpop.f32.mrb[0].mxu0
    %v4029 = vadd.f32 %v3986, %v4028
    %v4030 = vpop.f32.mrb[0].mxu0
    %v4031 = vadd.f32 %v3988, %v4030
    %v4032 = vpop.f32.mrb[0].mxu0
    %v4033 = vadd.f32 %v3990, %v4032
    %v4034 = vpop.f32.mrb[0].mxu0
    %v4035 = vadd.f32 %v3992, %v4034
    %4036 = vdwg.mxu0
    %4037 = vmatprep.subr.bf16.mxu0 %v2929
    %4038 = vmatpush1.bf16.msra.mxu0 %v2928
    %4039 = vmatprep.subr.bf16.mxu0 %v2937
    %4040 = vmatpush1.bf16.msra.mxu0 %v2936
    %4041 = vmatprep.subr.bf16.mxu0 %v2945
    %4042 = vmatpush1.bf16.msra.mxu0 %v2944
    %4043 = vmatprep.subr.bf16.mxu0 %v2953
    %4044 = vmatpush1.bf16.msra.mxu0 %v2952
    %4045 = vmatprep.subr.bf16.mxu0 %v2961
    %4046 = vmatpush1.bf16.msra.mxu0 %v2960
    %4047 = vmatprep.subr.bf16.mxu0 %v2969
    %4048 = vmatpush1.bf16.msra.mxu0 %v2968
    %4049 = vmatprep.subr.bf16.mxu0 %v2977
    %4050 = vmatpush1.bf16.msra.mxu0 %v2976
    %4051 = vmatprep.subr.bf16.mxu0 %v2985
    %4052 = vmatpush1.bf16.msra.mxu0 %v2984
    %4053 = vmatprep.subr.bf16.mxu0 %v2993
    %4054 = vmatpush1.bf16.msra.mxu0 %v2992
    %4055 = vmatprep.subr.bf16.mxu0 %v3001
    %4056 = vmatpush1.bf16.msra.mxu0 %v3000
    %4057 = vmatprep.subr.bf16.mxu0 %v3009
    %4058 = vmatpush1.bf16.msra.mxu0 %v3008
    %4059 = vmatprep.subr.bf16.mxu0 %v3017
    %4060 = vmatpush1.bf16.msra.mxu0 %v3016
    %4061 = vmatprep.subr.bf16.mxu0 %v3025
    %4062 = vmatpush1.bf16.msra.mxu0 %v3024
    %4063 = vmatprep.subr.bf16.mxu0 %v3033
    %4064 = vmatpush1.bf16.msra.mxu0 %v3032
    %4065 = vmatprep.subr.bf16.mxu0 %v3041
    %4066 = vmatpush1.bf16.msra.mxu0 %v3040
    %4067 = vmatprep.subr.bf16.mxu0 %v3049
    %4068 = vmatpush1.bf16.msra.mxu0 %v3048
    %4069 = vmatprep.mubr.bf16.mxu0 %v449
    %4070 = vmatmul.mubr.bf16.gmra.mrb[0].mxu0 %v448
    %v4071 = vpop.f32.mrb[0].mxu0
    %v4072 = vadd.f32 %v4029, %v4071
    %v4073 = vpop.f32.mrb[0].mxu0
    %v4074 = vadd.f32 %v4031, %v4073
    %v4075 = vpop.f32.mrb[0].mxu0
    %v4076 = vadd.f32 %v4033, %v4075
    %v4077 = vpop.f32.mrb[0].mxu0
    %v4078 = vadd.f32 %v4035, %v4077
    %4079 = vdwg.mxu0
    %4080 = vmatprep.subr.bf16.mxu0 %v2547
    %4081 = vmatpush1.bf16.msra.mxu0 %v2546
    %4082 = vmatprep.subr.bf16.mxu0 %v2555
    %4083 = vmatpush1.bf16.msra.mxu0 %v2554
    %4084 = vmatprep.subr.bf16.mxu0 %v2563
    %4085 = vmatpush1.bf16.msra.mxu0 %v2562
    %4086 = vmatprep.subr.bf16.mxu0 %v2571
    %4087 = vmatpush1.bf16.msra.mxu0 %v2570
    %4088 = vmatprep.subr.bf16.mxu0 %v2579
    %4089 = vmatpush1.bf16.msra.mxu0 %v2578
    %4090 = vmatprep.subr.bf16.mxu0 %v2587
    %4091 = vmatpush1.bf16.msra.mxu0 %v2586
    %4092 = vmatprep.subr.bf16.mxu0 %v2595
    %4093 = vmatpush1.bf16.msra.mxu0 %v2594
    %4094 = vmatprep.subr.bf16.mxu0 %v2603
    %4095 = vmatpush1.bf16.msra.mxu0 %v2602
    %4096 = vmatprep.subr.bf16.mxu0 %v2611
    %4097 = vmatpush1.bf16.msra.mxu0 %v2610
    %4098 = vmatprep.subr.bf16.mxu0 %v2619
    %4099 = vmatpush1.bf16.msra.mxu0 %v2618
    %4100 = vmatprep.subr.bf16.mxu0 %v2627
    %4101 = vmatpush1.bf16.msra.mxu0 %v2626
    %4102 = vmatprep.subr.bf16.mxu0 %v2635
    %4103 = vmatpush1.bf16.msra.mxu0 %v2634
    %4104 = vmatprep.subr.bf16.mxu0 %v2643
    %4105 = vmatpush1.bf16.msra.mxu0 %v2642
    %4106 = vmatprep.subr.bf16.mxu0 %v2651
    %4107 = vmatpush1.bf16.msra.mxu0 %v2650
    %4108 = vmatprep.subr.bf16.mxu0 %v2659
    %4109 = vmatpush1.bf16.msra.mxu0 %v2658
    %4110 = vmatprep.subr.bf16.mxu0 %v2667
    %4111 = vmatpush1.bf16.msra.mxu0 %v2666
    %4112 = vmatprep.mubr.bf16.mxu0 %v443
    %4113 = vmatmul.mubr.bf16.gmra.mrb[0].mxu0 %v442
    %v4114 = vpop.f32.mrb[0].mxu0
    %v4115 = vadd.f32 %v991, %v4114
    %v4116 = vpop.f32.mrb[0].mxu0
    %v4117 = vadd.f32 %v995, %v4116
    %v4118 = vpop.f32.mrb[0].mxu0
    %v4119 = vadd.f32 %v991, %v4118
    %v4120 = vpop.f32.mrb[0].mxu0
    %v4121 = vadd.f32 %v995, %v4120
    %4122 = vdwg.mxu0
    %4123 = vmatprep.subr.bf16.mxu0 %v2675
    %4124 = vmatpush1.bf16.msra.mxu0 %v2674
    %4125 = vmatprep.subr.bf16.mxu0 %v2683
    %4126 = vmatpush1.bf16.msra.mxu0 %v2682
    %4127 = vmatprep.subr.bf16.mxu0 %v2691
    %4128 = vmatpush1.bf16.msra.mxu0 %v2690
    %4129 = vmatprep.subr.bf16.mxu0 %v2699
    %4130 = vmatpush1.bf16.msra.mxu0 %v2698
    %4131 = vmatprep.subr.bf16.mxu0 %v2707
    %4132 = vmatpush1.bf16.msra.mxu0 %v2706
    %4133 = vmatprep.subr.bf16.mxu0 %v2715
    %4134 = vmatpush1.bf16.msra.mxu0 %v2714
    %4135 = vmatprep.subr.bf16.mxu0 %v2723
    %4136 = vmatpush1.bf16.msra.mxu0 %v2722
    %4137 = vmatprep.subr.bf16.mxu0 %v2731
    %4138 = vmatpush1.bf16.msra.mxu0 %v2730
    %4139 = vmatprep.subr.bf16.mxu0 %v2739
    %4140 = vmatpush1.bf16.msra.mxu0 %v2738
    %4141 = vmatprep.subr.bf16.mxu0 %v2747
    %4142 = vmatpush1.bf16.msra.mxu0 %v2746
    %4143 = vmatprep.subr.bf16.mxu0 %v2755
    %4144 = vmatpush1.bf16.msra.mxu0 %v2754
    %4145 = vmatprep.subr.bf16.mxu0 %v2763
    %4146 = vmatpush1.bf16.msra.mxu0 %v2762
    %4147 = vmatprep.subr.bf16.mxu0 %v2771
    %4148 = vmatpush1.bf16.msra.mxu0 %v2770
    %4149 = vmatprep.subr.bf16.mxu0 %v2779
    %4150 = vmatpush1.bf16.msra.mxu0 %v2778
    %4151 = vmatprep.subr.bf16.mxu0 %v2787
    %4152 = vmatpush1.bf16.msra.mxu0 %v2786
    %4153 = vmatprep.subr.bf16.mxu0 %v2795
    %4154 = vmatpush1.bf16.msra.mxu0 %v2794
    %4155 = vmatprep.mubr.bf16.mxu0 %v445
    %4156 = vmatmul.mubr.bf16.gmra.mrb[0].mxu0 %v444
    %v4157 = vpop.f32.mrb[0].mxu0
    %v4158 = vadd.f32 %v4115, %v4157
    %v4159 = vpop.f32.mrb[0].mxu0
    %v4160 = vadd.f32 %v4117, %v4159
    %v4161 = vpop.f32.mrb[0].mxu0
    %v4162 = vadd.f32 %v4119, %v4161
    %v4163 = vpop.f32.mrb[0].mxu0
    %v4164 = vadd.f32 %v4121, %v4163
    %4165 = vdwg.mxu0
    %4166 = vmatprep.subr.bf16.mxu0 %v2803
    %4167 = vmatpush1.bf16.msra.mxu0 %v2802
    %4168 = vmatprep.subr.bf16.mxu0 %v2811
    %4169 = vmatpush1.bf16.msra.mxu0 %v2810
    %4170 = vmatprep.subr.bf16.mxu0 %v2819
    %4171 = vmatpush1.bf16.msra.mxu0 %v2818
    %4172 = vmatprep.subr.bf16.mxu0 %v2827
    %4173 = vmatpush1.bf16.msra.mxu0 %v2826
    %4174 = vmatprep.subr.bf16.mxu0 %v2835
    %4175 = vmatpush1.bf16.msra.mxu0 %v2834
    %4176 = vmatprep.subr.bf16.mxu0 %v2843
    %4177 = vmatpush1.bf16.msra.mxu0 %v2842
    %4178 = vmatprep.subr.bf16.mxu0 %v2851
    %4179 = vmatpush1.bf16.msra.mxu0 %v2850
    %4180 = vmatprep.subr.bf16.mxu0 %v2859
    %4181 = vmatpush1.bf16.msra.mxu0 %v2858
    %4182 = vmatprep.subr.bf16.mxu0 %v2867
    %4183 = vmatpush1.bf16.msra.mxu0 %v2866
    %4184 = vmatprep.subr.bf16.mxu0 %v2875
    %4185 = vmatpush1.bf16.msra.mxu0 %v2874
    %4186 = vmatprep.subr.bf16.mxu0 %v2883
    %4187 = vmatpush1.bf16.msra.mxu0 %v2882
    %4188 = vmatprep.subr.bf16.mxu0 %v2891
    %4189 = vmatpush1.bf16.msra.mxu0 %v2890
    %4190 = vmatprep.subr.bf16.mxu0 %v2899
    %4191 = vmatpush1.bf16.msra.mxu0 %v2898
    %4192 = vmatprep.subr.bf16.mxu0 %v2907
    %4193 = vmatpush1.bf16.msra.mxu0 %v2906
    %4194 = vmatprep.subr.bf16.mxu0 %v2915
    %4195 = vmatpush1.bf16.msra.mxu0 %v2914
    %4196 = vmatprep.subr.bf16.mxu0 %v2923
    %4197 = vmatpush1.bf16.msra.mxu0 %v2922
    %4198 = vmatprep.mubr.bf16.mxu0 %v447
    %4199 = vmatmul.mubr.bf16.gmra.mrb[0].mxu0 %v446
    %v4200 = vpop.f32.mrb[0].mxu0
    %v4201 = vadd.f32 %v4158, %v4200
    %v4202 = vpop.f32.mrb[0].mxu0
    %v4203 = vadd.f32 %v4160, %v4202
    %v4204 = vpop.f32.mrb[0].mxu0
    %v4205 = vadd.f32 %v4162, %v4204
    %v4206 = vpop.f32.mrb[0].mxu0
    %v4207 = vadd.f32 %v4164, %v4206
    %4208 = vdwg.mxu0
    %4209 = vmatprep.subr.bf16.mxu0 %v2931
    %4210 = vmatpush1.bf16.msra.mxu0 %v2930
    %4211 = vmatprep.subr.bf16.mxu0 %v2939
    %4212 = vmatpush1.bf16.msra.mxu0 %v2938
    %4213 = vmatprep.subr.bf16.mxu0 %v2947
    %4214 = vmatpush1.bf16.msra.mxu0 %v2946
    %4215 = vmatprep.subr.bf16.mxu0 %v2955
    %4216 = vmatpush1.bf16.msra.mxu0 %v2954
    %4217 = vmatprep.subr.bf16.mxu0 %v2963
    %4218 = vmatpush1.bf16.msra.mxu0 %v2962
    %4219 = vmatprep.subr.bf16.mxu0 %v2971
    %4220 = vmatpush1.bf16.msra.mxu0 %v2970
    %4221 = vmatprep.subr.bf16.mxu0 %v2979
    %4222 = vmatpush1.bf16.msra.mxu0 %v2978
    %4223 = vmatprep.subr.bf16.mxu0 %v2987
    %4224 = vmatpush1.bf16.msra.mxu0 %v2986
    %4225 = vmatprep.subr.bf16.mxu0 %v2995
    %4226 = vmatpush1.bf16.msra.mxu0 %v2994
    %4227 = vmatprep.subr.bf16.mxu0 %v3003
    %4228 = vmatpush1.bf16.msra.mxu0 %v3002
    %4229 = vmatprep.subr.bf16.mxu0 %v3011
    %4230 = vmatpush1.bf16.msra.mxu0 %v3010
    %4231 = vmatprep.subr.bf16.mxu0 %v3019
    %4232 = vmatpush1.bf16.msra.mxu0 %v3018
    %4233 = vmatprep.subr.bf16.mxu0 %v3027
    %4234 = vmatpush1.bf16.msra.mxu0 %v3026
    %4235 = vmatprep.subr.bf16.mxu0 %v3035
    %4236 = vmatpush1.bf16.msra.mxu0 %v3034
    %4237 = vmatprep.subr.bf16.mxu0 %v3043
    %4238 = vmatpush1.bf16.msra.mxu0 %v3042
    %4239 = vmatprep.subr.bf16.mxu0 %v3051
    %4240 = vmatpush1.bf16.msra.mxu0 %v3050
    %4241 = vmatprep.mubr.bf16.mxu0 %v449
    %4242 = vmatmul.mubr.bf16.gmra.mrb[0].mxu0 %v448
    %v4243 = vpop.f32.mrb[0].mxu0
    %v4244 = vadd.f32 %v4201, %v4243
    %v4245 = vpop.f32.mrb[0].mxu0
    %v4246 = vadd.f32 %v4203, %v4245
    %v4247 = vpop.f32.mrb[0].mxu0
    %v4248 = vadd.f32 %v4205, %v4247
    %v4249 = vpop.f32.mrb[0].mxu0
    %v4250 = vadd.f32 %v4207, %v4249
    %4251 = vdwg.mxu0
    %v4252 = vmax.f32 %v3728, 0.0
    %v4253 = vmax.f32 %v3730, 0.0
    %v4254 = vmax.f32 %v3900, 0.0
    %v4255 = vmax.f32 %v3902, 0.0
    %v4256 = vmax.f32 %v4072, 0.0
    %v4257 = vmax.f32 %v4074, 0.0
    %v4258 = vmax.f32 %v4244, 0.0
    %v4259 = vmax.f32 %v4246, 0.0
    %v4260 = vmax.f32 %v3732, 0.0
    %v4261 = vmax.f32 %v3734, 0.0
    %v4262 = vmax.f32 %v3904, 0.0
    %v4263 = vmax.f32 %v3906, 0.0
    %v4264 = vmax.f32 %v4076, 0.0
    %v4265 = vmax.f32 %v4078, 0.0
    %v4266 = vmax.f32 %v4248, 0.0
    %v4267 = vmax.f32 %v4250, 0.0
    %v4268 = vld [vmem:[#allocation11] sm:$0xff]
    %v4269 = vunpack.c.l.bf16 %v4268
    %v4270 = vunpack.c.h.bf16 %v4268
    %v4273 = vlaneseq
    %v4274 = vshrl.u32 %v4273, 7
    %v4275 = vsub.s32 0, %v4274
    %v4276 = vrot.slane %v4269, %v4275
    %v4277 = vlaneseq
    %v4278 = vshrl.u32 %v4277, 7
    %v4279 = vsub.s32 2, %v4278
    %v4280 = vrot.slane %v4269, %v4279
    %v4281 = vlaneseq
    %v4282 = vshrl.u32 %v4281, 7
    %v4283 = vsub.s32 4, %v4282
    %v4284 = vrot.slane %v4269, %v4283
    %v4285 = vlaneseq
    %v4286 = vshrl.u32 %v4285, 7
    %v4287 = vsub.s32 6, %v4286
    %v4288 = vrot.slane %v4269, %v4287
    %v4289 = vlaneseq
    %v4290 = vshrl.u32 %v4289, 7
    %v4291 = vsub.s32 0, %v4290
    %v4292 = vrot.slane %v4270, %v4291
    %v4293 = vlaneseq
    %v4294 = vshrl.u32 %v4293, 7
    %v4295 = vsub.s32 2, %v4294
    %v4296 = vrot.slane %v4270, %v4295
    %v4297 = vlaneseq
    %v4298 = vshrl.u32 %v4297, 7
    %v4299 = vsub.s32 4, %v4298
    %v4300 = vrot.slane %v4270, %v4299
    %v4301 = vlaneseq
    %v4302 = vshrl.u32 %v4301, 7
    %v4303 = vsub.s32 6, %v4302
    %v4304 = vrot.slane %v4270, %v4303
    %v4313 = vlaneseq
    %v4314 = vshrl.u32 %v4313, 7
    %v4315 = vsub.s32 0, %v4314
    %v4316 = vrot.slane %v4276, %v4315
    %v4317 = vlaneseq
    %v4318 = vshrl.u32 %v4317, 7
    %v4319 = vsub.s32 0, %v4318
    %v4320 = vrot.slane %v4280, %v4319
    %v4321 = vlaneseq
    %v4322 = vshrl.u32 %v4321, 7
    %v4323 = vsub.s32 0, %v4322
    %v4324 = vrot.slane %v4284, %v4323
    %v4325 = vlaneseq
    %v4326 = vshrl.u32 %v4325, 7
    %v4327 = vsub.s32 0, %v4326
    %v4328 = vrot.slane %v4288, %v4327
    %v4329 = vlaneseq
    %v4330 = vshrl.u32 %v4329, 7
    %v4331 = vsub.s32 0, %v4330
    %v4332 = vrot.slane %v4292, %v4331
    %v4333 = vlaneseq
    %v4334 = vshrl.u32 %v4333, 7
    %v4335 = vsub.s32 0, %v4334
    %v4336 = vrot.slane %v4296, %v4335
    %v4337 = vlaneseq
    %v4338 = vshrl.u32 %v4337, 7
    %v4339 = vsub.s32 0, %v4338
    %v4340 = vrot.slane %v4300, %v4339
    %v4341 = vlaneseq
    %v4342 = vshrl.u32 %v4341, 7
    %v4343 = vsub.s32 0, %v4342
    %v4344 = vrot.slane %v4304, %v4343
    %v4345 = vmul.f32 %v4252, %v4316
    %v4346 = vmul.f32 %v4253, %v4320
    %v4347 = vmul.f32 %v4254, %v4324
    %v4348 = vmul.f32 %v4255, %v4328
    %v4349 = vmul.f32 %v4256, %v4332
    %v4350 = vmul.f32 %v4257, %v4336
    %v4351 = vmul.f32 %v4258, %v4340
    %v4352 = vmul.f32 %v4259, %v4344
    %v4353 = vmul.f32 %v4260, %v4316
    %v4354 = vmul.f32 %v4261, %v4320
    %v4355 = vmul.f32 %v4262, %v4324
    %v4356 = vmul.f32 %v4263, %v4328
    %v4357 = vmul.f32 %v4264, %v4332
    %v4358 = vmul.f32 %v4265, %v4336
    %v4359 = vmul.f32 %v4266, %v4340
    %v4360 = vmul.f32 %v4267, %v4344
    %v4361 = vadd.f32 %v4345, %v4346
    %v4362 = vadd.f32 %v4361, %v4347
    %v4363 = vadd.f32 %v4362, %v4348
    %v4364 = vadd.f32 %v4363, %v4349
    %v4365 = vadd.f32 %v4364, %v4350
    %v4366 = vadd.f32 %v4365, %v4351
    %v4367 = vadd.f32 %v4366, %v4352
    %4368 = vadd.xlane.f32.xlu0 %v4367
    %v4369 = vpop.xlane.xlu0 %4368
    %v4370 = vadd.f32 %v4353, %v4354
    %v4371 = vadd.f32 %v4370, %v4355
    %v4372 = vadd.f32 %v4371, %v4356
    %v4373 = vadd.f32 %v4372, %v4357
    %v4374 = vadd.f32 %v4373, %v4358
    %v4375 = vadd.f32 %v4374, %v4359
    %v4376 = vadd.f32 %v4375, %v4360
    %4377 = vadd.xlane.f32.xlu0 %v4376
    %v4378 = vpop.xlane.xlu0 %4377
    %v4379 = vld [vmem:[#allocation2] sm:$0x1]
    %v4381 = vlaneseq
    %v4382 = vshrl.u32 %v4381, 7
    %v4383 = vsub.s32 0, %v4382
    %v4384 = vrot.slane %v4379, %v4383
    %v4386 = vadd.f32 %v4369, %v4384
    %v4387 = vadd.f32 %v4378, %v4384
    %vm4388 = vcmask 7168
    %4389 = vst.msk [vmem:[%s7] sm:$0xff] %vm4388, %v4386
    %4390 = vst.msk [vmem:[%s7 + $0x8] sm:$0xff] %vm4388, %v4387
    // Predicated region
    $region54: #{tpu_custom_call.1} parent=1 // pred_check
      _
    $region55: #{tpu_custom_call.1} parent=1 // pred_check_branch
      %4392 = sbr.rel (0) target = $region57
    $region56: #{tpu_custom_call.1} parent=1 // pred_region
      _
    $region57: #{tpu_custom_call.1} parent=1 // pred_fallthru
      _
    // Predicated region
    $region58: #{tpu_custom_call.1} parent=1 // pred_check
      _
    $region59: #{tpu_custom_call.1} parent=1 // pred_check_branch
      %4394 = sbr.rel (0) target = $region61
    $region60: #{tpu_custom_call.1} parent=1 // pred_region
      _
    $region61: #{tpu_custom_call.1} parent=1 // pred_fallthru
      _
    %4395 = vsyncpa [#allocation4], 1
    %4396 = vsyncpa [#allocation6], 1
    %4397 = vsyncpa [#allocation9], 1
    %4398 = vsyncpa [#allocation12], 1

// kernel: tpu_custom_call.1
$region0: #{tpu_custom_call.1}
  #allocation0 [shape = 'u32[]', space=smem, size = 0x4, offset = 0x4, fixed_abs, tag = 'smem constant byte address 0x4 - core index']
  #allocation1 [shape = 'u32[144,128]{1,0:T(1,128)}', space=vmem, size = 0x12000, scoped, tag = 'internal scratch']
  #allocation2 [shape = 'f32[1,1]{1,0:T(1,128)S(1)}', space=vmem, size = 0x200, scoped, tag = 'scoped memory for tpu_custom_call.1']
  %s0 = inlined_call_operand.hbm [shape: bf16[16,32], index: 0, kind: input, shape index: {}]
  %s1 = inlined_call_operand.hbm [shape: bf16[32,1024], index: 1, kind: input, shape index: {}]
  %s2 = inlined_call_operand.hbm [shape: f32[1,1024], index: 2, kind: input, shape index: {}]
  %s3 = inlined_call_operand.hbm [shape: bf16[1024,1024], index: 3, kind: input, shape index: {}]
  %s4 = inlined_call_operand.hbm [shape: f32[1,1024], index: 4, kind: input, shape index: {}]
  %s5 = inlined_call_operand.hbm [shape: bf16[1,1024], index: 5, kind: input, shape index: {}]
  %s6 = inlined_call_operand.<no memory space> [shape: f32[1,1], index: 6, kind: input, shape index: {}]
  %s7 = inlined_call_operand.vmem [shape: f32[16,1], index: 7, kind: output, shape index: {}]
  %s8 = sld [smem:[#allocation0]]
  $region62: #{tpu_custom_call.1} parent=0
    _
  %s10 = ssub.s32 1, %s8
  %s11 = scalar_select 0, %s10, %s8
  %v12 = vstv %s6
  %13 = vst [vmem:[#allocation2] sm:$0x1] %v12
  $region1: #{tpu_custom_call.1} parent=0
    #allocation3 [shape = 'u8[4096]{0}', space=vmem, size = 0x1000, scoped, tag = 'input window, operand 0, single buffered']
    #allocation4 [shape = 's32[1]{0}', space=sflag, size = 0x4, scoped, tag = 'scoped memory for tpu_custom_call.1']
    #allocation5 [shape = 'u8[65536]{0}', space=vmem, size = 0x10000, scoped, tag = 'input window, operand 1, single buffered']
    #allocation6 [shape = 's32[1]{0}', space=sflag, size = 0x4, scoped, tag = 'scoped memory for tpu_custom_call.1']
    #allocation7 [shape = 'u8[4096]{0}', space=vmem, size = 0x1000, scoped, tag = 'input window, operand 2, single buffered']
    #allocation8 [shape = 'u8[2097152]{0}', space=vmem, size = 0x200000, scoped, tag = 'input window, operand 3, single buffered']
    #allocation9 [shape = 's32[1]{0}', space=sflag, size = 0x4, scoped, tag = 'scoped memory for tpu_custom_call.1']
    #allocation10 [shape = 'u8[4096]{0}', space=vmem, size = 0x1000, scoped, tag = 'input window, operand 4, single buffered']
    #allocation11 [shape = 'u8[4096]{0}', space=vmem, size = 0x1000, scoped, tag = 'input window, operand 5, single buffered']
    #allocation12 [shape = 's32[1]{0}', space=sflag, size = 0x4, scoped, tag = 'scoped memory for tpu_custom_call.1']
    %14 = vsyncpa [#allocation4], 0
    %15 = vsyncpa [#allocation6], 0
    %16 = vsyncpa [#allocation9], 0
    %17 = vsyncpa [#allocation12], 0
    // Predicated region
    $region2: #{tpu_custom_call.1} parent=1 // pred_check
      _
    $region3: #{tpu_custom_call.1} parent=1 // pred_check_branch
      %19 = sbr.rel (0) target = $region5
    $region4: #{tpu_custom_call.1} parent=1 // pred_region
      %s21 = ssub.s32 128, 128
      %22 = vsyncadd [#allocation4], %s21
      %s23 = sshll.u32 [#allocation3], 4
      %s24 = int_to_ptr.vmem [resolvable:$true] %s23
      %29 = dma.hbm_to_vmem [thread:$0]  %s0, 128, %s24, [#allocation4], 64, 64, 4
    $region5: #{tpu_custom_call.1} parent=1 // pred_fallthru
      _
    // Predicated region
    $region6: #{tpu_custom_call.1} parent=1 // pred_check
      _
    $region7: #{tpu_custom_call.1} parent=1 // pred_check_branch
      %31 = sbr.rel (0) target = $region9
    $region8: #{tpu_custom_call.1} parent=1 // pred_region
      %s33 = ssub.s32 2048, 2048
      %34 = vsyncadd [#allocation6], %s33
      %s35 = sshll.u32 [#allocation5], 4
      %s36 = int_to_ptr.vmem [resolvable:$true] %s35
      %41 = dma.hbm_to_vmem [thread:$0]  %s1, 2048, %s36, [#allocation6], 512, 512, 32
    $region9: #{tpu_custom_call.1} parent=1 // pred_fallthru
      _
    // Predicated region
    $region10: #{tpu_custom_call.1} parent=1 // pred_check
      _
    $region11: #{tpu_custom_call.1} parent=1 // pred_check_branch
      %43 = sbr.rel (0) target = $region13
    $region12: #{tpu_custom_call.1} parent=1 // pred_region
      %s45 = ssub.s32 128, 128
      %46 = vsyncadd [#allocation6], %s45
      %s48 = sshll.u32 [#allocation7], 4
      %s49 = int_to_ptr.vmem [resolvable:$true] %s48
      %51 = dma.hbm_to_vmem [thread:$0]  %s2, 128, %s49, [#allocation6]
    $region13: #{tpu_custom_call.1} parent=1 // pred_fallthru
      _
    // Predicated region
    $region14: #{tpu_custom_call.1} parent=1 // pred_check
      _
    $region15: #{tpu_custom_call.1} parent=1 // pred_check_branch
      %53 = sbr.rel (0) target = $region17
    $region16: #{tpu_custom_call.1} parent=1 // pred_region
      %s55 = ssub.s32 65536, 65536
      %56 = vsyncadd [#allocation9], %s55
      %s57 = sshll.u32 [#allocation8], 4
      %s58 = int_to_ptr.vmem [resolvable:$true] %s57
      %63 = dma.hbm_to_vmem [thread:$0]  %s3, 65536, %s58, [#allocation9], 512, 512, 32
    $region17: #{tpu_custom_call.1} parent=1 // pred_fallthru
      _
    // Predicated region
    $region18: #{tpu_custom_call.1} parent=1 // pred_check
      _
    $region19: #{tpu_custom_call.1} parent=1 // pred_check_branch
      %65 = sbr.rel (0) target = $region21
    $region20: #{tpu_custom_call.1} parent=1 // pred_region
      %s67 = ssub.s32 128, 128
      %68 = vsyncadd [#allocation9], %s67
      %s70 = sshll.u32 [#allocation10], 4
      %s71 = int_to_ptr.vmem [resolvable:$true] %s70
      %73 = dma.hbm_to_vmem [thread:$0]  %s4, 128, %s71, [#allocation9]
    $region21: #{tpu_custom_call.1} parent=1 // pred_fallthru
      _
    // Predicated region
    $region22: #{tpu_custom_call.1} parent=1 // pred_check
      _
    $region23: #{tpu_custom_call.1} parent=1 // pred_check_branch
      %75 = sbr.rel (0) target = $region25
    $region24: #{tpu_custom_call.1} parent=1 // pred_region
      %s77 = ssub.s32 128, 128
      %78 = vsyncadd [#allocation12], %s77
      %s80 = sshll.u32 [#allocation11], 4
      %s81 = int_to_ptr.vmem [resolvable:$true] %s80
      %83 = dma.hbm_to_vmem [thread:$0]  %s5, 128, %s81, [#allocation12]
    $region25: #{tpu_custom_call.1} parent=1 // pred_fallthru
      _
    // Predicated region
    $region26: #{tpu_custom_call.1} parent=1 // pred_check
      _
    $region27: #{tpu_custom_call.1} parent=1 // pred_check_branch
      %85 = sbr.rel (0) target = $region29
    $region28: #{tpu_custom_call.1} parent=1 // pred_region
      _
    $region29: #{tpu_custom_call.1} parent=1 // pred_fallthru
      _
    // Predicated region
    $region30: #{tpu_custom_call.1} parent=1 // pred_check
      _
    $region31: #{tpu_custom_call.1} parent=1 // pred_check_branch
      %87 = sbr.rel (0) target = $region33
    $region32: #{tpu_custom_call.1} parent=1 // pred_region
      %88 = dma.done [#allocation4], 128
    $region33: #{tpu_custom_call.1} parent=1 // pred_fallthru
      _
    // Predicated region
    $region34: #{tpu_custom_call.1} parent=1 // pred_check
      _
    $region35: #{tpu_custom_call.1} parent=1 // pred_check_branch
      %90 = sbr.rel (0) target = $region37
    $region36: #{tpu_custom_call.1} parent=1 // pred_region
      %91 = dma.done [#allocation6], 2048
    $region37: #{tpu_custom_call.1} parent=1 // pred_fallthru
      _
    // Predicated region
    $region38: #{tpu_custom_call.1} parent=1 // pred_check
      _
    $region39: #{tpu_custom_call.1} parent=1 // pred_check_branch
      %93 = sbr.rel (0) target = $region41
    $region40: #{tpu_custom_call.1} parent=1 // pred_region
      %94 = dma.done [#allocation6], 128
    $region41: #{tpu_custom_call.1} parent=1 // pred_fallthru
      _
    // Predicated region
    $region42: #{tpu_custom_call.1} parent=1 // pred_check
      _
    $region43: #{tpu_custom_call.1} parent=1 // pred_check_branch
      %96 = sbr.rel (0) target = $region45
    $region44: #{tpu_custom_call.1} parent=1 // pred_region
      %97 = dma.done [#allocation9], 65536
    $region45: #{tpu_custom_call.1} parent=1 // pred_fallthru
      _
    // Predicated region
    $region46: #{tpu_custom_call.1} parent=1 // pred_check
      _
    $region47: #{tpu_custom_call.1} parent=1 // pred_check_branch
      %99 = sbr.rel (0) target = $region49
    $region48: #{tpu_custom_call.1} parent=1 // pred_region
      %100 = dma.done [#allocation9], 128
    $region49: #{tpu_custom_call.1} parent=1 // pred_fallthru
      _
    // Predicated region
    $region50: #{tpu_custom_call.1} parent=1 // pred_check
      _
    $region51: #{tpu_custom_call.1} parent=1 // pred_check_branch
      %102 = sbr.rel (0) target = $region53
    $region52: #{tpu_custom_call.1} parent=1 // pred_region
      %103 = dma.done [#allocation12], 128
    $region53: #{tpu_custom_call.1} parent=1 // pred_fallthru
      _
    %v105 = vld [vmem:[#allocation3] sm:$0xf]
    %v106 = vld [vmem:[#allocation3 + $0x4] sm:$0xf]
    %v107 = vld [vmem:[#allocation5] sm:$0xff]
    %v108 = vld [vmem:[#allocation5 + $0x8] sm:$0xff]
    %v109 = vld [vmem:[#allocation5 + $0x10] sm:$0xff]
    %v110 = vld [vmem:[#allocation5 + $0x18] sm:$0xff]
    %v111 = vld [vmem:[#allocation5 + $0x20] sm:$0xff]
    %v112 = vld [vmem:[#allocation5 + $0x28] sm:$0xff]
    %v113 = vld [vmem:[#allocation5 + $0x30] sm:$0xff]
    %v114 = vld [vmem:[#allocation5 + $0x38] sm:$0xff]
    %v115 = vld [vmem:[#allocation5 + $0x40] sm:$0xff]
    %v116 = vld [vmem:[#allocation5 + $0x48] sm:$0xff]
    %v117 = vld [vmem:[#allocation5 + $0x50] sm:$0xff]
    %v118 = vld [vmem:[#allocation5 + $0x58] sm:$0xff]
    %v119 = vld [vmem:[#allocation5 + $0x60] sm:$0xff]
    %v120 = vld [vmem:[#allocation5 + $0x68] sm:$0xff]
    %v121 = vld [vmem:[#allocation5 + $0x70] sm:$0xff]
    %v122 = vld [vmem:[#allocation5 + $0x78] sm:$0xff]
    %v123 = vld [vmem:[#allocation7] sm:$0xff]
    %v125 = vlaneseq
    %v126 = vshrl.u32 %v125, 7
    %v127 = vsub.s32 0, %v126
    %v128 = vrot.slane %v123, %v127
    %v129 = vlaneseq
    %v130 = vshrl.u32 %v129, 7
    %v131 = vsub.s32 1, %v130
    %v132 = vrot.slane %v123, %v131
    %v133 = vlaneseq
    %v134 = vshrl.u32 %v133, 7
    %v135 = vsub.s32 2, %v134
    %v136 = vrot.slane %v123, %v135
    %v137 = vlaneseq
    %v138 = vshrl.u32 %v137, 7
    %v139 = vsub.s32 3, %v138
    %v140 = vrot.slane %v123, %v139
    %v141 = vlaneseq
    %v142 = vshrl.u32 %v141, 7
    %v143 = vsub.s32 4, %v142
    %v144 = vrot.slane %v123, %v143
    %v145 = vlaneseq
    %v146 = vshrl.u32 %v145, 7
    %v147 = vsub.s32 5, %v146
    %v148 = vrot.slane %v123, %v147
    %v149 = vlaneseq
    %v150 = vshrl.u32 %v149, 7
    %v151 = vsub.s32 6, %v150
    %v152 = vrot.slane %v123, %v151
    %v153 = vlaneseq
    %v154 = vshrl.u32 %v153, 7
    %v155 = vsub.s32 7, %v154
    %v156 = vrot.slane %v123, %v155
    %v167 = vunpack.c.l.b16 %v105
    %v168 = vunpack.c.l.b16 %v106
    %v169 = vpack.c.b16 %v168, %v167
    %v186 = vunpack.c.l.b16 %v107
    %v187 = vunpack.c.h.b16 %v107
    %v188 = vunpack.c.l.b16 %v108
    %v189 = vunpack.c.h.b16 %v108
    %v190 = vunpack.c.l.b16 %v109
    %v191 = vunpack.c.h.b16 %v109
    %v192 = vunpack.c.l.b16 %v110
    %v193 = vunpack.c.h.b16 %v110
    %v194 = vunpack.c.l.b16 %v111
    %v195 = vunpack.c.h.b16 %v111
    %v196 = vunpack.c.l.b16 %v112
    %v197 = vunpack.c.h.b16 %v112
    %v198 = vunpack.c.l.b16 %v113
    %v199 = vunpack.c.h.b16 %v113
    %v200 = vunpack.c.l.b16 %v114
    %v201 = vunpack.c.h.b16 %v114
    %v202 = vunpack.c.l.b16 %v115
    %v203 = vunpack.c.h.b16 %v115
    %v204 = vunpack.c.l.b16 %v116
    %v205 = vunpack.c.h.b16 %v116
    %v206 = vunpack.c.l.b16 %v117
    %v207 = vunpack.c.h.b16 %v117
    %v208 = vunpack.c.l.b16 %v118
    %v209 = vunpack.c.h.b16 %v118
    %v210 = vunpack.c.l.b16 %v119
    %v211 = vunpack.c.h.b16 %v119
    %v212 = vunpack.c.l.b16 %v120
    %v213 = vunpack.c.h.b16 %v120
    %v214 = vunpack.c.l.b16 %v121
    %v215 = vunpack.c.h.b16 %v121
    %v216 = vunpack.c.l.b16 %v122
    %v217 = vunpack.c.h.b16 %v122
    %v218 = vpack.c.b16 %v194, %v186
    %v219 = vpack.c.b16 %v195, %v187
    %v220 = vpack.c.b16 %v196, %v188
    %v221 = vpack.c.b16 %v197, %v189
    %v222 = vpack.c.b16 %v198, %v190
    %v223 = vpack.c.b16 %v199, %v191
    %v224 = vpack.c.b16 %v200, %v192
    %v225 = vpack.c.b16 %v201, %v193
    %v226 = vpack.c.b16 %v210, %v202
    %v227 = vpack.c.b16 %v211, %v203
    %v228 = vpack.c.b16 %v212, %v204
    %v229 = vpack.c.b16 %v213, %v205
    %v230 = vpack.c.b16 %v214, %v206
    %v231 = vpack.c.b16 %v215, %v207
    %v232 = vpack.c.b16 %v216, %v208
    %v233 = vpack.c.b16 %v217, %v209
    %vm250 = vcmask 261120
    %v252 = vsel %vm250, %v169, 0
    %254 = vmatprep.subr.bf16.mxu0 %v219
    %255 = vmatpush1.bf16.msra.mxu0 %v218
    %256 = vmatprep.subr.bf16.mxu0 %v227
    %257 = vmatpush1.bf16.msra.mxu0 %v226
    %258 = vmatprep.subr.bf16.mxu0 0
    %259 = vmatpush1.bf16.msra.mxu0 0
    %260 = vmatprep.subr.bf16.mxu0 0
    %261 = vmatpush1.bf16.msra.mxu0 0
    %262 = vmatprep.subr.bf16.mxu0 0
    %263 = vmatpush1.bf16.msra.mxu0 0
    %264 = vmatprep.subr.bf16.mxu0 0
    %265 = vmatpush1.bf16.msra.mxu0 0
    %266 = vmatprep.subr.bf16.mxu0 0
    %267 = vmatpush1.bf16.msra.mxu0 0
    %268 = vmatprep.subr.bf16.mxu0 0
    %269 = vmatpush1.bf16.msra.mxu0 0
    %270 = vmatprep.subr.bf16.mxu0 0
    %271 = vmatpush1.bf16.msra.mxu0 0
    %272 = vmatprep.subr.bf16.mxu0 0
    %273 = vmatpush1.bf16.msra.mxu0 0
    %274 = vmatprep.subr.bf16.mxu0 0
    %275 = vmatpush1.bf16.msra.mxu0 0
    %276 = vmatprep.subr.bf16.mxu0 0
    %277 = vmatpush1.bf16.msra.mxu0 0
    %278 = vmatprep.subr.bf16.mxu0 0
    %279 = vmatpush1.bf16.msra.mxu0 0
    %280 = vmatprep.subr.bf16.mxu0 0
    %281 = vmatpush1.bf16.msra.mxu0 0
    %282 = vmatprep.subr.bf16.mxu0 0
    %283 = vmatpush1.bf16.msra.mxu0 0
    %284 = vmatprep.subr.bf16.mxu0 0
    %285 = vmatpush1.bf16.msra.mxu0 0
    %286 = vmatprep.mubr.bf16.mxu0 0
    %287 = vmatmul.mubr.bf16.gmra.mrb[0].mxu0 %v252
    %v288 = vpop.f32.mrb[0].mxu0
    %v289 = vadd.f32 %v128, %v288
    %v290 = vpop.f32.mrb[0].mxu0
    %v291 = vadd.f32 %v132, %v290
    %v292 = vpop.f32.mrb[0].mxu0
    %v293 = vadd.f32 %v128, %v292
    %v294 = vpop.f32.mrb[0].mxu0
    %v295 = vadd.f32 %v132, %v294
    %296 = vdwg.mxu0
    %297 = vmatprep.subr.bf16.mxu0 %v221
    %298 = vmatpush1.bf16.msra.mxu0 %v220
    %299 = vmatprep.subr.bf16.mxu0 %v229
    %300 = vmatpush1.bf16.msra.mxu0 %v228
    %301 = vmatprep.subr.bf16.mxu0 0
    %302 = vmatpush1.bf16.msra.mxu0 0
    %303 = vmatprep.subr.bf16.mxu0 0
    %304 = vmatpush1.bf16.msra.mxu0 0
    %305 = vmatprep.subr.bf16.mxu0 0
    %306 = vmatpush1.bf16.msra.mxu0 0
    %307 = vmatprep.subr.bf16.mxu0 0
    %308 = vmatpush1.bf16.msra.mxu0 0
    %309 = vmatprep.subr.bf16.mxu0 0
    %310 = vmatpush1.bf16.msra.mxu0 0
    %311 = vmatprep.subr.bf16.mxu0 0
    %312 = vmatpush1.bf16.msra.mxu0 0
    %313 = vmatprep.subr.bf16.mxu0 0
    %314 = vmatpush1.bf16.msra.mxu0 0
    %315 = vmatprep.subr.bf16.mxu0 0
    %316 = vmatpush1.bf16.msra.mxu0 0
    %317 = vmatprep.subr.bf16.mxu0 0
    %318 = vmatpush1.bf16.msra.mxu0 0
    %319 = vmatprep.subr.bf16.mxu0 0
    %320 = vmatpush1.bf16.msra.mxu0 0
    %321 = vmatprep.subr.bf16.mxu0 0
    %322 = vmatpush1.bf16.msra.mxu0 0
    %323 = vmatprep.subr.bf16.mxu0 0
    %324 = vmatpush1.bf16.msra.mxu0 0
    %325 = vmatprep.subr.bf16.mxu0 0
    %326 = vmatpush1.bf16.msra.mxu0 0
    %327 = vmatprep.subr.bf16.mxu0 0
    %328 = vmatpush1.bf16.msra.mxu0 0
    %329 = vmatprep.mubr.bf16.mxu0 0
    %330 = vmatmul.mubr.bf16.gmra.mrb[0].mxu0 %v252
    %v331 = vpop.f32.mrb[0].mxu0
    %v332 = vadd.f32 %v136, %v331
    %v333 = vpop.f32.mrb[0].mxu0
    %v334 = vadd.f32 %v140, %v333
    %v335 = vpop.f32.mrb[0].mxu0
    %v336 = vadd.f32 %v136, %v335
    %v337 = vpop.f32.mrb[0].mxu0
    %v338 = vadd.f32 %v140, %v337
    %339 = vdwg.mxu0
    %340 = vmatprep.subr.bf16.mxu0 %v223
    %341 = vmatpush1.bf16.msra.mxu0 %v222
    %342 = vmatprep.subr.bf16.mxu0 %v231
    %343 = vmatpush1.bf16.msra.mxu0 %v230
    %344 = vmatprep.subr.bf16.mxu0 0
    %345 = vmatpush1.bf16.msra.mxu0 0
    %346 = vmatprep.subr.bf16.mxu0 0
    %347 = vmatpush1.bf16.msra.mxu0 0
    %348 = vmatprep.subr.bf16.mxu0 0
    %349 = vmatpush1.bf16.msra.mxu0 0
    %350 = vmatprep.subr.bf16.mxu0 0
    %351 = vmatpush1.bf16.msra.mxu0 0
    %352 = vmatprep.subr.bf16.mxu0 0
    %353 = vmatpush1.bf16.msra.mxu0 0
    %354 = vmatprep.subr.bf16.mxu0 0
    %355 = vmatpush1.bf16.msra.mxu0 0
    %356 = vmatprep.subr.bf16.mxu0 0
    %357 = vmatpush1.bf16.msra.mxu0 0
    %358 = vmatprep.subr.bf16.mxu0 0
    %359 = vmatpush1.bf16.msra.mxu0 0
    %360 = vmatprep.subr.bf16.mxu0 0
    %361 = vmatpush1.bf16.msra.mxu0 0
    %362 = vmatprep.subr.bf16.mxu0 0
    %363 = vmatpush1.bf16.msra.mxu0 0
    %364 = vmatprep.subr.bf16.mxu0 0
    %365 = vmatpush1.bf16.msra.mxu0 0
    %366 = vmatprep.subr.bf16.mxu0 0
    %367 = vmatpush1.bf16.msra.mxu0 0
    %368 = vmatprep.subr.bf16.mxu0 0
    %369 = vmatpush1.bf16.msra.mxu0 0
    %370 = vmatprep.subr.bf16.mxu0 0
    %371 = vmatpush1.bf16.msra.mxu0 0
    %372 = vmatprep.mubr.bf16.mxu0 0
    %373 = vmatmul.mubr.bf16.gmra.mrb[0].mxu0 %v252
    %v374 = vpop.f32.mrb[0].mxu0
    %v375 = vadd.f32 %v144, %v374
    %v376 = vpop.f32.mrb[0].mxu0
    %v377 = vadd.f32 %v148, %v376
    %v378 = vpop.f32.mrb[0].mxu0
    %v379 = vadd.f32 %v144, %v378
    %v380 = vpop.f32.mrb[0].mxu0
    %v381 = vadd.f32 %v148, %v380
    %382 = vdwg.mxu0
    %383 = vmatprep.subr.bf16.mxu0 %v225
    %384 = vmatpush1.bf16.msra.mxu0 %v224
    %385 = vmatprep.subr.bf16.mxu0 %v233
    %386 = vmatpush1.bf16.msra.mxu0 %v232
    %387 = vmatprep.subr.bf16.mxu0 0
    %388 = vmatpush1.bf16.msra.mxu0 0
    %389 = vmatprep.subr.bf16.mxu0 0
    %390 = vmatpush1.bf16.msra.mxu0 0
    %391 = vmatprep.subr.bf16.mxu0 0
    %392 = vmatpush1.bf16.msra.mxu0 0
    %393 = vmatprep.subr.bf16.mxu0 0
    %394 = vmatpush1.bf16.msra.mxu0 0
    %395 = vmatprep.subr.bf16.mxu0 0
    %396 = vmatpush1.bf16.msra.mxu0 0
    %397 = vmatprep.subr.bf16.mxu0 0
    %398 = vmatpush1.bf16.msra.mxu0 0
    %399 = vmatprep.subr.bf16.mxu0 0
    %400 = vmatpush1.bf16.msra.mxu0 0
    %401 = vmatprep.subr.bf16.mxu0 0
    %402 = vmatpush1.bf16.msra.mxu0 0
    %403 = vmatprep.subr.bf16.mxu0 0
    %404 = vmatpush1.bf16.msra.mxu0 0
    %405 = vmatprep.subr.bf16.mxu0 0
    %406 = vmatpush1.bf16.msra.mxu0 0
    %407 = vmatprep.subr.bf16.mxu0 0
    %408 = vmatpush1.bf16.msra.mxu0 0
    %409 = vmatprep.subr.bf16.mxu0 0
    %410 = vmatpush1.bf16.msra.mxu0 0
    %411 = vmatprep.subr.bf16.mxu0 0
    %412 = vmatpush1.bf16.msra.mxu0 0
    %413 = vmatprep.subr.bf16.mxu0 0
    %414 = vmatpush1.bf16.msra.mxu0 0
    %415 = vmatprep.mubr.bf16.mxu0 0
    %416 = vmatmul.mubr.bf16.gmra.mrb[0].mxu0 %v252
    %v417 = vpop.f32.mrb[0].mxu0
    %v418 = vadd.f32 %v152, %v417
    %v419 = vpop.f32.mrb[0].mxu0
    %v420 = vadd.f32 %v156, %v419
    %v421 = vpop.f32.mrb[0].mxu0
    %v422 = vadd.f32 %v152, %v421
    %v423 = vpop.f32.mrb[0].mxu0
    %v424 = vadd.f32 %v156, %v423
    %425 = vdwg.mxu0
    %v426 = vmax.f32 %v289, 0.0
    %v427 = vmax.f32 %v291, 0.0
    %v428 = vmax.f32 %v332, 0.0
    %v429 = vmax.f32 %v334, 0.0
    %v430 = vmax.f32 %v375, 0.0
    %v431 = vmax.f32 %v377, 0.0
    %v432 = vmax.f32 %v418, 0.0
    %v433 = vmax.f32 %v420, 0.0
    %v434 = vmax.f32 %v293, 0.0
    %v435 = vmax.f32 %v295, 0.0
    %v436 = vmax.f32 %v336, 0.0
    %v437 = vmax.f32 %v338, 0.0
    %v438 = vmax.f32 %v379, 0.0
    %v439 = vmax.f32 %v381, 0.0
    %v440 = vmax.f32 %v422, 0.0
    %v441 = vmax.f32 %v424, 0.0
    %v442 = vpack.c.bf16 %v434, %v426
    %v443 = vpack.c.bf16 %v435, %v427
    %v444 = vpack.c.bf16 %v436, %v428
    %v445 = vpack.c.bf16 %v437, %v429
    %v446 = vpack.c.bf16 %v438, %v430
    %v447 = vpack.c.bf16 %v439, %v431
    %v448 = vpack.c.bf16 %v440, %v432
    %v449 = vpack.c.bf16 %v441, %v433
    %v450 = vld [vmem:[#allocation8] sm:$0xff]
    %v451 = vld [vmem:[#allocation8 + $0x8] sm:$0xff]
    %v452 = vld [vmem:[#allocation8 + $0x10] sm:$0xff]
    %v453 = vld [vmem:[#allocation8 + $0x18] sm:$0xff]
    %v454 = vld [vmem:[#allocation8 + $0x20] sm:$0xff]
    %v455 = vld [vmem:[#allocation8 + $0x28] sm:$0xff]
    %v456 = vld [vmem:[#allocation8 + $0x30] sm:$0xff]
    %v457 = vld [vmem:[#allocation8 + $0x38] sm:$0xff]
    %v458 = vld [vmem:[#allocation8 + $0x40] sm:$0xff]
    %v459 = vld [vmem:[#allocation8 + $0x48] sm:$0xff]
    %v460 = vld [vmem:[#allocation8 + $0x50] sm:$0xff]
    %v461 = vld [vmem:[#allocation8 + $0x58] sm:$0xff]
    %v462 = vld [vmem:[#allocation8 + $0x60] sm:$0xff]
    %v463 = vld [vmem:[#allocation8 + $0x68] sm:$0xff]
    %v464 = vld [vmem:[#allocation8 + $0x70] sm:$0xff]
    %v465 = vld [vmem:[#allocation8 + $0x78] sm:$0xff]
    %v466 = vld [vmem:[#allocation8 + $0x80] sm:$0xff]
    %v467 = vld [vmem:[#allocation8 + $0x88] sm:$0xff]
    %v468 = vld [vmem:[#allocation8 + $0x90] sm:$0xff]
    %v469 = vld [vmem:[#allocation8 + $0x98] sm:$0xff]
    %v470 = vld [vmem:[#allocation8 + $0xa0] sm:$0xff]
    %v471 = vld [vmem:[#allocation8 + $0xa8] sm:$0xff]
    %v472 = vld [vmem:[#allocation8 + $0xb0] sm:$0xff]
    %v473 = vld [vmem:[#allocation8 + $0xb8] sm:$0xff]
    %v474 = vld [vmem:[#allocation8 + $0xc0] sm:$0xff]
    %v475 = vld [vmem:[#allocation8 + $0xc8] sm:$0xff]
    %v476 = vld [vmem:[#allocation8 + $0xd0] sm:$0xff]
    %v477 = vld [vmem:[#allocation8 + $0xd8] sm:$0xff]
    %v478 = vld [vmem:[#allocation8 + $0xe0] sm:$0xff]
    %v479 = vld [vmem:[#allocation8 + $0xe8] sm:$0xff]
    %v480 = vld [vmem:[#allocation8 + $0xf0] sm:$0xff]
    %v481 = vld [vmem:[#allocation8 + $0xf8] sm:$0xff]
    %v482 = vld [vmem:[#allocation8 + $0x100] sm:$0xff]
    %v483 = vld [vmem:[#allocation8 + $0x108] sm:$0xff]
    %v484 = vld [vmem:[#allocation8 + $0x110] sm:$0xff]
    %v485 = vld [vmem:[#allocation8 + $0x118] sm:$0xff]
    %v486 = vld [vmem:[#allocation8 + $0x120] sm:$0xff]
    %v487 = vld [vmem:[#allocation8 + $0x128] sm:$0xff]
    %v488 = vld [vmem:[#allocation8 + $0x130] sm:$0xff]
    %v489 = vld [vmem:[#allocation8 + $0x138] sm:$0xff]
    %v490 = vld [vmem:[#allocation8 + $0x140] sm:$0xff]
    %v491 = vld [vmem:[#allocation8 + $0x148] sm:$0xff]
    %v492 = vld [vmem:[#allocation8 + $0x150] sm:$0xff]
    %v493 = vld [vmem:[#allocation8 + $0x158] sm:$0xff]
    %v494 = vld [vmem:[#allocation8 + $0x160] sm:$0xff]
    %v495 = vld [vmem:[#allocation8 + $0x168] sm:$0xff]
    %v496 = vld [vmem:[#allocation8 + $0x170] sm:$0xff]
    %v497 = vld [vmem:[#allocation8 + $0x178] sm:$0xff]
    %v498 = vld [vmem:[#allocation8 + $0x180] sm:$0xff]
    %v499 = vld [vmem:[#allocation8 + $0x188] sm:$0xff]
    %v500 = vld [vmem:[#allocation8 + $0x190] sm:$0xff]
    %v501 = vld [vmem:[#allocation8 + $0x198] sm:$0xff]
    %v502 = vld [vmem:[#allocation8 + $0x1a0] sm:$0xff]
    %v503 = vld [vmem:[#allocation8 + $0x1a8] sm:$0xff]
    %v504 = vld [vmem:[#allocation8 + $0x1b0] sm:$0xff]
    %v505 = vld [vmem:[#allocation8 + $0x1b8] sm:$0xff]
    %v506 = vld [vmem:[#allocation8 + $0x1c0] sm:$0xff]
    %v507 = vld [vmem:[#allocation8 + $0x1c8] sm:$0xff]
    %v508 = vld [vmem:[#allocation8 + $0x1d0] sm:$0xff]
    %v509 = vld [vmem:[#allocation8 + $0x1d8] sm:$0xff]
    %v510 = vld [vmem:[#allocation8 + $0x1e0] sm:$0xff]
    %v511 = vld [vmem:[#allocation8 + $0x1e8] sm:$0xff]
    %v512 = vld [vmem:[#allocation8 + $0x1f0] sm:$0xff]
    %v513 = vld [vmem:[#allocation8 + $0x1f8] sm:$0xff]
    %v514 = vld [vmem:[#allocation8 + $0x200] sm:$0xff]
    %v515 = vld [vmem:[#allocation8 + $0x208] sm:$0xff]
    %v516 = vld [vmem:[#allocation8 + $0x210] sm:$0xff]
    %v517 = vld [vmem:[#allocation8 + $0x218] sm:$0xff]
    %v518 = vld [vmem:[#allocation8 + $0x220] sm:$0xff]
    %v519 = vld [vmem:[#allocation8 + $0x228] sm:$0xff]
    %v520 = vld [vmem:[#allocation8 + $0x230] sm:$0xff]
    %v521 = vld [vmem:[#allocation8 + $0x238] sm:$0xff]
    %v522 = vld [vmem:[#allocation8 + $0x240] sm:$0xff]
    %v523 = vld [vmem:[#allocation8 + $0x248] sm:$0xff]
    %v524 = vld [vmem:[#allocation8 + $0x250] sm:$0xff]
    %v525 = vld [vmem:[#allocation8 + $0x258] sm:$0xff]
    %v526 = vld [vmem:[#allocation8 + $0x260] sm:$0xff]
    %v527 = vld [vmem:[#allocation8 + $0x268] sm:$0xff]
    %v528 = vld [vmem:[#allocation8 + $0x270] sm:$0xff]
    %v529 = vld [vmem:[#allocation8 + $0x278] sm:$0xff]
    %v530 = vld [vmem:[#allocation8 + $0x280] sm:$0xff]
    %v531 = vld [vmem:[#allocation8 + $0x288] sm:$0xff]
    %v532 = vld [vmem:[#allocation8 + $0x290] sm:$0xff]
    %v533 = vld [vmem:[#allocation8 + $0x298] sm:$0xff]
    %v534 = vld [vmem:[#allocation8 + $0x2a0] sm:$0xff]
    %v535 = vld [vmem:[#allocation8 + $0x2a8] sm:$0xff]
    %v536 = vld [vmem:[#allocation8 + $0x2b0] sm:$0xff]
    %v537 = vld [vmem:[#allocation8 + $0x2b8] sm:$0xff]
    %v538 = vld [vmem:[#allocation8 + $0x2c0] sm:$0xff]
    %v539 = vld [vmem:[#allocation8 + $0x2c8] sm:$0xff]
    %v540 = vld [vmem:[#allocation8 + $0x2d0] sm:$0xff]
    %v541 = vld [vmem:[#allocation8 + $0x2d8] sm:$0xff]
    %v542 = vld [vmem:[#allocation8 + $0x2e0] sm:$0xff]
    %v543 = vld [vmem:[#allocation8 + $0x2e8] sm:$0xff]
    %v544 = vld [vmem:[#allocation8 + $0x2f0] sm:$0xff]
    %v545 = vld [vmem:[#allocation8 + $0x2f8] sm:$0xff]
    %v546 = vld [vmem:[#allocation8 + $0x300] sm:$0xff]
    %v547 = vld [vmem:[#allocation8 + $0x308] sm:$0xff]
    %v548 = vld [vmem:[#allocation8 + $0x310] sm:$0xff]
    %v549 = vld [vmem:[#allocation8 + $0x318] sm:$0xff]
    %v550 = vld [vmem:[#allocation8 + $0x320] sm:$0xff]
    %v551 = vld [vmem:[#allocation8 + $0x328] sm:$0xff]
    %v552 = vld [vmem:[#allocation8 + $0x330] sm:$0xff]
    %v553 = vld [vmem:[#allocation8 + $0x338] sm:$0xff]
    %v554 = vld [vmem:[#allocation8 + $0x340] sm:$0xff]
    %v555 = vld [vmem:[#allocation8 + $0x348] sm:$0xff]
    %v556 = vld [vmem:[#allocation8 + $0x350] sm:$0xff]
    %v557 = vld [vmem:[#allocation8 + $0x358] sm:$0xff]
    %v558 = vld [vmem:[#allocation8 + $0x360] sm:$0xff]
    %v559 = vld [vmem:[#allocation8 + $0x368] sm:$0xff]
    %v560 = vld [vmem:[#allocation8 + $0x370] sm:$0xff]
    %v561 = vld [vmem:[#allocation8 + $0x378] sm:$0xff]
    %v562 = vld [vmem:[#allocation8 + $0x380] sm:$0xff]
    %v563 = vld [vmem:[#allocation8 + $0x388] sm:$0xff]
    %v564 = vld [vmem:[#allocation8 + $0x390] sm:$0xff]
    %v565 = vld [vmem:[#allocation8 + $0x398] sm:$0xff]
    %v566 = vld [vmem:[#allocation8 + $0x3a0] sm:$0xff]
    %v567 = vld [vmem:[#allocation8 + $0x3a8] sm:$0xff]
    %v568 = vld [vmem:[#allocation8 + $0x3b0] sm:$0xff]
    %v569 = vld [vmem:[#allocation8 + $0x3b8] sm:$0xff]
    %v570 = vld [vmem:[#allocation8 + $0x3c0] sm:$0xff]
    %v571 = vld [vmem:[#allocation8 + $0x3c8] sm:$0xff]
    %v572 = vld [vmem:[#allocation8 + $0x3d0] sm:$0xff]
    %v573 = vld [vmem:[#allocation8 + $0x3d8] sm:$0xff]
    %v574 = vld [vmem:[#allocation8 + $0x3e0] sm:$0xff]
    %v575 = vld [vmem:[#allocation8 + $0x3e8] sm:$0xff]
    %v576 = vld [vmem:[#allocation8 + $0x3f0] sm:$0xff]
    %v577 = vld [vmem:[#allocation8 + $0x3f8] sm:$0xff]
    %v578 = vld [vmem:[#allocation8 + $0x400] sm:$0xff]
    %v579 = vld [vmem:[#allocation8 + $0x408] sm:$0xff]
    %v580 = vld [vmem:[#allocation8 + $0x410] sm:$0xff]
    %v581 = vld [vmem:[#allocation8 + $0x418] sm:$0xff]
    %v582 = vld [vmem:[#allocation8 + $0x420] sm:$0xff]
    %v583 = vld [vmem:[#allocation8 + $0x428] sm:$0xff]
    %v584 = vld [vmem:[#allocation8 + $0x430] sm:$0xff]
    %v585 = vld [vmem:[#allocation8 + $0x438] sm:$0xff]
    %v586 = vld [vmem:[#allocation8 + $0x440] sm:$0xff]
    %v587 = vld [vmem:[#allocation8 + $0x448] sm:$0xff]
    %v588 = vld [vmem:[#allocation8 + $0x450] sm:$0xff]
    %v589 = vld [vmem:[#allocation8 + $0x458] sm:$0xff]
    %v590 = vld [vmem:[#allocation8 + $0x460] sm:$0xff]
    %v591 = vld [vmem:[#allocation8 + $0x468] sm:$0xff]
    %v592 = vld [vmem:[#allocation8 + $0x470] sm:$0xff]
    %v593 = vld [vmem:[#allocation8 + $0x478] sm:$0xff]
    %v594 = vld [vmem:[#allocation8 + $0x480] sm:$0xff]
    %v595 = vld [vmem:[#allocation8 + $0x488] sm:$0xff]
    %v596 = vld [vmem:[#allocation8 + $0x490] sm:$0xff]
    %v597 = vld [vmem:[#allocation8 + $0x498] sm:$0xff]
    %v598 = vld [vmem:[#allocation8 + $0x4a0] sm:$0xff]
    %v599 = vld [vmem:[#allocation8 + $0x4a8] sm:$0xff]
    %v600 = vld [vmem:[#allocation8 + $0x4b0] sm:$0xff]
    %v601 = vld [vmem:[#allocation8 + $0x4b8] sm:$0xff]
    %v602 = vld [vmem:[#allocation8 + $0x4c0] sm:$0xff]
    %v603 = vld [vmem:[#allocation8 + $0x4c8] sm:$0xff]
    %v604 = vld [vmem:[#allocation8 + $0x4d0] sm:$0xff]
    %v605 = vld [vmem:[#allocation8 + $0x4d8] sm:$0xff]
    %v606 = vld [vmem:[#allocation8 + $0x4e0] sm:$0xff]
    %v607 = vld [vmem:[#allocation8 + $0x4e8] sm:$0xff]
    %v608 = vld [vmem:[#allocation8 + $0x4f0] sm:$0xff]
    %v609 = vld [vmem:[#allocation8 + $0x4f8] sm:$0xff]
    %v610 = vld [vmem:[#allocation8 + $0x500] sm:$0xff]
    %v611 = vld [vmem:[#allocation8 + $0x508] sm:$0xff]
    %v612 = vld [vmem:[#allocation8 + $0x510] sm:$0xff]
    %v613 = vld [vmem:[#allocation8 + $0x518] sm:$0xff]
    %v614 = vld [vmem:[#allocation8 + $0x520] sm:$0xff]
    %v615 = vld [vmem:[#allocation8 + $0x528] sm:$0xff]
    %v616 = vld [vmem:[#allocation8 + $0x530] sm:$0xff]
    %v617 = vld [vmem:[#allocation8 + $0x538] sm:$0xff]
    %v618 = vld [vmem:[#allocation8 + $0x540] sm:$0xff]
    %v619 = vld [vmem:[#allocation8 + $0x548] sm:$0xff]
    %v620 = vld [vmem:[#allocation8 + $0x550] sm:$0xff]
    %v621 = vld [vmem:[#allocation8 + $0x558] sm:$0xff]
    %v622 = vld [vmem:[#allocation8 + $0x560] sm:$0xff]
    %v623 = vld [vmem:[#allocation8 + $0x568] sm:$0xff]
    %v624 = vld [vmem:[#allocation8 + $0x570] sm:$0xff]
    %v625 = vld [vmem:[#allocation8 + $0x578] sm:$0xff]
    %v626 = vld [vmem:[#allocation8 + $0x580] sm:$0xff]
    %v627 = vld [vmem:[#allocation8 + $0x588] sm:$0xff]
    %v628 = vld [vmem:[#allocation8 + $0x590] sm:$0xff]
    %v629 = vld [vmem:[#allocation8 + $0x598] sm:$0xff]
    %v630 = vld [vmem:[#allocation8 + $0x5a0] sm:$0xff]
    %v631 = vld [vmem:[#allocation8 + $0x5a8] sm:$0xff]
    %v632 = vld [vmem:[#allocation8 + $0x5b0] sm:$0xff]
    %v633 = vld [vmem:[#allocation8 + $0x5b8] sm:$0xff]
    %v634 = vld [vmem:[#allocation8 + $0x5c0] sm:$0xff]
    %v635 = vld [vmem:[#allocation8 + $0x5c8] sm:$0xff]
    %v636 = vld [vmem:[#allocation8 + $0x5d0] sm:$0xff]
    %v637 = vld [vmem:[#allocation8 + $0x5d8] sm:$0xff]
    %v638 = vld [vmem:[#allocation8 + $0x5e0] sm:$0xff]
    %v639 = vld [vmem:[#allocation8 + $0x5e8] sm:$0xff]
    %v640 = vld [vmem:[#allocation8 + $0x5f0] sm:$0xff]
    %v641 = vld [vmem:[#allocation8 + $0x5f8] sm:$0xff]
    %v642 = vld [vmem:[#allocation8 + $0x600] sm:$0xff]
    %v643 = vld [vmem:[#allocation8 + $0x608] sm:$0xff]
    %v644 = vld [vmem:[#allocation8 + $0x610] sm:$0xff]
    %v645 = vld [vmem:[#allocation8 + $0x618] sm:$0xff]
    %v646 = vld [vmem:[#allocation8 + $0x620] sm:$0xff]
    %v647 = vld [vmem:[#allocation8 + $0x628] sm:$0xff]
    %v648 = vld [vmem:[#allocation8 + $0x630] sm:$0xff]
    %v649 = vld [vmem:[#allocation8 + $0x638] sm:$0xff]
    %v650 = vld [vmem:[#allocation8 + $0x640] sm:$0xff]
    %v651 = vld [vmem:[#allocation8 + $0x648] sm:$0xff]
    %v652 = vld [vmem:[#allocation8 + $0x650] sm:$0xff]
    %v653 = vld [vmem:[#allocation8 + $0x658] sm:$0xff]
    %v654 = vld [vmem:[#allocation8 + $0x660] sm:$0xff]
    %v655 = vld [vmem:[#allocation8 + $0x668] sm:$0xff]
    %v656 = vld [vmem:[#allocation8 + $0x670] sm:$0xff]
    %v657 = vld [vmem:[#allocation8 + $0x678] sm:$0xff]
    %v658 = vld [vmem:[#allocation8 + $0x680] sm:$0xff]
    %v659 = vld [vmem:[#allocation8 + $0x688] sm:$0xff]
    %v660 = vld [vmem:[#allocation8 + $0x690] sm:$0xff]
    %v661 = vld [vmem:[#allocation8 + $0x698] sm:$0xff]
    %v662 = vld [vmem:[#allocation8 + $0x6a0] sm:$0xff]
    %v663 = vld [vmem:[#allocation8 + $0x6a8] sm:$0xff]
    %v664 = vld [vmem:[#allocation8 + $0x6b0] sm:$0xff]
    %v665 = vld [vmem:[#allocation8 + $0x6b8] sm:$0xff]
    %v666 = vld [vmem:[#allocation8 + $0x6c0] sm:$0xff]
    %v667 = vld [vmem:[#allocation8 + $0x6c8] sm:$0xff]
    %v668 = vld [vmem:[#allocation8 + $0x6d0] sm:$0xff]
    %v669 = vld [vmem:[#allocation8 + $0x6d8] sm:$0xff]
    %v670 = vld [vmem:[#allocation8 + $0x6e0] sm:$0xff]
    %v671 = vld [vmem:[#allocation8 + $0x6e8] sm:$0xff]
    %v672 = vld [vmem:[#allocation8 + $0x6f0] sm:$0xff]
    %v673 = vld [vmem:[#allocation8 + $0x6f8] sm:$0xff]
    %v674 = vld [vmem:[#allocation8 + $0x700] sm:$0xff]
    %v675 = vld [vmem:[#allocation8 + $0x708] sm:$0xff]
    %v676 = vld [vmem:[#allocation8 + $0x710] sm:$0xff]
    %v677 = vld [vmem:[#allocation8 + $0x718] sm:$0xff]
    %v678 = vld [vmem:[#allocation8 + $0x720] sm:$0xff]
    %v679 = vld [vmem:[#allocation8 + $0x728] sm:$0xff]
    %v680 = vld [vmem:[#allocation8 + $0x730] sm:$0xff]
    %v681 = vld [vmem:[#allocation8 + $0x738] sm:$0xff]
    %v682 = vld [vmem:[#allocation8 + $0x740] sm:$0xff]
    %v683 = vld [vmem:[#allocation8 + $0x748] sm:$0xff]
    %v684 = vld [vmem:[#allocation8 + $0x750] sm:$0xff]
    %v685 = vld [vmem:[#allocation8 + $0x758] sm:$0xff]
    %v686 = vld [vmem:[#allocation8 + $0x760] sm:$0xff]
    %v687 = vld [vmem:[#allocation8 + $0x768] sm:$0xff]
    %v688 = vld [vmem:[#allocation8 + $0x770] sm:$0xff]
    %v689 = vld [vmem:[#allocation8 + $0x778] sm:$0xff]
    %v690 = vld [vmem:[#allocation8 + $0x780] sm:$0xff]
    %v691 = vld [vmem:[#allocation8 + $0x788] sm:$0xff]
    %v692 = vld [vmem:[#allocation8 + $0x790] sm:$0xff]
    %v693 = vld [vmem:[#allocation8 + $0x798] sm:$0xff]
    %v694 = vld [vmem:[#allocation8 + $0x7a0] sm:$0xff]
    %v695 = vld [vmem:[#allocation8 + $0x7a8] sm:$0xff]
    %v696 = vld [vmem:[#allocation8 + $0x7b0] sm:$0xff]
    %v697 = vld [vmem:[#allocation8 + $0x7b8] sm:$0xff]
    %v698 = vld [vmem:[#allocation8 + $0x7c0] sm:$0xff]
    %v699 = vld [vmem:[#allocation8 + $0x7c8] sm:$0xff]
    %v700 = vld [vmem:[#allocation8 + $0x7d0] sm:$0xff]
    %v701 = vld [vmem:[#allocation8 + $0x7d8] sm:$0xff]
    %v702 = vld [vmem:[#allocation8 + $0x7e0] sm:$0xff]
    %v703 = vld [vmem:[#allocation8 + $0x7e8] sm:$0xff]
    %v704 = vld [vmem:[#allocation8 + $0x7f0] sm:$0xff]
    %v705 = vld [vmem:[#allocation8 + $0x7f8] sm:$0xff]
    %v706 = vld [vmem:[#allocation8 + $0x800] sm:$0xff]
    %v707 = vld [vmem:[#allocation8 + $0x808] sm:$0xff]
    %v708 = vld [vmem:[#allocation8 + $0x810] sm:$0xff]
    %v709 = vld [vmem:[#allocation8 + $0x818] sm:$0xff]
    %v710 = vld [vmem:[#allocation8 + $0x820] sm:$0xff]
    %v711 = vld [vmem:[#allocation8 + $0x828] sm:$0xff]
    %v712 = vld [vmem:[#allocation8 + $0x830] sm:$0xff]
    %v713 = vld [vmem:[#allocation8 + $0x838] sm:$0xff]
    %v714 = vld [vmem:[#allocation8 + $0x840] sm:$0xff]
    %v715 = vld [vmem:[#allocation8 + $0x848] sm:$0xff]
    %v716 = vld [vmem:[#allocation8 + $0x850] sm:$0xff]
    %v717 = vld [vmem:[#allocation8 + $0x858] sm:$0xff]
    %v718 = vld [vmem:[#allocation8 + $0x860] sm:$0xff]
    %v719 = vld [vmem:[#allocation8 + $0x868] sm:$0xff]
    %v720 = vld [vmem:[#allocation8 + $0x870] sm:$0xff]
    %v721 = vld [vmem:[#allocation8 + $0x878] sm:$0xff]
    %v722 = vld [vmem:[#allocation8 + $0x880] sm:$0xff]
    %v723 = vld [vmem:[#allocation8 + $0x888] sm:$0xff]
    %v724 = vld [vmem:[#allocation8 + $0x890] sm:$0xff]
    %v725 = vld [vmem:[#allocation8 + $0x898] sm:$0xff]
    %v726 = vld [vmem:[#allocation8 + $0x8a0] sm:$0xff]
    %v727 = vld [vmem:[#allocation8 + $0x8a8] sm:$0xff]
    %v728 = vld [vmem:[#allocation8 + $0x8b0] sm:$0xff]
    %v729 = vld [vmem:[#allocation8 + $0x8b8] sm:$0xff]
    %v730 = vld [vmem:[#allocation8 + $0x8c0] sm:$0xff]
    %v731 = vld [vmem:[#allocation8 + $0x8c8] sm:$0xff]
    %v732 = vld [vmem:[#allocation8 + $0x8d0] sm:$0xff]
    %v733 = vld [vmem:[#allocation8 + $0x8d8] sm:$0xff]
    %v734 = vld [vmem:[#allocation8 + $0x8e0] sm:$0xff]
    %v735 = vld [vmem:[#allocation8 + $0x8e8] sm:$0xff]
    %v736 = vld [vmem:[#allocation8 + $0x8f0] sm:$0xff]
    %v737 = vld [vmem:[#allocation8 + $0x8f8] sm:$0xff]
    %v738 = vld [vmem:[#allocation8 + $0x900] sm:$0xff]
    %v739 = vld [vmem:[#allocation8 + $0x908] sm:$0xff]
    %v740 = vld [vmem:[#allocation8 + $0x910] sm:$0xff]
    %v741 = vld [vmem:[#allocation8 + $0x918] sm:$0xff]
    %v742 = vld [vmem:[#allocation8 + $0x920] sm:$0xff]
    %v743 = vld [vmem:[#allocation8 + $0x928] sm:$0xff]
    %v744 = vld [vmem:[#allocation8 + $0x930] sm:$0xff]
    %v745 = vld [vmem:[#allocation8 + $0x938] sm:$0xff]
    %v746 = vld [vmem:[#allocation8 + $0x940] sm:$0xff]
    %v747 = vld [vmem:[#allocation8 + $0x948] sm:$0xff]
    %v748 = vld [vmem:[#allocation8 + $0x950] sm:$0xff]
    %v749 = vld [vmem:[#allocation8 + $0x958] sm:$0xff]
    %v750 = vld [vmem:[#allocation8 + $0x960] sm:$0xff]
    %v751 = vld [vmem:[#allocation8 + $0x968] sm:$0xff]
    %v752 = vld [vmem:[#allocation8 + $0x970] sm:$0xff]
    %v753 = vld [vmem:[#allocation8 + $0x978] sm:$0xff]
    %v754 = vld [vmem:[#allocation8 + $0x980] sm:$0xff]
    %v755 = vld [vmem:[#allocation8 + $0x988] sm:$0xff]
    %v756 = vld [vmem:[#allocation8 + $0x990] sm:$0xff]
    %v757 = vld [vmem:[#allocation8 + $0x998] sm:$0xff]
    %v758 = vld [vmem:[#allocation8 + $0x9a0] sm:$0xff]
    %v759 = vld [vmem:[#allocation8 + $0x9a8] sm:$0xff]
    %v760 = vld [vmem:[#allocation8 + $0x9b0] sm:$0xff]
    %v761 = vld [vmem:[#allocation8 + $0x9b8] sm:$0xff]
    %v762 = vld [vmem:[#allocation8 + $0x9c0] sm:$0xff]
    %v763 = vld [vmem:[#allocation8 + $0x9c8] sm:$0xff]
    %v764 = vld [vmem:[#allocation8 + $0x9d0] sm:$0xff]
    %v765 = vld [vmem:[#allocation8 + $0x9d8] sm:$0xff]
    %v766 = vld [vmem:[#allocation8 + $0x9e0] sm:$0xff]
    %v767 = vld [vmem:[#allocation8 + $0x9e8] sm:$0xff]
    %v768 = vld [vmem:[#allocation8 + $0x9f0] sm:$0xff]
    %v769 = vld [vmem:[#allocation8 + $0x9f8] sm:$0xff]
    %v770 = vld [vmem:[#allocation8 + $0xa00] sm:$0xff]
    %v771 = vld [vmem:[#allocation8 + $0xa08] sm:$0xff]
    %v772 = vld [vmem:[#allocation8 + $0xa10] sm:$0xff]
    %v773 = vld [vmem:[#allocation8 + $0xa18] sm:$0xff]
    %v774 = vld [vmem:[#allocation8 + $0xa20] sm:$0xff]
    %v775 = vld [vmem:[#allocation8 + $0xa28] sm:$0xff]
    %v776 = vld [vmem:[#allocation8 + $0xa30] sm:$0xff]
    %v777 = vld [vmem:[#allocation8 + $0xa38] sm:$0xff]
    %v778 = vld [vmem:[#allocation8 + $0xa40] sm:$0xff]
    %v779 = vld [vmem:[#allocation8 + $0xa48] sm:$0xff]
    %v780 = vld [vmem:[#allocation8 + $0xa50] sm:$0xff]
    %v781 = vld [vmem:[#allocation8 + $0xa58] sm:$0xff]
    %v782 = vld [vmem:[#allocation8 + $0xa60] sm:$0xff]
    %v783 = vld [vmem:[#allocation8 + $0xa68] sm:$0xff]
    %v784 = vld [vmem:[#allocation8 + $0xa70] sm:$0xff]
    %v785 = vld [vmem:[#allocation8 + $0xa78] sm:$0xff]
    %v786 = vld [vmem:[#allocation8 + $0xa80] sm:$0xff]
    %v787 = vld [vmem:[#allocation8 + $0xa88] sm:$0xff]
    %v788 = vld [vmem:[#allocation8 + $0xa90] sm:$0xff]
    %v789 = vld [vmem:[#allocation8 + $0xa98] sm:$0xff]
    %v790 = vld [vmem:[#allocation8 + $0xaa0] sm:$0xff]
    %v791 = vld [vmem:[#allocation8 + $0xaa8] sm:$0xff]
    %v792 = vld [vmem:[#allocation8 + $0xab0] sm:$0xff]
    %v793 = vld [vmem:[#allocation8 + $0xab8] sm:$0xff]
    %v794 = vld [vmem:[#allocation8 + $0xac0] sm:$0xff]
    %v795 = vld [vmem:[#allocation8 + $0xac8] sm:$0xff]
    %v796 = vld [vmem:[#allocation8 + $0xad0] sm:$0xff]
    %v797 = vld [vmem:[#allocation8 + $0xad8] sm:$0xff]
    %v798 = vld [vmem:[#allocation8 + $0xae0] sm:$0xff]
    %v799 = vld [vmem:[#allocation8 + $0xae8] sm:$0xff]
    %v800 = vld [vmem:[#allocation8 + $0xaf0] sm:$0xff]
    %v801 = vld [vmem:[#allocation8 + $0xaf8] sm:$0xff]
    %v802 = vld [vmem:[#allocation8 + $0xb00] sm:$0xff]
    %v803 = vld [vmem:[#allocation8 + $0xb08] sm:$0xff]
    %v804 = vld [vmem:[#allocation8 + $0xb10] sm:$0xff]
    %v805 = vld [vmem:[#allocation8 + $0xb18] sm:$0xff]
    %v806 = vld [vmem:[#allocation8 + $0xb20] sm:$0xff]
    %v807 = vld [vmem:[#allocation8 + $0xb28] sm:$0xff]
    %v808 = vld [vmem:[#allocation8 + $0xb30] sm:$0xff]
    %v809 = vld [vmem:[#allocation8 + $0xb38] sm:$0xff]
    %v810 = vld [vmem:[#allocation8 + $0xb40] sm:$0xff]
    %v811 = vld [vmem:[#allocation8 + $0xb48] sm:$0xff]
    %v812 = vld [vmem:[#allocation8 + $0xb50] sm:$0xff]
    %v813 = vld [vmem:[#allocation8 + $0xb58] sm:$0xff]
    %v814 = vld [vmem:[#allocation8 + $0xb60] sm:$0xff]
    %v815 = vld [vmem:[#allocation8 + $0xb68] sm:$0xff]
    %v816 = vld [vmem:[#allocation8 + $0xb70] sm:$0xff]
    %v817 = vld [vmem:[#allocation8 + $0xb78] sm:$0xff]
    %v818 = vld [vmem:[#allocation8 + $0xb80] sm:$0xff]
    %v819 = vld [vmem:[#allocation8 + $0xb88] sm:$0xff]
    %v820 = vld [vmem:[#allocation8 + $0xb90] sm:$0xff]
    %v821 = vld [vmem:[#allocation8 + $0xb98] sm:$0xff]
    %v822 = vld [vmem:[#allocation8 + $0xba0] sm:$0xff]
    %v823 = vld [vmem:[#allocation8 + $0xba8] sm:$0xff]
    %v824 = vld [vmem:[#allocation8 + $0xbb0] sm:$0xff]
    %v825 = vld [vmem:[#allocation8 + $0xbb8] sm:$0xff]
    %v826 = vld [vmem:[#allocation8 + $0xbc0] sm:$0xff]
    %v827 = vld [vmem:[#allocation8 + $0xbc8] sm:$0xff]
    %v828 = vld [vmem:[#allocation8 + $0xbd0] sm:$0xff]
    %v829 = vld [vmem:[#allocation8 + $0xbd8] sm:$0xff]
    %v830 = vld [vmem:[#allocation8 + $0xbe0] sm:$0xff]
    %v831 = vld [vmem:[#allocation8 + $0xbe8] sm:$0xff]
    %v832 = vld [vmem:[#allocation8 + $0xbf0] sm:$0xff]
    %v833 = vld [vmem:[#allocation8 + $0xbf8] sm:$0xff]
    %v834 = vld [vmem:[#allocation8 + $0xc00] sm:$0xff]
    %v835 = vld [vmem:[#allocation8 + $0xc08] sm:$0xff]
    %v836 = vld [vmem:[#allocation8 + $0xc10] sm:$0xff]
    %v837 = vld [vmem:[#allocation8 + $0xc18] sm:$0xff]
    %v838 = vld [vmem:[#allocation8 + $0xc20] sm:$0xff]
    %v839 = vld [vmem:[#allocation8 + $0xc28] sm:$0xff]
    %v840 = vld [vmem:[#allocation8 + $0xc30] sm:$0xff]
    %v841 = vld [vmem:[#allocation8 + $0xc38] sm:$0xff]
    %v842 = vld [vmem:[#allocation8 + $0xc40] sm:$0xff]
    %v843 = vld [vmem:[#allocation8 + $0xc48] sm:$0xff]
    %v844 = vld [vmem:[#allocation8 + $0xc50] sm:$0xff]
    %v845 = vld [vmem:[#allocation8 + $0xc58] sm:$0xff]
    %v846 = vld [vmem:[#allocation8 + $0xc60] sm:$0xff]
    %v847 = vld [vmem:[#allocation8 + $0xc68] sm:$0xff]
    %v848 = vld [vmem:[#allocation8 + $0xc70] sm:$0xff]
    %v849 = vld [vmem:[#allocation8 + $0xc78] sm:$0xff]
    %v850 = vld [vmem:[#allocation8 + $0xc80] sm:$0xff]
    %v851 = vld [vmem:[#allocation8 + $0xc88] sm:$0xff]
    %v852 = vld [vmem:[#allocation8 + $0xc90] sm:$0xff]
    %v853 = vld [vmem:[#allocation8 + $0xc98] sm:$0xff]
    %v854 = vld [vmem:[#allocation8 + $0xca0] sm:$0xff]
    %v855 = vld [vmem:[#allocation8 + $0xca8] sm:$0xff]
    %v856 = vld [vmem:[#allocation8 + $0xcb0] sm:$0xff]
    %v857 = vld [vmem:[#allocation8 + $0xcb8] sm:$0xff]
    %v858 = vld [vmem:[#allocation8 + $0xcc0] sm:$0xff]
    %v859 = vld [vmem:[#allocation8 + $0xcc8] sm:$0xff]
    %v860 = vld [vmem:[#allocation8 + $0xcd0] sm:$0xff]
    %v861 = vld [vmem:[#allocation8 + $0xcd8] sm:$0xff]
    %v862 = vld [vmem:[#allocation8 + $0xce0] sm:$0xff]
    %v863 = vld [vmem:[#allocation8 + $0xce8] sm:$0xff]
    %v864 = vld [vmem:[#allocation8 + $0xcf0] sm:$0xff]
    %v865 = vld [vmem:[#allocation8 + $0xcf8] sm:$0xff]
    %v866 = vld [vmem:[#allocation8 + $0xd00] sm:$0xff]
    %v867 = vld [vmem:[#allocation8 + $0xd08] sm:$0xff]
    %v868 = vld [vmem:[#allocation8 + $0xd10] sm:$0xff]
    %v869 = vld [vmem:[#allocation8 + $0xd18] sm:$0xff]
    %v870 = vld [vmem:[#allocation8 + $0xd20] sm:$0xff]
    %v871 = vld [vmem:[#allocation8 + $0xd28] sm:$0xff]
    %v872 = vld [vmem:[#allocation8 + $0xd30] sm:$0xff]
    %v873 = vld [vmem:[#allocation8 + $0xd38] sm:$0xff]
    %v874 = vld [vmem:[#allocation8 + $0xd40] sm:$0xff]
    %v875 = vld [vmem:[#allocation8 + $0xd48] sm:$0xff]
    %v876 = vld [vmem:[#allocation8 + $0xd50] sm:$0xff]
    %v877 = vld [vmem:[#allocation8 + $0xd58] sm:$0xff]
    %v878 = vld [vmem:[#allocation8 + $0xd60] sm:$0xff]
    %v879 = vld [vmem:[#allocation8 + $0xd68] sm:$0xff]
    %v880 = vld [vmem:[#allocation8 + $0xd70] sm:$0xff]
    %v881 = vld [vmem:[#allocation8 + $0xd78] sm:$0xff]
    %v882 = vld [vmem:[#allocation8 + $0xd80] sm:$0xff]
    %v883 = vld [vmem:[#allocation8 + $0xd88] sm:$0xff]
    %v884 = vld [vmem:[#allocation8 + $0xd90] sm:$0xff]
    %v885 = vld [vmem:[#allocation8 + $0xd98] sm:$0xff]
    %v886 = vld [vmem:[#allocation8 + $0xda0] sm:$0xff]
    %v887 = vld [vmem:[#allocation8 + $0xda8] sm:$0xff]
    %v888 = vld [vmem:[#allocation8 + $0xdb0] sm:$0xff]
    %v889 = vld [vmem:[#allocation8 + $0xdb8] sm:$0xff]
    %v890 = vld [vmem:[#allocation8 + $0xdc0] sm:$0xff]
    %v891 = vld [vmem:[#allocation8 + $0xdc8] sm:$0xff]
    %v892 = vld [vmem:[#allocation8 + $0xdd0] sm:$0xff]
    %v893 = vld [vmem:[#allocation8 + $0xdd8] sm:$0xff]
    %v894 = vld [vmem:[#allocation8 + $0xde0] sm:$0xff]
    %v895 = vld [vmem:[#allocation8 + $0xde8] sm:$0xff]
    %v896 = vld [vmem:[#allocation8 + $0xdf0] sm:$0xff]
    %v897 = vld [vmem:[#allocation8 + $0xdf8] sm:$0xff]
    %v898 = vld [vmem:[#allocation8 + $0xe00] sm:$0xff]
    %v899 = vld [vmem:[#allocation8 + $0xe08] sm:$0xff]
    %v900 = vld [vmem:[#allocation8 + $0xe10] sm:$0xff]
    %v901 = vld [vmem:[#allocation8 + $0xe18] sm:$0xff]
    %v902 = vld [vmem:[#allocation8 + $0xe20] sm:$0xff]
    %v903 = vld [vmem:[#allocation8 + $0xe28] sm:$0xff]
    %v904 = vld [vmem:[#allocation8 + $0xe30] sm:$0xff]
    %v905 = vld [vmem:[#allocation8 + $0xe38] sm:$0xff]
    %v906 = vld [vmem:[#allocation8 + $0xe40] sm:$0xff]
    %v907 = vld [vmem:[#allocation8 + $0xe48] sm:$0xff]
    %v908 = vld [vmem:[#allocation8 + $0xe50] sm:$0xff]
    %v909 = vld [vmem:[#allocation8 + $0xe58] sm:$0xff]
    %v910 = vld [vmem:[#allocation8 + $0xe60] sm:$0xff]
    %v911 = vld [vmem:[#allocation8 + $0xe68] sm:$0xff]
    %v912 = vld [vmem:[#allocation8 + $0xe70] sm:$0xff]
    %v913 = vld [vmem:[#allocation8 + $0xe78] sm:$0xff]
    %v914 = vld [vmem:[#allocation8 + $0xe80] sm:$0xff]
    %v915 = vld [vmem:[#allocation8 + $0xe88] sm:$0xff]
    %v916 = vld [vmem:[#allocation8 + $0xe90] sm:$0xff]
    %v917 = vld [vmem:[#allocation8 + $0xe98] sm:$0xff]
    %v918 = vld [vmem:[#allocation8 + $0xea0] sm:$0xff]
    %v919 = vld [vmem:[#allocation8 + $0xea8] sm:$0xff]
    %v920 = vld [vmem:[#allocation8 + $0xeb0] sm:$0xff]
    %v921 = vld [vmem:[#allocation8 + $0xeb8] sm:$0xff]
    %v922 = vld [vmem:[#allocation8 + $0xec0] sm:$0xff]
    %v923 = vld [vmem:[#allocation8 + $0xec8] sm:$0xff]
    %v924 = vld [vmem:[#allocation8 + $0xed0] sm:$0xff]
    %v925 = vld [vmem:[#allocation8 + $0xed8] sm:$0xff]
    %v926 = vld [vmem:[#allocation8 + $0xee0] sm:$0xff]
    %v927 = vld [vmem:[#allocation8 + $0xee8] sm:$0xff]
    %v928 = vld [vmem:[#allocation8 + $0xef0] sm:$0xff]
    %v929 = vld [vmem:[#allocation8 + $0xef8] sm:$0xff]
    %v930 = vld [vmem:[#allocation8 + $0xf00] sm:$0xff]
    %v931 = vld [vmem:[#allocation8 + $0xf08] sm:$0xff]
    %v932 = vld [vmem:[#allocation8 + $0xf10] sm:$0xff]
    %v933 = vld [vmem:[#allocation8 + $0xf18] sm:$0xff]
    %v934 = vld [vmem:[#allocation8 + $0xf20] sm:$0xff]
    %v935 = vld [vmem:[#allocation8 + $0xf28] sm:$0xff]
    %v936 = vld [vmem:[#allocation8 + $0xf30] sm:$0xff]
    %v937 = vld [vmem:[#allocation8 + $0xf38] sm:$0xff]
    %v938 = vld [vmem:[#allocation8 + $0xf40] sm:$0xff]
    %v939 = vld [vmem:[#allocation8 + $0xf48] sm:$0xff]
    %v940 = vld [vmem:[#allocation8 + $0xf50] sm:$0xff]
    %v941 = vld [vmem:[#allocation8 + $0xf58] sm:$0xff]
    %v942 = vld [vmem:[#allocation8 + $0xf60] sm:$0xff]
    %v943 = vld [vmem:[#allocation8 + $0xf68] sm:$0xff]
    %v944 = vld [vmem:[#allocation8 + $0xf70] sm:$0xff]
    %v945 = vld [vmem:[#allocation8 + $0xf78] sm:$0xff]
    %v946 = vld [vmem:[#allocation8 + $0xf80] sm:$0xff]
    %v947 = vld [vmem:[#allocation8 + $0xf88] sm:$0xff]
    %v948 = vld [vmem:[#allocation8 + $0xf90] sm:$0xff]
    %v949 = vld [vmem:[#allocation8 + $0xf98] sm:$0xff]
    %v950 = vld [vmem:[#allocation8 + $0xfa0] sm:$0xff]
    %v951 = vld [vmem:[#allocation8 + $0xfa8] sm:$0xff]
    %v952 = vld [vmem:[#allocation8 + $0xfb0] sm:$0xff]
    %v953 = vld [vmem:[#allocation8 + $0xfb8] sm:$0xff]
    %v954 = vld [vmem:[#allocation8 + $0xfc0] sm:$0xff]
    %v955 = vld [vmem:[#allocation8 + $0xfc8] sm:$0xff]
    %v956 = vld [vmem:[#allocation8 + $0xfd0] sm:$0xff]
    %v957 = vld [vmem:[#allocation8 + $0xfd8] sm:$0xff]
    %v958 = vld [vmem:[#allocation8 + $0xfe0] sm:$0xff]
    %v959 = vld [vmem:[#allocation8 + $0xfe8] sm:$0xff]
    %v960 = vld [vmem:[#allocation8 + $0xff0] sm:$0xff]
    %v961 = vld [vmem:[#allocation8 + $0xff8] sm:$0xff]
    %v962 = vld [vmem:[#allocation10] sm:$0xff]
    %v964 = vlaneseq
    %v965 = vshrl.u32 %v964, 7
    %v966 = vsub.s32 0, %v965
    %v967 = vrot.slane %v962, %v966
    %v968 = vlaneseq
    %v969 = vshrl.u32 %v968, 7
    %v970 = vsub.s32 1, %v969
    %v971 = vrot.slane %v962, %v970
    %v972 = vlaneseq
    %v973 = vshrl.u32 %v972, 7
    %v974 = vsub.s32 2, %v973
    %v975 = vrot.slane %v962, %v974
    %v976 = vlaneseq
    %v977 = vshrl.u32 %v976, 7
    %v978 = vsub.s32 3, %v977
    %v979 = vrot.slane %v962, %v978
    %v980 = vlaneseq
    %v981 = vshrl.u32 %v980, 7
    %v982 = vsub.s32 4, %v981
    %v983 = vrot.slane %v962, %v982
    %v984 = vlaneseq
    %v985 = vshrl.u32 %v984, 7
    %v986 = vsub.s32 5, %v985
    %v987 = vrot.slane %v962, %v986
    %v988 = vlaneseq
    %v989 = vshrl.u32 %v988, 7
    %v990 = vsub.s32 6, %v989
    %v991 = vrot.slane %v962, %v990
    %v992 = vlaneseq
    %v993 = vshrl.u32 %v992, 7
    %v994 = vsub.s32 7, %v993
    %v995 = vrot.slane %v962, %v994
    %v1516 = vunpack.c.l.b16 %v450
    %v1517 = vunpack.c.h.b16 %v450
    %v1518 = vunpack.c.l.b16 %v451
    %v1519 = vunpack.c.h.b16 %v451
    %v1520 = vunpack.c.l.b16 %v452
    %v1521 = vunpack.c.h.b16 %v452
    %v1522 = vunpack.c.l.b16 %v453
    %v1523 = vunpack.c.h.b16 %v453
    %v1524 = vunpack.c.l.b16 %v454
    %v1525 = vunpack.c.h.b16 %v454
    %v1526 = vunpack.c.l.b16 %v455
    %v1527 = vunpack.c.h.b16 %v455
    %v1528 = vunpack.c.l.b16 %v456
    %v1529 = vunpack.c.h.b16 %v456
    %v1530 = vunpack.c.l.b16 %v457
    %v1531 = vunpack.c.h.b16 %v457
    %v1532 = vunpack.c.l.b16 %v458
    %v1533 = vunpack.c.h.b16 %v458
    %v1534 = vunpack.c.l.b16 %v459
    %v1535 = vunpack.c.h.b16 %v459
    %v1536 = vunpack.c.l.b16 %v460
    %v1537 = vunpack.c.h.b16 %v460
    %v1538 = vunpack.c.l.b16 %v461
    %v1539 = vunpack.c.h.b16 %v461
    %v1540 = vunpack.c.l.b16 %v462
    %v1541 = vunpack.c.h.b16 %v462
    %v1542 = vunpack.c.l.b16 %v463
    %v1543 = vunpack.c.h.b16 %v463
    %v1544 = vunpack.c.l.b16 %v464
    %v1545 = vunpack.c.h.b16 %v464
    %v1546 = vunpack.c.l.b16 %v465
    %v1547 = vunpack.c.h.b16 %v465
    %v1548 = vunpack.c.l.b16 %v466
    %v1549 = vunpack.c.h.b16 %v466
    %v1550 = vunpack.c.l.b16 %v467
    %v1551 = vunpack.c.h.b16 %v467
    %v1552 = vunpack.c.l.b16 %v468
    %v1553 = vunpack.c.h.b16 %v468
    %v1554 = vunpack.c.l.b16 %v469
    %v1555 = vunpack.c.h.b16 %v469
    %v1556 = vunpack.c.l.b16 %v470
    %v1557 = vunpack.c.h.b16 %v470
    %v1558 = vunpack.c.l.b16 %v471
    %v1559 = vunpack.c.h.b16 %v471
    %v1560 = vunpack.c.l.b16 %v472
    %v1561 = vunpack.c.h.b16 %v472
    %v1562 = vunpack.c.l.b16 %v473
    %v1563 = vunpack.c.h.b16 %v473
    %v1564 = vunpack.c.l.b16 %v474
    %v1565 = vunpack.c.h.b16 %v474
    %v1566 = vunpack.c.l.b16 %v475
    %v1567 = vunpack.c.h.b16 %v475
    %v1568 = vunpack.c.l.b16 %v476
    %v1569 = vunpack.c.h.b16 %v476
    %v1570 = vunpack.c.l.b16 %v477
    %v1571 = vunpack.c.h.b16 %v477
    %v1572 = vunpack.c.l.b16 %v478
    %v1573 = vunpack.c.h.b16 %v478
    %v1574 = vunpack.c.l.b16 %v479
    %v1575 = vunpack.c.h.b16 %v479
    %v1576 = vunpack.c.l.b16 %v480
    %v1577 = vunpack.c.h.b16 %v480
    %v1578 = vunpack.c.l.b16 %v481
    %v1579 = vunpack.c.h.b16 %v481
    %v1580 = vunpack.c.l.b16 %v482
    %v1581 = vunpack.c.h.b16 %v482
    %v1582 = vunpack.c.l.b16 %v483
    %v1583 = vunpack.c.h.b16 %v483
    %v1584 = vunpack.c.l.b16 %v484
    %v1585 = vunpack.c.h.b16 %v484
    %v1586 = vunpack.c.l.b16 %v485
    %v1587 = vunpack.c.h.b16 %v485
    %v1588 = vunpack.c.l.b16 %v486
    %v1589 = vunpack.c.h.b16 %v486
    %v1590 = vunpack.c.l.b16 %v487
    %v1591 = vunpack.c.h.b16 %v487
    %v1592 = vunpack.c.l.b16 %v488
    %v1593 = vunpack.c.h.b16 %v488
    %v1594 = vunpack.c.l.b16 %v489
    %v1595 = vunpack.c.h.b16 %v489
    %v1596 = vunpack.c.l.b16 %v490
    %v1597 = vunpack.c.h.b16 %v490
    %v1598 = vunpack.c.l.b16 %v491
    %v1599 = vunpack.c.h.b16 %v491
    %v1600 = vunpack.c.l.b16 %v492
    %v1601 = vunpack.c.h.b16 %v492
    %v1602 = vunpack.c.l.b16 %v493
    %v1603 = vunpack.c.h.b16 %v493
    %v1604 = vunpack.c.l.b16 %v494
    %v1605 = vunpack.c.h.b16 %v494
    %v1606 = vunpack.c.l.b16 %v495
    %v1607 = vunpack.c.h.b16 %v495
    %v1608 = vunpack.c.l.b16 %v496
    %v1609 = vunpack.c.h.b16 %v496
    %v1610 = vunpack.c.l.b16 %v497
    %v1611 = vunpack.c.h.b16 %v497
    %v1612 = vunpack.c.l.b16 %v498
    %v1613 = vunpack.c.h.b16 %v498
    %v1614 = vunpack.c.l.b16 %v499
    %v1615 = vunpack.c.h.b16 %v499
    %v1616 = vunpack.c.l.b16 %v500
    %v1617 = vunpack.c.h.b16 %v500
    %v1618 = vunpack.c.l.b16 %v501
    %v1619 = vunpack.c.h.b16 %v501
    %v1620 = vunpack.c.l.b16 %v502
    %v1621 = vunpack.c.h.b16 %v502
    %v1622 = vunpack.c.l.b16 %v503
    %v1623 = vunpack.c.h.b16 %v503
    %v1624 = vunpack.c.l.b16 %v504
    %v1625 = vunpack.c.h.b16 %v504
    %v1626 = vunpack.c.l.b16 %v505
    %v1627 = vunpack.c.h.b16 %v505
    %v1628 = vunpack.c.l.b16 %v506
    %v1629 = vunpack.c.h.b16 %v506
    %v1630 = vunpack.c.l.b16 %v507
    %v1631 = vunpack.c.h.b16 %v507
    %v1632 = vunpack.c.l.b16 %v508
    %v1633 = vunpack.c.h.b16 %v508
    %v1634 = vunpack.c.l.b16 %v509
    %v1635 = vunpack.c.h.b16 %v509
    %v1636 = vunpack.c.l.b16 %v510
    %v1637 = vunpack.c.h.b16 %v510
    %v1638 = vunpack.c.l.b16 %v511
    %v1639 = vunpack.c.h.b16 %v511
    %v1640 = vunpack.c.l.b16 %v512
    %v1641 = vunpack.c.h.b16 %v512
    %v1642 = vunpack.c.l.b16 %v513
    %v1643 = vunpack.c.h.b16 %v513
    %v1644 = vunpack.c.l.b16 %v514
    %v1645 = vunpack.c.h.b16 %v514
    %v1646 = vunpack.c.l.b16 %v515
    %v1647 = vunpack.c.h.b16 %v515
    %v1648 = vunpack.c.l.b16 %v516
    %v1649 = vunpack.c.h.b16 %v516
    %v1650 = vunpack.c.l.b16 %v517
    %v1651 = vunpack.c.h.b16 %v517
    %v1652 = vunpack.c.l.b16 %v518
    %v1653 = vunpack.c.h.b16 %v518
    %v1654 = vunpack.c.l.b16 %v519
    %v1655 = vunpack.c.h.b16 %v519
    %v1656 = vunpack.c.l.b16 %v520
    %v1657 = vunpack.c.h.b16 %v520
    %v1658 = vunpack.c.l.b16 %v521
    %v1659 = vunpack.c.h.b16 %v521
    %v1660 = vunpack.c.l.b16 %v522
    %v1661 = vunpack.c.h.b16 %v522
    %v1662 = vunpack.c.l.b16 %v523
    %v1663 = vunpack.c.h.b16 %v523
    %v1664 = vunpack.c.l.b16 %v524
    %v1665 = vunpack.c.h.b16 %v524
    %v1666 = vunpack.c.l.b16 %v525
    %v1667 = vunpack.c.h.b16 %v525
    %v1668 = vunpack.c.l.b16 %v526
    %v1669 = vunpack.c.h.b16 %v526
    %v1670 = vunpack.c.l.b16 %v527
    %v1671 = vunpack.c.h.b16 %v527
    %v1672 = vunpack.c.l.b16 %v528
    %v1673 = vunpack.c.h.b16 %v528
    %v1674 = vunpack.c.l.b16 %v529
    %v1675 = vunpack.c.h.b16 %v529
    %v1676 = vunpack.c.l.b16 %v530
    %v1677 = vunpack.c.h.b16 %v530
    %v1678 = vunpack.c.l.b16 %v531
    %v1679 = vunpack.c.h.b16 %v531
    %v1680 = vunpack.c.l.b16 %v532
    %v1681 = vunpack.c.h.b16 %v532
    %v1682 = vunpack.c.l.b16 %v533
    %v1683 = vunpack.c.h.b16 %v533
    %v1684 = vunpack.c.l.b16 %v534
    %v1685 = vunpack.c.h.b16 %v534
    %v1686 = vunpack.c.l.b16 %v535
    %v1687 = vunpack.c.h.b16 %v535
    %v1688 = vunpack.c.l.b16 %v536
    %v1689 = vunpack.c.h.b16 %v536
    %v1690 = vunpack.c.l.b16 %v537
    %v1691 = vunpack.c.h.b16 %v537
    %v1692 = vunpack.c.l.b16 %v538
    %v1693 = vunpack.c.h.b16 %v538
    %v1694 = vunpack.c.l.b16 %v539
    %v1695 = vunpack.c.h.b16 %v539
    %v1696 = vunpack.c.l.b16 %v540
    %v1697 = vunpack.c.h.b16 %v540
    %v1698 = vunpack.c.l.b16 %v541
    %v1699 = vunpack.c.h.b16 %v541
    %v1700 = vunpack.c.l.b16 %v542
    %v1701 = vunpack.c.h.b16 %v542
    %v1702 = vunpack.c.l.b16 %v543
    %v1703 = vunpack.c.h.b16 %v543
    %v1704 = vunpack.c.l.b16 %v544
    %v1705 = vunpack.c.h.b16 %v544
    %v1706 = vunpack.c.l.b16 %v545
    %v1707 = vunpack.c.h.b16 %v545
    %v1708 = vunpack.c.l.b16 %v546
    %v1709 = vunpack.c.h.b16 %v546
    %v1710 = vunpack.c.l.b16 %v547
    %v1711 = vunpack.c.h.b16 %v547
    %v1712 = vunpack.c.l.b16 %v548
    %v1713 = vunpack.c.h.b16 %v548
    %v1714 = vunpack.c.l.b16 %v549
    %v1715 = vunpack.c.h.b16 %v549
    %v1716 = vunpack.c.l.b16 %v550
    %v1717 = vunpack.c.h.b16 %v550
    %v1718 = vunpack.c.l.b16 %v551
    %v1719 = vunpack.c.h.b16 %v551
    %v1720 = vunpack.c.l.b16 %v552
    %v1721 = vunpack.c.h.b16 %v552
    %v1722 = vunpack.c.l.b16 %v553
    %v1723 = vunpack.c.h.b16 %v553
    %v1724 = vunpack.c.l.b16 %v554
    %v1725 = vunpack.c.h.b16 %v554
    %v1726 = vunpack.c.l.b16 %v555
    %v1727 = vunpack.c.h.b16 %v555
    %v1728 = vunpack.c.l.b16 %v556
    %v1729 = vunpack.c.h.b16 %v556
    %v1730 = vunpack.c.l.b16 %v557
    %v1731 = vunpack.c.h.b16 %v557
    %v1732 = vunpack.c.l.b16 %v558
    %v1733 = vunpack.c.h.b16 %v558
    %v1734 = vunpack.c.l.b16 %v559
    %v1735 = vunpack.c.h.b16 %v559
    %v1736 = vunpack.c.l.b16 %v560
    %v1737 = vunpack.c.h.b16 %v560
    %v1738 = vunpack.c.l.b16 %v561
    %v1739 = vunpack.c.h.b16 %v561
    %v1740 = vunpack.c.l.b16 %v562
    %v1741 = vunpack.c.h.b16 %v562
    %v1742 = vunpack.c.l.b16 %v563
    %v1743 = vunpack.c.h.b16 %v563
    %v1744 = vunpack.c.l.b16 %v564
    %v1745 = vunpack.c.h.b16 %v564
    %v1746 = vunpack.c.l.b16 %v565
    %v1747 = vunpack.c.h.b16 %v565
    %v1748 = vunpack.c.l.b16 %v566
    %v1749 = vunpack.c.h.b16 %v566
    %v1750 = vunpack.c.l.b16 %v567
    %v1751 = vunpack.c.h.b16 %v567
    %v1752 = vunpack.c.l.b16 %v568
    %v1753 = vunpack.c.h.b16 %v568
    %v1754 = vunpack.c.l.b16 %v569
    %v1755 = vunpack.c.h.b16 %v569
    %v1756 = vunpack.c.l.b16 %v570
    %v1757 = vunpack.c.h.b16 %v570
    %v1758 = vunpack.c.l.b16 %v571
    %v1759 = vunpack.c.h.b16 %v571
    %v1760 = vunpack.c.l.b16 %v572
    %v1761 = vunpack.c.h.b16 %v572
    %v1762 = vunpack.c.l.b16 %v573
    %v1763 = vunpack.c.h.b16 %v573
    %v1764 = vunpack.c.l.b16 %v574
    %v1765 = vunpack.c.h.b16 %v574
    %v1766 = vunpack.c.l.b16 %v575
    %v1767 = vunpack.c.h.b16 %v575
    %v1768 = vunpack.c.l.b16 %v576
    %v1769 = vunpack.c.h.b16 %v576
    %v1770 = vunpack.c.l.b16 %v577
    %v1771 = vunpack.c.h.b16 %v577
    %v1772 = vunpack.c.l.b16 %v578
    %v1773 = vunpack.c.h.b16 %v578
    %v1774 = vunpack.c.l.b16 %v579
    %v1775 = vunpack.c.h.b16 %v579
    %v1776 = vunpack.c.l.b16 %v580
    %v1777 = vunpack.c.h.b16 %v580
    %v1778 = vunpack.c.l.b16 %v581
    %v1779 = vunpack.c.h.b16 %v581
    %v1780 = vunpack.c.l.b16 %v582
    %v1781 = vunpack.c.h.b16 %v582
    %v1782 = vunpack.c.l.b16 %v583
    %v1783 = vunpack.c.h.b16 %v583
    %v1784 = vunpack.c.l.b16 %v584
    %v1785 = vunpack.c.h.b16 %v584
    %v1786 = vunpack.c.l.b16 %v585
    %v1787 = vunpack.c.h.b16 %v585
    %v1788 = vunpack.c.l.b16 %v586
    %v1789 = vunpack.c.h.b16 %v586
    %v1790 = vunpack.c.l.b16 %v587
    %v1791 = vunpack.c.h.b16 %v587
    %v1792 = vunpack.c.l.b16 %v588
    %v1793 = vunpack.c.h.b16 %v588
    %v1794 = vunpack.c.l.b16 %v589
    %v1795 = vunpack.c.h.b16 %v589
    %v1796 = vunpack.c.l.b16 %v590
    %v1797 = vunpack.c.h.b16 %v590
    %v1798 = vunpack.c.l.b16 %v591
    %v1799 = vunpack.c.h.b16 %v591
    %v1800 = vunpack.c.l.b16 %v592
    %v1801 = vunpack.c.h.b16 %v592
    %v1802 = vunpack.c.l.b16 %v593
    %v1803 = vunpack.c.h.b16 %v593
    %v1804 = vunpack.c.l.b16 %v594
    %v1805 = vunpack.c.h.b16 %v594
    %v1806 = vunpack.c.l.b16 %v595
    %v1807 = vunpack.c.h.b16 %v595
    %v1808 = vunpack.c.l.b16 %v596
    %v1809 = vunpack.c.h.b16 %v596
    %v1810 = vunpack.c.l.b16 %v597
    %v1811 = vunpack.c.h.b16 %v597
    %v1812 = vunpack.c.l.b16 %v598
    %v1813 = vunpack.c.h.b16 %v598
    %v1814 = vunpack.c.l.b16 %v599
    %v1815 = vunpack.c.h.b16 %v599
    %v1816 = vunpack.c.l.b16 %v600
    %v1817 = vunpack.c.h.b16 %v600
    %v1818 = vunpack.c.l.b16 %v601
    %v1819 = vunpack.c.h.b16 %v601
    %v1820 = vunpack.c.l.b16 %v602
    %v1821 = vunpack.c.h.b16 %v602
    %v1822 = vunpack.c.l.b16 %v603
    %v1823 = vunpack.c.h.b16 %v603
    %v1824 = vunpack.c.l.b16 %v604
    %v1825 = vunpack.c.h.b16 %v604
    %v1826 = vunpack.c.l.b16 %v605
    %v1827 = vunpack.c.h.b16 %v605
    %v1828 = vunpack.c.l.b16 %v606
    %v1829 = vunpack.c.h.b16 %v606
    %v1830 = vunpack.c.l.b16 %v607
    %v1831 = vunpack.c.h.b16 %v607
    %v1832 = vunpack.c.l.b16 %v608
    %v1833 = vunpack.c.h.b16 %v608
    %v1834 = vunpack.c.l.b16 %v609
    %v1835 = vunpack.c.h.b16 %v609
    %v1836 = vunpack.c.l.b16 %v610
    %v1837 = vunpack.c.h.b16 %v610
    %v1838 = vunpack.c.l.b16 %v611
    %v1839 = vunpack.c.h.b16 %v611
    %v1840 = vunpack.c.l.b16 %v612
    %v1841 = vunpack.c.h.b16 %v612
    %v1842 = vunpack.c.l.b16 %v613
    %v1843 = vunpack.c.h.b16 %v613
    %v1844 = vunpack.c.l.b16 %v614
    %v1845 = vunpack.c.h.b16 %v614
    %v1846 = vunpack.c.l.b16 %v615
    %v1847 = vunpack.c.h.b16 %v615
    %v1848 = vunpack.c.l.b16 %v616
    %v1849 = vunpack.c.h.b16 %v616
    %v1850 = vunpack.c.l.b16 %v617
    %v1851 = vunpack.c.h.b16 %v617
    %v1852 = vunpack.c.l.b16 %v618
    %v1853 = vunpack.c.h.b16 %v618
    %v1854 = vunpack.c.l.b16 %v619
    %v1855 = vunpack.c.h.b16 %v619
    %v1856 = vunpack.c.l.b16 %v620
    %v1857 = vunpack.c.h.b16 %v620
    %v1858 = vunpack.c.l.b16 %v621
    %v1859 = vunpack.c.h.b16 %v621
    %v1860 = vunpack.c.l.b16 %v622
    %v1861 = vunpack.c.h.b16 %v622
    %v1862 = vunpack.c.l.b16 %v623
    %v1863 = vunpack.c.h.b16 %v623
    %v1864 = vunpack.c.l.b16 %v624
    %v1865 = vunpack.c.h.b16 %v624
    %v1866 = vunpack.c.l.b16 %v625
    %v1867 = vunpack.c.h.b16 %v625
    %v1868 = vunpack.c.l.b16 %v626
    %v1869 = vunpack.c.h.b16 %v626
    %v1870 = vunpack.c.l.b16 %v627
    %v1871 = vunpack.c.h.b16 %v627
    %v1872 = vunpack.c.l.b16 %v628
    %v1873 = vunpack.c.h.b16 %v628
    %v1874 = vunpack.c.l.b16 %v629
    %v1875 = vunpack.c.h.b16 %v629
    %v1876 = vunpack.c.l.b16 %v630
    %v1877 = vunpack.c.h.b16 %v630
    %v1878 = vunpack.c.l.b16 %v631
    %v1879 = vunpack.c.h.b16 %v631
    %v1880 = vunpack.c.l.b16 %v632
    %v1881 = vunpack.c.h.b16 %v632
    %v1882 = vunpack.c.l.b16 %v633
    %v1883 = vunpack.c.h.b16 %v633
    %v1884 = vunpack.c.l.b16 %v634
    %v1885 = vunpack.c.h.b16 %v634
    %v1886 = vunpack.c.l.b16 %v635
    %v1887 = vunpack.c.h.b16 %v635
    %v1888 = vunpack.c.l.b16 %v636
    %v1889 = vunpack.c.h.b16 %v636
    %v1890 = vunpack.c.l.b16 %v637
    %v1891 = vunpack.c.h.b16 %v637
    %v1892 = vunpack.c.l.b16 %v638
    %v1893 = vunpack.c.h.b16 %v638
    %v1894 = vunpack.c.l.b16 %v639
    %v1895 = vunpack.c.h.b16 %v639
    %v1896 = vunpack.c.l.b16 %v640
    %v1897 = vunpack.c.h.b16 %v640
    %v1898 = vunpack.c.l.b16 %v641
    %v1899 = vunpack.c.h.b16 %v641
    %v1900 = vunpack.c.l.b16 %v642
    %v1901 = vunpack.c.h.b16 %v642
    %v1902 = vunpack.c.l.b16 %v643
    %v1903 = vunpack.c.h.b16 %v643
    %v1904 = vunpack.c.l.b16 %v644
    %v1905 = vunpack.c.h.b16 %v644
    %v1906 = vunpack.c.l.b16 %v645
    %v1907 = vunpack.c.h.b16 %v645
    %v1908 = vunpack.c.l.b16 %v646
    %v1909 = vunpack.c.h.b16 %v646
    %v1910 = vunpack.c.l.b16 %v647
    %v1911 = vunpack.c.h.b16 %v647
    %v1912 = vunpack.c.l.b16 %v648
    %v1913 = vunpack.c.h.b16 %v648
    %v1914 = vunpack.c.l.b16 %v649
    %v1915 = vunpack.c.h.b16 %v649
    %v1916 = vunpack.c.l.b16 %v650
    %v1917 = vunpack.c.h.b16 %v650
    %v1918 = vunpack.c.l.b16 %v651
    %v1919 = vunpack.c.h.b16 %v651
    %v1920 = vunpack.c.l.b16 %v652
    %v1921 = vunpack.c.h.b16 %v652
    %v1922 = vunpack.c.l.b16 %v653
    %v1923 = vunpack.c.h.b16 %v653
    %v1924 = vunpack.c.l.b16 %v654
    %v1925 = vunpack.c.h.b16 %v654
    %v1926 = vunpack.c.l.b16 %v655
    %v1927 = vunpack.c.h.b16 %v655
    %v1928 = vunpack.c.l.b16 %v656
    %v1929 = vunpack.c.h.b16 %v656
    %v1930 = vunpack.c.l.b16 %v657
    %v1931 = vunpack.c.h.b16 %v657
    %v1932 = vunpack.c.l.b16 %v658
    %v1933 = vunpack.c.h.b16 %v658
    %v1934 = vunpack.c.l.b16 %v659
    %v1935 = vunpack.c.h.b16 %v659
    %v1936 = vunpack.c.l.b16 %v660
    %v1937 = vunpack.c.h.b16 %v660
    %v1938 = vunpack.c.l.b16 %v661
    %v1939 = vunpack.c.h.b16 %v661
    %v1940 = vunpack.c.l.b16 %v662
    %v1941 = vunpack.c.h.b16 %v662
    %v1942 = vunpack.c.l.b16 %v663
    %v1943 = vunpack.c.h.b16 %v663
    %v1944 = vunpack.c.l.b16 %v664
    %v1945 = vunpack.c.h.b16 %v664
    %v1946 = vunpack.c.l.b16 %v665
    %v1947 = vunpack.c.h.b16 %v665
    %v1948 = vunpack.c.l.b16 %v666
    %v1949 = vunpack.c.h.b16 %v666
    %v1950 = vunpack.c.l.b16 %v667
    %v1951 = vunpack.c.h.b16 %v667
    %v1952 = vunpack.c.l.b16 %v668
    %v1953 = vunpack.c.h.b16 %v668
    %v1954 = vunpack.c.l.b16 %v669
    %v1955 = vunpack.c.h.b16 %v669
    %v1956 = vunpack.c.l.b16 %v670
    %v1957 = vunpack.c.h.b16 %v670
    %v1958 = vunpack.c.l.b16 %v671
    %v1959 = vunpack.c.h.b16 %v671
    %v1960 = vunpack.c.l.b16 %v672
    %v1961 = vunpack.c.h.b16 %v672
    %v1962 = vunpack.c.l.b16 %v673
    %v1963 = vunpack.c.h.b16 %v673
    %v1964 = vunpack.c.l.b16 %v674
    %v1965 = vunpack.c.h.b16 %v674
    %v1966 = vunpack.c.l.b16 %v675
    %v1967 = vunpack.c.h.b16 %v675
    %v1968 = vunpack.c.l.b16 %v676
    %v1969 = vunpack.c.h.b16 %v676
    %v1970 = vunpack.c.l.b16 %v677
    %v1971 = vunpack.c.h.b16 %v677
    %v1972 = vunpack.c.l.b16 %v678
    %v1973 = vunpack.c.h.b16 %v678
    %v1974 = vunpack.c.l.b16 %v679
    %v1975 = vunpack.c.h.b16 %v679
    %v1976 = vunpack.c.l.b16 %v680
    %v1977 = vunpack.c.h.b16 %v680
    %v1978 = vunpack.c.l.b16 %v681
    %v1979 = vunpack.c.h.b16 %v681
    %v1980 = vunpack.c.l.b16 %v682
    %v1981 = vunpack.c.h.b16 %v682
    %v1982 = vunpack.c.l.b16 %v683
    %v1983 = vunpack.c.h.b16 %v683
    %v1984 = vunpack.c.l.b16 %v684
    %v1985 = vunpack.c.h.b16 %v684
    %v1986 = vunpack.c.l.b16 %v685
    %v1987 = vunpack.c.h.b16 %v685
    %v1988 = vunpack.c.l.b16 %v686
    %v1989 = vunpack.c.h.b16 %v686
    %v1990 = vunpack.c.l.b16 %v687
    %v1991 = vunpack.c.h.b16 %v687
    %v1992 = vunpack.c.l.b16 %v688
    %v1993 = vunpack.c.h.b16 %v688
    %v1994 = vunpack.c.l.b16 %v689
    %v1995 = vunpack.c.h.b16 %v689
    %v1996 = vunpack.c.l.b16 %v690
    %v1997 = vunpack.c.h.b16 %v690
    %v1998 = vunpack.c.l.b16 %v691
    %v1999 = vunpack.c.h.b16 %v691
    %v2000 = vunpack.c.l.b16 %v692
    %v2001 = vunpack.c.h.b16 %v692
    %v2002 = vunpack.c.l.b16 %v693
    %v2003 = vunpack.c.h.b16 %v693
    %v2004 = vunpack.c.l.b16 %v694
    %v2005 = vunpack.c.h.b16 %v694
    %v2006 = vunpack.c.l.b16 %v695
    %v2007 = vunpack.c.h.b16 %v695
    %v2008 = vunpack.c.l.b16 %v696
    %v2009 = vunpack.c.h.b16 %v696
    %v2010 = vunpack.c.l.b16 %v697
    %v2011 = vunpack.c.h.b16 %v697
    %v2012 = vunpack.c.l.b16 %v698
    %v2013 = vunpack.c.h.b16 %v698
    %v2014 = vunpack.c.l.b16 %v699
    %v2015 = vunpack.c.h.b16 %v699
    %v2016 = vunpack.c.l.b16 %v700
    %v2017 = vunpack.c.h.b16 %v700
    %v2018 = vunpack.c.l.b16 %v701
    %v2019 = vunpack.c.h.b16 %v701
    %v2020 = vunpack.c.l.b16 %v702
    %v2021 = vunpack.c.h.b16 %v702
    %v2022 = vunpack.c.l.b16 %v703
    %v2023 = vunpack.c.h.b16 %v703
    %v2024 = vunpack.c.l.b16 %v704
    %v2025 = vunpack.c.h.b16 %v704
    %v2026 = vunpack.c.l.b16 %v705
    %v2027 = vunpack.c.h.b16 %v705
    %v2028 = vunpack.c.l.b16 %v706
    %v2029 = vunpack.c.h.b16 %v706
    %v2030 = vunpack.c.l.b16 %v707
    %v2031 = vunpack.c.h.b16 %v707
    %v2032 = vunpack.c.l.b16 %v708
    %v2033 = vunpack.c.h.b16 %v708
    %v2034 = vunpack.c.l.b16 %v709
    %v2035 = vunpack.c.h.b16 %v709
    %v2036 = vunpack.c.l.b16 %v710
    %v2037 = vunpack.c.h.b16 %v710
    %v2038 = vunpack.c.l.b16 %v711
    %v2039 = vunpack.c.h.b16 %v711
    %v2040 = vunpack.c.l.b16 %v712
    %v2041 = vunpack.c.h.b16 %v712
    %v2042 = vunpack.c.l.b16 %v713
    %v2043 = vunpack.c.h.b16 %v713
    %v2044 = vunpack.c.l.b16 %v714
    %v2045 = vunpack.c.h.b16 %v714
    %v2046 = vunpack.c.l.b16 %v715
    %v2047 = vunpack.c.h.b16 %v715
    %v2048 = vunpack.c.l.b16 %v716
    %v2049 = vunpack.c.h.b16 %v716
    %v2050 = vunpack.c.l.b16 %v717
    %v2051 = vunpack.c.h.b16 %v717
    %v2052 = vunpack.c.l.b16 %v718
    %v2053 = vunpack.c.h.b16 %v718
    %v2054 = vunpack.c.l.b16 %v719
    %v2055 = vunpack.c.h.b16 %v719
    %v2056 = vunpack.c.l.b16 %v720
    %v2057 = vunpack.c.h.b16 %v720
    %v2058 = vunpack.c.l.b16 %v721
    %v2059 = vunpack.c.h.b16 %v721
    %v2060 = vunpack.c.l.b16 %v722
    %v2061 = vunpack.c.h.b16 %v722
    %v2062 = vunpack.c.l.b16 %v723
    %v2063 = vunpack.c.h.b16 %v723
    %v2064 = vunpack.c.l.b16 %v724
    %v2065 = vunpack.c.h.b16 %v724
    %v2066 = vunpack.c.l.b16 %v725
    %v2067 = vunpack.c.h.b16 %v725
    %v2068 = vunpack.c.l.b16 %v726
    %v2069 = vunpack.c.h.b16 %v726
    %v2070 = vunpack.c.l.b16 %v727
    %v2071 = vunpack.c.h.b16 %v727
    %v2072 = vunpack.c.l.b16 %v728
    %v2073 = vunpack.c.h.b16 %v728
    %v2074 = vunpack.c.l.b16 %v729
    %v2075 = vunpack.c.h.b16 %v729
    %v2076 = vunpack.c.l.b16 %v730
    %v2077 = vunpack.c.h.b16 %v730
    %v2078 = vunpack.c.l.b16 %v731
    %v2079 = vunpack.c.h.b16 %v731
    %v2080 = vunpack.c.l.b16 %v732
    %v2081 = vunpack.c.h.b16 %v732
    %v2082 = vunpack.c.l.b16 %v733
    %v2083 = vunpack.c.h.b16 %v733
    %v2084 = vunpack.c.l.b16 %v734
    %v2085 = vunpack.c.h.b16 %v734
    %v2086 = vunpack.c.l.b16 %v735
    %v2087 = vunpack.c.h.b16 %v735
    %v2088 = vunpack.c.l.b16 %v736
    %v2089 = vunpack.c.h.b16 %v736
    %v2090 = vunpack.c.l.b16 %v737
    %v2091 = vunpack.c.h.b16 %v737
    %v2092 = vunpack.c.l.b16 %v738
    %v2093 = vunpack.c.h.b16 %v738
    %v2094 = vunpack.c.l.b16 %v739
    %v2095 = vunpack.c.h.b16 %v739
    %v2096 = vunpack.c.l.b16 %v740
    %v2097 = vunpack.c.h.b16 %v740
    %v2098 = vunpack.c.l.b16 %v741
    %v2099 = vunpack.c.h.b16 %v741
    %v2100 = vunpack.c.l.b16 %v742
    %v2101 = vunpack.c.h.b16 %v742
    %v2102 = vunpack.c.l.b16 %v743
    %v2103 = vunpack.c.h.b16 %v743
    %v2104 = vunpack.c.l.b16 %v744
    %v2105 = vunpack.c.h.b16 %v744
    %v2106 = vunpack.c.l.b16 %v745
    %v2107 = vunpack.c.h.b16 %v745
    %v2108 = vunpack.c.l.b16 %v746
    %v2109 = vunpack.c.h.b16 %v746
    %v2110 = vunpack.c.l.b16 %v747
    %v2111 = vunpack.c.h.b16 %v747
    %v2112 = vunpack.c.l.b16 %v748
    %v2113 = vunpack.c.h.b16 %v748
    %v2114 = vunpack.c.l.b16 %v749
    %v2115 = vunpack.c.h.b16 %v749
    %v2116 = vunpack.c.l.b16 %v750
    %v2117 = vunpack.c.h.b16 %v750
    %v2118 = vunpack.c.l.b16 %v751
    %v2119 = vunpack.c.h.b16 %v751
    %v2120 = vunpack.c.l.b16 %v752
    %v2121 = vunpack.c.h.b16 %v752
    %v2122 = vunpack.c.l.b16 %v753
    %v2123 = vunpack.c.h.b16 %v753
    %v2124 = vunpack.c.l.b16 %v754
    %v2125 = vunpack.c.h.b16 %v754
    %v2126 = vunpack.c.l.b16 %v755
    %v2127 = vunpack.c.h.b16 %v755
    %v2128 = vunpack.c.l.b16 %v756
    %v2129 = vunpack.c.h.b16 %v756
    %v2130 = vunpack.c.l.b16 %v757
    %v2131 = vunpack.c.h.b16 %v757
    %v2132 = vunpack.c.l.b16 %v758
    %v2133 = vunpack.c.h.b16 %v758
    %v2134 = vunpack.c.l.b16 %v759
    %v2135 = vunpack.c.h.b16 %v759
    %v2136 = vunpack.c.l.b16 %v760
    %v2137 = vunpack.c.h.b16 %v760
    %v2138 = vunpack.c.l.b16 %v761
    %v2139 = vunpack.c.h.b16 %v761
    %v2140 = vunpack.c.l.b16 %v762
    %v2141 = vunpack.c.h.b16 %v762
    %v2142 = vunpack.c.l.b16 %v763
    %v2143 = vunpack.c.h.b16 %v763
    %v2144 = vunpack.c.l.b16 %v764
    %v2145 = vunpack.c.h.b16 %v764
    %v2146 = vunpack.c.l.b16 %v765
    %v2147 = vunpack.c.h.b16 %v765
    %v2148 = vunpack.c.l.b16 %v766
    %v2149 = vunpack.c.h.b16 %v766
    %v2150 = vunpack.c.l.b16 %v767
    %v2151 = vunpack.c.h.b16 %v767
    %v2152 = vunpack.c.l.b16 %v768
    %v2153 = vunpack.c.h.b16 %v768
    %v2154 = vunpack.c.l.b16 %v769
    %v2155 = vunpack.c.h.b16 %v769
    %v2156 = vunpack.c.l.b16 %v770
    %v2157 = vunpack.c.h.b16 %v770
    %v2158 = vunpack.c.l.b16 %v771
    %v2159 = vunpack.c.h.b16 %v771
    %v2160 = vunpack.c.l.b16 %v772
    %v2161 = vunpack.c.h.b16 %v772
    %v2162 = vunpack.c.l.b16 %v773
    %v2163 = vunpack.c.h.b16 %v773
    %v2164 = vunpack.c.l.b16 %v774
    %v2165 = vunpack.c.h.b16 %v774
    %v2166 = vunpack.c.l.b16 %v775
    %v2167 = vunpack.c.h.b16 %v775
    %v2168 = vunpack.c.l.b16 %v776
    %v2169 = vunpack.c.h.b16 %v776
    %v2170 = vunpack.c.l.b16 %v777
    %v2171 = vunpack.c.h.b16 %v777
    %v2172 = vunpack.c.l.b16 %v778
    %v2173 = vunpack.c.h.b16 %v778
    %v2174 = vunpack.c.l.b16 %v779
    %v2175 = vunpack.c.h.b16 %v779
    %v2176 = vunpack.c.l.b16 %v780
    %v2177 = vunpack.c.h.b16 %v780
    %v2178 = vunpack.c.l.b16 %v781
    %v2179 = vunpack.c.h.b16 %v781
    %v2180 = vunpack.c.l.b16 %v782
    %v2181 = vunpack.c.h.b16 %v782
    %v2182 = vunpack.c.l.b16 %v783
    %v2183 = vunpack.c.h.b16 %v783
    %v2184 = vunpack.c.l.b16 %v784
    %v2185 = vunpack.c.h.b16 %v784
    %v2186 = vunpack.c.l.b16 %v785
    %v2187 = vunpack.c.h.b16 %v785
    %v2188 = vunpack.c.l.b16 %v786
    %v2189 = vunpack.c.h.b16 %v786
    %v2190 = vunpack.c.l.b16 %v787
    %v2191 = vunpack.c.h.b16 %v787
    %v2192 = vunpack.c.l.b16 %v788
    %v2193 = vunpack.c.h.b16 %v788
    %v2194 = vunpack.c.l.b16 %v789
    %v2195 = vunpack.c.h.b16 %v789
    %v2196 = vunpack.c.l.b16 %v790
    %v2197 = vunpack.c.h.b16 %v790
    %v2198 = vunpack.c.l.b16 %v791
    %v2199 = vunpack.c.h.b16 %v791
    %v2200 = vunpack.c.l.b16 %v792
    %v2201 = vunpack.c.h.b16 %v792
    %v2202 = vunpack.c.l.b16 %v793
    %v2203 = vunpack.c.h.b16 %v793
    %v2204 = vunpack.c.l.b16 %v794
    %v2205 = vunpack.c.h.b16 %v794
    %v2206 = vunpack.c.l.b16 %v795
    %v2207 = vunpack.c.h.b16 %v795
    %v2208 = vunpack.c.l.b16 %v796
    %v2209 = vunpack.c.h.b16 %v796
    %v2210 = vunpack.c.l.b16 %v797
    %v2211 = vunpack.c.h.b16 %v797
    %v2212 = vunpack.c.l.b16 %v798
    %v2213 = vunpack.c.h.b16 %v798
    %v2214 = vunpack.c.l.b16 %v799
    %v2215 = vunpack.c.h.b16 %v799
    %v2216 = vunpack.c.l.b16 %v800
    %v2217 = vunpack.c.h.b16 %v800
    %v2218 = vunpack.c.l.b16 %v801
    %v2219 = vunpack.c.h.b16 %v801
    %v2220 = vunpack.c.l.b16 %v802
    %v2221 = vunpack.c.h.b16 %v802
    %v2222 = vunpack.c.l.b16 %v803
    %v2223 = vunpack.c.h.b16 %v803
    %v2224 = vunpack.c.l.b16 %v804
    %v2225 = vunpack.c.h.b16 %v804
    %v2226 = vunpack.c.l.b16 %v805
    %v2227 = vunpack.c.h.b16 %v805
    %v2228 = vunpack.c.l.b16 %v806
    %v2229 = vunpack.c.h.b16 %v806
    %v2230 = vunpack.c.l.b16 %v807
    %v2231 = vunpack.c.h.b16 %v807
    %v2232 = vunpack.c.l.b16 %v808
    %v2233 = vunpack.c.h.b16 %v808
    %v2234 = vunpack.c.l.b16 %v809
    %v2235 = vunpack.c.h.b16 %v809
    %v2236 = vunpack.c.l.b16 %v810
    %v2237 = vunpack.c.h.b16 %v810
    %v2238 = vunpack.c.l.b16 %v811
    %v2239 = vunpack.c.h.b16 %v811
    %v2240 = vunpack.c.l.b16 %v812
    %v2241 = vunpack.c.h.b16 %v812
    %v2242 = vunpack.c.l.b16 %v813
    %v2243 = vunpack.c.h.b16 %v813
    %v2244 = vunpack.c.l.b16 %v814
    %v2245 = vunpack.c.h.b16 %v814
    %v2246 = vunpack.c.l.b16 %v815
    %v2247 = vunpack.c.h.b16 %v815
    %v2248 = vunpack.c.l.b16 %v816
    %v2249 = vunpack.c.h.b16 %v816
    %v2250 = vunpack.c.l.b16 %v817
    %v2251 = vunpack.c.h.b16 %v817
    %v2252 = vunpack.c.l.b16 %v818
    %v2253 = vunpack.c.h.b16 %v818
    %v2254 = vunpack.c.l.b16 %v819
    %v2255 = vunpack.c.h.b16 %v819
    %v2256 = vunpack.c.l.b16 %v820
    %v2257 = vunpack.c.h.b16 %v820
    %v2258 = vunpack.c.l.b16 %v821
    %v2259 = vunpack.c.h.b16 %v821
    %v2260 = vunpack.c.l.b16 %v822
    %v2261 = vunpack.c.h.b16 %v822
    %v2262 = vunpack.c.l.b16 %v823
    %v2263 = vunpack.c.h.b16 %v823
    %v2264 = vunpack.c.l.b16 %v824
    %v2265 = vunpack.c.h.b16 %v824
    %v2266 = vunpack.c.l.b16 %v825
    %v2267 = vunpack.c.h.b16 %v825
    %v2268 = vunpack.c.l.b16 %v826
    %v2269 = vunpack.c.h.b16 %v826
    %v2270 = vunpack.c.l.b16 %v827
    %v2271 = vunpack.c.h.b16 %v827
    %v2272 = vunpack.c.l.b16 %v828
    %v2273 = vunpack.c.h.b16 %v828
    %v2274 = vunpack.c.l.b16 %v829
    %v2275 = vunpack.c.h.b16 %v829
    %v2276 = vunpack.c.l.b16 %v830
    %v2277 = vunpack.c.h.b16 %v830
    %v2278 = vunpack.c.l.b16 %v831
    %v2279 = vunpack.c.h.b16 %v831
    %v2280 = vunpack.c.l.b16 %v832
    %v2281 = vunpack.c.h.b16 %v832
    %v2282 = vunpack.c.l.b16 %v833
    %v2283 = vunpack.c.h.b16 %v833
    %v2284 = vunpack.c.l.b16 %v834
    %v2285 = vunpack.c.h.b16 %v834
    %v2286 = vunpack.c.l.b16 %v835
    %v2287 = vunpack.c.h.b16 %v835
    %v2288 = vunpack.c.l.b16 %v836
    %v2289 = vunpack.c.h.b16 %v836
    %v2290 = vunpack.c.l.b16 %v837
    %v2291 = vunpack.c.h.b16 %v837
    %v2292 = vunpack.c.l.b16 %v838
    %v2293 = vunpack.c.h.b16 %v838
    %v2294 = vunpack.c.l.b16 %v839
    %v2295 = vunpack.c.h.b16 %v839
    %v2296 = vunpack.c.l.b16 %v840
    %v2297 = vunpack.c.h.b16 %v840
    %v2298 = vunpack.c.l.b16 %v841
    %v2299 = vunpack.c.h.b16 %v841
    %v2300 = vunpack.c.l.b16 %v842
    %v2301 = vunpack.c.h.b16 %v842
    %v2302 = vunpack.c.l.b16 %v843
    %v2303 = vunpack.c.h.b16 %v843
    %v2304 = vunpack.c.l.b16 %v844
    %v2305 = vunpack.c.h.b16 %v844
    %v2306 = vunpack.c.l.b16 %v845
    %v2307 = vunpack.c.h.b16 %v845
    %v2308 = vunpack.c.l.b16 %v846
    %v2309 = vunpack.c.h.b16 %v846
    %v2310 = vunpack.c.l.b16 %v847
    %v2311 = vunpack.c.h.b16 %v847
    %v2312 = vunpack.c.l.b16 %v848
    %v2313 = vunpack.c.h.b16 %v848
    %v2314 = vunpack.c.l.b16 %v849
    %v2315 = vunpack.c.h.b16 %v849
    %v2316 = vunpack.c.l.b16 %v850
    %v2317 = vunpack.c.h.b16 %v850
    %v2318 = vunpack.c.l.b16 %v851
    %v2319 = vunpack.c.h.b16 %v851
    %v2320 = vunpack.c.l.b16 %v852
    %v2321 = vunpack.c.h.b16 %v852
    %v2322 = vunpack.c.l.b16 %v853
    %v2323 = vunpack.c.h.b16 %v853
    %v2324 = vunpack.c.l.b16 %v854
    %v2325 = vunpack.c.h.b16 %v854
    %v2326 = vunpack.c.l.b16 %v855
    %v2327 = vunpack.c.h.b16 %v855
    %v2328 = vunpack.c.l.b16 %v856
    %v2329 = vunpack.c.h.b16 %v856
    %v2330 = vunpack.c.l.b16 %v857
    %v2331 = vunpack.c.h.b16 %v857
    %v2332 = vunpack.c.l.b16 %v858
    %v2333 = vunpack.c.h.b16 %v858
    %v2334 = vunpack.c.l.b16 %v859
    %v2335 = vunpack.c.h.b16 %v859
    %v2336 = vunpack.c.l.b16 %v860
    %v2337 = vunpack.c.h.b16 %v860
    %v2338 = vunpack.c.l.b16 %v861
    %v2339 = vunpack.c.h.b16 %v861
    %v2340 = vunpack.c.l.b16 %v862
    %v2341 = vunpack.c.h.b16 %v862
    %v2342 = vunpack.c.l.b16 %v863
    %v2343 = vunpack.c.h.b16 %v863
    %v2344 = vunpack.c.l.b16 %v864
    %v2345 = vunpack.c.h.b16 %v864
    %v2346 = vunpack.c.l.b16 %v865
    %v2347 = vunpack.c.h.b16 %v865
    %v2348 = vunpack.c.l.b16 %v866
    %v2349 = vunpack.c.h.b16 %v866
    %v2350 = vunpack.c.l.b16 %v867
    %v2351 = vunpack.c.h.b16 %v867
    %v2352 = vunpack.c.l.b16 %v868
    %v2353 = vunpack.c.h.b16 %v868
    %v2354 = vunpack.c.l.b16 %v869
    %v2355 = vunpack.c.h.b16 %v869
    %v2356 = vunpack.c.l.b16 %v870
    %v2357 = vunpack.c.h.b16 %v870
    %v2358 = vunpack.c.l.b16 %v871
    %v2359 = vunpack.c.h.b16 %v871
    %v2360 = vunpack.c.l.b16 %v872
    %v2361 = vunpack.c.h.b16 %v872
    %v2362 = vunpack.c.l.b16 %v873
    %v2363 = vunpack.c.h.b16 %v873
    %v2364 = vunpack.c.l.b16 %v874
    %v2365 = vunpack.c.h.b16 %v874
    %v2366 = vunpack.c.l.b16 %v875
    %v2367 = vunpack.c.h.b16 %v875
    %v2368 = vunpack.c.l.b16 %v876
    %v2369 = vunpack.c.h.b16 %v876
    %v2370 = vunpack.c.l.b16 %v877
    %v2371 = vunpack.c.h.b16 %v877
    %v2372 = vunpack.c.l.b16 %v878
    %v2373 = vunpack.c.h.b16 %v878
    %v2374 = vunpack.c.l.b16 %v879
    %v2375 = vunpack.c.h.b16 %v879
    %v2376 = vunpack.c.l.b16 %v880
    %v2377 = vunpack.c.h.b16 %v880
    %v2378 = vunpack.c.l.b16 %v881
    %v2379 = vunpack.c.h.b16 %v881
    %v2380 = vunpack.c.l.b16 %v882
    %v2381 = vunpack.c.h.b16 %v882
    %v2382 = vunpack.c.l.b16 %v883
    %v2383 = vunpack.c.h.b16 %v883
    %v2384 = vunpack.c.l.b16 %v884
    %v2385 = vunpack.c.h.b16 %v884
    %v2386 = vunpack.c.l.b16 %v885
    %v2387 = vunpack.c.h.b16 %v885
    %v2388 = vunpack.c.l.b16 %v886
    %v2389 = vunpack.c.h.b16 %v886
    %v2390 = vunpack.c.l.b16 %v887
    %v2391 = vunpack.c.h.b16 %v887
    %v2392 = vunpack.c.l.b16 %v888
    %v2393 = vunpack.c.h.b16 %v888
    %v2394 = vunpack.c.l.b16 %v889
    %v2395 = vunpack.c.h.b16 %v889
    %v2396 = vunpack.c.l.b16 %v890
    %v2397 = vunpack.c.h.b16 %v890
    %v2398 = vunpack.c.l.b16 %v891
    %v2399 = vunpack.c.h.b16 %v891
    %v2400 = vunpack.c.l.b16 %v892
    %v2401 = vunpack.c.h.b16 %v892
    %v2402 = vunpack.c.l.b16 %v893
    %v2403 = vunpack.c.h.b16 %v893
    %v2404 = vunpack.c.l.b16 %v894
    %v2405 = vunpack.c.h.b16 %v894
    %v2406 = vunpack.c.l.b16 %v895
    %v2407 = vunpack.c.h.b16 %v895
    %v2408 = vunpack.c.l.b16 %v896
    %v2409 = vunpack.c.h.b16 %v896
    %v2410 = vunpack.c.l.b16 %v897
    %v2411 = vunpack.c.h.b16 %v897
    %v2412 = vunpack.c.l.b16 %v898
    %v2413 = vunpack.c.h.b16 %v898
    %v2414 = vunpack.c.l.b16 %v899
    %v2415 = vunpack.c.h.b16 %v899
    %v2416 = vunpack.c.l.b16 %v900
    %v2417 = vunpack.c.h.b16 %v900
    %v2418 = vunpack.c.l.b16 %v901
    %v2419 = vunpack.c.h.b16 %v901
    %v2420 = vunpack.c.l.b16 %v902
    %v2421 = vunpack.c.h.b16 %v902
    %v2422 = vunpack.c.l.b16 %v903
    %v2423 = vunpack.c.h.b16 %v903
    %v2424 = vunpack.c.l.b16 %v904
    %v2425 = vunpack.c.h.b16 %v904
    %v2426 = vunpack.c.l.b16 %v905
    %v2427 = vunpack.c.h.b16 %v905
    %v2428 = vunpack.c.l.b16 %v906
    %v2429 = vunpack.c.h.b16 %v906
    %v2430 = vunpack.c.l.b16 %v907
    %v2431 = vunpack.c.h.b16 %v907
    %v2432 = vunpack.c.l.b16 %v908
    %v2433 = vunpack.c.h.b16 %v908
    %v2434 = vunpack.c.l.b16 %v909
    %v2435 = vunpack.c.h.b16 %v909
    %v2436 = vunpack.c.l.b16 %v910
    %v2437 = vunpack.c.h.b16 %v910
    %v2438 = vunpack.c.l.b16 %v911
    %v2439 = vunpack.c.h.b16 %v911
    %v2440 = vunpack.c.l.b16 %v912
    %v2441 = vunpack.c.h.b16 %v912
    %v2442 = vunpack.c.l.b16 %v913
    %v2443 = vunpack.c.h.b16 %v913
    %v2444 = vunpack.c.l.b16 %v914
    %v2445 = vunpack.c.h.b16 %v914
    %v2446 = vunpack.c.l.b16 %v915
    %v2447 = vunpack.c.h.b16 %v915
    %v2448 = vunpack.c.l.b16 %v916
    %v2449 = vunpack.c.h.b16 %v916
    %v2450 = vunpack.c.l.b16 %v917
    %v2451 = vunpack.c.h.b16 %v917
    %v2452 = vunpack.c.l.b16 %v918
    %v2453 = vunpack.c.h.b16 %v918
    %v2454 = vunpack.c.l.b16 %v919
    %v2455 = vunpack.c.h.b16 %v919
    %v2456 = vunpack.c.l.b16 %v920
    %v2457 = vunpack.c.h.b16 %v920
    %v2458 = vunpack.c.l.b16 %v921
    %v2459 = vunpack.c.h.b16 %v921
    %v2460 = vunpack.c.l.b16 %v922
    %v2461 = vunpack.c.h.b16 %v922
    %v2462 = vunpack.c.l.b16 %v923
    %v2463 = vunpack.c.h.b16 %v923
    %v2464 = vunpack.c.l.b16 %v924
    %v2465 = vunpack.c.h.b16 %v924
    %v2466 = vunpack.c.l.b16 %v925
    %v2467 = vunpack.c.h.b16 %v925
    %v2468 = vunpack.c.l.b16 %v926
    %v2469 = vunpack.c.h.b16 %v926
    %v2470 = vunpack.c.l.b16 %v927
    %v2471 = vunpack.c.h.b16 %v927
    %v2472 = vunpack.c.l.b16 %v928
    %v2473 = vunpack.c.h.b16 %v928
    %v2474 = vunpack.c.l.b16 %v929
    %v2475 = vunpack.c.h.b16 %v929
    %v2476 = vunpack.c.l.b16 %v930
    %v2477 = vunpack.c.h.b16 %v930
    %v2478 = vunpack.c.l.b16 %v931
    %v2479 = vunpack.c.h.b16 %v931
    %v2480 = vunpack.c.l.b16 %v932
    %v2481 = vunpack.c.h.b16 %v932
    %v2482 = vunpack.c.l.b16 %v933
    %v2483 = vunpack.c.h.b16 %v933
    %v2484 = vunpack.c.l.b16 %v934
    %v2485 = vunpack.c.h.b16 %v934
    %v2486 = vunpack.c.l.b16 %v935
    %v2487 = vunpack.c.h.b16 %v935
    %v2488 = vunpack.c.l.b16 %v936
    %v2489 = vunpack.c.h.b16 %v936
    %v2490 = vunpack.c.l.b16 %v937
    %v2491 = vunpack.c.h.b16 %v937
    %v2492 = vunpack.c.l.b16 %v938
    %v2493 = vunpack.c.h.b16 %v938
    %v2494 = vunpack.c.l.b16 %v939
    %v2495 = vunpack.c.h.b16 %v939
    %v2496 = vunpack.c.l.b16 %v940
    %v2497 = vunpack.c.h.b16 %v940
    %v2498 = vunpack.c.l.b16 %v941
    %v2499 = vunpack.c.h.b16 %v941
    %v2500 = vunpack.c.l.b16 %v942
    %v2501 = vunpack.c.h.b16 %v942
    %v2502 = vunpack.c.l.b16 %v943
    %v2503 = vunpack.c.h.b16 %v943
    %v2504 = vunpack.c.l.b16 %v944
    %v2505 = vunpack.c.h.b16 %v944
    %v2506 = vunpack.c.l.b16 %v945
    %v2507 = vunpack.c.h.b16 %v945
    %v2508 = vunpack.c.l.b16 %v946
    %v2509 = vunpack.c.h.b16 %v946
    %v2510 = vunpack.c.l.b16 %v947
    %v2511 = vunpack.c.h.b16 %v947
    %v2512 = vunpack.c.l.b16 %v948
    %v2513 = vunpack.c.h.b16 %v948
    %v2514 = vunpack.c.l.b16 %v949
    %v2515 = vunpack.c.h.b16 %v949
    %v2516 = vunpack.c.l.b16 %v950
    %v2517 = vunpack.c.h.b16 %v950
    %v2518 = vunpack.c.l.b16 %v951
    %v2519 = vunpack.c.h.b16 %v951
    %v2520 = vunpack.c.l.b16 %v952
    %v2521 = vunpack.c.h.b16 %v952
    %v2522 = vunpack.c.l.b16 %v953
    %v2523 = vunpack.c.h.b16 %v953
    %v2524 = vunpack.c.l.b16 %v954
    %v2525 = vunpack.c.h.b16 %v954
    %v2526 = vunpack.c.l.b16 %v955
    %v2527 = vunpack.c.h.b16 %v955
    %v2528 = vunpack.c.l.b16 %v956
    %v2529 = vunpack.c.h.b16 %v956
    %v2530 = vunpack.c.l.b16 %v957
    %v2531 = vunpack.c.h.b16 %v957
    %v2532 = vunpack.c.l.b16 %v958
    %v2533 = vunpack.c.h.b16 %v958
    %v2534 = vunpack.c.l.b16 %v959
    %v2535 = vunpack.c.h.b16 %v959
    %v2536 = vunpack.c.l.b16 %v960
    %v2537 = vunpack.c.h.b16 %v960
    %v2538 = vunpack.c.l.b16 %v961
    %v2539 = vunpack.c.h.b16 %v961
    %v2540 = vpack.c.b16 %v1524, %v1516
    %v2541 = vpack.c.b16 %v1525, %v1517
    %v2542 = vpack.c.b16 %v1526, %v1518
    %v2543 = vpack.c.b16 %v1527, %v1519
    %v2544 = vpack.c.b16 %v1528, %v1520
    %v2545 = vpack.c.b16 %v1529, %v1521
    %v2546 = vpack.c.b16 %v1530, %v1522
    %v2547 = vpack.c.b16 %v1531, %v1523
    %v2548 = vpack.c.b16 %v1540, %v1532
    %v2549 = vpack.c.b16 %v1541, %v1533
    %v2550 = vpack.c.b16 %v1542, %v1534
    %v2551 = vpack.c.b16 %v1543, %v1535
    %v2552 = vpack.c.b16 %v1544, %v1536
    %v2553 = vpack.c.b16 %v1545, %v1537
    %v2554 = vpack.c.b16 %v1546, %v1538
    %v2555 = vpack.c.b16 %v1547, %v1539
    %v2556 = vpack.c.b16 %v1556, %v1548
    %v2557 = vpack.c.b16 %v1557, %v1549
    %v2558 = vpack.c.b16 %v1558, %v1550
    %v2559 = vpack.c.b16 %v1559, %v1551
    %v2560 = vpack.c.b16 %v1560, %v1552
    %v2561 = vpack.c.b16 %v1561, %v1553
    %v2562 = vpack.c.b16 %v1562, %v1554
    %v2563 = vpack.c.b16 %v1563, %v1555
    %v2564 = vpack.c.b16 %v1572, %v1564
    %v2565 = vpack.c.b16 %v1573, %v1565
    %v2566 = vpack.c.b16 %v1574, %v1566
    %v2567 = vpack.c.b16 %v1575, %v1567
    %v2568 = vpack.c.b16 %v1576, %v1568
    %v2569 = vpack.c.b16 %v1577, %v1569
    %v2570 = vpack.c.b16 %v1578, %v1570
    %v2571 = vpack.c.b16 %v1579, %v1571
    %v2572 = vpack.c.b16 %v1588, %v1580
    %v2573 = vpack.c.b16 %v1589, %v1581
    %v2574 = vpack.c.b16 %v1590, %v1582
    %v2575 = vpack.c.b16 %v1591, %v1583
    %v2576 = vpack.c.b16 %v1592, %v1584
    %v2577 = vpack.c.b16 %v1593, %v1585
    %v2578 = vpack.c.b16 %v1594, %v1586
    %v2579 = vpack.c.b16 %v1595, %v1587
    %v2580 = vpack.c.b16 %v1604, %v1596
    %v2581 = vpack.c.b16 %v1605, %v1597
    %v2582 = vpack.c.b16 %v1606, %v1598
    %v2583 = vpack.c.b16 %v1607, %v1599
    %v2584 = vpack.c.b16 %v1608, %v1600
    %v2585 = vpack.c.b16 %v1609, %v1601
    %v2586 = vpack.c.b16 %v1610, %v1602
    %v2587 = vpack.c.b16 %v1611, %v1603
    %v2588 = vpack.c.b16 %v1620, %v1612
    %v2589 = vpack.c.b16 %v1621, %v1613
    %v2590 = vpack.c.b16 %v1622, %v1614
    %v2591 = vpack.c.b16 %v1623, %v1615
    %v2592 = vpack.c.b16 %v1624, %v1616
    %v2593 = vpack.c.b16 %v1625, %v1617
    %v2594 = vpack.c.b16 %v1626, %v1618
    %v2595 = vpack.c.b16 %v1627, %v1619
    %v2596 = vpack.c.b16 %v1636, %v1628
    %v2597 = vpack.c.b16 %v1637, %v1629
    %v2598 = vpack.c.b16 %v1638, %v1630
    %v2599 = vpack.c.b16 %v1639, %v1631
    %v2600 = vpack.c.b16 %v1640, %v1632
    %v2601 = vpack.c.b16 %v1641, %v1633
    %v2602 = vpack.c.b16 %v1642, %v1634
    %v2603 = vpack.c.b16 %v1643, %v1635
    %v2604 = vpack.c.b16 %v1652, %v1644
    %v2605 = vpack.c.b16 %v1653, %v1645
    %v2606 = vpack.c.b16 %v1654, %v1646
    %v2607 = vpack.c.b16 %v1655, %v1647
    %v2608 = vpack.c.b16 %v1656, %v1648
    %v2609 = vpack.c.b16 %v1657, %v1649
    %v2610 = vpack.c.b16 %v1658, %v1650
    %v2611 = vpack.c.b16 %v1659, %v1651
    %v2612 = vpack.c.b16 %v1668, %v1660
    %v2613 = vpack.c.b16 %v1669, %v1661
    %v2614 = vpack.c.b16 %v1670, %v1662
    %v2615 = vpack.c.b16 %v1671, %v1663
    %v2616 = vpack.c.b16 %v1672, %v1664
    %v2617 = vpack.c.b16 %v1673, %v1665
    %v2618 = vpack.c.b16 %v1674, %v1666
    %v2619 = vpack.c.b16 %v1675, %v1667
    %v2620 = vpack.c.b16 %v1684, %v1676
    %v2621 = vpack.c.b16 %v1685, %v1677
    %v2622 = vpack.c.b16 %v1686, %v1678
    %v2623 = vpack.c.b16 %v1687, %v1679
    %v2624 = vpack.c.b16 %v1688, %v1680
    %v2625 = vpack.c.b16 %v1689, %v1681
    %v2626 = vpack.c.b16 %v1690, %v1682
    %v2627 = vpack.c.b16 %v1691, %v1683
    %v2628 = vpack.c.b16 %v1700, %v1692
    %v2629 = vpack.c.b16 %v1701, %v1693
    %v2630 = vpack.c.b16 %v1702, %v1694
    %v2631 = vpack.c.b16 %v1703, %v1695
    %v2632 = vpack.c.b16 %v1704, %v1696
    %v2633 = vpack.c.b16 %v1705, %v1697
    %v2634 = vpack.c.b16 %v1706, %v1698
    %v2635 = vpack.c.b16 %v1707, %v1699
    %v2636 = vpack.c.b16 %v1716, %v1708
    %v2637 = vpack.c.b16 %v1717, %v1709
    %v2638 = vpack.c.b16 %v1718, %v1710
    %v2639 = vpack.c.b16 %v1719, %v1711
    %v2640 = vpack.c.b16 %v1720, %v1712
    %v2641 = vpack.c.b16 %v1721, %v1713
    %v2642 = vpack.c.b16 %v1722, %v1714
    %v2643 = vpack.c.b16 %v1723, %v1715
    %v2644 = vpack.c.b16 %v1732, %v1724
    %v2645 = vpack.c.b16 %v1733, %v1725
    %v2646 = vpack.c.b16 %v1734, %v1726
    %v2647 = vpack.c.b16 %v1735, %v1727
    %v2648 = vpack.c.b16 %v1736, %v1728
    %v2649 = vpack.c.b16 %v1737, %v1729
    %v2650 = vpack.c.b16 %v1738, %v1730
    %v2651 = vpack.c.b16 %v1739, %v1731
    %v2652 = vpack.c.b16 %v1748, %v1740
    %v2653 = vpack.c.b16 %v1749, %v1741
    %v2654 = vpack.c.b16 %v1750, %v1742
    %v2655 = vpack.c.b16 %v1751, %v1743
    %v2656 = vpack.c.b16 %v1752, %v1744
    %v2657 = vpack.c.b16 %v1753, %v1745
    %v2658 = vpack.c.b16 %v1754, %v1746
    %v2659 = vpack.c.b16 %v1755, %v1747
    %v2660 = vpack.c.b16 %v1764, %v1756
    %v2661 = vpack.c.b16 %v1765, %v1757
    %v2662 = vpack.c.b16 %v1766, %v1758
    %v2663 = vpack.c.b16 %v1767, %v1759
    %v2664 = vpack.c.b16 %v1768, %v1760
    %v2665 = vpack.c.b16 %v1769, %v1761
    %v2666 = vpack.c.b16 %v1770, %v1762
    %v2667 = vpack.c.b16 %v1771, %v1763
    %v2668 = vpack.c.b16 %v1780, %v1772
    %v2669 = vpack.c.b16 %v1781, %v1773
    %v2670 = vpack.c.b16 %v1782, %v1774
    %v2671 = vpack.c.b16 %v1783, %v1775
    %v2672 = vpack.c.b16 %v1784, %v1776
    %v2673 = vpack.c.b16 %v1785, %v1777
    %v2674 = vpack.c.b16 %v1786, %v1778
    %v2675 = vpack.c.b16 %v1787, %v1779
    %v2676 = vpack.c.b16 %v1796, %v1788
    %v2677 = vpack.c.b16 %v1797, %v1789
    %v2678 = vpack.c.b16 %v1798, %v1790
    %v2679 = vpack.c.b16 %v1799, %v1791
    %v2680 = vpack.c.b16 %v1800, %v1792
    %v2681 = vpack.c.b16 %v1801, %v1793
    %v2682 = vpack.c.b16 %v1802, %v1794
    %v2683 = vpack.c.b16 %v1803, %v1795
    %v2684 = vpack.c.b16 %v1812, %v1804
    %v2685 = vpack.c.b16 %v1813, %v1805
    %v2686 = vpack.c.b16 %v1814, %v1806
    %v2687 = vpack.c.b16 %v1815, %v1807
    %v2688 = vpack.c.b16 %v1816, %v1808
    %v2689 = vpack.c.b16 %v1817, %v1809
    %v2690 = vpack.c.b16 %v1818, %v1810
    %v2691 = vpack.c.b16 %v1819, %v1811
    %v2692 = vpack.c.b16 %v1828, %v1820
    %v2693 = vpack.c.b16 %v1829, %v1821
    %v2694 = vpack.c.b16 %v1830, %v1822
    %v2695 = vpack.c.b16 %v1831, %v1823
    %v2696 = vpack.c.b16 %v1832, %v1824
    %v2697 = vpack.c.b16 %v1833, %v1825
    %v2698 = vpack.c.b16 %v1834, %v1826
    %v2699 = vpack.c.b16 %v1835, %v1827
    %v2700 = vpack.c.b16 %v1844, %v1836
    %v2701 = vpack.c.b16 %v1845, %v1837
    %v2702 = vpack.c.b16 %v1846, %v1838
    %v2703 = vpack.c.b16 %v1847, %v1839
    %v2704 = vpack.c.b16 %v1848, %v1840
    %v2705 = vpack.c.b16 %v1849, %v1841
    %v2706 = vpack.c.b16 %v1850, %v1842
    %v2707 = vpack.c.b16 %v1851, %v1843
    %v2708 = vpack.c.b16 %v1860, %v1852
    %v2709 = vpack.c.b16 %v1861, %v1853
    %v2710 = vpack.c.b16 %v1862, %v1854
    %v2711 = vpack.c.b16 %v1863, %v1855
    %v2712 = vpack.c.b16 %v1864, %v1856
    %v2713 = vpack.c.b16 %v1865, %v1857
    %v2714 = vpack.c.b16 %v1866, %v1858
    %v2715 = vpack.c.b16 %v1867, %v1859
    %v2716 = vpack.c.b16 %v1876, %v1868
    %v2717 = vpack.c.b16 %v1877, %v1869
    %v2718 = vpack.c.b16 %v1878, %v1870
    %v2719 = vpack.c.b16 %v1879, %v1871
    %v2720 = vpack.c.b16 %v1880, %v1872
    %v2721 = vpack.c.b16 %v1881, %v1873
    %v2722 = vpack.c.b16 %v1882, %v1874
    %v2723 = vpack.c.b16 %v1883, %v1875
    %v2724 = vpack.c.b16 %v1892, %v1884
    %v2725 = vpack.c.b16 %v1893, %v1885
    %v2726 = vpack.c.b16 %v1894, %v1886
    %v2727 = vpack.c.b16 %v1895, %v1887
    %v2728 = vpack.c.b16 %v1896, %v1888
    %v2729 = vpack.c.b16 %v1897, %v1889
    %v2730 = vpack.c.b16 %v1898, %v1890
    %v2731 = vpack.c.b16 %v1899, %v1891
    %v2732 = vpack.c.b16 %v1908, %v1900
    %v2733 = vpack.c.b16 %v1909, %v1901
    %v2734 = vpack.c.b16 %v1910, %v1902
    %v2735 = vpack.c.b16 %v1911, %v1903
    %v2736 = vpack.c.b16 %v1912, %v1904
    %v2737 = vpack.c.b16 %v1913, %v1905
    %v2738 = vpack.c.b16 %v1914, %v1906
    %v2739 = vpack.c.b16 %v1915, %v1907
    %v2740 = vpack.c.b16 %v1924, %v1916
    %v2741 = vpack.c.b16 %v1925, %v1917
    %v2742 = vpack.c.b16 %v1926, %v1918
    %v2743 = vpack.c.b16 %v1927, %v1919
    %v2744 = vpack.c.b16 %v1928, %v1920
    %v2745 = vpack.c.b16 %v1929, %v1921
    %v2746 = vpack.c.b16 %v1930, %v1922
    %v2747 = vpack.c.b16 %v1931, %v1923
    %v2748 = vpack.c.b16 %v1940, %v1932
    %v2749 = vpack.c.b16 %v1941, %v1933
    %v2750 = vpack.c.b16 %v1942, %v1934
    %v2751 = vpack.c.b16 %v1943, %v1935
    %v2752 = vpack.c.b16 %v1944, %v1936
    %v2753 = vpack.c.b16 %v1945, %v1937
    %v2754 = vpack.c.b16 %v1946, %v1938
    %v2755 = vpack.c.b16 %v1947, %v1939
    %v2756 = vpack.c.b16 %v1956, %v1948
    %v2757 = vpack.c.b16 %v1957, %v1949
    %v2758 = vpack.c.b16 %v1958, %v1950
    %v2759 = vpack.c.b16 %v1959, %v1951
    %v2760 = vpack.c.b16 %v1960, %v1952
    %v2761 = vpack.c.b16 %v1961, %v1953
    %v2762 = vpack.c.b16 %v1962, %v1954
    %v2763 = vpack.c.b16 %v1963, %v1955
    %v2764 = vpack.c.b16 %v1972, %v1964
    %v2765 = vpack.c.b16 %v1973, %v1965
    %v2766 = vpack.c.b16 %v1974, %v1966
    %v2767 = vpack.c.b16 %v1975, %v1967
    %v2768 = vpack.c.b16 %v1976, %v1968
    %v2769 = vpack.c.b16 %v1977, %v1969
    %v2770 = vpack.c.b16 %v1978, %v1970
    %v2771 = vpack.c.b16 %v1979, %v1971
    %v2772 = vpack.c.b16 %v1988, %v1980
    %v2773 = vpack.c.b16 %v1989, %v1981
    %v2774 = vpack.c.b16 %v1990, %v1982
    %v2775 = vpack.c.b16 %v1991, %v1983
    %v2776 = vpack.c.b16 %v1992, %v1984
    %v2777 = vpack.c.b16 %v1993, %v1985
    %v2778 = vpack.c.b16 %v1994, %v1986
    %v2779 = vpack.c.b16 %v1995, %v1987
    %v2780 = vpack.c.b16 %v2004, %v1996
    %v2781 = vpack.c.b16 %v2005, %v1997
    %v2782 = vpack.c.b16 %v2006, %v1998
    %v2783 = vpack.c.b16 %v2007, %v1999
    %v2784 = vpack.c.b16 %v2008, %v2000
    %v2785 = vpack.c.b16 %v2009, %v2001
    %v2786 = vpack.c.b16 %v2010, %v2002
    %v2787 = vpack.c.b16 %v2011, %v2003
    %v2788 = vpack.c.b16 %v2020, %v2012
    %v2789 = vpack.c.b16 %v2021, %v2013
    %v2790 = vpack.c.b16 %v2022, %v2014
    %v2791 = vpack.c.b16 %v2023, %v2015
    %v2792 = vpack.c.b16 %v2024, %v2016
    %v2793 = vpack.c.b16 %v2025, %v2017
    %v2794 = vpack.c.b16 %v2026, %v2018
    %v2795 = vpack.c.b16 %v2027, %v2019
    %v2796 = vpack.c.b16 %v2036, %v2028
    %v2797 = vpack.c.b16 %v2037, %v2029
    %v2798 = vpack.c.b16 %v2038, %v2030
    %v2799 = vpack.c.b16 %v2039, %v2031
    %v2800 = vpack.c.b16 %v2040, %v2032
    %v2801 = vpack.c.b16 %v2041, %v2033
    %v2802 = vpack.c.b16 %v2042, %v2034
    %v2803 = vpack.c.b16 %v2043, %v2035
    %v2804 = vpack.c.b16 %v2052, %v2044
    %v2805 = vpack.c.b16 %v2053, %v2045
    %v2806 = vpack.c.b16 %v2054, %v2046
    %v2807 = vpack.c.b16 %v2055, %v2047
    %v2808 = vpack.c.b16 %v2056, %v2048
    %v2809 = vpack.c.b16 %v2057, %v2049
    %v2810 = vpack.c.b16 %v2058, %v2050
    %v2811 = vpack.c.b16 %v2059, %v2051
    %v2812 = vpack.c.b16 %v2068, %v2060
    %v2813 = vpack.c.b16 %v2069, %v2061
    %v2814 = vpack.c.b16 %v2070, %v2062
    %v2815 = vpack.c.b16 %v2071, %v2063
    %v2816 = vpack.c.b16 %v2072, %v2064
    %v2817 = vpack.c.b16 %v2073, %v2065
    %v2818 = vpack.c.b16 %v2074, %v2066
    %v2819 = vpack.c.b16 %v2075, %v2067
    %v2820 = vpack.c.b16 %v2084, %v2076
    %v2821 = vpack.c.b16 %v2085, %v2077
    %v2822 = vpack.c.b16 %v2086, %v2078
    %v2823 = vpack.c.b16 %v2087, %v2079
    %v2824 = vpack.c.b16 %v2088, %v2080
    %v2825 = vpack.c.b16 %v2089, %v2081
    %v2826 = vpack.c.b16 %v2090, %v2082
    %v2827 = vpack.c.b16 %v2091, %v2083
    %v2828 = vpack.c.b16 %v2100, %v2092
    %v2829 = vpack.c.b16 %v2101, %v2093
    %v2830 = vpack.c.b16 %v2102, %v2094
    %v2831 = vpack.c.b16 %v2103, %v2095
    %v2832 = vpack.c.b16 %v2104, %v2096
    %v2833 = vpack.c.b16 %v2105, %v2097
    %v2834 = vpack.c.b16 %v2106, %v2098
    %v2835 = vpack.c.b16 %v2107, %v2099
    %v2836 = vpack.c.b16 %v2116, %v2108
    %v2837 = vpack.c.b16 %v2117, %v2109
    %v2838 = vpack.c.b16 %v2118, %v2110
    %v2839 = vpack.c.b16 %v2119, %v2111
    %v2840 = vpack.c.b16 %v2120, %v2112
    %v2841 = vpack.c.b16 %v2121, %v2113
    %v2842 = vpack.c.b16 %v2122, %v2114
    %v2843 = vpack.c.b16 %v2123, %v2115
    %v2844 = vpack.c.b16 %v2132, %v2124
    %v2845 = vpack.c.b16 %v2133, %v2125
    %v2846 = vpack.c.b16 %v2134, %v2126
    %v2847 = vpack.c.b16 %v2135, %v2127
    %v2848 = vpack.c.b16 %v2136, %v2128
    %v2849 = vpack.c.b16 %v2137, %v2129
    %v2850 = vpack.c.b16 %v2138, %v2130
    %v2851 = vpack.c.b16 %v2139, %v2131
    %v2852 = vpack.c.b16 %v2148, %v2140
    %v2853 = vpack.c.b16 %v2149, %v2141
    %v2854 = vpack.c.b16 %v2150, %v2142
    %v2855 = vpack.c.b16 %v2151, %v2143
    %v2856 = vpack.c.b16 %v2152, %v2144
    %v2857 = vpack.c.b16 %v2153, %v2145
    %v2858 = vpack.c.b16 %v2154, %v2146
    %v2859 = vpack.c.b16 %v2155, %v2147
    %v2860 = vpack.c.b16 %v2164, %v2156
    %v2861 = vpack.c.b16 %v2165, %v2157
    %v2862 = vpack.c.b16 %v2166, %v2158
    %v2863 = vpack.c.b16 %v2167, %v2159
    %v2864 = vpack.c.b16 %v2168, %v2160
    %v2865 = vpack.c.b16 %v2169, %v2161
    %v2866 = vpack.c.b16 %v2170, %v2162
    %v2867 = vpack.c.b16 %v2171, %v2163
    %v2868 = vpack.c.b16 %v2180, %v2172
    %v2869 = vpack.c.b16 %v2181, %v2173
    %v2870 = vpack.c.b16 %v2182, %v2174
    %v2871 = vpack.c.b16 %v2183, %v2175
    %v2872 = vpack.c.b16 %v2184, %v2176
    %v2873 = vpack.c.b16 %v2185, %v2177
    %v2874 = vpack.c.b16 %v2186, %v2178
    %v2875 = vpack.c.b16 %v2187, %v2179
    %v2876 = vpack.c.b16 %v2196, %v2188
    %v2877 = vpack.c.b16 %v2197, %v2189
    %v2878 = vpack.c.b16 %v2198, %v2190
    %v2879 = vpack.c.b16 %v2199, %v2191
    %v2880 = vpack.c.b16 %v2200, %v2192
    %v2881 = vpack.c.b16 %v2201, %v2193
    %v2882 = vpack.c.b16 %v2202, %v2194
    %v2883 = vpack.c.b16 %v2203, %v2195
    %v2884 = vpack.c.b16 %v2212, %v2204
    %v2885 = vpack.c.b16 %v2213, %v2205
    %v2886 = vpack.c.b16 %v2214, %v2206
    %v2887 = vpack.c.b16 %v2215, %v2207
    %v2888 = vpack.c.b16 %v2216, %v2208
    %v2889 = vpack.c.b16 %v2217, %v2209
    %v2890 = vpack.c.b16 %v2218, %v2210
    %v2891 = vpack.c.b16 %v2219, %v2211
    %v2892 = vpack.c.b16 %v2228, %v2220
    %v2893 = vpack.c.b16 %v2229, %v2221
    %v2894 = vpack.c.b16 %v2230, %v2222
    %v2895 = vpack.c.b16 %v2231, %v2223
    %v2896 = vpack.c.b16 %v2232, %v2224
    %v2897 = vpack.c.b16 %v2233, %v2225
    %v2898 = vpack.c.b16 %v2234, %v2226
    %v2899 = vpack.c.b16 %v2235, %v2227
    %v2900 = vpack.c.b16 %v2244, %v2236
    %v2901 = vpack.c.b16 %v2245, %v2237
    %v2902 = vpack.c.b16 %v2246, %v2238
    %v2903 = vpack.c.b16 %v2247, %v2239
    %v2904 = vpack.c.b16 %v2248, %v2240
    %v2905 = vpack.c.b16 %v2249, %v2241
    %v2906 = vpack.c.b16 %v2250, %v2242
    %v2907 = vpack.c.b16 %v2251, %v2243
    %v2908 = vpack.c.b16 %v2260, %v2252
    %v2909 = vpack.c.b16 %v2261, %v2253
    %v2910 = vpack.c.b16 %v2262, %v2254
    %v2911 = vpack.c.b16 %v2263, %v2255
    %v2912 = vpack.c.b16 %v2264, %v2256
    %v2913 = vpack.c.b16 %v2265, %v2257
    %v2914 = vpack.c.b16 %v2266, %v2258
    %v2915 = vpack.c.b16 %v2267, %v2259
    %v2916 = vpack.c.b16 %v2276, %v2268
    %v2917 = vpack.c.b16 %v2277, %v2269
    %v2918 = vpack.c.b16 %v2278, %v2270
    %v2919 = vpack.c.b16 %v2279, %v2271
    %v2920 = vpack.c.b16 %v2280, %v2272
    %v2921 = vpack.c.b16 %v2281, %v2273
    %v2922 = vpack.c.b16 %v2282, %v2274
    %v2923 = vpack.c.b16 %v2283, %v2275
    %v2924 = vpack.c.b16 %v2292, %v2284
    %v2925 = vpack.c.b16 %v2293, %v2285
    %v2926 = vpack.c.b16 %v2294, %v2286
    %v2927 = vpack.c.b16 %v2295, %v2287
    %v2928 = vpack.c.b16 %v2296, %v2288
    %v2929 = vpack.c.b16 %v2297, %v2289
    %v2930 = vpack.c.b16 %v2298, %v2290
    %v2931 = vpack.c.b16 %v2299, %v2291
    %v2932 = vpack.c.b16 %v2308, %v2300
    %v2933 = vpack.c.b16 %v2309, %v2301
    %v2934 = vpack.c.b16 %v2310, %v2302
    %v2935 = vpack.c.b16 %v2311, %v2303
    %v2936 = vpack.c.b16 %v2312, %v2304
    %v2937 = vpack.c.b16 %v2313, %v2305
    %v2938 = vpack.c.b16 %v2314, %v2306
    %v2939 = vpack.c.b16 %v2315, %v2307
    %v2940 = vpack.c.b16 %v2324, %v2316
    %v2941 = vpack.c.b16 %v2325, %v2317
    %v2942 = vpack.c.b16 %v2326, %v2318
    %v2943 = vpack.c.b16 %v2327, %v2319
    %v2944 = vpack.c.b16 %v2328, %v2320
    %v2945 = vpack.c.b16 %v2329, %v2321
    %v2946 = vpack.c.b16 %v2330, %v2322
    %v2947 = vpack.c.b16 %v2331, %v2323
    %v2948 = vpack.c.b16 %v2340, %v2332
    %v2949 = vpack.c.b16 %v2341, %v2333
    %v2950 = vpack.c.b16 %v2342, %v2334
    %v2951 = vpack.c.b16 %v2343, %v2335
    %v2952 = vpack.c.b16 %v2344, %v2336
    %v2953 = vpack.c.b16 %v2345, %v2337
    %v2954 = vpack.c.b16 %v2346, %v2338
    %v2955 = vpack.c.b16 %v2347, %v2339
    %v2956 = vpack.c.b16 %v2356, %v2348
    %v2957 = vpack.c.b16 %v2357, %v2349
    %v2958 = vpack.c.b16 %v2358, %v2350
    %v2959 = vpack.c.b16 %v2359, %v2351
    %v2960 = vpack.c.b16 %v2360, %v2352
    %v2961 = vpack.c.b16 %v2361, %v2353
    %v2962 = vpack.c.b16 %v2362, %v2354
    %v2963 = vpack.c.b16 %v2363, %v2355
    %v2964 = vpack.c.b16 %v2372, %v2364
    %v2965 = vpack.c.b16 %v2373, %v2365
    %v2966 = vpack.c.b16 %v2374, %v2366
    %v2967 = vpack.c.b16 %v2375, %v2367
    %v2968 = vpack.c.b16 %v2376, %v2368
    %v2969 = vpack.c.b16 %v2377, %v2369
    %v2970 = vpack.c.b16 %v2378, %v2370
    %v2971 = vpack.c.b16 %v2379, %v2371
    %v2972 = vpack.c.b16 %v2388, %v2380
    %v2973 = vpack.c.b16 %v2389, %v2381
    %v2974 = vpack.c.b16 %v2390, %v2382
    %v2975 = vpack.c.b16 %v2391, %v2383
    %v2976 = vpack.c.b16 %v2392, %v2384
    %v2977 = vpack.c.b16 %v2393, %v2385
    %v2978 = vpack.c.b16 %v2394, %v2386
    %v2979 = vpack.c.b16 %v2395, %v2387
    %v2980 = vpack.c.b16 %v2404, %v2396
    %v2981 = vpack.c.b16 %v2405, %v2397
    %v2982 = vpack.c.b16 %v2406, %v2398
    %v2983 = vpack.c.b16 %v2407, %v2399
    %v2984 = vpack.c.b16 %v2408, %v2400
    %v2985 = vpack.c.b16 %v2409, %v2401
    %v2986 = vpack.c.b16 %v2410, %v2402
    %v2987 = vpack.c.b16 %v2411, %v2403
    %v2988 = vpack.c.b16 %v2420, %v2412
    %v2989 = vpack.c.b16 %v2421, %v2413
    %v2990 = vpack.c.b16 %v2422, %v2414
    %v2991 = vpack.c.b16 %v2423, %v2415
    %v2992 = vpack.c.b16 %v2424, %v2416
    %v2993 = vpack.c.b16 %v2425, %v2417
    %v2994 = vpack.c.b16 %v2426, %v2418
    %v2995 = vpack.c.b16 %v2427, %v2419
    %v2996 = vpack.c.b16 %v2436, %v2428
    %v2997 = vpack.c.b16 %v2437, %v2429
    %v2998 = vpack.c.b16 %v2438, %v2430
    %v2999 = vpack.c.b16 %v2439, %v2431
    %v3000 = vpack.c.b16 %v2440, %v2432
    %v3001 = vpack.c.b16 %v2441, %v2433
    %v3002 = vpack.c.b16 %v2442, %v2434
    %v3003 = vpack.c.b16 %v2443, %v2435
    %v3004 = vpack.c.b16 %v2452, %v2444
    %v3005 = vpack.c.b16 %v2453, %v2445
    %v3006 = vpack.c.b16 %v2454, %v2446
    %v3007 = vpack.c.b16 %v2455, %v2447
    %v3008 = vpack.c.b16 %v2456, %v2448
    %v3009 = vpack.c.b16 %v2457, %v2449
    %v3010 = vpack.c.b16 %v2458, %v2450
    %v3011 = vpack.c.b16 %v2459, %v2451
    %v3012 = vpack.c.b16 %v2468, %v2460
    %v3013 = vpack.c.b16 %v2469, %v2461
    %v3014 = vpack.c.b16 %v2470, %v2462
    %v3015 = vpack.c.b16 %v2471, %v2463
    %v3016 = vpack.c.b16 %v2472, %v2464
    %v3017 = vpack.c.b16 %v2473, %v2465
    %v3018 = vpack.c.b16 %v2474, %v2466
    %v3019 = vpack.c.b16 %v2475, %v2467
    %v3020 = vpack.c.b16 %v2484, %v2476
    %v3021 = vpack.c.b16 %v2485, %v2477
    %v3022 = vpack.c.b16 %v2486, %v2478
    %v3023 = vpack.c.b16 %v2487, %v2479
    %v3024 = vpack.c.b16 %v2488, %v2480
    %v3025 = vpack.c.b16 %v2489, %v2481
    %v3026 = vpack.c.b16 %v2490, %v2482
    %v3027 = vpack.c.b16 %v2491, %v2483
    %v3028 = vpack.c.b16 %v2500, %v2492
    %v3029 = vpack.c.b16 %v2501, %v2493
    %v3030 = vpack.c.b16 %v2502, %v2494
    %v3031 = vpack.c.b16 %v2503, %v2495
    %v3032 = vpack.c.b16 %v2504, %v2496
    %v3033 = vpack.c.b16 %v2505, %v2497
    %v3034 = vpack.c.b16 %v2506, %v2498
    %v3035 = vpack.c.b16 %v2507, %v2499
    %v3036 = vpack.c.b16 %v2516, %v2508
    %v3037 = vpack.c.b16 %v2517, %v2509
    %v3038 = vpack.c.b16 %v2518, %v2510
    %v3039 = vpack.c.b16 %v2519, %v2511
    %v3040 = vpack.c.b16 %v2520, %v2512
    %v3041 = vpack.c.b16 %v2521, %v2513
    %v3042 = vpack.c.b16 %v2522, %v2514
    %v3043 = vpack.c.b16 %v2523, %v2515
    %v3044 = vpack.c.b16 %v2532, %v2524
    %v3045 = vpack.c.b16 %v2533, %v2525
    %v3046 = vpack.c.b16 %v2534, %v2526
    %v3047 = vpack.c.b16 %v2535, %v2527
    %v3048 = vpack.c.b16 %v2536, %v2528
    %v3049 = vpack.c.b16 %v2537, %v2529
    %v3050 = vpack.c.b16 %v2538, %v2530
    %v3051 = vpack.c.b16 %v2539, %v2531
    %3564 = vmatprep.subr.bf16.mxu0 %v2541
    %3565 = vmatpush1.bf16.msra.mxu0 %v2540
    %3566 = vmatprep.subr.bf16.mxu0 %v2549
    %3567 = vmatpush1.bf16.msra.mxu0 %v2548
    %3568 = vmatprep.subr.bf16.mxu0 %v2557
    %3569 = vmatpush1.bf16.msra.mxu0 %v2556
    %3570 = vmatprep.subr.bf16.mxu0 %v2565
    %3571 = vmatpush1.bf16.msra.mxu0 %v2564
    %3572 = vmatprep.subr.bf16.mxu0 %v2573
    %3573 = vmatpush1.bf16.msra.mxu0 %v2572
    %3574 = vmatprep.subr.bf16.mxu0 %v2581
    %3575 = vmatpush1.bf16.msra.mxu0 %v2580
    %3576 = vmatprep.subr.bf16.mxu0 %v2589
    %3577 = vmatpush1.bf16.msra.mxu0 %v2588
    %3578 = vmatprep.subr.bf16.mxu0 %v2597
    %3579 = vmatpush1.bf16.msra.mxu0 %v2596
    %3580 = vmatprep.subr.bf16.mxu0 %v2605
    %3581 = vmatpush1.bf16.msra.mxu0 %v2604
    %3582 = vmatprep.subr.bf16.mxu0 %v2613
    %3583 = vmatpush1.bf16.msra.mxu0 %v2612
    %3584 = vmatprep.subr.bf16.mxu0 %v2621
    %3585 = vmatpush1.bf16.msra.mxu0 %v2620
    %3586 = vmatprep.subr.bf16.mxu0 %v2629
    %3587 = vmatpush1.bf16.msra.mxu0 %v2628
    %3588 = vmatprep.subr.bf16.mxu0 %v2637
    %3589 = vmatpush1.bf16.msra.mxu0 %v2636
    %3590 = vmatprep.subr.bf16.mxu0 %v2645
    %3591 = vmatpush1.bf16.msra.mxu0 %v2644
    %3592 = vmatprep.subr.bf16.mxu0 %v2653
    %3593 = vmatpush1.bf16.msra.mxu0 %v2652
    %3594 = vmatprep.subr.bf16.mxu0 %v2661
    %3595 = vmatpush1.bf16.msra.mxu0 %v2660
    %3596 = vmatprep.mubr.bf16.mxu0 %v443
    %3597 = vmatmul.mubr.bf16.gmra.mrb[0].mxu0 %v442
    %v3598 = vpop.f32.mrb[0].mxu0
    %v3599 = vadd.f32 %v967, %v3598
    %v3600 = vpop.f32.mrb[0].mxu0
    %v3601 = vadd.f32 %v971, %v3600
    %v3602 = vpop.f32.mrb[0].mxu0
    %v3603 = vadd.f32 %v967, %v3602
    %v3604 = vpop.f32.mrb[0].mxu0
    %v3605 = vadd.f32 %v971, %v3604
    %3606 = vdwg.mxu0
    %3607 = vmatprep.subr.bf16.mxu0 %v2669
    %3608 = vmatpush1.bf16.msra.mxu0 %v2668
    %3609 = vmatprep.subr.bf16.mxu0 %v2677
    %3610 = vmatpush1.bf16.msra.mxu0 %v2676
    %3611 = vmatprep.subr.bf16.mxu0 %v2685
    %3612 = vmatpush1.bf16.msra.mxu0 %v2684
    %3613 = vmatprep.subr.bf16.mxu0 %v2693
    %3614 = vmatpush1.bf16.msra.mxu0 %v2692
    %3615 = vmatprep.subr.bf16.mxu0 %v2701
    %3616 = vmatpush1.bf16.msra.mxu0 %v2700
    %3617 = vmatprep.subr.bf16.mxu0 %v2709
    %3618 = vmatpush1.bf16.msra.mxu0 %v2708
    %3619 = vmatprep.subr.bf16.mxu0 %v2717
    %3620 = vmatpush1.bf16.msra.mxu0 %v2716
    %3621 = vmatprep.subr.bf16.mxu0 %v2725
    %3622 = vmatpush1.bf16.msra.mxu0 %v2724
    %3623 = vmatprep.subr.bf16.mxu0 %v2733
    %3624 = vmatpush1.bf16.msra.mxu0 %v2732
    %3625 = vmatprep.subr.bf16.mxu0 %v2741
    %3626 = vmatpush1.bf16.msra.mxu0 %v2740
    %3627 = vmatprep.subr.bf16.mxu0 %v2749
    %3628 = vmatpush1.bf16.msra.mxu0 %v2748
    %3629 = vmatprep.subr.bf16.mxu0 %v2757
    %3630 = vmatpush1.bf16.msra.mxu0 %v2756
    %3631 = vmatprep.subr.bf16.mxu0 %v2765
    %3632 = vmatpush1.bf16.msra.mxu0 %v2764
    %3633 = vmatprep.subr.bf16.mxu0 %v2773
    %3634 = vmatpush1.bf16.msra.mxu0 %v2772
    %3635 = vmatprep.subr.bf16.mxu0 %v2781
    %3636 = vmatpush1.bf16.msra.mxu0 %v2780
    %3637 = vmatprep.subr.bf16.mxu0 %v2789
    %3638 = vmatpush1.bf16.msra.mxu0 %v2788
    %3639 = vmatprep.mubr.bf16.mxu0 %v445
    %3640 = vmatmul.mubr.bf16.gmra.mrb[0].mxu0 %v444
    %v3641 = vpop.f32.mrb[0].mxu0
    %v3642 = vadd.f32 %v3599, %v3641
    %v3643 = vpop.f32.mrb[0].mxu0
    %v3644 = vadd.f32 %v3601, %v3643
    %v3645 = vpop.f32.mrb[0].mxu0
    %v3646 = vadd.f32 %v3603, %v3645
    %v3647 = vpop.f32.mrb[0].mxu0
    %v3648 = vadd.f32 %v3605, %v3647
    %3649 = vdwg.mxu0
    %3650 = vmatprep.subr.bf16.mxu0 %v2797
    %3651 = vmatpush1.bf16.msra.mxu0 %v2796
    %3652 = vmatprep.subr.bf16.mxu0 %v2805
    %3653 = vmatpush1.bf16.msra.mxu0 %v2804
    %3654 = vmatprep.subr.bf16.mxu0 %v2813
    %3655 = vmatpush1.bf16.msra.mxu0 %v2812
    %3656 = vmatprep.subr.bf16.mxu0 %v2821
    %3657 = vmatpush1.bf16.msra.mxu0 %v2820
    %3658 = vmatprep.subr.bf16.mxu0 %v2829
    %3659 = vmatpush1.bf16.msra.mxu0 %v2828
    %3660 = vmatprep.subr.bf16.mxu0 %v2837
    %3661 = vmatpush1.bf16.msra.mxu0 %v2836
    %3662 = vmatprep.subr.bf16.mxu0 %v2845
    %3663 = vmatpush1.bf16.msra.mxu0 %v2844
    %3664 = vmatprep.subr.bf16.mxu0 %v2853
    %3665 = vmatpush1.bf16.msra.mxu0 %v2852
    %3666 = vmatprep.subr.bf16.mxu0 %v2861
    %3667 = vmatpush1.bf16.msra.mxu0 %v2860
    %3668 = vmatprep.subr.bf16.mxu0 %v2869
    %3669 = vmatpush1.bf16.msra.mxu0 %v2868
    %3670 = vmatprep.subr.bf16.mxu0 %v2877
    %3671 = vmatpush1.bf16.msra.mxu0 %v2876
    %3672 = vmatprep.subr.bf16.mxu0 %v2885
    %3673 = vmatpush1.bf16.msra.mxu0 %v2884
    %3674 = vmatprep.subr.bf16.mxu0 %v2893
    %3675 = vmatpush1.bf16.msra.mxu0 %v2892
    %3676 = vmatprep.subr.bf16.mxu0 %v2901
    %3677 = vmatpush1.bf16.msra.mxu0 %v2900
    %3678 = vmatprep.subr.bf16.mxu0 %v2909
    %3679 = vmatpush1.bf16.msra.mxu0 %v2908
    %3680 = vmatprep.subr.bf16.mxu0 %v2917
    %3681 = vmatpush1.bf16.msra.mxu0 %v2916
    %3682 = vmatprep.mubr.bf16.mxu0 %v447
    %3683 = vmatmul.mubr.bf16.gmra.mrb[0].mxu0 %v446
    %v3684 = vpop.f32.mrb[0].mxu0
    %v3685 = vadd.f32 %v3642, %v3684
    %v3686 = vpop.f32.mrb[0].mxu0
    %v3687 = vadd.f32 %v3644, %v3686
    %v3688 = vpop.f32.mrb[0].mxu0
    %v3689 = vadd.f32 %v3646, %v3688
    %v3690 = vpop.f32.mrb[0].mxu0
    %v3691 = vadd.f32 %v3648, %v3690
    %3692 = vdwg.mxu0
    %3693 = vmatprep.subr.bf16.mxu0 %v2925
    %3694 = vmatpush1.bf16.msra.mxu0 %v2924
    %3695 = vmatprep.subr.bf16.mxu0 %v2933
    %3696 = vmatpush1.bf16.msra.mxu0 %v2932
    %3697 = vmatprep.subr.bf16.mxu0 %v2941
    %3698 = vmatpush1.bf16.msra.mxu0 %v2940
    %3699 = vmatprep.subr.bf16.mxu0 %v2949
    %3700 = vmatpush1.bf16.msra.mxu0 %v2948
    %3701 = vmatprep.subr.bf16.mxu0 %v2957
    %3702 = vmatpush1.bf16.msra.mxu0 %v2956
    %3703 = vmatprep.subr.bf16.mxu0 %v2965
    %3704 = vmatpush1.bf16.msra.mxu0 %v2964
    %3705 = vmatprep.subr.bf16.mxu0 %v2973
    %3706 = vmatpush1.bf16.msra.mxu0 %v2972
    %3707 = vmatprep.subr.bf16.mxu0 %v2981
    %3708 = vmatpush1.bf16.msra.mxu0 %v2980
    %3709 = vmatprep.subr.bf16.mxu0 %v2989
    %3710 = vmatpush1.bf16.msra.mxu0 %v2988
    %3711 = vmatprep.subr.bf16.mxu0 %v2997
    %3712 = vmatpush1.bf16.msra.mxu0 %v2996
    %3713 = vmatprep.subr.bf16.mxu0 %v3005
    %3714 = vmatpush1.bf16.msra.mxu0 %v3004
    %3715 = vmatprep.subr.bf16.mxu0 %v3013
    %3716 = vmatpush1.bf16.msra.mxu0 %v3012
    %3717 = vmatprep.subr.bf16.mxu0 %v3021
    %3718 = vmatpush1.bf16.msra.mxu0 %v3020
    %3719 = vmatprep.subr.bf16.mxu0 %v3029
    %3720 = vmatpush1.bf16.msra.mxu0 %v3028
    %3721 = vmatprep.subr.bf16.mxu0 %v3037
    %3722 = vmatpush1.bf16.msra.mxu0 %v3036
    %3723 = vmatprep.subr.bf16.mxu0 %v3045
    %3724 = vmatpush1.bf16.msra.mxu0 %v3044
    %3725 = vmatprep.mubr.bf16.mxu0 %v449
    %3726 = vmatmul.mubr.bf16.gmra.mrb[0].mxu0 %v448
    %v3727 = vpop.f32.mrb[0].mxu0
    %v3728 = vadd.f32 %v3685, %v3727
    %v3729 = vpop.f32.mrb[0].mxu0
    %v3730 = vadd.f32 %v3687, %v3729
    %v3731 = vpop.f32.mrb[0].mxu0
    %v3732 = vadd.f32 %v3689, %v3731
    %v3733 = vpop.f32.mrb[0].mxu0
    %v3734 = vadd.f32 %v3691, %v3733
    %3735 = vdwg.mxu0
    %3736 = vmatprep.subr.bf16.mxu0 %v2543
    %3737 = vmatpush1.bf16.msra.mxu0 %v2542
    %3738 = vmatprep.subr.bf16.mxu0 %v2551
    %3739 = vmatpush1.bf16.msra.mxu0 %v2550
    %3740 = vmatprep.subr.bf16.mxu0 %v2559
    %3741 = vmatpush1.bf16.msra.mxu0 %v2558
    %3742 = vmatprep.subr.bf16.mxu0 %v2567
    %3743 = vmatpush1.bf16.msra.mxu0 %v2566
    %3744 = vmatprep.subr.bf16.mxu0 %v2575
    %3745 = vmatpush1.bf16.msra.mxu0 %v2574
    %3746 = vmatprep.subr.bf16.mxu0 %v2583
    %3747 = vmatpush1.bf16.msra.mxu0 %v2582
    %3748 = vmatprep.subr.bf16.mxu0 %v2591
    %3749 = vmatpush1.bf16.msra.mxu0 %v2590
    %3750 = vmatprep.subr.bf16.mxu0 %v2599
    %3751 = vmatpush1.bf16.msra.mxu0 %v2598
    %3752 = vmatprep.subr.bf16.mxu0 %v2607
    %3753 = vmatpush1.bf16.msra.mxu0 %v2606
    %3754 = vmatprep.subr.bf16.mxu0 %v2615
    %3755 = vmatpush1.bf16.msra.mxu0 %v2614
    %3756 = vmatprep.subr.bf16.mxu0 %v2623
    %3757 = vmatpush1.bf16.msra.mxu0 %v2622
    %3758 = vmatprep.subr.bf16.mxu0 %v2631
    %3759 = vmatpush1.bf16.msra.mxu0 %v2630
    %3760 = vmatprep.subr.bf16.mxu0 %v2639
    %3761 = vmatpush1.bf16.msra.mxu0 %v2638
    %3762 = vmatprep.subr.bf16.mxu0 %v2647
    %3763 = vmatpush1.bf16.msra.mxu0 %v2646
    %3764 = vmatprep.subr.bf16.mxu0 %v2655
    %3765 = vmatpush1.bf16.msra.mxu0 %v2654
    %3766 = vmatprep.subr.bf16.mxu0 %v2663
    %3767 = vmatpush1.bf16.msra.mxu0 %v2662
    %3768 = vmatprep.mubr.bf16.mxu0 %v443
    %3769 = vmatmul.mubr.bf16.gmra.mrb[0].mxu0 %v442
    %v3770 = vpop.f32.mrb[0].mxu0
    %v3771 = vadd.f32 %v975, %v3770
    %v3772 = vpop.f32.mrb[0].mxu0
    %v3773 = vadd.f32 %v979, %v3772
    %v3774 = vpop.f32.mrb[0].mxu0
    %v3775 = vadd.f32 %v975, %v3774
    %v3776 = vpop.f32.mrb[0].mxu0
    %v3777 = vadd.f32 %v979, %v3776
    %3778 = vdwg.mxu0
    %3779 = vmatprep.subr.bf16.mxu0 %v2671
    %3780 = vmatpush1.bf16.msra.mxu0 %v2670
    %3781 = vmatprep.subr.bf16.mxu0 %v2679
    %3782 = vmatpush1.bf16.msra.mxu0 %v2678
    %3783 = vmatprep.subr.bf16.mxu0 %v2687
    %3784 = vmatpush1.bf16.msra.mxu0 %v2686
    %3785 = vmatprep.subr.bf16.mxu0 %v2695
    %3786 = vmatpush1.bf16.msra.mxu0 %v2694
    %3787 = vmatprep.subr.bf16.mxu0 %v2703
    %3788 = vmatpush1.bf16.msra.mxu0 %v2702
    %3789 = vmatprep.subr.bf16.mxu0 %v2711
    %3790 = vmatpush1.bf16.msra.mxu0 %v2710
    %3791 = vmatprep.subr.bf16.mxu0 %v2719
    %3792 = vmatpush1.bf16.msra.mxu0 %v2718
    %3793 = vmatprep.subr.bf16.mxu0 %v2727
    %3794 = vmatpush1.bf16.msra.mxu0 %v2726
    %3795 = vmatprep.subr.bf16.mxu0 %v2735
    %3796 = vmatpush1.bf16.msra.mxu0 %v2734
    %3797 = vmatprep.subr.bf16.mxu0 %v2743
    %3798 = vmatpush1.bf16.msra.mxu0 %v2742
    %3799 = vmatprep.subr.bf16.mxu0 %v2751
    %3800 = vmatpush1.bf16.msra.mxu0 %v2750
    %3801 = vmatprep.subr.bf16.mxu0 %v2759
    %3802 = vmatpush1.bf16.msra.mxu0 %v2758
    %3803 = vmatprep.subr.bf16.mxu0 %v2767
    %3804 = vmatpush1.bf16.msra.mxu0 %v2766
    %3805 = vmatprep.subr.bf16.mxu0 %v2775
    %3806 = vmatpush1.bf16.msra.mxu0 %v2774
    %3807 = vmatprep.subr.bf16.mxu0 %v2783
    %3808 = vmatpush1.bf16.msra.mxu0 %v2782
    %3809 = vmatprep.subr.bf16.mxu0 %v2791
    %3810 = vmatpush1.bf16.msra.mxu0 %v2790
    %3811 = vmatprep.mubr.bf16.mxu0 %v445
    %3812 = vmatmul.mubr.bf16.gmra.mrb[0].mxu0 %v444
    %v3813 = vpop.f32.mrb[0].mxu0
    %v3814 = vadd.f32 %v3771, %v3813
    %v3815 = vpop.f32.mrb[0].mxu0
    %v3816 = vadd.f32 %v3773, %v3815
    %v3817 = vpop.f32.mrb[0].mxu0
    %v3818 = vadd.f32 %v3775, %v3817
    %v3819 = vpop.f32.mrb[0].mxu0
    %v3820 = vadd.f32 %v3777, %v3819
    %3821 = vdwg.mxu0
    %3822 = vmatprep.subr.bf16.mxu0 %v2799
    %3823 = vmatpush1.bf16.msra.mxu0 %v2798
    %3824 = vmatprep.subr.bf16.mxu0 %v2807
    %3825 = vmatpush1.bf16.msra.mxu0 %v2806
    %3826 = vmatprep.subr.bf16.mxu0 %v2815
    %3827 = vmatpush1.bf16.msra.mxu0 %v2814
    %3828 = vmatprep.subr.bf16.mxu0 %v2823
    %3829 = vmatpush1.bf16.msra.mxu0 %v2822
    %3830 = vmatprep.subr.bf16.mxu0 %v2831
    %3831 = vmatpush1.bf16.msra.mxu0 %v2830
    %3832 = vmatprep.subr.bf16.mxu0 %v2839
    %3833 = vmatpush1.bf16.msra.mxu0 %v2838
    %3834 = vmatprep.subr.bf16.mxu0 %v2847
    %3835 = vmatpush1.bf16.msra.mxu0 %v2846
    %3836 = vmatprep.subr.bf16.mxu0 %v2855
    %3837 = vmatpush1.bf16.msra.mxu0 %v2854
    %3838 = vmatprep.subr.bf16.mxu0 %v2863
    %3839 = vmatpush1.bf16.msra.mxu0 %v2862
    %3840 = vmatprep.subr.bf16.mxu0 %v2871
    %3841 = vmatpush1.bf16.msra.mxu0 %v2870
    %3842 = vmatprep.subr.bf16.mxu0 %v2879
    %3843 = vmatpush1.bf16.msra.mxu0 %v2878
    %3844 = vmatprep.subr.bf16.mxu0 %v2887
    %3845 = vmatpush1.bf16.msra.mxu0 %v2886
    %3846 = vmatprep.subr.bf16.mxu0 %v2895
    %3847 = vmatpush1.bf16.msra.mxu0 %v2894
    %3848 = vmatprep.subr.bf16.mxu0 %v2903
    %3849 = vmatpush1.bf16.msra.mxu0 %v2902
    %3850 = vmatprep.subr.bf16.mxu0 %v2911
    %3851 = vmatpush1.bf16.msra.mxu0 %v2910
    %3852 = vmatprep.subr.bf16.mxu0 %v2919
    %3853 = vmatpush1.bf16.msra.mxu0 %v2918
    %3854 = vmatprep.mubr.bf16.mxu0 %v447
    %3855 = vmatmul.mubr.bf16.gmra.mrb[0].mxu0 %v446
    %v3856 = vpop.f32.mrb[0].mxu0
    %v3857 = vadd.f32 %v3814, %v3856
    %v3858 = vpop.f32.mrb[0].mxu0
    %v3859 = vadd.f32 %v3816, %v3858
    %v3860 = vpop.f32.mrb[0].mxu0
    %v3861 = vadd.f32 %v3818, %v3860
    %v3862 = vpop.f32.mrb[0].mxu0
    %v3863 = vadd.f32 %v3820, %v3862
    %3864 = vdwg.mxu0
    %3865 = vmatprep.subr.bf16.mxu0 %v2927
    %3866 = vmatpush1.bf16.msra.mxu0 %v2926
    %3867 = vmatprep.subr.bf16.mxu0 %v2935
    %3868 = vmatpush1.bf16.msra.mxu0 %v2934
    %3869 = vmatprep.subr.bf16.mxu0 %v2943
    %3870 = vmatpush1.bf16.msra.mxu0 %v2942
    %3871 = vmatprep.subr.bf16.mxu0 %v2951
    %3872 = vmatpush1.bf16.msra.mxu0 %v2950
    %3873 = vmatprep.subr.bf16.mxu0 %v2959
    %3874 = vmatpush1.bf16.msra.mxu0 %v2958
    %3875 = vmatprep.subr.bf16.mxu0 %v2967
    %3876 = vmatpush1.bf16.msra.mxu0 %v2966
    %3877 = vmatprep.subr.bf16.mxu0 %v2975
    %3878 = vmatpush1.bf16.msra.mxu0 %v2974
    %3879 = vmatprep.subr.bf16.mxu0 %v2983
    %3880 = vmatpush1.bf16.msra.mxu0 %v2982
    %3881 = vmatprep.subr.bf16.mxu0 %v2991
    %3882 = vmatpush1.bf16.msra.mxu0 %v2990
    %3883 = vmatprep.subr.bf16.mxu0 %v2999
    %3884 = vmatpush1.bf16.msra.mxu0 %v2998
    %3885 = vmatprep.subr.bf16.mxu0 %v3007
    %3886 = vmatpush1.bf16.msra.mxu0 %v3006
    %3887 = vmatprep.subr.bf16.mxu0 %v3015
    %3888 = vmatpush1.bf16.msra.mxu0 %v3014
    %3889 = vmatprep.subr.bf16.mxu0 %v3023
    %3890 = vmatpush1.bf16.msra.mxu0 %v3022
    %3891 = vmatprep.subr.bf16.mxu0 %v3031
    %3892 = vmatpush1.bf16.msra.mxu0 %v3030
    %3893 = vmatprep.subr.bf16.mxu0 %v3039
    %3894 = vmatpush1.bf16.msra.mxu0 %v3038
    %3895 = vmatprep.subr.bf16.mxu0 %v3047
    %3896 = vmatpush1.bf16.msra.mxu0 %v3046
    %3897 = vmatprep.mubr.bf16.mxu0 %v449
    %3898 = vmatmul.mubr.bf16.gmra.mrb[0].mxu0 %v448
    %v3899 = vpop.f32.mrb[0].mxu0
    %v3900 = vadd.f32 %v3857, %v3899
    %v3901 = vpop.f32.mrb[0].mxu0
    %v3902 = vadd.f32 %v3859, %v3901
    %v3903 = vpop.f32.mrb[0].mxu0
    %v3904 = vadd.f32 %v3861, %v3903
    %v3905 = vpop.f32.mrb[0].mxu0
    %v3906 = vadd.f32 %v3863, %v3905
    %3907 = vdwg.mxu0
    %3908 = vmatprep.subr.bf16.mxu0 %v2545
    %3909 = vmatpush1.bf16.msra.mxu0 %v2544
    %3910 = vmatprep.subr.bf16.mxu0 %v2553
    %3911 = vmatpush1.bf16.msra.mxu0 %v2552
    %3912 = vmatprep.subr.bf16.mxu0 %v2561
    %3913 = vmatpush1.bf16.msra.mxu0 %v2560
    %3914 = vmatprep.subr.bf16.mxu0 %v2569
    %3915 = vmatpush1.bf16.msra.mxu0 %v2568
    %3916 = vmatprep.subr.bf16.mxu0 %v2577
    %3917 = vmatpush1.bf16.msra.mxu0 %v2576
    %3918 = vmatprep.subr.bf16.mxu0 %v2585
    %3919 = vmatpush1.bf16.msra.mxu0 %v2584
    %3920 = vmatprep.subr.bf16.mxu0 %v2593
    %3921 = vmatpush1.bf16.msra.mxu0 %v2592
    %3922 = vmatprep.subr.bf16.mxu0 %v2601
    %3923 = vmatpush1.bf16.msra.mxu0 %v2600
    %3924 = vmatprep.subr.bf16.mxu0 %v2609
    %3925 = vmatpush1.bf16.msra.mxu0 %v2608
    %3926 = vmatprep.subr.bf16.mxu0 %v2617
    %3927 = vmatpush1.bf16.msra.mxu0 %v2616
    %3928 = vmatprep.subr.bf16.mxu0 %v2625
    %3929 = vmatpush1.bf16.msra.mxu0 %v2624
    %3930 = vmatprep.subr.bf16.mxu0 %v2633
    %3931 = vmatpush1.bf16.msra.mxu0 %v2632
    %3932 = vmatprep.subr.bf16.mxu0 %v2641
    %3933 = vmatpush1.bf16.msra.mxu0 %v2640
    %3934 = vmatprep.subr.bf16.mxu0 %v2649
    %3935 = vmatpush1.bf16.msra.mxu0 %v2648
    %3936 = vmatprep.subr.bf16.mxu0 %v2657
    %3937 = vmatpush1.bf16.msra.mxu0 %v2656
    %3938 = vmatprep.subr.bf16.mxu0 %v2665
    %3939 = vmatpush1.bf16.msra.mxu0 %v2664
    %3940 = vmatprep.mubr.bf16.mxu0 %v443
    %3941 = vmatmul.mubr.bf16.gmra.mrb[0].mxu0 %v442
    %v3942 = vpop.f32.mrb[0].mxu0
    %v3943 = vadd.f32 %v983, %v3942
    %v3944 = vpop.f32.mrb[0].mxu0
    %v3945 = vadd.f32 %v987, %v3944
    %v3946 = vpop.f32.mrb[0].mxu0
    %v3947 = vadd.f32 %v983, %v3946
    %v3948 = vpop.f32.mrb[0].mxu0
    %v3949 = vadd.f32 %v987, %v3948
    %3950 = vdwg.mxu0
    %3951 = vmatprep.subr.bf16.mxu0 %v2673
    %3952 = vmatpush1.bf16.msra.mxu0 %v2672
    %3953 = vmatprep.subr.bf16.mxu0 %v2681
    %3954 = vmatpush1.bf16.msra.mxu0 %v2680
    %3955 = vmatprep.subr.bf16.mxu0 %v2689
    %3956 = vmatpush1.bf16.msra.mxu0 %v2688
    %3957 = vmatprep.subr.bf16.mxu0 %v2697
    %3958 = vmatpush1.bf16.msra.mxu0 %v2696
    %3959 = vmatprep.subr.bf16.mxu0 %v2705
    %3960 = vmatpush1.bf16.msra.mxu0 %v2704
    %3961 = vmatprep.subr.bf16.mxu0 %v2713
    %3962 = vmatpush1.bf16.msra.mxu0 %v2712
    %3963 = vmatprep.subr.bf16.mxu0 %v2721
    %3964 = vmatpush1.bf16.msra.mxu0 %v2720
    %3965 = vmatprep.subr.bf16.mxu0 %v2729
    %3966 = vmatpush1.bf16.msra.mxu0 %v2728
    %3967 = vmatprep.subr.bf16.mxu0 %v2737
    %3968 = vmatpush1.bf16.msra.mxu0 %v2736
    %3969 = vmatprep.subr.bf16.mxu0 %v2745
    %3970 = vmatpush1.bf16.msra.mxu0 %v2744
    %3971 = vmatprep.subr.bf16.mxu0 %v2753
    %3972 = vmatpush1.bf16.msra.mxu0 %v2752
    %3973 = vmatprep.subr.bf16.mxu0 %v2761
    %3974 = vmatpush1.bf16.msra.mxu0 %v2760
    %3975 = vmatprep.subr.bf16.mxu0 %v2769
    %3976 = vmatpush1.bf16.msra.mxu0 %v2768
    %3977 = vmatprep.subr.bf16.mxu0 %v2777
    %3978 = vmatpush1.bf16.msra.mxu0 %v2776
    %3979 = vmatprep.subr.bf16.mxu0 %v2785
    %3980 = vmatpush1.bf16.msra.mxu0 %v2784
    %3981 = vmatprep.subr.bf16.mxu0 %v2793
    %3982 = vmatpush1.bf16.msra.mxu0 %v2792
    %3983 = vmatprep.mubr.bf16.mxu0 %v445
    %3984 = vmatmul.mubr.bf16.gmra.mrb[0].mxu0 %v444
    %v3985 = vpop.f32.mrb[0].mxu0
    %v3986 = vadd.f32 %v3943, %v3985
    %v3987 = vpop.f32.mrb[0].mxu0
    %v3988 = vadd.f32 %v3945, %v3987
    %v3989 = vpop.f32.mrb[0].mxu0
    %v3990 = vadd.f32 %v3947, %v3989
    %v3991 = vpop.f32.mrb[0].mxu0
    %v3992 = vadd.f32 %v3949, %v3991
    %3993 = vdwg.mxu0
    %3994 = vmatprep.subr.bf16.mxu0 %v2801
    %3995 = vmatpush1.bf16.msra.mxu0 %v2800
    %3996 = vmatprep.subr.bf16.mxu0 %v2809
    %3997 = vmatpush1.bf16.msra.mxu0 %v2808
    %3998 = vmatprep.subr.bf16.mxu0 %v2817
    %3999 = vmatpush1.bf16.msra.mxu0 %v2816
    %4000 = vmatprep.subr.bf16.mxu0 %v2825
    %4001 = vmatpush1.bf16.msra.mxu0 %v2824
    %4002 = vmatprep.subr.bf16.mxu0 %v2833
    %4003 = vmatpush1.bf16.msra.mxu0 %v2832
    %4004 = vmatprep.subr.bf16.mxu0 %v2841
    %4005 = vmatpush1.bf16.msra.mxu0 %v2840
    %4006 = vmatprep.subr.bf16.mxu0 %v2849
    %4007 = vmatpush1.bf16.msra.mxu0 %v2848
    %4008 = vmatprep.subr.bf16.mxu0 %v2857
    %4009 = vmatpush1.bf16.msra.mxu0 %v2856
    %4010 = vmatprep.subr.bf16.mxu0 %v2865
    %4011 = vmatpush1.bf16.msra.mxu0 %v2864
    %4012 = vmatprep.subr.bf16.mxu0 %v2873
    %4013 = vmatpush1.bf16.msra.mxu0 %v2872
    %4014 = vmatprep.subr.bf16.mxu0 %v2881
    %4015 = vmatpush1.bf16.msra.mxu0 %v2880
    %4016 = vmatprep.subr.bf16.mxu0 %v2889
    %4017 = vmatpush1.bf16.msra.mxu0 %v2888
    %4018 = vmatprep.subr.bf16.mxu0 %v2897
    %4019 = vmatpush1.bf16.msra.mxu0 %v2896
    %4020 = vmatprep.subr.bf16.mxu0 %v2905
    %4021 = vmatpush1.bf16.msra.mxu0 %v2904
    %4022 = vmatprep.subr.bf16.mxu0 %v2913
    %4023 = vmatpush1.bf16.msra.mxu0 %v2912
    %4024 = vmatprep.subr.bf16.mxu0 %v2921
    %4025 = vmatpush1.bf16.msra.mxu0 %v2920
    %4026 = vmatprep.mubr.bf16.mxu0 %v447
    %4027 = vmatmul.mubr.bf16.gmra.mrb[0].mxu0 %v446
    %v4028 = vpop.f32.mrb[0].mxu0
    %v4029 = vadd.f32 %v3986, %v4028
    %v4030 = vpop.f32.mrb[0].mxu0
    %v4031 = vadd.f32 %v3988, %v4030
    %v4032 = vpop.f32.mrb[0].mxu0
    %v4033 = vadd.f32 %v3990, %v4032
    %v4034 = vpop.f32.mrb[0].mxu0
    %v4035 = vadd.f32 %v3992, %v4034
    %4036 = vdwg.mxu0
    %4037 = vmatprep.subr.bf16.mxu0 %v2929
    %4038 = vmatpush1.bf16.msra.mxu0 %v2928
    %4039 = vmatprep.subr.bf16.mxu0 %v2937
    %4040 = vmatpush1.bf16.msra.mxu0 %v2936
    %4041 = vmatprep.subr.bf16.mxu0 %v2945
    %4042 = vmatpush1.bf16.msra.mxu0 %v2944
    %4043 = vmatprep.subr.bf16.mxu0 %v2953
    %4044 = vmatpush1.bf16.msra.mxu0 %v2952
    %4045 = vmatprep.subr.bf16.mxu0 %v2961
    %4046 = vmatpush1.bf16.msra.mxu0 %v2960
    %4047 = vmatprep.subr.bf16.mxu0 %v2969
    %4048 = vmatpush1.bf16.msra.mxu0 %v2968
    %4049 = vmatprep.subr.bf16.mxu0 %v2977
    %4050 = vmatpush1.bf16.msra.mxu0 %v2976
    %4051 = vmatprep.subr.bf16.mxu0 %v2985
    %4052 = vmatpush1.bf16.msra.mxu0 %v2984
    %4053 = vmatprep.subr.bf16.mxu0 %v2993
    %4054 = vmatpush1.bf16.msra.mxu0 %v2992
    %4055 = vmatprep.subr.bf16.mxu0 %v3001
    %4056 = vmatpush1.bf16.msra.mxu0 %v3000
    %4057 = vmatprep.subr.bf16.mxu0 %v3009
    %4058 = vmatpush1.bf16.msra.mxu0 %v3008
    %4059 = vmatprep.subr.bf16.mxu0 %v3017
    %4060 = vmatpush1.bf16.msra.mxu0 %v3016
    %4061 = vmatprep.subr.bf16.mxu0 %v3025
    %4062 = vmatpush1.bf16.msra.mxu0 %v3024
    %4063 = vmatprep.subr.bf16.mxu0 %v3033
    %4064 = vmatpush1.bf16.msra.mxu0 %v3032
    %4065 = vmatprep.subr.bf16.mxu0 %v3041
    %4066 = vmatpush1.bf16.msra.mxu0 %v3040
    %4067 = vmatprep.subr.bf16.mxu0 %v3049
    %4068 = vmatpush1.bf16.msra.mxu0 %v3048
    %4069 = vmatprep.mubr.bf16.mxu0 %v449
    %4070 = vmatmul.mubr.bf16.gmra.mrb[0].mxu0 %v448
    %v4071 = vpop.f32.mrb[0].mxu0
    %v4072 = vadd.f32 %v4029, %v4071
    %v4073 = vpop.f32.mrb[0].mxu0
    %v4074 = vadd.f32 %v4031, %v4073
    %v4075 = vpop.f32.mrb[0].mxu0
    %v4076 = vadd.f32 %v4033, %v4075
    %v4077 = vpop.f32.mrb[0].mxu0
    %v4078 = vadd.f32 %v4035, %v4077
    %4079 = vdwg.mxu0
    %4080 = vmatprep.subr.bf16.mxu0 %v2547
    %4081 = vmatpush1.bf16.msra.mxu0 %v2546
    %4082 = vmatprep.subr.bf16.mxu0 %v2555
    %4083 = vmatpush1.bf16.msra.mxu0 %v2554
    %4084 = vmatprep.subr.bf16.mxu0 %v2563
    %4085 = vmatpush1.bf16.msra.mxu0 %v2562
    %4086 = vmatprep.subr.bf16.mxu0 %v2571
    %4087 = vmatpush1.bf16.msra.mxu0 %v2570
    %4088 = vmatprep.subr.bf16.mxu0 %v2579
    %4089 = vmatpush1.bf16.msra.mxu0 %v2578
    %4090 = vmatprep.subr.bf16.mxu0 %v2587
    %4091 = vmatpush1.bf16.msra.mxu0 %v2586
    %4092 = vmatprep.subr.bf16.mxu0 %v2595
    %4093 = vmatpush1.bf16.msra.mxu0 %v2594
    %4094 = vmatprep.subr.bf16.mxu0 %v2603
    %4095 = vmatpush1.bf16.msra.mxu0 %v2602
    %4096 = vmatprep.subr.bf16.mxu0 %v2611
    %4097 = vmatpush1.bf16.msra.mxu0 %v2610
    %4098 = vmatprep.subr.bf16.mxu0 %v2619
    %4099 = vmatpush1.bf16.msra.mxu0 %v2618
    %4100 = vmatprep.subr.bf16.mxu0 %v2627
    %4101 = vmatpush1.bf16.msra.mxu0 %v2626
    %4102 = vmatprep.subr.bf16.mxu0 %v2635
    %4103 = vmatpush1.bf16.msra.mxu0 %v2634
    %4104 = vmatprep.subr.bf16.mxu0 %v2643
    %4105 = vmatpush1.bf16.msra.mxu0 %v2642
    %4106 = vmatprep.subr.bf16.mxu0 %v2651
    %4107 = vmatpush1.bf16.msra.mxu0 %v2650
    %4108 = vmatprep.subr.bf16.mxu0 %v2659
    %4109 = vmatpush1.bf16.msra.mxu0 %v2658
    %4110 = vmatprep.subr.bf16.mxu0 %v2667
    %4111 = vmatpush1.bf16.msra.mxu0 %v2666
    %4112 = vmatprep.mubr.bf16.mxu0 %v443
    %4113 = vmatmul.mubr.bf16.gmra.mrb[0].mxu0 %v442
    %v4114 = vpop.f32.mrb[0].mxu0
    %v4115 = vadd.f32 %v991, %v4114
    %v4116 = vpop.f32.mrb[0].mxu0
    %v4117 = vadd.f32 %v995, %v4116
    %v4118 = vpop.f32.mrb[0].mxu0
    %v4119 = vadd.f32 %v991, %v4118
    %v4120 = vpop.f32.mrb[0].mxu0
    %v4121 = vadd.f32 %v995, %v4120
    %4122 = vdwg.mxu0
    %4123 = vmatprep.subr.bf16.mxu0 %v2675
    %4124 = vmatpush1.bf16.msra.mxu0 %v2674
    %4125 = vmatprep.subr.bf16.mxu0 %v2683
    %4126 = vmatpush1.bf16.msra.mxu0 %v2682
    %4127 = vmatprep.subr.bf16.mxu0 %v2691
    %4128 = vmatpush1.bf16.msra.mxu0 %v2690
    %4129 = vmatprep.subr.bf16.mxu0 %v2699
    %4130 = vmatpush1.bf16.msra.mxu0 %v2698
    %4131 = vmatprep.subr.bf16.mxu0 %v2707
    %4132 = vmatpush1.bf16.msra.mxu0 %v2706
    %4133 = vmatprep.subr.bf16.mxu0 %v2715
    %4134 = vmatpush1.bf16.msra.mxu0 %v2714
    %4135 = vmatprep.subr.bf16.mxu0 %v2723
    %4136 = vmatpush1.bf16.msra.mxu0 %v2722
    %4137 = vmatprep.subr.bf16.mxu0 %v2731
    %4138 = vmatpush1.bf16.msra.mxu0 %v2730
    %4139 = vmatprep.subr.bf16.mxu0 %v2739
    %4140 = vmatpush1.bf16.msra.mxu0 %v2738
    %4141 = vmatprep.subr.bf16.mxu0 %v2747
    %4142 = vmatpush1.bf16.msra.mxu0 %v2746
    %4143 = vmatprep.subr.bf16.mxu0 %v2755
    %4144 = vmatpush1.bf16.msra.mxu0 %v2754
    %4145 = vmatprep.subr.bf16.mxu0 %v2763
    %4146 = vmatpush1.bf16.msra.mxu0 %v2762
    %4147 = vmatprep.subr.bf16.mxu0 %v2771
    %4148 = vmatpush1.bf16.msra.mxu0 %v2770
    %4149 = vmatprep.subr.bf16.mxu0 %v2779
    %4150 = vmatpush1.bf16.msra.mxu0 %v2778
    %4151 = vmatprep.subr.bf16.mxu0 %v2787
    %4152 = vmatpush1.bf16.msra.mxu0 %v2786
    %4153 = vmatprep.subr.bf16.mxu0 %v2795
    %4154 = vmatpush1.bf16.msra.mxu0 %v2794
    %4155 = vmatprep.mubr.bf16.mxu0 %v445
    %4156 = vmatmul.mubr.bf16.gmra.mrb[0].mxu0 %v444
    %v4157 = vpop.f32.mrb[0].mxu0
    %v4158 = vadd.f32 %v4115, %v4157
    %v4159 = vpop.f32.mrb[0].mxu0
    %v4160 = vadd.f32 %v4117, %v4159
    %v4161 = vpop.f32.mrb[0].mxu0
    %v4162 = vadd.f32 %v4119, %v4161
    %v4163 = vpop.f32.mrb[0].mxu0
    %v4164 = vadd.f32 %v4121, %v4163
    %4165 = vdwg.mxu0
    %4166 = vmatprep.subr.bf16.mxu0 %v2803
    %4167 = vmatpush1.bf16.msra.mxu0 %v2802
    %4168 = vmatprep.subr.bf16.mxu0 %v2811
    %4169 = vmatpush1.bf16.msra.mxu0 %v2810
    %4170 = vmatprep.subr.bf16.mxu0 %v2819
    %4171 = vmatpush1.bf16.msra.mxu0 %v2818
    %4172 = vmatprep.subr.bf16.mxu0 %v2827
    %4173 = vmatpush1.bf16.msra.mxu0 %v2826
    %4174 = vmatprep.subr.bf16.mxu0 %v2835
    %4175 = vmatpush1.bf16.msra.mxu0 %v2834
    %4176 = vmatprep.subr.bf16.mxu0 %v2843
    %4177 = vmatpush1.bf16.msra.mxu0 %v2842
    %4178 = vmatprep.subr.bf16.mxu0 %v2851
    %4179 = vmatpush1.bf16.msra.mxu0 %v2850
    %4180 = vmatprep.subr.bf16.mxu0 %v2859
    %4181 = vmatpush1.bf16.msra.mxu0 %v2858
    %4182 = vmatprep.subr.bf16.mxu0 %v2867
    %4183 = vmatpush1.bf16.msra.mxu0 %v2866
    %4184 = vmatprep.subr.bf16.mxu0 %v2875
    %4185 = vmatpush1.bf16.msra.mxu0 %v2874
    %4186 = vmatprep.subr.bf16.mxu0 %v2883
    %4187 = vmatpush1.bf16.msra.mxu0 %v2882
    %4188 = vmatprep.subr.bf16.mxu0 %v2891
    %4189 = vmatpush1.bf16.msra.mxu0 %v2890
    %4190 = vmatprep.subr.bf16.mxu0 %v2899
    %4191 = vmatpush1.bf16.msra.mxu0 %v2898
    %4192 = vmatprep.subr.bf16.mxu0 %v2907
    %4193 = vmatpush1.bf16.msra.mxu0 %v2906
    %4194 = vmatprep.subr.bf16.mxu0 %v2915
    %4195 = vmatpush1.bf16.msra.mxu0 %v2914
    %4196 = vmatprep.subr.bf16.mxu0 %v2923
    %4197 = vmatpush1.bf16.msra.mxu0 %v2922
    %4198 = vmatprep.mubr.bf16.mxu0 %v447
    %4199 = vmatmul.mubr.bf16.gmra.mrb[0].mxu0 %v446
    %v4200 = vpop.f32.mrb[0].mxu0
    %v4201 = vadd.f32 %v4158, %v4200
    %v4202 = vpop.f32.mrb[0].mxu0
    %v4203 = vadd.f32 %v4160, %v4202
    %v4204 = vpop.f32.mrb[0].mxu0
    %v4205 = vadd.f32 %v4162, %v4204
    %v4206 = vpop.f32.mrb[0].mxu0
    %v4207 = vadd.f32 %v4164, %v4206
    %4208 = vdwg.mxu0
    %4209 = vmatprep.subr.bf16.mxu0 %v2931
    %4210 = vmatpush1.bf16.msra.mxu0 %v2930
    %4211 = vmatprep.subr.bf16.mxu0 %v2939
    %4212 = vmatpush1.bf16.msra.mxu0 %v2938
    %4213 = vmatprep.subr.bf16.mxu0 %v2947
    %4214 = vmatpush1.bf16.msra.mxu0 %v2946
    %4215 = vmatprep.subr.bf16.mxu0 %v2955
    %4216 = vmatpush1.bf16.msra.mxu0 %v2954
    %4217 = vmatprep.subr.bf16.mxu0 %v2963
    %4218 = vmatpush1.bf16.msra.mxu0 %v2962
    %4219 = vmatprep.subr.bf16.mxu0 %v2971
    %4220 = vmatpush1.bf16.msra.mxu0 %v2970
    %4221 = vmatprep.subr.bf16.mxu0 %v2979
    %4222 = vmatpush1.bf16.msra.mxu0 %v2978
    %4223 = vmatprep.subr.bf16.mxu0 %v2987
    %4224 = vmatpush1.bf16.msra.mxu0 %v2986
    %4225 = vmatprep.subr.bf16.mxu0 %v2995
    %4226 = vmatpush1.bf16.msra.mxu0 %v2994
    %4227 = vmatprep.subr.bf16.mxu0 %v3003
    %4228 = vmatpush1.bf16.msra.mxu0 %v3002
    %4229 = vmatprep.subr.bf16.mxu0 %v3011
    %4230 = vmatpush1.bf16.msra.mxu0 %v3010
    %4231 = vmatprep.subr.bf16.mxu0 %v3019
    %4232 = vmatpush1.bf16.msra.mxu0 %v3018
    %4233 = vmatprep.subr.bf16.mxu0 %v3027
    %4234 = vmatpush1.bf16.msra.mxu0 %v3026
    %4235 = vmatprep.subr.bf16.mxu0 %v3035
    %4236 = vmatpush1.bf16.msra.mxu0 %v3034
    %4237 = vmatprep.subr.bf16.mxu0 %v3043
    %4238 = vmatpush1.bf16.msra.mxu0 %v3042
    %4239 = vmatprep.subr.bf16.mxu0 %v3051
    %4240 = vmatpush1.bf16.msra.mxu0 %v3050
    %4241 = vmatprep.mubr.bf16.mxu0 %v449
    %4242 = vmatmul.mubr.bf16.gmra.mrb[0].mxu0 %v448
    %v4243 = vpop.f32.mrb[0].mxu0
    %v4244 = vadd.f32 %v4201, %v4243
    %v4245 = vpop.f32.mrb[0].mxu0
    %v4246 = vadd.f32 %v4203, %v4245
    %v4247 = vpop.f32.mrb[0].mxu0
    %v4248 = vadd.f32 %v4205, %v4247
    %v4249 = vpop.f32.mrb[0].mxu0
    %v4250 = vadd.f32 %v4207, %v4249
    %4251 = vdwg.mxu0
    %v4252 = vmax.f32 %v3728, 0.0
    %v4253 = vmax.f32 %v3730, 0.0
    %v4254 = vmax.f32 %v3900, 0.0
    %v4255 = vmax.f32 %v3902, 0.0
    %v4256 = vmax.f32 %v4072, 0.0
    %v4257 = vmax.f32 %v4074, 0.0
    %v4258 = vmax.f32 %v4244, 0.0
    %v4259 = vmax.f32 %v4246, 0.0
    %v4260 = vmax.f32 %v3732, 0.0
    %v4261 = vmax.f32 %v3734, 0.0
    %v4262 = vmax.f32 %v3904, 0.0
    %v4263 = vmax.f32 %v3906, 0.0
    %v4264 = vmax.f32 %v4076, 0.0
    %v4265 = vmax.f32 %v4078, 0.0
    %v4266 = vmax.f32 %v4248, 0.0
    %v4267 = vmax.f32 %v4250, 0.0
    %v4268 = vld [vmem:[#allocation11] sm:$0xff]
    %v4269 = vunpack.c.l.bf16 %v4268
    %v4270 = vunpack.c.h.bf16 %v4268
    %v4273 = vlaneseq
    %v4274 = vshrl.u32 %v4273, 7
    %v4275 = vsub.s32 0, %v4274
    %v4276 = vrot.slane %v4269, %v4275
    %v4277 = vlaneseq
    %v4278 = vshrl.u32 %v4277, 7
    %v4279 = vsub.s32 2, %v4278
    %v4280 = vrot.slane %v4269, %v4279
    %v4281 = vlaneseq
    %v4282 = vshrl.u32 %v4281, 7
    %v4283 = vsub.s32 4, %v4282
    %v4284 = vrot.slane %v4269, %v4283
    %v4285 = vlaneseq
    %v4286 = vshrl.u32 %v4285, 7
    %v4287 = vsub.s32 6, %v4286
    %v4288 = vrot.slane %v4269, %v4287
    %v4289 = vlaneseq
    %v4290 = vshrl.u32 %v4289, 7
    %v4291 = vsub.s32 0, %v4290
    %v4292 = vrot.slane %v4270, %v4291
    %v4293 = vlaneseq
    %v4294 = vshrl.u32 %v4293, 7
    %v4295 = vsub.s32 2, %v4294
    %v4296 = vrot.slane %v4270, %v4295
    %v4297 = vlaneseq
    %v4298 = vshrl.u32 %v4297, 7
    %v4299 = vsub.s32 4, %v4298
    %v4300 = vrot.slane %v4270, %v4299
    %v4301 = vlaneseq
    %v4302 = vshrl.u32 %v4301, 7
    %v4303 = vsub.s32 6, %v4302
    %v4304 = vrot.slane %v4270, %v4303
    %v4313 = vlaneseq
    %v4314 = vshrl.u32 %v4313, 7
    %v4315 = vsub.s32 0, %v4314
    %v4316 = vrot.slane %v4276, %v4315
    %v4317 = vlaneseq
    %v4318 = vshrl.u32 %v4317, 7
    %v4319 = vsub.s32 0, %v4318
    %v4320 = vrot.slane %v4280, %v4319
    %v4321 = vlaneseq
    %v4322 = vshrl.u32 %v4321, 7
    %v4323 = vsub.s32 0, %v4322
    %v4324 = vrot.slane %v4284, %v4323
    %v4325 = vlaneseq
    %v4326 = vshrl.u32 %v4325, 7
    %v4327 = vsub.s32 0, %v4326
    %v4328 = vrot.slane %v4288, %v4327
    %v4329 = vlaneseq
    %v4330 = vshrl.u32 %v4329, 7
    %v4331 = vsub.s32 0, %v4330
    %v4332 = vrot.slane %v4292, %v4331
    %v4333 = vlaneseq
    %v4334 = vshrl.u32 %v4333, 7
    %v4335 = vsub.s32 0, %v4334
    %v4336 = vrot.slane %v4296, %v4335
    %v4337 = vlaneseq
    %v4338 = vshrl.u32 %v4337, 7
    %v4339 = vsub.s32 0, %v4338
    %v4340 = vrot.slane %v4300, %v4339
    %v4341 = vlaneseq
    %v4342 = vshrl.u32 %v4341, 7
    %v4343 = vsub.s32 0, %v4342
    %v4344 = vrot.slane %v4304, %v4343
    %v4345 = vmul.f32 %v4252, %v4316
    %v4346 = vmul.f32 %v4253, %v4320
    %v4347 = vmul.f32 %v4254, %v4324
    %v4348 = vmul.f32 %v4255, %v4328
    %v4349 = vmul.f32 %v4256, %v4332
    %v4350 = vmul.f32 %v4257, %v4336
    %v4351 = vmul.f32 %v4258, %v4340
    %v4352 = vmul.f32 %v4259, %v4344
    %v4353 = vmul.f32 %v4260, %v4316
    %v4354 = vmul.f32 %v4261, %v4320
    %v4355 = vmul.f32 %v4262, %v4324
    %v4356 = vmul.f32 %v4263, %v4328
    %v4357 = vmul.f32 %v4264, %v4332
    %v4358 = vmul.f32 %v4265, %v4336
    %v4359 = vmul.f32 %v4266, %v4340
    %v4360 = vmul.f32 %v4267, %v4344
    %v4361 = vadd.f32 %v4345, %v4346
    %v4362 = vadd.f32 %v4361, %v4347
    %v4363 = vadd.f32 %v4362, %v4348
    %v4364 = vadd.f32 %v4363, %v4349
    %v4365 = vadd.f32 %v4364, %v4350
    %v4366 = vadd.f32 %v4365, %v4351
    %v4367 = vadd.f32 %v4366, %v4352
    %4368 = vadd.xlane.f32.xlu0 %v4367
    %v4369 = vpop.xlane.xlu0 %4368
    %v4370 = vadd.f32 %v4353, %v4354
    %v4371 = vadd.f32 %v4370, %v4355
    %v4372 = vadd.f32 %v4371, %v4356
    %v4373 = vadd.f32 %v4372, %v4357
    %v4374 = vadd.f32 %v4373, %v4358
    %v4375 = vadd.f32 %v4374, %v4359
    %v4376 = vadd.f32 %v4375, %v4360
    %4377 = vadd.xlane.f32.xlu0 %v4376
    %v4378 = vpop.xlane.xlu0 %4377
    %v4379 = vld [vmem:[#allocation2] sm:$0x1]
    %v4381 = vlaneseq
    %v4382 = vshrl.u32 %v4381, 7
    %v4383 = vsub.s32 0, %v4382
    %v4384 = vrot.slane %v4379, %v4383
    %v4386 = vadd.f32 %v4369, %v4384
    %v4387 = vadd.f32 %v4378, %v4384
    %vm4388 = vcmask 7168
    %4389 = vst.msk [vmem:[%s7] sm:$0xff] %vm4388, %v4386
    %4390 = vst.msk [vmem:[%s7 + $0x8] sm:$0xff] %vm4388, %v4387
    // Predicated region
    $region54: #{tpu_custom_call.1} parent=1 // pred_check
      _
    $region55: #{tpu_custom_call.1} parent=1 // pred_check_branch
      %4392 = sbr.rel (0) target = $region57
    $region56: #{tpu_custom_call.1} parent=1 // pred_region
      _
    $region57: #{tpu_custom_call.1} parent=1 // pred_fallthru
      _
    // Predicated region
    $region58: #{tpu_custom_call.1} parent=1 // pred_check
      _
    $region59: #{tpu_custom_call.1} parent=1 // pred_check_branch
      %4394 = sbr.rel (0) target = $region61
    $region60: #{tpu_custom_call.1} parent=1 // pred_region
      _
    $region61: #{tpu_custom_call.1} parent=1 // pred_fallthru
      _
    %4395 = vsyncpa [#allocation4], 1
    %4396 = vsyncpa [#allocation6], 1
    %4397 = vsyncpa [#allocation9], 1
    %4398 = vsyncpa [#allocation12], 1

</llo_original>
